<compile_context>
chip_gen: v7x
topology: tpu7x:2x2x1
jax: 0.10.0
libtpu: 0.0.40
codegen_flags: <defaults>
</compile_context>

<pallas_src>
import math
from functools import partial

import jax
import jax.numpy as jnp
from jax.experimental import pallas as pl
from jax.experimental.pallas import tpu as pltpu

VMEM_SPEC = pl.BlockSpec(memory_space=pltpu.MemorySpace.VMEM)


# ----------------------------- Pallas kernels --------------------------------

def _decoder_layer_kernel(*refs, n_heads, head_dim, want_attn):
    """Fully fused decoder layer for one batch element (grid over B)."""
    (trg_ref, enc_ref, tb_ref, sb_ref,
     sq_w, sq_b, sk_w, sk_b, sv_w, sv_b, so_w, so_b,
     cq_w, cq_b, ck_w, ck_b, cv_w, cv_b, co_w, co_b,
     f1_w, f1_b, f2_w, f2_b,
     g1, be1, g2, be2, g3, be3) = refs[:30]
    if want_attn:
        out_ref, attn_ref, ctx = refs[30], refs[31], refs[32]
    else:
        out_ref, ctx = refs[30], refs[31]
        attn_ref = None

    x = trg_ref[0]            # [Lt, H]
    e = enc_ref[0]            # [Ls, H]
    t_bias = tb_ref[0]        # [Lt, Lt] additive bias (0 / -1e10)
    s_bias = sb_ref[0]        # [1,  Ls] additive bias (0 / -1e10)
    inv_scale = 1.0 / math.sqrt(head_dim)

    def mha(xq, xkv, bias, wq, bq, wk, bk, wv, bv, wo, bo, sink):
        q = jnp.dot(xq, wq[...], preferred_element_type=jnp.float32) + bq[...]
        k = jnp.dot(xkv, wk[...], preferred_element_type=jnp.float32) + bk[...]
        v = jnp.dot(xkv, wv[...], preferred_element_type=jnp.float32) + bv[...]
        for h in range(n_heads):           # static unroll; scores stay in VMEM/vregs
            lo = h * head_dim
            qh = q[:, lo:lo + head_dim]
            kh = k[:, lo:lo + head_dim]
            vh = v[:, lo:lo + head_dim]
            en = jax.lax.dot_general(qh, kh, (((1,), (1,)), ((), ())),
                                     preferred_element_type=jnp.float32)
            en = en * inv_scale + bias
            en = en - jnp.max(en, axis=-1, keepdims=True)
            p = jnp.exp(en)
            a = p / jnp.sum(p, axis=-1, keepdims=True)
            ctx[:, lo:lo + head_dim] = jnp.dot(
                a, vh, preferred_element_type=jnp.float32)
            if sink is not None:
                sink[0, h, :, :] = a
        return jnp.dot(ctx[...], wo[...], preferred_element_type=jnp.float32) + bo[...]

    def add_ln(base, res, g, b):
        s = base + res
        mu = jnp.mean(s, axis=-1, keepdims=True)
        var = jnp.mean((s - mu) ** 2, axis=-1, keepdims=True)
        return (s - mu) * jax.lax.rsqrt(var + 1e-5) * g[...] + b[...]

    # self attention + residual LN
    sa = mha(x, x, t_bias, sq_w, sq_b, sk_w, sk_b, sv_w, sv_b, so_w, so_b, None)
    x1 = add_ln(x, sa, g1, be1)
    # encoder (cross) attention + residual LN
    ca = mha(x1, e, s_bias, cq_w, cq_b, ck_w, ck_b, cv_w, cv_b, co_w, co_b, attn_ref)
    x2 = add_ln(x1, ca, g2, be2)
    # position-wise FFN + residual LN
    h1 = jnp.maximum(
        jnp.dot(x2, f1_w[...], preferred_element_type=jnp.float32) + f1_b[...], 0.0)
    ff = jnp.dot(h1, f2_w[...], preferred_element_type=jnp.float32) + f2_b[...]
    out_ref[0, :, :] = add_ln(x2, ff, g3, be3)


def _linear_kernel(x_ref, w_ref, b_ref, o_ref):
    o_ref[...] = jnp.dot(x_ref[...], w_ref[...],
                         preferred_element_type=jnp.float32) + b_ref[...]


# ----------------------------- wrappers ---------------------------------------

def _full_spec(shape):
    nd = len(shape)
    return pl.BlockSpec(tuple(shape), lambda b, _nd=nd: (0,) * _nd)


def _batch_spec(shape):
    nd = len(shape)
    return pl.BlockSpec((1,) + tuple(shape[1:]),
                        lambda b, _nd=nd: (b,) + (0,) * (_nd - 1))


def _mha_param_list(p):
    return [p['fc_q']['w'], p['fc_q']['b'], p['fc_k']['w'], p['fc_k']['b'],
            p['fc_v']['w'], p['fc_v']['b'], p['fc_o']['w'], p['fc_o']['b']]


def decoder_layer_forward(lp, trg, enc_src, trg_bias, src_bias, n_heads, want_attn):
    B, Lt, H = trg.shape
    Ls = enc_src.shape[1]
    hd = H // n_heads

    weights = (_mha_param_list(lp['self_attn']) + _mha_param_list(lp['enc_attn']) +
               [lp['ffn']['fc_1']['w'], lp['ffn']['fc_1']['b'],
                lp['ffn']['fc_2']['w'], lp['ffn']['fc_2']['b'],
                lp['ln1_g'], lp['ln1_b'], lp['ln2_g'], lp['ln2_b'],
                lp['ln3_g'], lp['ln3_b']])

    ins = [trg, enc_src, trg_bias, src_bias] + weights
    in_specs = ([_batch_spec(trg.shape), _batch_spec(enc_src.shape),
                 _batch_spec(trg_bias.shape), _batch_spec(src_bias.shape)] +
                [_full_spec(w.shape) for w in weights])

    out_shapes = [jax.ShapeDtypeStruct((B, Lt, H), jnp.float32)]
    out_specs = [_batch_spec((B, Lt, H))]
    if want_attn:
        out_shapes.append(jax.ShapeDtypeStruct((B, n_heads, Lt, Ls), jnp.float32))
        out_specs.append(_batch_spec((B, n_heads, Lt, Ls)))

    outs = pl.pallas_call(
        partial(_decoder_layer_kernel, n_heads=n_heads, head_dim=hd,
                want_attn=want_attn),
        grid=(B,),
        out_shape=tuple(out_shapes) if want_attn else out_shapes[0],
        in_specs=in_specs,
        out_specs=tuple(out_specs) if want_attn else out_specs[0],
        scratch_shapes=[pltpu.VMEM((Lt, H), jnp.float32)],
        compiler_params=pltpu.CompilerParams(dimension_semantics=("parallel",)),
    )(*ins)

    if want_attn:
        return outs[0], outs[1]
    return outs, None


def fc_out_linear(x2d, w, b):
    """Final projection with the output width padded up to a 128-lane multiple."""
    M, K = x2d.shape
    N = w.shape[1]
    Np = ((N + 127) // 128) * 128
    w_p = jnp.zeros((K, Np), jnp.float32).at[:, :N].set(w)
    b_p = jnp.zeros((1, Np), jnp.float32).at[:, :N].set(b)
    y = pl.pallas_call(
        _linear_kernel,
        out_shape=jax.ShapeDtypeStruct((M, Np), jnp.float32),
        in_specs=[VMEM_SPEC, VMEM_SPEC, VMEM_SPEC],
        out_specs=VMEM_SPEC,
    )(x2d, w_p, b_p)
    return y[:, :N]


# ----------------------------- Decoder forward --------------------------------

def decoder_forward(params, trg, enc_src, trg_mask, src_mask, n_heads):
    """trg: [B, Lt] int32 ids; enc_src: [B, Ls, H];
       trg_mask: [B,1,Lt,Lt] bool; src_mask: [B,1,1,Ls] bool."""
    B, Lt = trg.shape
    H = params['tok_emb'].shape[1]

    # embedding gather (JAX glue)
    x = jnp.take(params['tok_emb'], trg, axis=0)                     # [B, Lt, H]
    # PositionalEncoding quirk of the reference module: pe has shape [max_len, 1, H]
    # and forward adds pe[:x.size(0)] -> [B, 1, H], broadcast over the sequence dim.
    x = x + params['pe'][:B]
    # dropout(s): identity in eval mode.

    # masks -> additive biases, computed once per forward
    trg_bias = jnp.where(trg_mask[:, 0], 0.0, -1e10).astype(jnp.float32)   # [B, Lt, Lt]
    src_bias = jnp.where(src_mask[:, 0], 0.0, -1e10).astype(jnp.float32)   # [B, 1,  Ls]

    n_layers = len(params['layers'])
    attention = None
    for i, lp in enumerate(params['layers']):
        want_attn = (i == n_layers - 1)      # only the last layer's attention is used
        x, a = decoder_layer_forward(lp, x, enc_src, trg_bias, src_bias,
                                     n_heads, want_attn)
        if a is not None:
            attention = a

    out = fc_out_linear(x.reshape(B * Lt, H),
                        params['fc_out']['w'], params['fc_out']['b'])
    return out.reshape(B, Lt, -1), attention


# ----------------------------- deterministic init -----------------------------

def _init_linear(key, din, dout):
    kw, kb = jax.random.split(key)
    return {'w': 0.02 * jax.random.normal(kw, (din, dout), jnp.float32),
            'b': 0.02 * jax.random.normal(kb, (1, dout), jnp.float32)}


def _init_mha(key, H):
    ks = jax.random.split(key, 4)
    return {'fc_q': _init_linear(ks[0], H, H), 'fc_k': _init_linear(ks[1], H, H),
            'fc_v': _init_linear(ks[2], H, H), 'fc_o': _init_linear(ks[3], H, H)}


def _init_ffn(key, H, pf):
    k1, k2 = jax.random.split(key)
    return {'fc_1': _init_linear(k1, H, pf), 'fc_2': _init_linear(k2, pf, H)}


def _init_dec_layer(key, H, pf):
    k1, k2, k3 = jax.random.split(key, 3)
    return {'self_attn': _init_mha(k1, H), 'enc_attn': _init_mha(k2, H),
            'ffn': _init_ffn(k3, H, pf),
            'ln1_g': jnp.ones((1, H), jnp.float32), 'ln1_b': jnp.zeros((1, H), jnp.float32),
            'ln2_g': jnp.ones((1, H), jnp.float32), 'ln2_b': jnp.zeros((1, H), jnp.float32),
            'ln3_g': jnp.ones((1, H), jnp.float32), 'ln3_b': jnp.zeros((1, H), jnp.float32)}


def _sinusoidal_pe(max_len, d_model):
    pos = jnp.arange(max_len, dtype=jnp.float32)[:, None]
    div = jnp.exp(jnp.arange(0, d_model, 2, dtype=jnp.float32)
                  * (-math.log(10000.0) / d_model))
    pe = jnp.zeros((max_len, d_model), jnp.float32)
    pe = pe.at[:, 0::2].set(jnp.sin(pos * div))
    pe = pe.at[:, 1::2].set(jnp.cos(pos * div))
    return pe[:, None, :]                       # [max_len, 1, d_model] (matches torch buffer)


def init_decoder_params(key, output_dim, H, n_layers, pf_dim, pe_max_len=5000):
    ks = jax.random.split(key, n_layers + 2)
    return {'tok_emb': 0.02 * jax.random.normal(ks[0], (output_dim, H), jnp.float32),
            'pe': _sinusoidal_pe(pe_max_len, H),
            'layers': [_init_dec_layer(ks[2 + i], H, pf_dim) for i in range(n_layers)],
            'fc_out': _init_linear(ks[1], H, output_dim)}


# ----------------------------------- main -------------------------------------

if __name__ == "__main__":
    OUTPUT_DIM = 18                      # trg vocab size
    HID_DIM, N_LAYERS, N_HEADS, PF_DIM = 32, 2, 4, 64
    TRG_PAD_IDX = 1
    B, LT, LS = 2, 8, 8

    root = jax.random.PRNGKey(0)
    kp, kt, ke = jax.random.split(root, 3)
    params = init_decoder_params(kp, OUTPUT_DIM, HID_DIM, N_LAYERS, PF_DIM)

    trg = jax.random.randint(kt, (B, LT), 2, OUTPUT_DIM, dtype=jnp.int32)
    trg = trg.at[1, -3:].set(TRG_PAD_IDX)            # some padding to exercise masks
    enc_src = 0.1 * jax.random.normal(ke, (B, LS, HID_DIM), jnp.float32)

    # masks as produced by the standard Seq2Seq wrapper around this Decoder
    src_valid = jnp.ones((B, LS), dtype=bool).at[1, -2:].set(False)
    src_mask = src_valid[:, None, None, :]                          # [B,1,1,Ls]
    trg_pad = (trg != TRG_PAD_IDX)[:, None, None, :]                # [B,1,1,Lt]
    causal = jnp.tril(jnp.ones((LT, LT), dtype=bool))
    trg_mask = trg_pad & causal[None, None]                         # [B,1,Lt,Lt]

    fwd = jax.jit(partial(decoder_forward, n_heads=N_HEADS))
    output, attention = fwd(params, trg, enc_src, trg_mask, src_mask)
    jax.block_until_ready((output, attention))

    assert output.shape == (B, LT, OUTPUT_DIM)
    assert attention.shape == (B, N_HEADS, LT, LS)
    assert bool(jnp.all(jnp.isfinite(output))) and bool(jnp.all(jnp.isfinite(attention)))
    print("KERNEL_OK")
</pallas_src>

<mosaic_0001>
module attributes {stable_mosaic.version = 11 : i64} {
  func.func @_linear_kernel(%arg0: memref<16x32xf32, #tpu.memory_space<vmem>>, %arg1: memref<32x128xf32, #tpu.memory_space<vmem>>, %arg2: memref<1x128xf32, #tpu.memory_space<vmem>>, %arg3: memref<16x128xf32, #tpu.memory_space<vmem>>) attributes {dimension_semantics = [], scalar_prefetch = 0 : i64, scratch_operands = 0 : i64, tpu.core_type = #tpu.core_type<tc>} {
    %c0 = arith.constant 0 : index
    %c0_0 = arith.constant 0 : index
    %0 = vector.load %arg0[%c0, %c0_0] : memref<16x32xf32, #tpu.memory_space<vmem>>, vector<16x32xf32>
    %c0_1 = arith.constant 0 : index
    %c0_2 = arith.constant 0 : index
    %1 = vector.load %arg1[%c0_1, %c0_2] : memref<32x128xf32, #tpu.memory_space<vmem>>, vector<32x128xf32>
    %cst = arith.constant dense<0.000000e+00> : vector<16x128xf32>
    %2 = tpu.matmul %0, %1, %cst {dimension_numbers = #tpu.dot_dimension_numbers<[1], [0], [0], [1], [0, 0, 1, 1], [], []>} : vector<16x32xf32>, vector<32x128xf32>, vector<16x128xf32> -> vector<16x128xf32>
    %c0_3 = arith.constant 0 : index
    %c0_4 = arith.constant 0 : index
    %3 = vector.load %arg2[%c0_3, %c0_4] : memref<1x128xf32, #tpu.memory_space<vmem>>, vector<1x128xf32>
    %4 = vector.broadcast %3 : vector<1x128xf32> to vector<16x128xf32>
    %5 = arith.addf %2, %4 : vector<16x128xf32>
    %c0_5 = arith.constant 0 : index
    %c0_6 = arith.constant 0 : index
    %6 = vector.load %arg3[%c0_5, %c0_6] : memref<16x128xf32, #tpu.memory_space<vmem>>, vector<16x128xf32>
    tpu.vector_store %arg3[%c0_5, %c0_6], %5 {strides = array<i32>} : memref<16x128xf32, #tpu.memory_space<vmem>>, vector<16x128xf32>,
    return
  }
}

module attributes {stable_mosaic.version = 11 : i64} {
  func.func @_decoder_layer_kernel(%arg0: i32, %arg1: memref<1x8x32xf32, #tpu.memory_space<vmem>>, %arg2: memref<1x8x32xf32, #tpu.memory_space<vmem>>, %arg3: memref<1x8x8xf32, #tpu.memory_space<vmem>>, %arg4: memref<1x1x8xf32, #tpu.memory_space<vmem>>, %arg5: memref<32x32xf32, #tpu.memory_space<vmem>>, %arg6: memref<1x32xf32, #tpu.memory_space<vmem>>, %arg7: memref<32x32xf32, #tpu.memory_space<vmem>>, %arg8: memref<1x32xf32, #tpu.memory_space<vmem>>, %arg9: memref<32x32xf32, #tpu.memory_space<vmem>>, %arg10: memref<1x32xf32, #tpu.memory_space<vmem>>, %arg11: memref<32x32xf32, #tpu.memory_space<vmem>>, %arg12: memref<1x32xf32, #tpu.memory_space<vmem>>, %arg13: memref<32x32xf32, #tpu.memory_space<vmem>>, %arg14: memref<1x32xf32, #tpu.memory_space<vmem>>, %arg15: memref<32x32xf32, #tpu.memory_space<vmem>>, %arg16: memref<1x32xf32, #tpu.memory_space<vmem>>, %arg17: memref<32x32xf32, #tpu.memory_space<vmem>>, %arg18: memref<1x32xf32, #tpu.memory_space<vmem>>, %arg19: memref<32x32xf32, #tpu.memory_space<vmem>>, %arg20: memref<1x32xf32, #tpu.memory_space<vmem>>, %arg21: memref<32x64xf32, #tpu.memory_space<vmem>>, %arg22: memref<1x64xf32, #tpu.memory_space<vmem>>, %arg23: memref<64x32xf32, #tpu.memory_space<vmem>>, %arg24: memref<1x32xf32, #tpu.memory_space<vmem>>, %arg25: memref<1x32xf32, #tpu.memory_space<vmem>>, %arg26: memref<1x32xf32, #tpu.memory_space<vmem>>, %arg27: memref<1x32xf32, #tpu.memory_space<vmem>>, %arg28: memref<1x32xf32, #tpu.memory_space<vmem>>, %arg29: memref<1x32xf32, #tpu.memory_space<vmem>>, %arg30: memref<1x32xf32, #tpu.memory_space<vmem>>, %arg31: memref<1x8x32xf32, #tpu.memory_space<vmem>>, %arg32: memref<8x32xf32, #tpu.memory_space<vmem>>) attributes {dimension_semantics = [#tpu.dimension_semantics<parallel>], iteration_bounds = array<i64: 2>, scalar_prefetch = 0 : i64, scratch_operands = 1 : i64, tpu.core_type = #tpu.core_type<tc>, window_params = [{transform_indices = @transform_0, window_bounds = array<i64: 1, 8, 32>}, {transform_indices = @transform_1, window_bounds = array<i64: 1, 8, 32>}, {transform_indices = @transform_2, window_bounds = array<i64: 1, 8, 8>}, {transform_indices = @transform_3, window_bounds = array<i64: 1, 1, 8>}, {pipeline_mode = #tpu.pipeline_mode<synchronous>, transform_indices = @transform_4, window_bounds = array<i64: 32, 32>}, {pipeline_mode = #tpu.pipeline_mode<synchronous>, transform_indices = @transform_5, window_bounds = array<i64: 1, 32>}, {pipeline_mode = #tpu.pipeline_mode<synchronous>, transform_indices = @transform_6, window_bounds = array<i64: 32, 32>}, {pipeline_mode = #tpu.pipeline_mode<synchronous>, transform_indices = @transform_7, window_bounds = array<i64: 1, 32>}, {pipeline_mode = #tpu.pipeline_mode<synchronous>, transform_indices = @transform_8, window_bounds = array<i64: 32, 32>}, {pipeline_mode = #tpu.pipeline_mode<synchronous>, transform_indices = @transform_9, window_bounds = array<i64: 1, 32>}, {pipeline_mode = #tpu.pipeline_mode<synchronous>, transform_indices = @transform_10, window_bounds = array<i64: 32, 32>}, {pipeline_mode = #tpu.pipeline_mode<synchronous>, transform_indices = @transform_11, window_bounds = array<i64: 1, 32>}, {pipeline_mode = #tpu.pipeline_mode<synchronous>, transform_indices = @transform_12, window_bounds = array<i64: 32, 32>}, {pipeline_mode = #tpu.pipeline_mode<synchronous>, transform_indices = @transform_13, window_bounds = array<i64: 1, 32>}, {pipeline_mode = #tpu.pipeline_mode<synchronous>, transform_indices = @transform_14, window_bounds = array<i64: 32, 32>}, {pipeline_mode = #tpu.pipeline_mode<synchronous>, transform_indices = @transform_15, window_bounds = array<i64: 1, 32>}, {pipeline_mode = #tpu.pipeline_mode<synchronous>, transform_indices = @transform_16, window_bounds = array<i64: 32, 32>}, {pipeline_mode = #tpu.pipeline_mode<synchronous>, transform_indices = @transform_17, window_bounds = array<i64: 1, 32>}, {pipeline_mode = #tpu.pipeline_mode<synchronous>, transform_indices = @transform_18, window_bounds = array<i64: 32, 32>}, {pipeline_mode = #tpu.pipeline_mode<synchronous>, transform_indices = @transform_19, window_bounds = array<i64: 1, 32>}, {pipeline_mode = #tpu.pipeline_mode<synchronous>, transform_indices = @transform_20, window_bounds = array<i64: 32, 64>}, {pipeline_mode = #tpu.pipeline_mode<synchronous>, transform_indices = @transform_21, window_bounds = array<i64: 1, 64>}, {pipeline_mode = #tpu.pipeline_mode<synchronous>, transform_indices = @transform_22, window_bounds = array<i64: 64, 32>}, {pipeline_mode = #tpu.pipeline_mode<synchronous>, transform_indices = @transform_23, window_bounds = array<i64: 1, 32>}, {pipeline_mode = #tpu.pipeline_mode<synchronous>, transform_indices = @transform_24, window_bounds = array<i64: 1, 32>}, {pipeline_mode = #tpu.pipeline_mode<synchronous>, transform_indices = @transform_25, window_bounds = array<i64: 1, 32>}, {pipeline_mode = #tpu.pipeline_mode<synchronous>, transform_indices = @transform_26, window_bounds = array<i64: 1, 32>}, {pipeline_mode = #tpu.pipeline_mode<synchronous>, transform_indices = @transform_27, window_bounds = array<i64: 1, 32>}, {pipeline_mode = #tpu.pipeline_mode<synchronous>, transform_indices = @transform_28, window_bounds = array<i64: 1, 32>}, {pipeline_mode = #tpu.pipeline_mode<synchronous>, transform_indices = @transform_29, window_bounds = array<i64: 1, 32>}, {transform_indices = @transform_30, window_bounds = array<i64: 1, 8, 32>}]} {
    %c0 = arith.constant 0 : index
    %c0_0 = arith.constant 0 : index
    %c0_1 = arith.constant 0 : index
    %0 = vector.load %arg1[%c0, %c0_0, %c0_1] : memref<1x8x32xf32, #tpu.memory_space<vmem>>, vector<1x8x32xf32>
    %1 = vector.shape_cast %0 : vector<1x8x32xf32> to vector<8x32xf32>
    %c0_2 = arith.constant 0 : index
    %c0_3 = arith.constant 0 : index
    %c0_4 = arith.constant 0 : index
    %2 = vector.load %arg2[%c0_2, %c0_3, %c0_4] : memref<1x8x32xf32, #tpu.memory_space<vmem>>, vector<1x8x32xf32>
    %3 = vector.shape_cast %2 : vector<1x8x32xf32> to vector<8x32xf32>
    %c0_5 = arith.constant 0 : index
    %c0_6 = arith.constant 0 : index
    %c0_7 = arith.constant 0 : index
    %4 = vector.load %arg3[%c0_5, %c0_6, %c0_7] : memref<1x8x8xf32, #tpu.memory_space<vmem>>, vector<1x8x8xf32>
    %5 = vector.shape_cast %4 : vector<1x8x8xf32> to vector<8x8xf32>
    %c0_8 = arith.constant 0 : index
    %c0_9 = arith.constant 0 : index
    %c0_10 = arith.constant 0 : index
    %6 = vector.load %arg4[%c0_8, %c0_9, %c0_10] : memref<1x1x8xf32, #tpu.memory_space<vmem>>, vector<1x1x8xf32>
    %7 = vector.shape_cast %6 : vector<1x1x8xf32> to vector<1x8xf32>
    %c0_11 = arith.constant 0 : index
    %c0_12 = arith.constant 0 : index
    %8 = vector.load %arg5[%c0_11, %c0_12] : memref<32x32xf32, #tpu.memory_space<vmem>>, vector<32x32xf32>
    %cst = arith.constant dense<0.000000e+00> : vector<8x32xf32>
    %9 = tpu.matmul %1, %8, %cst {dimension_numbers = #tpu.dot_dimension_numbers<[1], [0], [0], [1], [0, 0, 1, 1], [], []>} : vector<8x32xf32>, vector<32x32xf32>, vector<8x32xf32> -> vector<8x32xf32>
    %c0_13 = arith.constant 0 : index
    %c0_14 = arith.constant 0 : index
    %10 = vector.load %arg6[%c0_13, %c0_14] : memref<1x32xf32, #tpu.memory_space<vmem>>, vector<1x32xf32>
    %11 = vector.broadcast %10 : vector<1x32xf32> to vector<8x32xf32>
    %12 = arith.addf %9, %11 : vector<8x32xf32>
    %c0_15 = arith.constant 0 : index
    %c0_16 = arith.constant 0 : index
    %13 = vector.load %arg7[%c0_15, %c0_16] : memref<32x32xf32, #tpu.memory_space<vmem>>, vector<32x32xf32>
    %cst_17 = arith.constant dense<0.000000e+00> : vector<8x32xf32>
    %14 = tpu.matmul %1, %13, %cst_17 {dimension_numbers = #tpu.dot_dimension_numbers<[1], [0], [0], [1], [0, 0, 1, 1], [], []>} : vector<8x32xf32>, vector<32x32xf32>, vector<8x32xf32> -> vector<8x32xf32>
    %c0_18 = arith.constant 0 : index
    %c0_19 = arith.constant 0 : index
    %15 = vector.load %arg8[%c0_18, %c0_19] : memref<1x32xf32, #tpu.memory_space<vmem>>, vector<1x32xf32>
    %16 = vector.broadcast %15 : vector<1x32xf32> to vector<8x32xf32>
    %17 = arith.addf %14, %16 : vector<8x32xf32>
    %c0_20 = arith.constant 0 : index
    %c0_21 = arith.constant 0 : index
    %18 = vector.load %arg9[%c0_20, %c0_21] : memref<32x32xf32, #tpu.memory_space<vmem>>, vector<32x32xf32>
    %cst_22 = arith.constant dense<0.000000e+00> : vector<8x32xf32>
    %19 = tpu.matmul %1, %18, %cst_22 {dimension_numbers = #tpu.dot_dimension_numbers<[1], [0], [0], [1], [0, 0, 1, 1], [], []>} : vector<8x32xf32>, vector<32x32xf32>, vector<8x32xf32> -> vector<8x32xf32>
    %c0_23 = arith.constant 0 : index
    %c0_24 = arith.constant 0 : index
    %20 = vector.load %arg10[%c0_23, %c0_24] : memref<1x32xf32, #tpu.memory_space<vmem>>, vector<1x32xf32>
    %21 = vector.broadcast %20 : vector<1x32xf32> to vector<8x32xf32>
    %22 = arith.addf %19, %21 : vector<8x32xf32>
    %23 = vector.extract_strided_slice %12 {offsets = [0, 0], sizes = [8, 8], strides = [1, 1]} : vector<8x32xf32> to vector<8x8xf32>
    %24 = vector.extract_strided_slice %17 {offsets = [0, 0], sizes = [8, 8], strides = [1, 1]} : vector<8x32xf32> to vector<8x8xf32>
    %25 = vector.extract_strided_slice %22 {offsets = [0, 0], sizes = [8, 8], strides = [1, 1]} : vector<8x32xf32> to vector<8x8xf32>
    %cst_25 = arith.constant dense<0.000000e+00> : vector<8x8xf32>
    %26 = tpu.matmul %23, %24, %cst_25 {dimension_numbers = #tpu.dot_dimension_numbers<[1], [1], [0], [0], [0, 0, 1, 0], [], []>} : vector<8x8xf32>, vector<8x8xf32>, vector<8x8xf32> -> vector<8x8xf32>
    %cst_26 = arith.constant 0.353553385 : f32
    %27 = vector.broadcast %cst_26 : f32 to vector<8x8xf32>
    %28 = arith.mulf %26, %27 : vector<8x8xf32>
    %29 = arith.addf %28, %5 : vector<8x8xf32>
    %cst_27 = arith.constant dense<0xFF800000> : vector<8xf32>
    %30 = vector.multi_reduction <maximumf>, %29, %cst_27 [1] : vector<8x8xf32> to vector<8xf32>
    %31 = vector.shape_cast %30 : vector<8xf32> to vector<8x1xf32>
    %32 = vector.broadcast %31 : vector<8x1xf32> to vector<8x8xf32>
    %33 = arith.subf %29, %32 : vector<8x8xf32>
    %34 = math.exp %33 : vector<8x8xf32>
    %cst_28 = arith.constant dense<0.000000e+00> : vector<8xf32>
    %35 = vector.multi_reduction <add>, %34, %cst_28 [1] : vector<8x8xf32> to vector<8xf32>
    %36 = vector.shape_cast %35 : vector<8xf32> to vector<8x1xf32>
    %37 = vector.broadcast %36 : vector<8x1xf32> to vector<8x8xf32>
    %38 = arith.divf %34, %37 : vector<8x8xf32>
    %cst_29 = arith.constant dense<0.000000e+00> : vector<8x8xf32>
    %39 = tpu.matmul %38, %25, %cst_29 {dimension_numbers = #tpu.dot_dimension_numbers<[1], [0], [0], [1], [0, 0, 1, 1], [], []>} : vector<8x8xf32>, vector<8x8xf32>, vector<8x8xf32> -> vector<8x8xf32>
    %c0_30 = arith.constant 0 : index
    %c0_31 = arith.constant 0 : index
    %40 = vector.load %arg32[%c0_30, %c0_31] : memref<8x32xf32, #tpu.memory_space<vmem>>, vector<8x8xf32>
    tpu.vector_store %arg32[%c0_30, %c0_31], %39 {strides = array<i32>} : memref<8x32xf32, #tpu.memory_space<vmem>>, vector<8x8xf32>,
    %41 = vector.extract_strided_slice %12 {offsets = [0, 8], sizes = [8, 8], strides = [1, 1]} : vector<8x32xf32> to vector<8x8xf32>
    %42 = vector.extract_strided_slice %17 {offsets = [0, 8], sizes = [8, 8], strides = [1, 1]} : vector<8x32xf32> to vector<8x8xf32>
    %43 = vector.extract_strided_slice %22 {offsets = [0, 8], sizes = [8, 8], strides = [1, 1]} : vector<8x32xf32> to vector<8x8xf32>
    %cst_32 = arith.constant dense<0.000000e+00> : vector<8x8xf32>
    %44 = tpu.matmul %41, %42, %cst_32 {dimension_numbers = #tpu.dot_dimension_numbers<[1], [1], [0], [0], [0, 0, 1, 0], [], []>} : vector<8x8xf32>, vector<8x8xf32>, vector<8x8xf32> -> vector<8x8xf32>
    %cst_33 = arith.constant 0.353553385 : f32
    %45 = vector.broadcast %cst_33 : f32 to vector<8x8xf32>
    %46 = arith.mulf %44, %45 : vector<8x8xf32>
    %47 = arith.addf %46, %5 : vector<8x8xf32>
    %cst_34 = arith.constant dense<0xFF800000> : vector<8xf32>
    %48 = vector.multi_reduction <maximumf>, %47, %cst_34 [1] : vector<8x8xf32> to vector<8xf32>
    %49 = vector.shape_cast %48 : vector<8xf32> to vector<8x1xf32>
    %50 = vector.broadcast %49 : vector<8x1xf32> to vector<8x8xf32>
    %51 = arith.subf %47, %50 : vector<8x8xf32>
    %52 = math.exp %51 : vector<8x8xf32>
    %cst_35 = arith.constant dense<0.000000e+00> : vector<8xf32>
    %53 = vector.multi_reduction <add>, %52, %cst_35 [1] : vector<8x8xf32> to vector<8xf32>
    %54 = vector.shape_cast %53 : vector<8xf32> to vector<8x1xf32>
    %55 = vector.broadcast %54 : vector<8x1xf32> to vector<8x8xf32>
    %56 = arith.divf %52, %55 : vector<8x8xf32>
    %cst_36 = arith.constant dense<0.000000e+00> : vector<8x8xf32>
    %57 = tpu.matmul %56, %43, %cst_36 {dimension_numbers = #tpu.dot_dimension_numbers<[1], [0], [0], [1], [0, 0, 1, 1], [], []>} : vector<8x8xf32>, vector<8x8xf32>, vector<8x8xf32> -> vector<8x8xf32>
    %c0_37 = arith.constant 0 : index
    %c8 = arith.constant 8 : index
    %58 = vector.load %arg32[%c0_37, %c8] : memref<8x32xf32, #tpu.memory_space<vmem>>, vector<8x8xf32>
    tpu.vector_store %arg32[%c0_37, %c8], %57 {strides = array<i32>} : memref<8x32xf32, #tpu.memory_space<vmem>>, vector<8x8xf32>,
    %59 = vector.extract_strided_slice %12 {offsets = [0, 16], sizes = [8, 8], strides = [1, 1]} : vector<8x32xf32> to vector<8x8xf32>
    %60 = vector.extract_strided_slice %17 {offsets = [0, 16], sizes = [8, 8], strides = [1, 1]} : vector<8x32xf32> to vector<8x8xf32>
    %61 = vector.extract_strided_slice %22 {offsets = [0, 16], sizes = [8, 8], strides = [1, 1]} : vector<8x32xf32> to vector<8x8xf32>
    %cst_38 = arith.constant dense<0.000000e+00> : vector<8x8xf32>
    %62 = tpu.matmul %59, %60, %cst_38 {dimension_numbers = #tpu.dot_dimension_numbers<[1], [1], [0], [0], [0, 0, 1, 0], [], []>} : vector<8x8xf32>, vector<8x8xf32>, vector<8x8xf32> -> vector<8x8xf32>
    %cst_39 = arith.constant 0.353553385 : f32
    %63 = vector.broadcast %cst_39 : f32 to vector<8x8xf32>
    %64 = arith.mulf %62, %63 : vector<8x8xf32>
    %65 = arith.addf %64, %5 : vector<8x8xf32>
    %cst_40 = arith.constant dense<0xFF800000> : vector<8xf32>
    %66 = vector.multi_reduction <maximumf>, %65, %cst_40 [1] : vector<8x8xf32> to vector<8xf32>
    %67 = vector.shape_cast %66 : vector<8xf32> to vector<8x1xf32>
    %68 = vector.broadcast %67 : vector<8x1xf32> to vector<8x8xf32>
    %69 = arith.subf %65, %68 : vector<8x8xf32>
    %70 = math.exp %69 : vector<8x8xf32>
    %cst_41 = arith.constant dense<0.000000e+00> : vector<8xf32>
    %71 = vector.multi_reduction <add>, %70, %cst_41 [1] : vector<8x8xf32> to vector<8xf32>
    %72 = vector.shape_cast %71 : vector<8xf32> to vector<8x1xf32>
    %73 = vector.broadcast %72 : vector<8x1xf32> to vector<8x8xf32>
    %74 = arith.divf %70, %73 : vector<8x8xf32>
    %cst_42 = arith.constant dense<0.000000e+00> : vector<8x8xf32>
    %75 = tpu.matmul %74, %61, %cst_42 {dimension_numbers = #tpu.dot_dimension_numbers<[1], [0], [0], [1], [0, 0, 1, 1], [], []>} : vector<8x8xf32>, vector<8x8xf32>, vector<8x8xf32> -> vector<8x8xf32>
    %c0_43 = arith.constant 0 : index
    %c16 = arith.constant 16 : index
    %76 = vector.load %arg32[%c0_43, %c16] : memref<8x32xf32, #tpu.memory_space<vmem>>, vector<8x8xf32>
    tpu.vector_store %arg32[%c0_43, %c16], %75 {strides = array<i32>} : memref<8x32xf32, #tpu.memory_space<vmem>>, vector<8x8xf32>,
    %77 = vector.extract_strided_slice %12 {offsets = [0, 24], sizes = [8, 8], strides = [1, 1]} : vector<8x32xf32> to vector<8x8xf32>
    %78 = vector.extract_strided_slice %17 {offsets = [0, 24], sizes = [8, 8], strides = [1, 1]} : vector<8x32xf32> to vector<8x8xf32>
    %79 = vector.extract_strided_slice %22 {offsets = [0, 24], sizes = [8, 8], strides = [1, 1]} : vector<8x32xf32> to vector<8x8xf32>
    %cst_44 = arith.constant dense<0.000000e+00> : vector<8x8xf32>
    %80 = tpu.matmul %77, %78, %cst_44 {dimension_numbers = #tpu.dot_dimension_numbers<[1], [1], [0], [0], [0, 0, 1, 0], [], []>} : vector<8x8xf32>, vector<8x8xf32>, vector<8x8xf32> -> vector<8x8xf32>
    %cst_45 = arith.constant 0.353553385 : f32
    %81 = vector.broadcast %cst_45 : f32 to vector<8x8xf32>
    %82 = arith.mulf %80, %81 : vector<8x8xf32>
    %83 = arith.addf %82, %5 : vector<8x8xf32>
    %cst_46 = arith.constant dense<0xFF800000> : vector<8xf32>
    %84 = vector.multi_reduction <maximumf>, %83, %cst_46 [1] : vector<8x8xf32> to vector<8xf32>
    %85 = vector.shape_cast %84 : vector<8xf32> to vector<8x1xf32>
    %86 = vector.broadcast %85 : vector<8x1xf32> to vector<8x8xf32>
    %87 = arith.subf %83, %86 : vector<8x8xf32>
    %88 = math.exp %87 : vector<8x8xf32>
    %cst_47 = arith.constant dense<0.000000e+00> : vector<8xf32>
    %89 = vector.multi_reduction <add>, %88, %cst_47 [1] : vector<8x8xf32> to vector<8xf32>
    %90 = vector.shape_cast %89 : vector<8xf32> to vector<8x1xf32>
    %91 = vector.broadcast %90 : vector<8x1xf32> to vector<8x8xf32>
    %92 = arith.divf %88, %91 : vector<8x8xf32>
    %cst_48 = arith.constant dense<0.000000e+00> : vector<8x8xf32>
    %93 = tpu.matmul %92, %79, %cst_48 {dimension_numbers = #tpu.dot_dimension_numbers<[1], [0], [0], [1], [0, 0, 1, 1], [], []>} : vector<8x8xf32>, vector<8x8xf32>, vector<8x8xf32> -> vector<8x8xf32>
    %c0_49 = arith.constant 0 : index
    %c24 = arith.constant 24 : index
    %94 = vector.load %arg32[%c0_49, %c24] : memref<8x32xf32, #tpu.memory_space<vmem>>, vector<8x8xf32>
    tpu.vector_store %arg32[%c0_49, %c24], %93 {strides = array<i32>} : memref<8x32xf32, #tpu.memory_space<vmem>>, vector<8x8xf32>,
    %c0_50 = arith.constant 0 : index
    %c0_51 = arith.constant 0 : index
    %95 = vector.load %arg32[%c0_50, %c0_51] : memref<8x32xf32, #tpu.memory_space<vmem>>, vector<8x32xf32>
    %c0_52 = arith.constant 0 : index
    %c0_53 = arith.constant 0 : index
    %96 = vector.load %arg11[%c0_52, %c0_53] : memref<32x32xf32, #tpu.memory_space<vmem>>, vector<32x32xf32>
    %cst_54 = arith.constant dense<0.000000e+00> : vector<8x32xf32>
    %97 = tpu.matmul %95, %96, %cst_54 {dimension_numbers = #tpu.dot_dimension_numbers<[1], [0], [0], [1], [0, 0, 1, 1], [], []>} : vector<8x32xf32>, vector<32x32xf32>, vector<8x32xf32> -> vector<8x32xf32>
    %c0_55 = arith.constant 0 : index
    %c0_56 = arith.constant 0 : index
    %98 = vector.load %arg12[%c0_55, %c0_56] : memref<1x32xf32, #tpu.memory_space<vmem>>, vector<1x32xf32>
    %99 = vector.broadcast %98 : vector<1x32xf32> to vector<8x32xf32>
    %100 = arith.addf %97, %99 : vector<8x32xf32>
    %101 = arith.addf %1, %100 : vector<8x32xf32>
    %cst_57 = arith.constant dense<0.000000e+00> : vector<8xf32>
    %102 = vector.multi_reduction <add>, %101, %cst_57 [1] : vector<8x32xf32> to vector<8xf32>
    %103 = vector.shape_cast %102 : vector<8xf32> to vector<8x1xf32>
    %cst_58 = arith.constant 3.200000e+01 : f32
    %104 = vector.broadcast %cst_58 : f32 to vector<8x1xf32>
    %105 = arith.divf %103, %104 : vector<8x1xf32>
    %106 = vector.broadcast %105 : vector<8x1xf32> to vector<8x32xf32>
    %107 = arith.subf %101, %106 : vector<8x32xf32>
    %108 = arith.mulf %107, %107 : vector<8x32xf32>
    %cst_59 = arith.constant dense<0.000000e+00> : vector<8xf32>
    %109 = vector.multi_reduction <add>, %108, %cst_59 [1] : vector<8x32xf32> to vector<8xf32>
    %110 = vector.shape_cast %109 : vector<8xf32> to vector<8x1xf32>
    %cst_60 = arith.constant 3.200000e+01 : f32
    %111 = vector.broadcast %cst_60 : f32 to vector<8x1xf32>
    %112 = arith.divf %110, %111 : vector<8x1xf32>
    %113 = vector.broadcast %105 : vector<8x1xf32> to vector<8x32xf32>
    %114 = arith.subf %101, %113 : vector<8x32xf32>
    %cst_61 = arith.constant 9.99999974E-6 : f32
    %115 = vector.broadcast %cst_61 : f32 to vector<8x1xf32>
    %116 = arith.addf %112, %115 : vector<8x1xf32>
    %117 = math.rsqrt %116 : vector<8x1xf32>
    %118 = vector.broadcast %117 : vector<8x1xf32> to vector<8x32xf32>
    %119 = arith.mulf %114, %118 : vector<8x32xf32>
    %c0_62 = arith.constant 0 : index
    %c0_63 = arith.constant 0 : index
    %120 = vector.load %arg25[%c0_62, %c0_63] : memref<1x32xf32, #tpu.memory_space<vmem>>, vector<1x32xf32>
    %121 = vector.broadcast %120 : vector<1x32xf32> to vector<8x32xf32>
    %122 = arith.mulf %119, %121 : vector<8x32xf32>
    %c0_64 = arith.constant 0 : index
    %c0_65 = arith.constant 0 : index
    %123 = vector.load %arg26[%c0_64, %c0_65] : memref<1x32xf32, #tpu.memory_space<vmem>>, vector<1x32xf32>
    %124 = vector.broadcast %123 : vector<1x32xf32> to vector<8x32xf32>
    %125 = arith.addf %122, %124 : vector<8x32xf32>
    %c0_66 = arith.constant 0 : index
    %c0_67 = arith.constant 0 : index
    %126 = vector.load %arg13[%c0_66, %c0_67] : memref<32x32xf32, #tpu.memory_space<vmem>>, vector<32x32xf32>
    %cst_68 = arith.constant dense<0.000000e+00> : vector<8x32xf32>
    %127 = tpu.matmul %125, %126, %cst_68 {dimension_numbers = #tpu.dot_dimension_numbers<[1], [0], [0], [1], [0, 0, 1, 1], [], []>} : vector<8x32xf32>, vector<32x32xf32>, vector<8x32xf32> -> vector<8x32xf32>
    %c0_69 = arith.constant 0 : index
    %c0_70 = arith.constant 0 : index
    %128 = vector.load %arg14[%c0_69, %c0_70] : memref<1x32xf32, #tpu.memory_space<vmem>>, vector<1x32xf32>
    %129 = vector.broadcast %128 : vector<1x32xf32> to vector<8x32xf32>
    %130 = arith.addf %127, %129 : vector<8x32xf32>
    %c0_71 = arith.constant 0 : index
    %c0_72 = arith.constant 0 : index
    %131 = vector.load %arg15[%c0_71, %c0_72] : memref<32x32xf32, #tpu.memory_space<vmem>>, vector<32x32xf32>
    %cst_73 = arith.constant dense<0.000000e+00> : vector<8x32xf32>
    %132 = tpu.matmul %3, %131, %cst_73 {dimension_numbers = #tpu.dot_dimension_numbers<[1], [0], [0], [1], [0, 0, 1, 1], [], []>} : vector<8x32xf32>, vector<32x32xf32>, vector<8x32xf32> -> vector<8x32xf32>
    %c0_74 = arith.constant 0 : index
    %c0_75 = arith.constant 0 : index
    %133 = vector.load %arg16[%c0_74, %c0_75] : memref<1x32xf32, #tpu.memory_space<vmem>>, vector<1x32xf32>
    %134 = vector.broadcast %133 : vector<1x32xf32> to vector<8x32xf32>
    %135 = arith.addf %132, %134 : vector<8x32xf32>
    %c0_76 = arith.constant 0 : index
    %c0_77 = arith.constant 0 : index
    %136 = vector.load %arg17[%c0_76, %c0_77] : memref<32x32xf32, #tpu.memory_space<vmem>>, vector<32x32xf32>
    %cst_78 = arith.constant dense<0.000000e+00> : vector<8x32xf32>
    %137 = tpu.matmul %3, %136, %cst_78 {dimension_numbers = #tpu.dot_dimension_numbers<[1], [0], [0], [1], [0, 0, 1, 1], [], []>} : vector<8x32xf32>, vector<32x32xf32>, vector<8x32xf32> -> vector<8x32xf32>
    %c0_79 = arith.constant 0 : index
    %c0_80 = arith.constant 0 : index
    %138 = vector.load %arg18[%c0_79, %c0_80] : memref<1x32xf32, #tpu.memory_space<vmem>>, vector<1x32xf32>
    %139 = vector.broadcast %138 : vector<1x32xf32> to vector<8x32xf32>
    %140 = arith.addf %137, %139 : vector<8x32xf32>
    %141 = vector.extract_strided_slice %130 {offsets = [0, 0], sizes = [8, 8], strides = [1, 1]} : vector<8x32xf32> to vector<8x8xf32>
    %142 = vector.extract_strided_slice %135 {offsets = [0, 0], sizes = [8, 8], strides = [1, 1]} : vector<8x32xf32> to vector<8x8xf32>
    %143 = vector.extract_strided_slice %140 {offsets = [0, 0], sizes = [8, 8], strides = [1, 1]} : vector<8x32xf32> to vector<8x8xf32>
    %cst_81 = arith.constant dense<0.000000e+00> : vector<8x8xf32>
    %144 = tpu.matmul %141, %142, %cst_81 {dimension_numbers = #tpu.dot_dimension_numbers<[1], [1], [0], [0], [0, 0, 1, 0], [], []>} : vector<8x8xf32>, vector<8x8xf32>, vector<8x8xf32> -> vector<8x8xf32>
    %cst_82 = arith.constant 0.353553385 : f32
    %145 = vector.broadcast %cst_82 : f32 to vector<8x8xf32>
    %146 = arith.mulf %144, %145 : vector<8x8xf32>
    %147 = vector.broadcast %7 : vector<1x8xf32> to vector<8x8xf32>
    %148 = arith.addf %146, %147 : vector<8x8xf32>
    %cst_83 = arith.constant dense<0xFF800000> : vector<8xf32>
    %149 = vector.multi_reduction <maximumf>, %148, %cst_83 [1] : vector<8x8xf32> to vector<8xf32>
    %150 = vector.shape_cast %149 : vector<8xf32> to vector<8x1xf32>
    %151 = vector.broadcast %150 : vector<8x1xf32> to vector<8x8xf32>
    %152 = arith.subf %148, %151 : vector<8x8xf32>
    %153 = math.exp %152 : vector<8x8xf32>
    %cst_84 = arith.constant dense<0.000000e+00> : vector<8xf32>
    %154 = vector.multi_reduction <add>, %153, %cst_84 [1] : vector<8x8xf32> to vector<8xf32>
    %155 = vector.shape_cast %154 : vector<8xf32> to vector<8x1xf32>
    %156 = vector.broadcast %155 : vector<8x1xf32> to vector<8x8xf32>
    %157 = arith.divf %153, %156 : vector<8x8xf32>
    %cst_85 = arith.constant dense<0.000000e+00> : vector<8x8xf32>
    %158 = tpu.matmul %157, %143, %cst_85 {dimension_numbers = #tpu.dot_dimension_numbers<[1], [0], [0], [1], [0, 0, 1, 1], [], []>} : vector<8x8xf32>, vector<8x8xf32>, vector<8x8xf32> -> vector<8x8xf32>
    %c0_86 = arith.constant 0 : index
    %c0_87 = arith.constant 0 : index
    %159 = vector.load %arg32[%c0_86, %c0_87] : memref<8x32xf32, #tpu.memory_space<vmem>>, vector<8x8xf32>
    tpu.vector_store %arg32[%c0_86, %c0_87], %158 {strides = array<i32>} : memref<8x32xf32, #tpu.memory_space<vmem>>, vector<8x8xf32>,
    %160 = vector.extract_strided_slice %130 {offsets = [0, 8], sizes = [8, 8], strides = [1, 1]} : vector<8x32xf32> to vector<8x8xf32>
    %161 = vector.extract_strided_slice %135 {offsets = [0, 8], sizes = [8, 8], strides = [1, 1]} : vector<8x32xf32> to vector<8x8xf32>
    %162 = vector.extract_strided_slice %140 {offsets = [0, 8], sizes = [8, 8], strides = [1, 1]} : vector<8x32xf32> to vector<8x8xf32>
    %cst_88 = arith.constant dense<0.000000e+00> : vector<8x8xf32>
    %163 = tpu.matmul %160, %161, %cst_88 {dimension_numbers = #tpu.dot_dimension_numbers<[1], [1], [0], [0], [0, 0, 1, 0], [], []>} : vector<8x8xf32>, vector<8x8xf32>, vector<8x8xf32> -> vector<8x8xf32>
    %cst_89 = arith.constant 0.353553385 : f32
    %164 = vector.broadcast %cst_89 : f32 to vector<8x8xf32>
    %165 = arith.mulf %163, %164 : vector<8x8xf32>
    %166 = vector.broadcast %7 : vector<1x8xf32> to vector<8x8xf32>
    %167 = arith.addf %165, %166 : vector<8x8xf32>
    %cst_90 = arith.constant dense<0xFF800000> : vector<8xf32>
    %168 = vector.multi_reduction <maximumf>, %167, %cst_90 [1] : vector<8x8xf32> to vector<8xf32>
    %169 = vector.shape_cast %168 : vector<8xf32> to vector<8x1xf32>
    %170 = vector.broadcast %169 : vector<8x1xf32> to vector<8x8xf32>
    %171 = arith.subf %167, %170 : vector<8x8xf32>
    %172 = math.exp %171 : vector<8x8xf32>
    %cst_91 = arith.constant dense<0.000000e+00> : vector<8xf32>
    %173 = vector.multi_reduction <add>, %172, %cst_91 [1] : vector<8x8xf32> to vector<8xf32>
    %174 = vector.shape_cast %173 : vector<8xf32> to vector<8x1xf32>
    %175 = vector.broadcast %174 : vector<8x1xf32> to vector<8x8xf32>
    %176 = arith.divf %172, %175 : vector<8x8xf32>
    %cst_92 = arith.constant dense<0.000000e+00> : vector<8x8xf32>
    %177 = tpu.matmul %176, %162, %cst_92 {dimension_numbers = #tpu.dot_dimension_numbers<[1], [0], [0], [1], [0, 0, 1, 1], [], []>} : vector<8x8xf32>, vector<8x8xf32>, vector<8x8xf32> -> vector<8x8xf32>
    %c0_93 = arith.constant 0 : index
    %c8_94 = arith.constant 8 : index
    %178 = vector.load %arg32[%c0_93, %c8_94] : memref<8x32xf32, #tpu.memory_space<vmem>>, vector<8x8xf32>
    tpu.vector_store %arg32[%c0_93, %c8_94], %177 {strides = array<i32>} : memref<8x32xf32, #tpu.memory_space<vmem>>, vector<8x8xf32>,
    %179 = vector.extract_strided_slice %130 {offsets = [0, 16], sizes = [8, 8], strides = [1, 1]} : vector<8x32xf32> to vector<8x8xf32>
    %180 = vector.extract_strided_slice %135 {offsets = [0, 16], sizes = [8, 8], strides = [1, 1]} : vector<8x32xf32> to vector<8x8xf32>
    %181 = vector.extract_strided_slice %140 {offsets = [0, 16], sizes = [8, 8], strides = [1, 1]} : vector<8x32xf32> to vector<8x8xf32>
    %cst_95 = arith.constant dense<0.000000e+00> : vector<8x8xf32>
    %182 = tpu.matmul %179, %180, %cst_95 {dimension_numbers = #tpu.dot_dimension_numbers<[1], [1], [0], [0], [0, 0, 1, 0], [], []>} : vector<8x8xf32>, vector<8x8xf32>, vector<8x8xf32> -> vector<8x8xf32>
    %cst_96 = arith.constant 0.353553385 : f32
    %183 = vector.broadcast %cst_96 : f32 to vector<8x8xf32>
    %184 = arith.mulf %182, %183 : vector<8x8xf32>
    %185 = vector.broadcast %7 : vector<1x8xf32> to vector<8x8xf32>
    %186 = arith.addf %184, %185 : vector<8x8xf32>
    %cst_97 = arith.constant dense<0xFF800000> : vector<8xf32>
    %187 = vector.multi_reduction <maximumf>, %186, %cst_97 [1] : vector<8x8xf32> to vector<8xf32>
    %188 = vector.shape_cast %187 : vector<8xf32> to vector<8x1xf32>
    %189 = vector.broadcast %188 : vector<8x1xf32> to vector<8x8xf32>
    %190 = arith.subf %186, %189 : vector<8x8xf32>
    %191 = math.exp %190 : vector<8x8xf32>
    %cst_98 = arith.constant dense<0.000000e+00> : vector<8xf32>
    %192 = vector.multi_reduction <add>, %191, %cst_98 [1] : vector<8x8xf32> to vector<8xf32>
    %193 = vector.shape_cast %192 : vector<8xf32> to vector<8x1xf32>
    %194 = vector.broadcast %193 : vector<8x1xf32> to vector<8x8xf32>
    %195 = arith.divf %191, %194 : vector<8x8xf32>
    %cst_99 = arith.constant dense<0.000000e+00> : vector<8x8xf32>
    %196 = tpu.matmul %195, %181, %cst_99 {dimension_numbers = #tpu.dot_dimension_numbers<[1], [0], [0], [1], [0, 0, 1, 1], [], []>} : vector<8x8xf32>, vector<8x8xf32>, vector<8x8xf32> -> vector<8x8xf32>
    %c0_100 = arith.constant 0 : index
    %c16_101 = arith.constant 16 : index
    %197 = vector.load %arg32[%c0_100, %c16_101] : memref<8x32xf32, #tpu.memory_space<vmem>>, vector<8x8xf32>
    tpu.vector_store %arg32[%c0_100, %c16_101], %196 {strides = array<i32>} : memref<8x32xf32, #tpu.memory_space<vmem>>, vector<8x8xf32>,
    %198 = vector.extract_strided_slice %130 {offsets = [0, 24], sizes = [8, 8], strides = [1, 1]} : vector<8x32xf32> to vector<8x8xf32>
    %199 = vector.extract_strided_slice %135 {offsets = [0, 24], sizes = [8, 8], strides = [1, 1]} : vector<8x32xf32> to vector<8x8xf32>
    %200 = vector.extract_strided_slice %140 {offsets = [0, 24], sizes = [8, 8], strides = [1, 1]} : vector<8x32xf32> to vector<8x8xf32>
    %cst_102 = arith.constant dense<0.000000e+00> : vector<8x8xf32>
    %201 = tpu.matmul %198, %199, %cst_102 {dimension_numbers = #tpu.dot_dimension_numbers<[1], [1], [0], [0], [0, 0, 1, 0], [], []>} : vector<8x8xf32>, vector<8x8xf32>, vector<8x8xf32> -> vector<8x8xf32>
    %cst_103 = arith.constant 0.353553385 : f32
    %202 = vector.broadcast %cst_103 : f32 to vector<8x8xf32>
    %203 = arith.mulf %201, %202 : vector<8x8xf32>
    %204 = vector.broadcast %7 : vector<1x8xf32> to vector<8x8xf32>
    %205 = arith.addf %203, %204 : vector<8x8xf32>
    %cst_104 = arith.constant dense<0xFF800000> : vector<8xf32>
    %206 = vector.multi_reduction <maximumf>, %205, %cst_104 [1] : vector<8x8xf32> to vector<8xf32>
    %207 = vector.shape_cast %206 : vector<8xf32> to vector<8x1xf32>
    %208 = vector.broadcast %207 : vector<8x1xf32> to vector<8x8xf32>
    %209 = arith.subf %205, %208 : vector<8x8xf32>
    %210 = math.exp %209 : vector<8x8xf32>
    %cst_105 = arith.constant dense<0.000000e+00> : vector<8xf32>
    %211 = vector.multi_reduction <add>, %210, %cst_105 [1] : vector<8x8xf32> to vector<8xf32>
    %212 = vector.shape_cast %211 : vector<8xf32> to vector<8x1xf32>
    %213 = vector.broadcast %212 : vector<8x1xf32> to vector<8x8xf32>
    %214 = arith.divf %210, %213 : vector<8x8xf32>
    %cst_106 = arith.constant dense<0.000000e+00> : vector<8x8xf32>
    %215 = tpu.matmul %214, %200, %cst_106 {dimension_numbers = #tpu.dot_dimension_numbers<[1], [0], [0], [1], [0, 0, 1, 1], [], []>} : vector<8x8xf32>, vector<8x8xf32>, vector<8x8xf32> -> vector<8x8xf32>
    %c0_107 = arith.constant 0 : index
    %c24_108 = arith.constant 24 : index
    %216 = vector.load %arg32[%c0_107, %c24_108] : memref<8x32xf32, #tpu.memory_space<vmem>>, vector<8x8xf32>
    tpu.vector_store %arg32[%c0_107, %c24_108], %215 {strides = array<i32>} : memref<8x32xf32, #tpu.memory_space<vmem>>, vector<8x8xf32>,
    %c0_109 = arith.constant 0 : index
    %c0_110 = arith.constant 0 : index
    %217 = vector.load %arg32[%c0_109, %c0_110] : memref<8x32xf32, #tpu.memory_space<vmem>>, vector<8x32xf32>
    %c0_111 = arith.constant 0 : index
    %c0_112 = arith.constant 0 : index
    %218 = vector.load %arg19[%c0_111, %c0_112] : memref<32x32xf32, #tpu.memory_space<vmem>>, vector<32x32xf32>
    %cst_113 = arith.constant dense<0.000000e+00> : vector<8x32xf32>
    %219 = tpu.matmul %217, %218, %cst_113 {dimension_numbers = #tpu.dot_dimension_numbers<[1], [0], [0], [1], [0, 0, 1, 1], [], []>} : vector<8x32xf32>, vector<32x32xf32>, vector<8x32xf32> -> vector<8x32xf32>
    %c0_114 = arith.constant 0 : index
    %c0_115 = arith.constant 0 : index
    %220 = vector.load %arg20[%c0_114, %c0_115] : memref<1x32xf32, #tpu.memory_space<vmem>>, vector<1x32xf32>
    %221 = vector.broadcast %220 : vector<1x32xf32> to vector<8x32xf32>
    %222 = arith.addf %219, %221 : vector<8x32xf32>
    %223 = arith.addf %125, %222 : vector<8x32xf32>
    %cst_116 = arith.constant dense<0.000000e+00> : vector<8xf32>
    %224 = vector.multi_reduction <add>, %223, %cst_116 [1] : vector<8x32xf32> to vector<8xf32>
    %225 = vector.shape_cast %224 : vector<8xf32> to vector<8x1xf32>
    %cst_117 = arith.constant 3.200000e+01 : f32
    %226 = vector.broadcast %cst_117 : f32 to vector<8x1xf32>
    %227 = arith.divf %225, %226 : vector<8x1xf32>
    %228 = vector.broadcast %227 : vector<8x1xf32> to vector<8x32xf32>
    %229 = arith.subf %223, %228 : vector<8x32xf32>
    %230 = arith.mulf %229, %229 : vector<8x32xf32>
    %cst_118 = arith.constant dense<0.000000e+00> : vector<8xf32>
    %231 = vector.multi_reduction <add>, %230, %cst_118 [1] : vector<8x32xf32> to vector<8xf32>
    %232 = vector.shape_cast %231 : vector<8xf32> to vector<8x1xf32>
    %cst_119 = arith.constant 3.200000e+01 : f32
    %233 = vector.broadcast %cst_119 : f32 to vector<8x1xf32>
    %234 = arith.divf %232, %233 : vector<8x1xf32>
    %235 = vector.broadcast %227 : vector<8x1xf32> to vector<8x32xf32>
    %236 = arith.subf %223, %235 : vector<8x32xf32>
    %cst_120 = arith.constant 9.99999974E-6 : f32
    %237 = vector.broadcast %cst_120 : f32 to vector<8x1xf32>
    %238 = arith.addf %234, %237 : vector<8x1xf32>
    %239 = math.rsqrt %238 : vector<8x1xf32>
    %240 = vector.broadcast %239 : vector<8x1xf32> to vector<8x32xf32>
    %241 = arith.mulf %236, %240 : vector<8x32xf32>
    %c0_121 = arith.constant 0 : index
    %c0_122 = arith.constant 0 : index
    %242 = vector.load %arg27[%c0_121, %c0_122] : memref<1x32xf32, #tpu.memory_space<vmem>>, vector<1x32xf32>
    %243 = vector.broadcast %242 : vector<1x32xf32> to vector<8x32xf32>
    %244 = arith.mulf %241, %243 : vector<8x32xf32>
    %c0_123 = arith.constant 0 : index
    %c0_124 = arith.constant 0 : index
    %245 = vector.load %arg28[%c0_123, %c0_124] : memref<1x32xf32, #tpu.memory_space<vmem>>, vector<1x32xf32>
    %246 = vector.broadcast %245 : vector<1x32xf32> to vector<8x32xf32>
    %247 = arith.addf %244, %246 : vector<8x32xf32>
    %c0_125 = arith.constant 0 : index
    %c0_126 = arith.constant 0 : index
    %248 = vector.load %arg21[%c0_125, %c0_126] : memref<32x64xf32, #tpu.memory_space<vmem>>, vector<32x64xf32>
    %cst_127 = arith.constant dense<0.000000e+00> : vector<8x64xf32>
    %249 = tpu.matmul %247, %248, %cst_127 {dimension_numbers = #tpu.dot_dimension_numbers<[1], [0], [0], [1], [0, 0, 1, 1], [], []>} : vector<8x32xf32>, vector<32x64xf32>, vector<8x64xf32> -> vector<8x64xf32>
    %c0_128 = arith.constant 0 : index
    %c0_129 = arith.constant 0 : index
    %250 = vector.load %arg22[%c0_128, %c0_129] : memref<1x64xf32, #tpu.memory_space<vmem>>, vector<1x64xf32>
    %251 = vector.broadcast %250 : vector<1x64xf32> to vector<8x64xf32>
    %252 = arith.addf %249, %251 : vector<8x64xf32>
    %cst_130 = arith.constant 0.000000e+00 : f32
    %253 = vector.broadcast %cst_130 : f32 to vector<8x64xf32>
    %254 = arith.maximumf %252, %253 : vector<8x64xf32>
    %c0_131 = arith.constant 0 : index
    %c0_132 = arith.constant 0 : index
    %255 = vector.load %arg23[%c0_131, %c0_132] : memref<64x32xf32, #tpu.memory_space<vmem>>, vector<64x32xf32>
    %cst_133 = arith.constant dense<0.000000e+00> : vector<8x32xf32>
    %256 = tpu.matmul %254, %255, %cst_133 {dimension_numbers = #tpu.dot_dimension_numbers<[1], [0], [0], [1], [0, 0, 1, 1], [], []>} : vector<8x64xf32>, vector<64x32xf32>, vector<8x32xf32> -> vector<8x32xf32>
    %c0_134 = arith.constant 0 : index
    %c0_135 = arith.constant 0 : index
    %257 = vector.load %arg24[%c0_134, %c0_135] : memref<1x32xf32, #tpu.memory_space<vmem>>, vector<1x32xf32>
    %258 = vector.broadcast %257 : vector<1x32xf32> to vector<8x32xf32>
    %259 = arith.addf %256, %258 : vector<8x32xf32>
    %260 = arith.addf %247, %259 : vector<8x32xf32>
    %cst_136 = arith.constant dense<0.000000e+00> : vector<8xf32>
    %261 = vector.multi_reduction <add>, %260, %cst_136 [1] : vector<8x32xf32> to vector<8xf32>
    %262 = vector.shape_cast %261 : vector<8xf32> to vector<8x1xf32>
    %cst_137 = arith.constant 3.200000e+01 : f32
    %263 = vector.broadcast %cst_137 : f32 to vector<8x1xf32>
    %264 = arith.divf %262, %263 : vector<8x1xf32>
    %265 = vector.broadcast %264 : vector<8x1xf32> to vector<8x32xf32>
    %266 = arith.subf %260, %265 : vector<8x32xf32>
    %267 = arith.mulf %266, %266 : vector<8x32xf32>
    %cst_138 = arith.constant dense<0.000000e+00> : vector<8xf32>
    %268 = vector.multi_reduction <add>, %267, %cst_138 [1] : vector<8x32xf32> to vector<8xf32>
    %269 = vector.shape_cast %268 : vector<8xf32> to vector<8x1xf32>
    %cst_139 = arith.constant 3.200000e+01 : f32
    %270 = vector.broadcast %cst_139 : f32 to vector<8x1xf32>
    %271 = arith.divf %269, %270 : vector<8x1xf32>
    %272 = vector.broadcast %264 : vector<8x1xf32> to vector<8x32xf32>
    %273 = arith.subf %260, %272 : vector<8x32xf32>
    %cst_140 = arith.constant 9.99999974E-6 : f32
    %274 = vector.broadcast %cst_140 : f32 to vector<8x1xf32>
    %275 = arith.addf %271, %274 : vector<8x1xf32>
    %276 = math.rsqrt %275 : vector<8x1xf32>
    %277 = vector.broadcast %276 : vector<8x1xf32> to vector<8x32xf32>
    %278 = arith.mulf %273, %277 : vector<8x32xf32>
    %c0_141 = arith.constant 0 : index
    %c0_142 = arith.constant 0 : index
    %279 = vector.load %arg29[%c0_141, %c0_142] : memref<1x32xf32, #tpu.memory_space<vmem>>, vector<1x32xf32>
    %280 = vector.broadcast %279 : vector<1x32xf32> to vector<8x32xf32>
    %281 = arith.mulf %278, %280 : vector<8x32xf32>
    %c0_143 = arith.constant 0 : index
    %c0_144 = arith.constant 0 : index
    %282 = vector.load %arg30[%c0_143, %c0_144] : memref<1x32xf32, #tpu.memory_space<vmem>>, vector<1x32xf32>
    %283 = vector.broadcast %282 : vector<1x32xf32> to vector<8x32xf32>
    %284 = arith.addf %281, %283 : vector<8x32xf32>
    %c0_145 = arith.constant 0 : index
    %c0_146 = arith.constant 0 : index
    %c0_147 = arith.constant 0 : index
    %285 = vector.load %arg31[%c0_145, %c0_146, %c0_147] : memref<1x8x32xf32, #tpu.memory_space<vmem>>, vector<1x8x32xf32>
    %286 = vector.shape_cast %285 : vector<1x8x32xf32> to vector<8x32xf32>
    %287 = vector.shape_cast %284 : vector<8x32xf32> to vector<1x8x32xf32>
    tpu.vector_store %arg31[%c0_145, %c0_146, %c0_147], %287 {strides = array<i32>} : memref<1x8x32xf32, #tpu.memory_space<vmem>>, vector<1x8x32xf32>,
    return
  }
  func.func @transform_0(%arg0: i32) -> (i32, i32, i32) {
    %c0_i32 = arith.constant 0 : i32
    %c0_i32_0 = arith.constant 0 : i32
    %c0_i32_1 = arith.constant 0 : i32
    return %arg0, %c0_i32, %c0_i32_0 : i32, i32, i32
  }
  func.func @transform_1(%arg0: i32) -> (i32, i32, i32) {
    %c0_i32 = arith.constant 0 : i32
    %c0_i32_0 = arith.constant 0 : i32
    %c0_i32_1 = arith.constant 0 : i32
    return %arg0, %c0_i32, %c0_i32_0 : i32, i32, i32
  }
  func.func @transform_2(%arg0: i32) -> (i32, i32, i32) {
    %c0_i32 = arith.constant 0 : i32
    %c0_i32_0 = arith.constant 0 : i32
    %c0_i32_1 = arith.constant 0 : i32
    return %arg0, %c0_i32, %c0_i32_0 : i32, i32, i32
  }
  func.func @transform_3(%arg0: i32) -> (i32, i32, i32) {
    %c0_i32 = arith.constant 0 : i32
    %c0_i32_0 = arith.constant 0 : i32
    %c0_i32_1 = arith.constant 0 : i32
    return %arg0, %c0_i32, %c0_i32_0 : i32, i32, i32
  }
  func.func @transform_4(%arg0: i32) -> (i32, i32) {
    %c0_i32 = arith.constant 0 : i32
    %c0_i32_0 = arith.constant 0 : i32
    %c0_i32_1 = arith.constant 0 : i32
    return %c0_i32, %c0_i32_0 : i32, i32
  }
  func.func @transform_5(%arg0: i32) -> (i32, i32) {
    %c0_i32 = arith.constant 0 : i32
    %c0_i32_0 = arith.constant 0 : i32
    %c0_i32_1 = arith.constant 0 : i32
    return %c0_i32, %c0_i32_0 : i32, i32
  }
  func.func @transform_6(%arg0: i32) -> (i32, i32) {
    %c0_i32 = arith.constant 0 : i32
    %c0_i32_0 = arith.constant 0 : i32
    %c0_i32_1 = arith.constant 0 : i32
    return %c0_i32, %c0_i32_0 : i32, i32
  }
  func.func @transform_7(%arg0: i32) -> (i32, i32) {
    %c0_i32 = arith.constant 0 : i32
    %c0_i32_0 = arith.constant 0 : i32
    %c0_i32_1 = arith.constant 0 : i32
    return %c0_i32, %c0_i32_0 : i32, i32
  }
  func.func @transform_8(%arg0: i32) -> (i32, i32) {
    %c0_i32 = arith.constant 0 : i32
    %c0_i32_0 = arith.constant 0 : i32
    %c0_i32_1 = arith.constant 0 : i32
    return %c0_i32, %c0_i32_0 : i32, i32
  }
  func.func @transform_9(%arg0: i32) -> (i32, i32) {
    %c0_i32 = arith.constant 0 : i32
    %c0_i32_0 = arith.constant 0 : i32
    %c0_i32_1 = arith.constant 0 : i32
    return %c0_i32, %c0_i32_0 : i32, i32
  }
  func.func @transform_10(%arg0: i32) -> (i32, i32) {
    %c0_i32 = arith.constant 0 : i32
    %c0_i32_0 = arith.constant 0 : i32
    %c0_i32_1 = arith.constant 0 : i32
    return %c0_i32, %c0_i32_0 : i32, i32
  }
  func.func @transform_11(%arg0: i32) -> (i32, i32) {
    %c0_i32 = arith.constant 0 : i32
    %c0_i32_0 = arith.constant 0 : i32
    %c0_i32_1 = arith.constant 0 : i32
    return %c0_i32, %c0_i32_0 : i32, i32
  }
  func.func @transform_12(%arg0: i32) -> (i32, i32) {
    %c0_i32 = arith.constant 0 : i32
    %c0_i32_0 = arith.constant 0 : i32
    %c0_i32_1 = arith.constant 0 : i32
    return %c0_i32, %c0_i32_0 : i32, i32
  }
  func.func @transform_13(%arg0: i32) -> (i32, i32) {
    %c0_i32 = arith.constant 0 : i32
    %c0_i32_0 = arith.constant 0 : i32
    %c0_i32_1 = arith.constant 0 : i32
    return %c0_i32, %c0_i32_0 : i32, i32
  }
  func.func @transform_14(%arg0: i32) -> (i32, i32) {
    %c0_i32 = arith.constant 0 : i32
    %c0_i32_0 = arith.constant 0 : i32
    %c0_i32_1 = arith.constant 0 : i32
    return %c0_i32, %c0_i32_0 : i32, i32
  }
  func.func @transform_15(%arg0: i32) -> (i32, i32) {
    %c0_i32 = arith.constant 0 : i32
    %c0_i32_0 = arith.constant 0 : i32
    %c0_i32_1 = arith.constant 0 : i32
    return %c0_i32, %c0_i32_0 : i32, i32
  }
  func.func @transform_16(%arg0: i32) -> (i32, i32) {
    %c0_i32 = arith.constant 0 : i32
    %c0_i32_0 = arith.constant 0 : i32
    %c0_i32_1 = arith.constant 0 : i32
    return %c0_i32, %c0_i32_0 : i32, i32
  }
  func.func @transform_17(%arg0: i32) -> (i32, i32) {
    %c0_i32 = arith.constant 0 : i32
    %c0_i32_0 = arith.constant 0 : i32
    %c0_i32_1 = arith.constant 0 : i32
    return %c0_i32, %c0_i32_0 : i32, i32
  }
  func.func @transform_18(%arg0: i32) -> (i32, i32) {
    %c0_i32 = arith.constant 0 : i32
    %c0_i32_0 = arith.constant 0 : i32
    %c0_i32_1 = arith.constant 0 : i32
    return %c0_i32, %c0_i32_0 : i32, i32
  }
  func.func @transform_19(%arg0: i32) -> (i32, i32) {
    %c0_i32 = arith.constant 0 : i32
    %c0_i32_0 = arith.constant 0 : i32
    %c0_i32_1 = arith.constant 0 : i32
    return %c0_i32, %c0_i32_0 : i32, i32
  }
  func.func @transform_20(%arg0: i32) -> (i32, i32) {
    %c0_i32 = arith.constant 0 : i32
    %c0_i32_0 = arith.constant 0 : i32
    %c0_i32_1 = arith.constant 0 : i32
    return %c0_i32, %c0_i32_0 : i32, i32
  }
  func.func @transform_21(%arg0: i32) -> (i32, i32) {
    %c0_i32 = arith.constant 0 : i32
    %c0_i32_0 = arith.constant 0 : i32
    %c0_i32_1 = arith.constant 0 : i32
    return %c0_i32, %c0_i32_0 : i32, i32
  }
  func.func @transform_22(%arg0: i32) -> (i32, i32) {
    %c0_i32 = arith.constant 0 : i32
    %c0_i32_0 = arith.constant 0 : i32
    %c0_i32_1 = arith.constant 0 : i32
    return %c0_i32, %c0_i32_0 : i32, i32
  }
  func.func @transform_23(%arg0: i32) -> (i32, i32) {
    %c0_i32 = arith.constant 0 : i32
    %c0_i32_0 = arith.constant 0 : i32
    %c0_i32_1 = arith.constant 0 : i32
    return %c0_i32, %c0_i32_0 : i32, i32
  }
  func.func @transform_24(%arg0: i32) -> (i32, i32) {
    %c0_i32 = arith.constant 0 : i32
    %c0_i32_0 = arith.constant 0 : i32
    %c0_i32_1 = arith.constant 0 : i32
    return %c0_i32, %c0_i32_0 : i32, i32
  }
  func.func @transform_25(%arg0: i32) -> (i32, i32) {
    %c0_i32 = arith.constant 0 : i32
    %c0_i32_0 = arith.constant 0 : i32
    %c0_i32_1 = arith.constant 0 : i32
    return %c0_i32, %c0_i32_0 : i32, i32
  }
  func.func @transform_26(%arg0: i32) -> (i32, i32) {
    %c0_i32 = arith.constant 0 : i32
    %c0_i32_0 = arith.constant 0 : i32
    %c0_i32_1 = arith.constant 0 : i32
    return %c0_i32, %c0_i32_0 : i32, i32
  }
  func.func @transform_27(%arg0: i32) -> (i32, i32) {
    %c0_i32 = arith.constant 0 : i32
    %c0_i32_0 = arith.constant 0 : i32
    %c0_i32_1 = arith.constant 0 : i32
    return %c0_i32, %c0_i32_0 : i32, i32
  }
  func.func @transform_28(%arg0: i32) -> (i32, i32) {
    %c0_i32 = arith.constant 0 : i32
    %c0_i32_0 = arith.constant 0 : i32
    %c0_i32_1 = arith.constant 0 : i32
    return %c0_i32, %c0_i32_0 : i32, i32
  }
  func.func @transform_29(%arg0: i32) -> (i32, i32) {
    %c0_i32 = arith.constant 0 : i32
    %c0_i32_0 = arith.constant 0 : i32
    %c0_i32_1 = arith.constant 0 : i32
    return %c0_i32, %c0_i32_0 : i32, i32
  }
  func.func @transform_30(%arg0: i32) -> (i32, i32, i32) {
    %c0_i32 = arith.constant 0 : i32
    %c0_i32_0 = arith.constant 0 : i32
    %c0_i32_1 = arith.constant 0 : i32
    return %arg0, %c0_i32, %c0_i32_0 : i32, i32, i32
  }
}

module attributes {stable_mosaic.version = 11 : i64} {
  func.func @_decoder_layer_kernel(%arg0: i32, %arg1: memref<1x8x32xf32, #tpu.memory_space<vmem>>, %arg2: memref<1x8x32xf32, #tpu.memory_space<vmem>>, %arg3: memref<1x8x8xf32, #tpu.memory_space<vmem>>, %arg4: memref<1x1x8xf32, #tpu.memory_space<vmem>>, %arg5: memref<32x32xf32, #tpu.memory_space<vmem>>, %arg6: memref<1x32xf32, #tpu.memory_space<vmem>>, %arg7: memref<32x32xf32, #tpu.memory_space<vmem>>, %arg8: memref<1x32xf32, #tpu.memory_space<vmem>>, %arg9: memref<32x32xf32, #tpu.memory_space<vmem>>, %arg10: memref<1x32xf32, #tpu.memory_space<vmem>>, %arg11: memref<32x32xf32, #tpu.memory_space<vmem>>, %arg12: memref<1x32xf32, #tpu.memory_space<vmem>>, %arg13: memref<32x32xf32, #tpu.memory_space<vmem>>, %arg14: memref<1x32xf32, #tpu.memory_space<vmem>>, %arg15: memref<32x32xf32, #tpu.memory_space<vmem>>, %arg16: memref<1x32xf32, #tpu.memory_space<vmem>>, %arg17: memref<32x32xf32, #tpu.memory_space<vmem>>, %arg18: memref<1x32xf32, #tpu.memory_space<vmem>>, %arg19: memref<32x32xf32, #tpu.memory_space<vmem>>, %arg20: memref<1x32xf32, #tpu.memory_space<vmem>>, %arg21: memref<32x64xf32, #tpu.memory_space<vmem>>, %arg22: memref<1x64xf32, #tpu.memory_space<vmem>>, %arg23: memref<64x32xf32, #tpu.memory_space<vmem>>, %arg24: memref<1x32xf32, #tpu.memory_space<vmem>>, %arg25: memref<1x32xf32, #tpu.memory_space<vmem>>, %arg26: memref<1x32xf32, #tpu.memory_space<vmem>>, %arg27: memref<1x32xf32, #tpu.memory_space<vmem>>, %arg28: memref<1x32xf32, #tpu.memory_space<vmem>>, %arg29: memref<1x32xf32, #tpu.memory_space<vmem>>, %arg30: memref<1x32xf32, #tpu.memory_space<vmem>>, %arg31: memref<1x8x32xf32, #tpu.memory_space<vmem>>, %arg32: memref<1x4x8x8xf32, #tpu.memory_space<vmem>>, %arg33: memref<8x32xf32, #tpu.memory_space<vmem>>) attributes {dimension_semantics = [#tpu.dimension_semantics<parallel>], iteration_bounds = array<i64: 2>, scalar_prefetch = 0 : i64, scratch_operands = 1 : i64, tpu.core_type = #tpu.core_type<tc>, window_params = [{transform_indices = @transform_0, window_bounds = array<i64: 1, 8, 32>}, {transform_indices = @transform_1, window_bounds = array<i64: 1, 8, 32>}, {transform_indices = @transform_2, window_bounds = array<i64: 1, 8, 8>}, {transform_indices = @transform_3, window_bounds = array<i64: 1, 1, 8>}, {pipeline_mode = #tpu.pipeline_mode<synchronous>, transform_indices = @transform_4, window_bounds = array<i64: 32, 32>}, {pipeline_mode = #tpu.pipeline_mode<synchronous>, transform_indices = @transform_5, window_bounds = array<i64: 1, 32>}, {pipeline_mode = #tpu.pipeline_mode<synchronous>, transform_indices = @transform_6, window_bounds = array<i64: 32, 32>}, {pipeline_mode = #tpu.pipeline_mode<synchronous>, transform_indices = @transform_7, window_bounds = array<i64: 1, 32>}, {pipeline_mode = #tpu.pipeline_mode<synchronous>, transform_indices = @transform_8, window_bounds = array<i64: 32, 32>}, {pipeline_mode = #tpu.pipeline_mode<synchronous>, transform_indices = @transform_9, window_bounds = array<i64: 1, 32>}, {pipeline_mode = #tpu.pipeline_mode<synchronous>, transform_indices = @transform_10, window_bounds = array<i64: 32, 32>}, {pipeline_mode = #tpu.pipeline_mode<synchronous>, transform_indices = @transform_11, window_bounds = array<i64: 1, 32>}, {pipeline_mode = #tpu.pipeline_mode<synchronous>, transform_indices = @transform_12, window_bounds = array<i64: 32, 32>}, {pipeline_mode = #tpu.pipeline_mode<synchronous>, transform_indices = @transform_13, window_bounds = array<i64: 1, 32>}, {pipeline_mode = #tpu.pipeline_mode<synchronous>, transform_indices = @transform_14, window_bounds = array<i64: 32, 32>}, {pipeline_mode = #tpu.pipeline_mode<synchronous>, transform_indices = @transform_15, window_bounds = array<i64: 1, 32>}, {pipeline_mode = #tpu.pipeline_mode<synchronous>, transform_indices = @transform_16, window_bounds = array<i64: 32, 32>}, {pipeline_mode = #tpu.pipeline_mode<synchronous>, transform_indices = @transform_17, window_bounds = array<i64: 1, 32>}, {pipeline_mode = #tpu.pipeline_mode<synchronous>, transform_indices = @transform_18, window_bounds = array<i64: 32, 32>}, {pipeline_mode = #tpu.pipeline_mode<synchronous>, transform_indices = @transform_19, window_bounds = array<i64: 1, 32>}, {pipeline_mode = #tpu.pipeline_mode<synchronous>, transform_indices = @transform_20, window_bounds = array<i64: 32, 64>}, {pipeline_mode = #tpu.pipeline_mode<synchronous>, transform_indices = @transform_21, window_bounds = array<i64: 1, 64>}, {pipeline_mode = #tpu.pipeline_mode<synchronous>, transform_indices = @transform_22, window_bounds = array<i64: 64, 32>}, {pipeline_mode = #tpu.pipeline_mode<synchronous>, transform_indices = @transform_23, window_bounds = array<i64: 1, 32>}, {pipeline_mode = #tpu.pipeline_mode<synchronous>, transform_indices = @transform_24, window_bounds = array<i64: 1, 32>}, {pipeline_mode = #tpu.pipeline_mode<synchronous>, transform_indices = @transform_25, window_bounds = array<i64: 1, 32>}, {pipeline_mode = #tpu.pipeline_mode<synchronous>, transform_indices = @transform_26, window_bounds = array<i64: 1, 32>}, {pipeline_mode = #tpu.pipeline_mode<synchronous>, transform_indices = @transform_27, window_bounds = array<i64: 1, 32>}, {pipeline_mode = #tpu.pipeline_mode<synchronous>, transform_indices = @transform_28, window_bounds = array<i64: 1, 32>}, {pipeline_mode = #tpu.pipeline_mode<synchronous>, transform_indices = @transform_29, window_bounds = array<i64: 1, 32>}, {transform_indices = @transform_30, window_bounds = array<i64: 1, 8, 32>}, {transform_indices = @transform_31, window_bounds = array<i64: 1, 4, 8, 8>}]} {
    %c0 = arith.constant 0 : index
    %c0_0 = arith.constant 0 : index
    %c0_1 = arith.constant 0 : index
    %0 = vector.load %arg1[%c0, %c0_0, %c0_1] : memref<1x8x32xf32, #tpu.memory_space<vmem>>, vector<1x8x32xf32>
    %1 = vector.shape_cast %0 : vector<1x8x32xf32> to vector<8x32xf32>
    %c0_2 = arith.constant 0 : index
    %c0_3 = arith.constant 0 : index
    %c0_4 = arith.constant 0 : index
    %2 = vector.load %arg2[%c0_2, %c0_3, %c0_4] : memref<1x8x32xf32, #tpu.memory_space<vmem>>, vector<1x8x32xf32>
    %3 = vector.shape_cast %2 : vector<1x8x32xf32> to vector<8x32xf32>
    %c0_5 = arith.constant 0 : index
    %c0_6 = arith.constant 0 : index
    %c0_7 = arith.constant 0 : index
    %4 = vector.load %arg3[%c0_5, %c0_6, %c0_7] : memref<1x8x8xf32, #tpu.memory_space<vmem>>, vector<1x8x8xf32>
    %5 = vector.shape_cast %4 : vector<1x8x8xf32> to vector<8x8xf32>
    %c0_8 = arith.constant 0 : index
    %c0_9 = arith.constant 0 : index
    %c0_10 = arith.constant 0 : index
    %6 = vector.load %arg4[%c0_8, %c0_9, %c0_10] : memref<1x1x8xf32, #tpu.memory_space<vmem>>, vector<1x1x8xf32>
    %7 = vector.shape_cast %6 : vector<1x1x8xf32> to vector<1x8xf32>
    %c0_11 = arith.constant 0 : index
    %c0_12 = arith.constant 0 : index
    %8 = vector.load %arg5[%c0_11, %c0_12] : memref<32x32xf32, #tpu.memory_space<vmem>>, vector<32x32xf32>
    %cst = arith.constant dense<0.000000e+00> : vector<8x32xf32>
    %9 = tpu.matmul %1, %8, %cst {dimension_numbers = #tpu.dot_dimension_numbers<[1], [0], [0], [1], [0, 0, 1, 1], [], []>} : vector<8x32xf32>, vector<32x32xf32>, vector<8x32xf32> -> vector<8x32xf32>
    %c0_13 = arith.constant 0 : index
    %c0_14 = arith.constant 0 : index
    %10 = vector.load %arg6[%c0_13, %c0_14] : memref<1x32xf32, #tpu.memory_space<vmem>>, vector<1x32xf32>
    %11 = vector.broadcast %10 : vector<1x32xf32> to vector<8x32xf32>
    %12 = arith.addf %9, %11 : vector<8x32xf32>
    %c0_15 = arith.constant 0 : index
    %c0_16 = arith.constant 0 : index
    %13 = vector.load %arg7[%c0_15, %c0_16] : memref<32x32xf32, #tpu.memory_space<vmem>>, vector<32x32xf32>
    %cst_17 = arith.constant dense<0.000000e+00> : vector<8x32xf32>
    %14 = tpu.matmul %1, %13, %cst_17 {dimension_numbers = #tpu.dot_dimension_numbers<[1], [0], [0], [1], [0, 0, 1, 1], [], []>} : vector<8x32xf32>, vector<32x32xf32>, vector<8x32xf32> -> vector<8x32xf32>
    %c0_18 = arith.constant 0 : index
    %c0_19 = arith.constant 0 : index
    %15 = vector.load %arg8[%c0_18, %c0_19] : memref<1x32xf32, #tpu.memory_space<vmem>>, vector<1x32xf32>
    %16 = vector.broadcast %15 : vector<1x32xf32> to vector<8x32xf32>
    %17 = arith.addf %14, %16 : vector<8x32xf32>
    %c0_20 = arith.constant 0 : index
    %c0_21 = arith.constant 0 : index
    %18 = vector.load %arg9[%c0_20, %c0_21] : memref<32x32xf32, #tpu.memory_space<vmem>>, vector<32x32xf32>
    %cst_22 = arith.constant dense<0.000000e+00> : vector<8x32xf32>
    %19 = tpu.matmul %1, %18, %cst_22 {dimension_numbers = #tpu.dot_dimension_numbers<[1], [0], [0], [1], [0, 0, 1, 1], [], []>} : vector<8x32xf32>, vector<32x32xf32>, vector<8x32xf32> -> vector<8x32xf32>
    %c0_23 = arith.constant 0 : index
    %c0_24 = arith.constant 0 : index
    %20 = vector.load %arg10[%c0_23, %c0_24] : memref<1x32xf32, #tpu.memory_space<vmem>>, vector<1x32xf32>
    %21 = vector.broadcast %20 : vector<1x32xf32> to vector<8x32xf32>
    %22 = arith.addf %19, %21 : vector<8x32xf32>
    %23 = vector.extract_strided_slice %12 {offsets = [0, 0], sizes = [8, 8], strides = [1, 1]} : vector<8x32xf32> to vector<8x8xf32>
    %24 = vector.extract_strided_slice %17 {offsets = [0, 0], sizes = [8, 8], strides = [1, 1]} : vector<8x32xf32> to vector<8x8xf32>
    %25 = vector.extract_strided_slice %22 {offsets = [0, 0], sizes = [8, 8], strides = [1, 1]} : vector<8x32xf32> to vector<8x8xf32>
    %cst_25 = arith.constant dense<0.000000e+00> : vector<8x8xf32>
    %26 = tpu.matmul %23, %24, %cst_25 {dimension_numbers = #tpu.dot_dimension_numbers<[1], [1], [0], [0], [0, 0, 1, 0], [], []>} : vector<8x8xf32>, vector<8x8xf32>, vector<8x8xf32> -> vector<8x8xf32>
    %cst_26 = arith.constant 0.353553385 : f32
    %27 = vector.broadcast %cst_26 : f32 to vector<8x8xf32>
    %28 = arith.mulf %26, %27 : vector<8x8xf32>
    %29 = arith.addf %28, %5 : vector<8x8xf32>
    %cst_27 = arith.constant dense<0xFF800000> : vector<8xf32>
    %30 = vector.multi_reduction <maximumf>, %29, %cst_27 [1] : vector<8x8xf32> to vector<8xf32>
    %31 = vector.shape_cast %30 : vector<8xf32> to vector<8x1xf32>
    %32 = vector.broadcast %31 : vector<8x1xf32> to vector<8x8xf32>
    %33 = arith.subf %29, %32 : vector<8x8xf32>
    %34 = math.exp %33 : vector<8x8xf32>
    %cst_28 = arith.constant dense<0.000000e+00> : vector<8xf32>
    %35 = vector.multi_reduction <add>, %34, %cst_28 [1] : vector<8x8xf32> to vector<8xf32>
    %36 = vector.shape_cast %35 : vector<8xf32> to vector<8x1xf32>
    %37 = vector.broadcast %36 : vector<8x1xf32> to vector<8x8xf32>
    %38 = arith.divf %34, %37 : vector<8x8xf32>
    %cst_29 = arith.constant dense<0.000000e+00> : vector<8x8xf32>
    %39 = tpu.matmul %38, %25, %cst_29 {dimension_numbers = #tpu.dot_dimension_numbers<[1], [0], [0], [1], [0, 0, 1, 1], [], []>} : vector<8x8xf32>, vector<8x8xf32>, vector<8x8xf32> -> vector<8x8xf32>
    %c0_30 = arith.constant 0 : index
    %c0_31 = arith.constant 0 : index
    %40 = vector.load %arg33[%c0_30, %c0_31] : memref<8x32xf32, #tpu.memory_space<vmem>>, vector<8x8xf32>
    tpu.vector_store %arg33[%c0_30, %c0_31], %39 {strides = array<i32>} : memref<8x32xf32, #tpu.memory_space<vmem>>, vector<8x8xf32>,
    %41 = vector.extract_strided_slice %12 {offsets = [0, 8], sizes = [8, 8], strides = [1, 1]} : vector<8x32xf32> to vector<8x8xf32>
    %42 = vector.extract_strided_slice %17 {offsets = [0, 8], sizes = [8, 8], strides = [1, 1]} : vector<8x32xf32> to vector<8x8xf32>
    %43 = vector.extract_strided_slice %22 {offsets = [0, 8], sizes = [8, 8], strides = [1, 1]} : vector<8x32xf32> to vector<8x8xf32>
    %cst_32 = arith.constant dense<0.000000e+00> : vector<8x8xf32>
    %44 = tpu.matmul %41, %42, %cst_32 {dimension_numbers = #tpu.dot_dimension_numbers<[1], [1], [0], [0], [0, 0, 1, 0], [], []>} : vector<8x8xf32>, vector<8x8xf32>, vector<8x8xf32> -> vector<8x8xf32>
    %cst_33 = arith.constant 0.353553385 : f32
    %45 = vector.broadcast %cst_33 : f32 to vector<8x8xf32>
    %46 = arith.mulf %44, %45 : vector<8x8xf32>
    %47 = arith.addf %46, %5 : vector<8x8xf32>
    %cst_34 = arith.constant dense<0xFF800000> : vector<8xf32>
    %48 = vector.multi_reduction <maximumf>, %47, %cst_34 [1] : vector<8x8xf32> to vector<8xf32>
    %49 = vector.shape_cast %48 : vector<8xf32> to vector<8x1xf32>
    %50 = vector.broadcast %49 : vector<8x1xf32> to vector<8x8xf32>
    %51 = arith.subf %47, %50 : vector<8x8xf32>
    %52 = math.exp %51 : vector<8x8xf32>
    %cst_35 = arith.constant dense<0.000000e+00> : vector<8xf32>
    %53 = vector.multi_reduction <add>, %52, %cst_35 [1] : vector<8x8xf32> to vector<8xf32>
    %54 = vector.shape_cast %53 : vector<8xf32> to vector<8x1xf32>
    %55 = vector.broadcast %54 : vector<8x1xf32> to vector<8x8xf32>
    %56 = arith.divf %52, %55 : vector<8x8xf32>
    %cst_36 = arith.constant dense<0.000000e+00> : vector<8x8xf32>
    %57 = tpu.matmul %56, %43, %cst_36 {dimension_numbers = #tpu.dot_dimension_numbers<[1], [0], [0], [1], [0, 0, 1, 1], [], []>} : vector<8x8xf32>, vector<8x8xf32>, vector<8x8xf32> -> vector<8x8xf32>
    %c0_37 = arith.constant 0 : index
    %c8 = arith.constant 8 : index
    %58 = vector.load %arg33[%c0_37, %c8] : memref<8x32xf32, #tpu.memory_space<vmem>>, vector<8x8xf32>
    tpu.vector_store %arg33[%c0_37, %c8], %57 {strides = array<i32>} : memref<8x32xf32, #tpu.memory_space<vmem>>, vector<8x8xf32>,
    %59 = vector.extract_strided_slice %12 {offsets = [0, 16], sizes = [8, 8], strides = [1, 1]} : vector<8x32xf32> to vector<8x8xf32>
    %60 = vector.extract_strided_slice %17 {offsets = [0, 16], sizes = [8, 8], strides = [1, 1]} : vector<8x32xf32> to vector<8x8xf32>
    %61 = vector.extract_strided_slice %22 {offsets = [0, 16], sizes = [8, 8], strides = [1, 1]} : vector<8x32xf32> to vector<8x8xf32>
    %cst_38 = arith.constant dense<0.000000e+00> : vector<8x8xf32>
    %62 = tpu.matmul %59, %60, %cst_38 {dimension_numbers = #tpu.dot_dimension_numbers<[1], [1], [0], [0], [0, 0, 1, 0], [], []>} : vector<8x8xf32>, vector<8x8xf32>, vector<8x8xf32> -> vector<8x8xf32>
    %cst_39 = arith.constant 0.353553385 : f32
    %63 = vector.broadcast %cst_39 : f32 to vector<8x8xf32>
    %64 = arith.mulf %62, %63 : vector<8x8xf32>
    %65 = arith.addf %64, %5 : vector<8x8xf32>
    %cst_40 = arith.constant dense<0xFF800000> : vector<8xf32>
    %66 = vector.multi_reduction <maximumf>, %65, %cst_40 [1] : vector<8x8xf32> to vector<8xf32>
    %67 = vector.shape_cast %66 : vector<8xf32> to vector<8x1xf32>
    %68 = vector.broadcast %67 : vector<8x1xf32> to vector<8x8xf32>
    %69 = arith.subf %65, %68 : vector<8x8xf32>
    %70 = math.exp %69 : vector<8x8xf32>
    %cst_41 = arith.constant dense<0.000000e+00> : vector<8xf32>
    %71 = vector.multi_reduction <add>, %70, %cst_41 [1] : vector<8x8xf32> to vector<8xf32>
    %72 = vector.shape_cast %71 : vector<8xf32> to vector<8x1xf32>
    %73 = vector.broadcast %72 : vector<8x1xf32> to vector<8x8xf32>
    %74 = arith.divf %70, %73 : vector<8x8xf32>
    %cst_42 = arith.constant dense<0.000000e+00> : vector<8x8xf32>
    %75 = tpu.matmul %74, %61, %cst_42 {dimension_numbers = #tpu.dot_dimension_numbers<[1], [0], [0], [1], [0, 0, 1, 1], [], []>} : vector<8x8xf32>, vector<8x8xf32>, vector<8x8xf32> -> vector<8x8xf32>
    %c0_43 = arith.constant 0 : index
    %c16 = arith.constant 16 : index
    %76 = vector.load %arg33[%c0_43, %c16] : memref<8x32xf32, #tpu.memory_space<vmem>>, vector<8x8xf32>
    tpu.vector_store %arg33[%c0_43, %c16], %75 {strides = array<i32>} : memref<8x32xf32, #tpu.memory_space<vmem>>, vector<8x8xf32>,
    %77 = vector.extract_strided_slice %12 {offsets = [0, 24], sizes = [8, 8], strides = [1, 1]} : vector<8x32xf32> to vector<8x8xf32>
    %78 = vector.extract_strided_slice %17 {offsets = [0, 24], sizes = [8, 8], strides = [1, 1]} : vector<8x32xf32> to vector<8x8xf32>
    %79 = vector.extract_strided_slice %22 {offsets = [0, 24], sizes = [8, 8], strides = [1, 1]} : vector<8x32xf32> to vector<8x8xf32>
    %cst_44 = arith.constant dense<0.000000e+00> : vector<8x8xf32>
    %80 = tpu.matmul %77, %78, %cst_44 {dimension_numbers = #tpu.dot_dimension_numbers<[1], [1], [0], [0], [0, 0, 1, 0], [], []>} : vector<8x8xf32>, vector<8x8xf32>, vector<8x8xf32> -> vector<8x8xf32>
    %cst_45 = arith.constant 0.353553385 : f32
    %81 = vector.broadcast %cst_45 : f32 to vector<8x8xf32>
    %82 = arith.mulf %80, %81 : vector<8x8xf32>
    %83 = arith.addf %82, %5 : vector<8x8xf32>
    %cst_46 = arith.constant dense<0xFF800000> : vector<8xf32>
    %84 = vector.multi_reduction <maximumf>, %83, %cst_46 [1] : vector<8x8xf32> to vector<8xf32>
    %85 = vector.shape_cast %84 : vector<8xf32> to vector<8x1xf32>
    %86 = vector.broadcast %85 : vector<8x1xf32> to vector<8x8xf32>
    %87 = arith.subf %83, %86 : vector<8x8xf32>
    %88 = math.exp %87 : vector<8x8xf32>
    %cst_47 = arith.constant dense<0.000000e+00> : vector<8xf32>
    %89 = vector.multi_reduction <add>, %88, %cst_47 [1] : vector<8x8xf32> to vector<8xf32>
    %90 = vector.shape_cast %89 : vector<8xf32> to vector<8x1xf32>
    %91 = vector.broadcast %90 : vector<8x1xf32> to vector<8x8xf32>
    %92 = arith.divf %88, %91 : vector<8x8xf32>
    %cst_48 = arith.constant dense<0.000000e+00> : vector<8x8xf32>
    %93 = tpu.matmul %92, %79, %cst_48 {dimension_numbers = #tpu.dot_dimension_numbers<[1], [0], [0], [1], [0, 0, 1, 1], [], []>} : vector<8x8xf32>, vector<8x8xf32>, vector<8x8xf32> -> vector<8x8xf32>
    %c0_49 = arith.constant 0 : index
    %c24 = arith.constant 24 : index
    %94 = vector.load %arg33[%c0_49, %c24] : memref<8x32xf32, #tpu.memory_space<vmem>>, vector<8x8xf32>
    tpu.vector_store %arg33[%c0_49, %c24], %93 {strides = array<i32>} : memref<8x32xf32, #tpu.memory_space<vmem>>, vector<8x8xf32>,
    %c0_50 = arith.constant 0 : index
    %c0_51 = arith.constant 0 : index
    %95 = vector.load %arg33[%c0_50, %c0_51] : memref<8x32xf32, #tpu.memory_space<vmem>>, vector<8x32xf32>
    %c0_52 = arith.constant 0 : index
    %c0_53 = arith.constant 0 : index
    %96 = vector.load %arg11[%c0_52, %c0_53] : memref<32x32xf32, #tpu.memory_space<vmem>>, vector<32x32xf32>
    %cst_54 = arith.constant dense<0.000000e+00> : vector<8x32xf32>
    %97 = tpu.matmul %95, %96, %cst_54 {dimension_numbers = #tpu.dot_dimension_numbers<[1], [0], [0], [1], [0, 0, 1, 1], [], []>} : vector<8x32xf32>, vector<32x32xf32>, vector<8x32xf32> -> vector<8x32xf32>
    %c0_55 = arith.constant 0 : index
    %c0_56 = arith.constant 0 : index
    %98 = vector.load %arg12[%c0_55, %c0_56] : memref<1x32xf32, #tpu.memory_space<vmem>>, vector<1x32xf32>
    %99 = vector.broadcast %98 : vector<1x32xf32> to vector<8x32xf32>
    %100 = arith.addf %97, %99 : vector<8x32xf32>
    %101 = arith.addf %1, %100 : vector<8x32xf32>
    %cst_57 = arith.constant dense<0.000000e+00> : vector<8xf32>
    %102 = vector.multi_reduction <add>, %101, %cst_57 [1] : vector<8x32xf32> to vector<8xf32>
    %103 = vector.shape_cast %102 : vector<8xf32> to vector<8x1xf32>
    %cst_58 = arith.constant 3.200000e+01 : f32
    %104 = vector.broadcast %cst_58 : f32 to vector<8x1xf32>
    %105 = arith.divf %103, %104 : vector<8x1xf32>
    %106 = vector.broadcast %105 : vector<8x1xf32> to vector<8x32xf32>
    %107 = arith.subf %101, %106 : vector<8x32xf32>
    %108 = arith.mulf %107, %107 : vector<8x32xf32>
    %cst_59 = arith.constant dense<0.000000e+00> : vector<8xf32>
    %109 = vector.multi_reduction <add>, %108, %cst_59 [1] : vector<8x32xf32> to vector<8xf32>
    %110 = vector.shape_cast %109 : vector<8xf32> to vector<8x1xf32>
    %cst_60 = arith.constant 3.200000e+01 : f32
    %111 = vector.broadcast %cst_60 : f32 to vector<8x1xf32>
    %112 = arith.divf %110, %111 : vector<8x1xf32>
    %113 = vector.broadcast %105 : vector<8x1xf32> to vector<8x32xf32>
    %114 = arith.subf %101, %113 : vector<8x32xf32>
    %cst_61 = arith.constant 9.99999974E-6 : f32
    %115 = vector.broadcast %cst_61 : f32 to vector<8x1xf32>
    %116 = arith.addf %112, %115 : vector<8x1xf32>
    %117 = math.rsqrt %116 : vector<8x1xf32>
    %118 = vector.broadcast %117 : vector<8x1xf32> to vector<8x32xf32>
    %119 = arith.mulf %114, %118 : vector<8x32xf32>
    %c0_62 = arith.constant 0 : index
    %c0_63 = arith.constant 0 : index
    %120 = vector.load %arg25[%c0_62, %c0_63] : memref<1x32xf32, #tpu.memory_space<vmem>>, vector<1x32xf32>
    %121 = vector.broadcast %120 : vector<1x32xf32> to vector<8x32xf32>
    %122 = arith.mulf %119, %121 : vector<8x32xf32>
    %c0_64 = arith.constant 0 : index
    %c0_65 = arith.constant 0 : index
    %123 = vector.load %arg26[%c0_64, %c0_65] : memref<1x32xf32, #tpu.memory_space<vmem>>, vector<1x32xf32>
    %124 = vector.broadcast %123 : vector<1x32xf32> to vector<8x32xf32>
    %125 = arith.addf %122, %124 : vector<8x32xf32>
    %c0_66 = arith.constant 0 : index
    %c0_67 = arith.constant 0 : index
    %126 = vector.load %arg13[%c0_66, %c0_67] : memref<32x32xf32, #tpu.memory_space<vmem>>, vector<32x32xf32>
    %cst_68 = arith.constant dense<0.000000e+00> : vector<8x32xf32>
    %127 = tpu.matmul %125, %126, %cst_68 {dimension_numbers = #tpu.dot_dimension_numbers<[1], [0], [0], [1], [0, 0, 1, 1], [], []>} : vector<8x32xf32>, vector<32x32xf32>, vector<8x32xf32> -> vector<8x32xf32>
    %c0_69 = arith.constant 0 : index
    %c0_70 = arith.constant 0 : index
    %128 = vector.load %arg14[%c0_69, %c0_70] : memref<1x32xf32, #tpu.memory_space<vmem>>, vector<1x32xf32>
    %129 = vector.broadcast %128 : vector<1x32xf32> to vector<8x32xf32>
    %130 = arith.addf %127, %129 : vector<8x32xf32>
    %c0_71 = arith.constant 0 : index
    %c0_72 = arith.constant 0 : index
    %131 = vector.load %arg15[%c0_71, %c0_72] : memref<32x32xf32, #tpu.memory_space<vmem>>, vector<32x32xf32>
    %cst_73 = arith.constant dense<0.000000e+00> : vector<8x32xf32>
    %132 = tpu.matmul %3, %131, %cst_73 {dimension_numbers = #tpu.dot_dimension_numbers<[1], [0], [0], [1], [0, 0, 1, 1], [], []>} : vector<8x32xf32>, vector<32x32xf32>, vector<8x32xf32> -> vector<8x32xf32>
    %c0_74 = arith.constant 0 : index
    %c0_75 = arith.constant 0 : index
    %133 = vector.load %arg16[%c0_74, %c0_75] : memref<1x32xf32, #tpu.memory_space<vmem>>, vector<1x32xf32>
    %134 = vector.broadcast %133 : vector<1x32xf32> to vector<8x32xf32>
    %135 = arith.addf %132, %134 : vector<8x32xf32>
    %c0_76 = arith.constant 0 : index
    %c0_77 = arith.constant 0 : index
    %136 = vector.load %arg17[%c0_76, %c0_77] : memref<32x32xf32, #tpu.memory_space<vmem>>, vector<32x32xf32>
    %cst_78 = arith.constant dense<0.000000e+00> : vector<8x32xf32>
    %137 = tpu.matmul %3, %136, %cst_78 {dimension_numbers = #tpu.dot_dimension_numbers<[1], [0], [0], [1], [0, 0, 1, 1], [], []>} : vector<8x32xf32>, vector<32x32xf32>, vector<8x32xf32> -> vector<8x32xf32>
    %c0_79 = arith.constant 0 : index
    %c0_80 = arith.constant 0 : index
    %138 = vector.load %arg18[%c0_79, %c0_80] : memref<1x32xf32, #tpu.memory_space<vmem>>, vector<1x32xf32>
    %139 = vector.broadcast %138 : vector<1x32xf32> to vector<8x32xf32>
    %140 = arith.addf %137, %139 : vector<8x32xf32>
    %141 = vector.extract_strided_slice %130 {offsets = [0, 0], sizes = [8, 8], strides = [1, 1]} : vector<8x32xf32> to vector<8x8xf32>
    %142 = vector.extract_strided_slice %135 {offsets = [0, 0], sizes = [8, 8], strides = [1, 1]} : vector<8x32xf32> to vector<8x8xf32>
    %143 = vector.extract_strided_slice %140 {offsets = [0, 0], sizes = [8, 8], strides = [1, 1]} : vector<8x32xf32> to vector<8x8xf32>
    %cst_81 = arith.constant dense<0.000000e+00> : vector<8x8xf32>
    %144 = tpu.matmul %141, %142, %cst_81 {dimension_numbers = #tpu.dot_dimension_numbers<[1], [1], [0], [0], [0, 0, 1, 0], [], []>} : vector<8x8xf32>, vector<8x8xf32>, vector<8x8xf32> -> vector<8x8xf32>
    %cst_82 = arith.constant 0.353553385 : f32
    %145 = vector.broadcast %cst_82 : f32 to vector<8x8xf32>
    %146 = arith.mulf %144, %145 : vector<8x8xf32>
    %147 = vector.broadcast %7 : vector<1x8xf32> to vector<8x8xf32>
    %148 = arith.addf %146, %147 : vector<8x8xf32>
    %cst_83 = arith.constant dense<0xFF800000> : vector<8xf32>
    %149 = vector.multi_reduction <maximumf>, %148, %cst_83 [1] : vector<8x8xf32> to vector<8xf32>
    %150 = vector.shape_cast %149 : vector<8xf32> to vector<8x1xf32>
    %151 = vector.broadcast %150 : vector<8x1xf32> to vector<8x8xf32>
    %152 = arith.subf %148, %151 : vector<8x8xf32>
    %153 = math.exp %152 : vector<8x8xf32>
    %cst_84 = arith.constant dense<0.000000e+00> : vector<8xf32>
    %154 = vector.multi_reduction <add>, %153, %cst_84 [1] : vector<8x8xf32> to vector<8xf32>
    %155 = vector.shape_cast %154 : vector<8xf32> to vector<8x1xf32>
    %156 = vector.broadcast %155 : vector<8x1xf32> to vector<8x8xf32>
    %157 = arith.divf %153, %156 : vector<8x8xf32>
    %cst_85 = arith.constant dense<0.000000e+00> : vector<8x8xf32>
    %158 = tpu.matmul %157, %143, %cst_85 {dimension_numbers = #tpu.dot_dimension_numbers<[1], [0], [0], [1], [0, 0, 1, 1], [], []>} : vector<8x8xf32>, vector<8x8xf32>, vector<8x8xf32> -> vector<8x8xf32>
    %c0_86 = arith.constant 0 : index
    %c0_87 = arith.constant 0 : index
    %159 = vector.load %arg33[%c0_86, %c0_87] : memref<8x32xf32, #tpu.memory_space<vmem>>, vector<8x8xf32>
    tpu.vector_store %arg33[%c0_86, %c0_87], %158 {strides = array<i32>} : memref<8x32xf32, #tpu.memory_space<vmem>>, vector<8x8xf32>,
    %c0_88 = arith.constant 0 : index
    %c0_89 = arith.constant 0 : index
    %c0_90 = arith.constant 0 : index
    %c0_91 = arith.constant 0 : index
    %160 = vector.load %arg32[%c0_88, %c0_89, %c0_90, %c0_91] : memref<1x4x8x8xf32, #tpu.memory_space<vmem>>, vector<1x1x8x8xf32>
    %161 = vector.shape_cast %160 : vector<1x1x8x8xf32> to vector<8x8xf32>
    %162 = vector.shape_cast %157 : vector<8x8xf32> to vector<1x1x8x8xf32>
    tpu.vector_store %arg32[%c0_88, %c0_89, %c0_90, %c0_91], %162 {strides = array<i32>} : memref<1x4x8x8xf32, #tpu.memory_space<vmem>>, vector<1x1x8x8xf32>,
    %163 = vector.extract_strided_slice %130 {offsets = [0, 8], sizes = [8, 8], strides = [1, 1]} : vector<8x32xf32> to vector<8x8xf32>
    %164 = vector.extract_strided_slice %135 {offsets = [0, 8], sizes = [8, 8], strides = [1, 1]} : vector<8x32xf32> to vector<8x8xf32>
    %165 = vector.extract_strided_slice %140 {offsets = [0, 8], sizes = [8, 8], strides = [1, 1]} : vector<8x32xf32> to vector<8x8xf32>
    %cst_92 = arith.constant dense<0.000000e+00> : vector<8x8xf32>
    %166 = tpu.matmul %163, %164, %cst_92 {dimension_numbers = #tpu.dot_dimension_numbers<[1], [1], [0], [0], [0, 0, 1, 0], [], []>} : vector<8x8xf32>, vector<8x8xf32>, vector<8x8xf32> -> vector<8x8xf32>
    %cst_93 = arith.constant 0.353553385 : f32
    %167 = vector.broadcast %cst_93 : f32 to vector<8x8xf32>
    %168 = arith.mulf %166, %167 : vector<8x8xf32>
    %169 = vector.broadcast %7 : vector<1x8xf32> to vector<8x8xf32>
    %170 = arith.addf %168, %169 : vector<8x8xf32>
    %cst_94 = arith.constant dense<0xFF800000> : vector<8xf32>
    %171 = vector.multi_reduction <maximumf>, %170, %cst_94 [1] : vector<8x8xf32> to vector<8xf32>
    %172 = vector.shape_cast %171 : vector<8xf32> to vector<8x1xf32>
    %173 = vector.broadcast %172 : vector<8x1xf32> to vector<8x8xf32>
    %174 = arith.subf %170, %173 : vector<8x8xf32>
    %175 = math.exp %174 : vector<8x8xf32>
    %cst_95 = arith.constant dense<0.000000e+00> : vector<8xf32>
    %176 = vector.multi_reduction <add>, %175, %cst_95 [1] : vector<8x8xf32> to vector<8xf32>
    %177 = vector.shape_cast %176 : vector<8xf32> to vector<8x1xf32>
    %178 = vector.broadcast %177 : vector<8x1xf32> to vector<8x8xf32>
    %179 = arith.divf %175, %178 : vector<8x8xf32>
    %cst_96 = arith.constant dense<0.000000e+00> : vector<8x8xf32>
    %180 = tpu.matmul %179, %165, %cst_96 {dimension_numbers = #tpu.dot_dimension_numbers<[1], [0], [0], [1], [0, 0, 1, 1], [], []>} : vector<8x8xf32>, vector<8x8xf32>, vector<8x8xf32> -> vector<8x8xf32>
    %c0_97 = arith.constant 0 : index
    %c8_98 = arith.constant 8 : index
    %181 = vector.load %arg33[%c0_97, %c8_98] : memref<8x32xf32, #tpu.memory_space<vmem>>, vector<8x8xf32>
    tpu.vector_store %arg33[%c0_97, %c8_98], %180 {strides = array<i32>} : memref<8x32xf32, #tpu.memory_space<vmem>>, vector<8x8xf32>,
    %c0_99 = arith.constant 0 : index
    %c1 = arith.constant 1 : index
    %c0_100 = arith.constant 0 : index
    %c0_101 = arith.constant 0 : index
    %182 = vector.load %arg32[%c0_99, %c1, %c0_100, %c0_101] : memref<1x4x8x8xf32, #tpu.memory_space<vmem>>, vector<1x1x8x8xf32>
    %183 = vector.shape_cast %182 : vector<1x1x8x8xf32> to vector<8x8xf32>
    %184 = vector.shape_cast %179 : vector<8x8xf32> to vector<1x1x8x8xf32>
    tpu.vector_store %arg32[%c0_99, %c1, %c0_100, %c0_101], %184 {strides = array<i32>} : memref<1x4x8x8xf32, #tpu.memory_space<vmem>>, vector<1x1x8x8xf32>,
    %185 = vector.extract_strided_slice %130 {offsets = [0, 16], sizes = [8, 8], strides = [1, 1]} : vector<8x32xf32> to vector<8x8xf32>
    %186 = vector.extract_strided_slice %135 {offsets = [0, 16], sizes = [8, 8], strides = [1, 1]} : vector<8x32xf32> to vector<8x8xf32>
    %187 = vector.extract_strided_slice %140 {offsets = [0, 16], sizes = [8, 8], strides = [1, 1]} : vector<8x32xf32> to vector<8x8xf32>
    %cst_102 = arith.constant dense<0.000000e+00> : vector<8x8xf32>
    %188 = tpu.matmul %185, %186, %cst_102 {dimension_numbers = #tpu.dot_dimension_numbers<[1], [1], [0], [0], [0, 0, 1, 0], [], []>} : vector<8x8xf32>, vector<8x8xf32>, vector<8x8xf32> -> vector<8x8xf32>
    %cst_103 = arith.constant 0.353553385 : f32
    %189 = vector.broadcast %cst_103 : f32 to vector<8x8xf32>
    %190 = arith.mulf %188, %189 : vector<8x8xf32>
    %191 = vector.broadcast %7 : vector<1x8xf32> to vector<8x8xf32>
    %192 = arith.addf %190, %191 : vector<8x8xf32>
    %cst_104 = arith.constant dense<0xFF800000> : vector<8xf32>
    %193 = vector.multi_reduction <maximumf>, %192, %cst_104 [1] : vector<8x8xf32> to vector<8xf32>
    %194 = vector.shape_cast %193 : vector<8xf32> to vector<8x1xf32>
    %195 = vector.broadcast %194 : vector<8x1xf32> to vector<8x8xf32>
    %196 = arith.subf %192, %195 : vector<8x8xf32>
    %197 = math.exp %196 : vector<8x8xf32>
    %cst_105 = arith.constant dense<0.000000e+00> : vector<8xf32>
    %198 = vector.multi_reduction <add>, %197, %cst_105 [1] : vector<8x8xf32> to vector<8xf32>
    %199 = vector.shape_cast %198 : vector<8xf32> to vector<8x1xf32>
    %200 = vector.broadcast %199 : vector<8x1xf32> to vector<8x8xf32>
    %201 = arith.divf %197, %200 : vector<8x8xf32>
    %cst_106 = arith.constant dense<0.000000e+00> : vector<8x8xf32>
    %202 = tpu.matmul %201, %187, %cst_106 {dimension_numbers = #tpu.dot_dimension_numbers<[1], [0], [0], [1], [0, 0, 1, 1], [], []>} : vector<8x8xf32>, vector<8x8xf32>, vector<8x8xf32> -> vector<8x8xf32>
    %c0_107 = arith.constant 0 : index
    %c16_108 = arith.constant 16 : index
    %203 = vector.load %arg33[%c0_107, %c16_108] : memref<8x32xf32, #tpu.memory_space<vmem>>, vector<8x8xf32>
    tpu.vector_store %arg33[%c0_107, %c16_108], %202 {strides = array<i32>} : memref<8x32xf32, #tpu.memory_space<vmem>>, vector<8x8xf32>,
    %c0_109 = arith.constant 0 : index
    %c2 = arith.constant 2 : index
    %c0_110 = arith.constant 0 : index
    %c0_111 = arith.constant 0 : index
    %204 = vector.load %arg32[%c0_109, %c2, %c0_110, %c0_111] : memref<1x4x8x8xf32, #tpu.memory_space<vmem>>, vector<1x1x8x8xf32>
    %205 = vector.shape_cast %204 : vector<1x1x8x8xf32> to vector<8x8xf32>
    %206 = vector.shape_cast %201 : vector<8x8xf32> to vector<1x1x8x8xf32>
    tpu.vector_store %arg32[%c0_109, %c2, %c0_110, %c0_111], %206 {strides = array<i32>} : memref<1x4x8x8xf32, #tpu.memory_space<vmem>>, vector<1x1x8x8xf32>,
    %207 = vector.extract_strided_slice %130 {offsets = [0, 24], sizes = [8, 8], strides = [1, 1]} : vector<8x32xf32> to vector<8x8xf32>
    %208 = vector.extract_strided_slice %135 {offsets = [0, 24], sizes = [8, 8], strides = [1, 1]} : vector<8x32xf32> to vector<8x8xf32>
    %209 = vector.extract_strided_slice %140 {offsets = [0, 24], sizes = [8, 8], strides = [1, 1]} : vector<8x32xf32> to vector<8x8xf32>
    %cst_112 = arith.constant dense<0.000000e+00> : vector<8x8xf32>
    %210 = tpu.matmul %207, %208, %cst_112 {dimension_numbers = #tpu.dot_dimension_numbers<[1], [1], [0], [0], [0, 0, 1, 0], [], []>} : vector<8x8xf32>, vector<8x8xf32>, vector<8x8xf32> -> vector<8x8xf32>
    %cst_113 = arith.constant 0.353553385 : f32
    %211 = vector.broadcast %cst_113 : f32 to vector<8x8xf32>
    %212 = arith.mulf %210, %211 : vector<8x8xf32>
    %213 = vector.broadcast %7 : vector<1x8xf32> to vector<8x8xf32>
    %214 = arith.addf %212, %213 : vector<8x8xf32>
    %cst_114 = arith.constant dense<0xFF800000> : vector<8xf32>
    %215 = vector.multi_reduction <maximumf>, %214, %cst_114 [1] : vector<8x8xf32> to vector<8xf32>
    %216 = vector.shape_cast %215 : vector<8xf32> to vector<8x1xf32>
    %217 = vector.broadcast %216 : vector<8x1xf32> to vector<8x8xf32>
    %218 = arith.subf %214, %217 : vector<8x8xf32>
    %219 = math.exp %218 : vector<8x8xf32>
    %cst_115 = arith.constant dense<0.000000e+00> : vector<8xf32>
    %220 = vector.multi_reduction <add>, %219, %cst_115 [1] : vector<8x8xf32> to vector<8xf32>
    %221 = vector.shape_cast %220 : vector<8xf32> to vector<8x1xf32>
    %222 = vector.broadcast %221 : vector<8x1xf32> to vector<8x8xf32>
    %223 = arith.divf %219, %222 : vector<8x8xf32>
    %cst_116 = arith.constant dense<0.000000e+00> : vector<8x8xf32>
    %224 = tpu.matmul %223, %209, %cst_116 {dimension_numbers = #tpu.dot_dimension_numbers<[1], [0], [0], [1], [0, 0, 1, 1], [], []>} : vector<8x8xf32>, vector<8x8xf32>, vector<8x8xf32> -> vector<8x8xf32>
    %c0_117 = arith.constant 0 : index
    %c24_118 = arith.constant 24 : index
    %225 = vector.load %arg33[%c0_117, %c24_118] : memref<8x32xf32, #tpu.memory_space<vmem>>, vector<8x8xf32>
    tpu.vector_store %arg33[%c0_117, %c24_118], %224 {strides = array<i32>} : memref<8x32xf32, #tpu.memory_space<vmem>>, vector<8x8xf32>,
    %c0_119 = arith.constant 0 : index
    %c3 = arith.constant 3 : index
    %c0_120 = arith.constant 0 : index
    %c0_121 = arith.constant 0 : index
    %226 = vector.load %arg32[%c0_119, %c3, %c0_120, %c0_121] : memref<1x4x8x8xf32, #tpu.memory_space<vmem>>, vector<1x1x8x8xf32>
    %227 = vector.shape_cast %226 : vector<1x1x8x8xf32> to vector<8x8xf32>
    %228 = vector.shape_cast %223 : vector<8x8xf32> to vector<1x1x8x8xf32>
    tpu.vector_store %arg32[%c0_119, %c3, %c0_120, %c0_121], %228 {strides = array<i32>} : memref<1x4x8x8xf32, #tpu.memory_space<vmem>>, vector<1x1x8x8xf32>,
    %c0_122 = arith.constant 0 : index
    %c0_123 = arith.constant 0 : index
    %229 = vector.load %arg33[%c0_122, %c0_123] : memref<8x32xf32, #tpu.memory_space<vmem>>, vector<8x32xf32>
    %c0_124 = arith.constant 0 : index
    %c0_125 = arith.constant 0 : index
    %230 = vector.load %arg19[%c0_124, %c0_125] : memref<32x32xf32, #tpu.memory_space<vmem>>, vector<32x32xf32>
    %cst_126 = arith.constant dense<0.000000e+00> : vector<8x32xf32>
    %231 = tpu.matmul %229, %230, %cst_126 {dimension_numbers = #tpu.dot_dimension_numbers<[1], [0], [0], [1], [0, 0, 1, 1], [], []>} : vector<8x32xf32>, vector<32x32xf32>, vector<8x32xf32> -> vector<8x32xf32>
    %c0_127 = arith.constant 0 : index
    %c0_128 = arith.constant 0 : index
    %232 = vector.load %arg20[%c0_127, %c0_128] : memref<1x32xf32, #tpu.memory_space<vmem>>, vector<1x32xf32>
    %233 = vector.broadcast %232 : vector<1x32xf32> to vector<8x32xf32>
    %234 = arith.addf %231, %233 : vector<8x32xf32>
    %235 = arith.addf %125, %234 : vector<8x32xf32>
    %cst_129 = arith.constant dense<0.000000e+00> : vector<8xf32>
    %236 = vector.multi_reduction <add>, %235, %cst_129 [1] : vector<8x32xf32> to vector<8xf32>
    %237 = vector.shape_cast %236 : vector<8xf32> to vector<8x1xf32>
    %cst_130 = arith.constant 3.200000e+01 : f32
    %238 = vector.broadcast %cst_130 : f32 to vector<8x1xf32>
    %239 = arith.divf %237, %238 : vector<8x1xf32>
    %240 = vector.broadcast %239 : vector<8x1xf32> to vector<8x32xf32>
    %241 = arith.subf %235, %240 : vector<8x32xf32>
    %242 = arith.mulf %241, %241 : vector<8x32xf32>
    %cst_131 = arith.constant dense<0.000000e+00> : vector<8xf32>
    %243 = vector.multi_reduction <add>, %242, %cst_131 [1] : vector<8x32xf32> to vector<8xf32>
    %244 = vector.shape_cast %243 : vector<8xf32> to vector<8x1xf32>
    %cst_132 = arith.constant 3.200000e+01 : f32
    %245 = vector.broadcast %cst_132 : f32 to vector<8x1xf32>
    %246 = arith.divf %244, %245 : vector<8x1xf32>
    %247 = vector.broadcast %239 : vector<8x1xf32> to vector<8x32xf32>
    %248 = arith.subf %235, %247 : vector<8x32xf32>
    %cst_133 = arith.constant 9.99999974E-6 : f32
    %249 = vector.broadcast %cst_133 : f32 to vector<8x1xf32>
    %250 = arith.addf %246, %249 : vector<8x1xf32>
    %251 = math.rsqrt %250 : vector<8x1xf32>
    %252 = vector.broadcast %251 : vector<8x1xf32> to vector<8x32xf32>
    %253 = arith.mulf %248, %252 : vector<8x32xf32>
    %c0_134 = arith.constant 0 : index
    %c0_135 = arith.constant 0 : index
    %254 = vector.load %arg27[%c0_134, %c0_135] : memref<1x32xf32, #tpu.memory_space<vmem>>, vector<1x32xf32>
    %255 = vector.broadcast %254 : vector<1x32xf32> to vector<8x32xf32>
    %256 = arith.mulf %253, %255 : vector<8x32xf32>
    %c0_136 = arith.constant 0 : index
    %c0_137 = arith.constant 0 : index
    %257 = vector.load %arg28[%c0_136, %c0_137] : memref<1x32xf32, #tpu.memory_space<vmem>>, vector<1x32xf32>
    %258 = vector.broadcast %257 : vector<1x32xf32> to vector<8x32xf32>
    %259 = arith.addf %256, %258 : vector<8x32xf32>
    %c0_138 = arith.constant 0 : index
    %c0_139 = arith.constant 0 : index
    %260 = vector.load %arg21[%c0_138, %c0_139] : memref<32x64xf32, #tpu.memory_space<vmem>>, vector<32x64xf32>
    %cst_140 = arith.constant dense<0.000000e+00> : vector<8x64xf32>
    %261 = tpu.matmul %259, %260, %cst_140 {dimension_numbers = #tpu.dot_dimension_numbers<[1], [0], [0], [1], [0, 0, 1, 1], [], []>} : vector<8x32xf32>, vector<32x64xf32>, vector<8x64xf32> -> vector<8x64xf32>
    %c0_141 = arith.constant 0 : index
    %c0_142 = arith.constant 0 : index
    %262 = vector.load %arg22[%c0_141, %c0_142] : memref<1x64xf32, #tpu.memory_space<vmem>>, vector<1x64xf32>
    %263 = vector.broadcast %262 : vector<1x64xf32> to vector<8x64xf32>
    %264 = arith.addf %261, %263 : vector<8x64xf32>
    %cst_143 = arith.constant 0.000000e+00 : f32
    %265 = vector.broadcast %cst_143 : f32 to vector<8x64xf32>
    %266 = arith.maximumf %264, %265 : vector<8x64xf32>
    %c0_144 = arith.constant 0 : index
    %c0_145 = arith.constant 0 : index
    %267 = vector.load %arg23[%c0_144, %c0_145] : memref<64x32xf32, #tpu.memory_space<vmem>>, vector<64x32xf32>
    %cst_146 = arith.constant dense<0.000000e+00> : vector<8x32xf32>
    %268 = tpu.matmul %266, %267, %cst_146 {dimension_numbers = #tpu.dot_dimension_numbers<[1], [0], [0], [1], [0, 0, 1, 1], [], []>} : vector<8x64xf32>, vector<64x32xf32>, vector<8x32xf32> -> vector<8x32xf32>
    %c0_147 = arith.constant 0 : index
    %c0_148 = arith.constant 0 : index
    %269 = vector.load %arg24[%c0_147, %c0_148] : memref<1x32xf32, #tpu.memory_space<vmem>>, vector<1x32xf32>
    %270 = vector.broadcast %269 : vector<1x32xf32> to vector<8x32xf32>
    %271 = arith.addf %268, %270 : vector<8x32xf32>
    %272 = arith.addf %259, %271 : vector<8x32xf32>
    %cst_149 = arith.constant dense<0.000000e+00> : vector<8xf32>
    %273 = vector.multi_reduction <add>, %272, %cst_149 [1] : vector<8x32xf32> to vector<8xf32>
    %274 = vector.shape_cast %273 : vector<8xf32> to vector<8x1xf32>
    %cst_150 = arith.constant 3.200000e+01 : f32
    %275 = vector.broadcast %cst_150 : f32 to vector<8x1xf32>
    %276 = arith.divf %274, %275 : vector<8x1xf32>
    %277 = vector.broadcast %276 : vector<8x1xf32> to vector<8x32xf32>
    %278 = arith.subf %272, %277 : vector<8x32xf32>
    %279 = arith.mulf %278, %278 : vector<8x32xf32>
    %cst_151 = arith.constant dense<0.000000e+00> : vector<8xf32>
    %280 = vector.multi_reduction <add>, %279, %cst_151 [1] : vector<8x32xf32> to vector<8xf32>
    %281 = vector.shape_cast %280 : vector<8xf32> to vector<8x1xf32>
    %cst_152 = arith.constant 3.200000e+01 : f32
    %282 = vector.broadcast %cst_152 : f32 to vector<8x1xf32>
    %283 = arith.divf %281, %282 : vector<8x1xf32>
    %284 = vector.broadcast %276 : vector<8x1xf32> to vector<8x32xf32>
    %285 = arith.subf %272, %284 : vector<8x32xf32>
    %cst_153 = arith.constant 9.99999974E-6 : f32
    %286 = vector.broadcast %cst_153 : f32 to vector<8x1xf32>
    %287 = arith.addf %283, %286 : vector<8x1xf32>
    %288 = math.rsqrt %287 : vector<8x1xf32>
    %289 = vector.broadcast %288 : vector<8x1xf32> to vector<8x32xf32>
    %290 = arith.mulf %285, %289 : vector<8x32xf32>
    %c0_154 = arith.constant 0 : index
    %c0_155 = arith.constant 0 : index
    %291 = vector.load %arg29[%c0_154, %c0_155] : memref<1x32xf32, #tpu.memory_space<vmem>>, vector<1x32xf32>
    %292 = vector.broadcast %291 : vector<1x32xf32> to vector<8x32xf32>
    %293 = arith.mulf %290, %292 : vector<8x32xf32>
    %c0_156 = arith.constant 0 : index
    %c0_157 = arith.constant 0 : index
    %294 = vector.load %arg30[%c0_156, %c0_157] : memref<1x32xf32, #tpu.memory_space<vmem>>, vector<1x32xf32>
    %295 = vector.broadcast %294 : vector<1x32xf32> to vector<8x32xf32>
    %296 = arith.addf %293, %295 : vector<8x32xf32>
    %c0_158 = arith.constant 0 : index
    %c0_159 = arith.constant 0 : index
    %c0_160 = arith.constant 0 : index
    %297 = vector.load %arg31[%c0_158, %c0_159, %c0_160] : memref<1x8x32xf32, #tpu.memory_space<vmem>>, vector<1x8x32xf32>
    %298 = vector.shape_cast %297 : vector<1x8x32xf32> to vector<8x32xf32>
    %299 = vector.shape_cast %296 : vector<8x32xf32> to vector<1x8x32xf32>
    tpu.vector_store %arg31[%c0_158, %c0_159, %c0_160], %299 {strides = array<i32>} : memref<1x8x32xf32, #tpu.memory_space<vmem>>, vector<1x8x32xf32>,
    return
  }
  func.func @transform_0(%arg0: i32) -> (i32, i32, i32) {
    %c0_i32 = arith.constant 0 : i32
    %c0_i32_0 = arith.constant 0 : i32
    %c0_i32_1 = arith.constant 0 : i32
    return %arg0, %c0_i32, %c0_i32_0 : i32, i32, i32
  }
  func.func @transform_1(%arg0: i32) -> (i32, i32, i32) {
    %c0_i32 = arith.constant 0 : i32
    %c0_i32_0 = arith.constant 0 : i32
    %c0_i32_1 = arith.constant 0 : i32
    return %arg0, %c0_i32, %c0_i32_0 : i32, i32, i32
  }
  func.func @transform_2(%arg0: i32) -> (i32, i32, i32) {
    %c0_i32 = arith.constant 0 : i32
    %c0_i32_0 = arith.constant 0 : i32
    %c0_i32_1 = arith.constant 0 : i32
    return %arg0, %c0_i32, %c0_i32_0 : i32, i32, i32
  }
  func.func @transform_3(%arg0: i32) -> (i32, i32, i32) {
    %c0_i32 = arith.constant 0 : i32
    %c0_i32_0 = arith.constant 0 : i32
    %c0_i32_1 = arith.constant 0 : i32
    return %arg0, %c0_i32, %c0_i32_0 : i32, i32, i32
  }
  func.func @transform_4(%arg0: i32) -> (i32, i32) {
    %c0_i32 = arith.constant 0 : i32
    %c0_i32_0 = arith.constant 0 : i32
    %c0_i32_1 = arith.constant 0 : i32
    return %c0_i32, %c0_i32_0 : i32, i32
  }
  func.func @transform_5(%arg0: i32) -> (i32, i32) {
    %c0_i32 = arith.constant 0 : i32
    %c0_i32_0 = arith.constant 0 : i32
    %c0_i32_1 = arith.constant 0 : i32
    return %c0_i32, %c0_i32_0 : i32, i32
  }
  func.func @transform_6(%arg0: i32) -> (i32, i32) {
    %c0_i32 = arith.constant 0 : i32
    %c0_i32_0 = arith.constant 0 : i32
    %c0_i32_1 = arith.constant 0 : i32
    return %c0_i32, %c0_i32_0 : i32, i32
  }
  func.func @transform_7(%arg0: i32) -> (i32, i32) {
    %c0_i32 = arith.constant 0 : i32
    %c0_i32_0 = arith.constant 0 : i32
    %c0_i32_1 = arith.constant 0 : i32
    return %c0_i32, %c0_i32_0 : i32, i32
  }
  func.func @transform_8(%arg0: i32) -> (i32, i32) {
    %c0_i32 = arith.constant 0 : i32
    %c0_i32_0 = arith.constant 0 : i32
    %c0_i32_1 = arith.constant 0 : i32
    return %c0_i32, %c0_i32_0 : i32, i32
  }
  func.func @transform_9(%arg0: i32) -> (i32, i32) {
    %c0_i32 = arith.constant 0 : i32
    %c0_i32_0 = arith.constant 0 : i32
    %c0_i32_1 = arith.constant 0 : i32
    return %c0_i32, %c0_i32_0 : i32, i32
  }
  func.func @transform_10(%arg0: i32) -> (i32, i32) {
    %c0_i32 = arith.constant 0 : i32
    %c0_i32_0 = arith.constant 0 : i32
    %c0_i32_1 = arith.constant 0 : i32
    return %c0_i32, %c0_i32_0 : i32, i32
  }
  func.func @transform_11(%arg0: i32) -> (i32, i32) {
    %c0_i32 = arith.constant 0 : i32
    %c0_i32_0 = arith.constant 0 : i32
    %c0_i32_1 = arith.constant 0 : i32
    return %c0_i32, %c0_i32_0 : i32, i32
  }
  func.func @transform_12(%arg0: i32) -> (i32, i32) {
    %c0_i32 = arith.constant 0 : i32
    %c0_i32_0 = arith.constant 0 : i32
    %c0_i32_1 = arith.constant 0 : i32
    return %c0_i32, %c0_i32_0 : i32, i32
  }
  func.func @transform_13(%arg0: i32) -> (i32, i32) {
    %c0_i32 = arith.constant 0 : i32
    %c0_i32_0 = arith.constant 0 : i32
    %c0_i32_1 = arith.constant 0 : i32
    return %c0_i32, %c0_i32_0 : i32, i32
  }
  func.func @transform_14(%arg0: i32) -> (i32, i32) {
    %c0_i32 = arith.constant 0 : i32
    %c0_i32_0 = arith.constant 0 : i32
    %c0_i32_1 = arith.constant 0 : i32
    return %c0_i32, %c0_i32_0 : i32, i32
  }
  func.func @transform_15(%arg0: i32) -> (i32, i32) {
    %c0_i32 = arith.constant 0 : i32
    %c0_i32_0 = arith.constant 0 : i32
    %c0_i32_1 = arith.constant 0 : i32
    return %c0_i32, %c0_i32_0 : i32, i32
  }
  func.func @transform_16(%arg0: i32) -> (i32, i32) {
    %c0_i32 = arith.constant 0 : i32
    %c0_i32_0 = arith.constant 0 : i32
    %c0_i32_1 = arith.constant 0 : i32
    return %c0_i32, %c0_i32_0 : i32, i32
  }
  func.func @transform_17(%arg0: i32) -> (i32, i32) {
    %c0_i32 = arith.constant 0 : i32
    %c0_i32_0 = arith.constant 0 : i32
    %c0_i32_1 = arith.constant 0 : i32
    return %c0_i32, %c0_i32_0 : i32, i32
  }
  func.func @transform_18(%arg0: i32) -> (i32, i32) {
    %c0_i32 = arith.constant 0 : i32
    %c0_i32_0 = arith.constant 0 : i32
    %c0_i32_1 = arith.constant 0 : i32
    return %c0_i32, %c0_i32_0 : i32, i32
  }
  func.func @transform_19(%arg0: i32) -> (i32, i32) {
    %c0_i32 = arith.constant 0 : i32
    %c0_i32_0 = arith.constant 0 : i32
    %c0_i32_1 = arith.constant 0 : i32
    return %c0_i32, %c0_i32_0 : i32, i32
  }
  func.func @transform_20(%arg0: i32) -> (i32, i32) {
    %c0_i32 = arith.constant 0 : i32
    %c0_i32_0 = arith.constant 0 : i32
    %c0_i32_1 = arith.constant 0 : i32
    return %c0_i32, %c0_i32_0 : i32, i32
  }
  func.func @transform_21(%arg0: i32) -> (i32, i32) {
    %c0_i32 = arith.constant 0 : i32
    %c0_i32_0 = arith.constant 0 : i32
    %c0_i32_1 = arith.constant 0 : i32
    return %c0_i32, %c0_i32_0 : i32, i32
  }
  func.func @transform_22(%arg0: i32) -> (i32, i32) {
    %c0_i32 = arith.constant 0 : i32
    %c0_i32_0 = arith.constant 0 : i32
    %c0_i32_1 = arith.constant 0 : i32
    return %c0_i32, %c0_i32_0 : i32, i32
  }
  func.func @transform_23(%arg0: i32) -> (i32, i32) {
    %c0_i32 = arith.constant 0 : i32
    %c0_i32_0 = arith.constant 0 : i32
    %c0_i32_1 = arith.constant 0 : i32
    return %c0_i32, %c0_i32_0 : i32, i32
  }
  func.func @transform_24(%arg0: i32) -> (i32, i32) {
    %c0_i32 = arith.constant 0 : i32
    %c0_i32_0 = arith.constant 0 : i32
    %c0_i32_1 = arith.constant 0 : i32
    return %c0_i32, %c0_i32_0 : i32, i32
  }
  func.func @transform_25(%arg0: i32) -> (i32, i32) {
    %c0_i32 = arith.constant 0 : i32
    %c0_i32_0 = arith.constant 0 : i32
    %c0_i32_1 = arith.constant 0 : i32
    return %c0_i32, %c0_i32_0 : i32, i32
  }
  func.func @transform_26(%arg0: i32) -> (i32, i32) {
    %c0_i32 = arith.constant 0 : i32
    %c0_i32_0 = arith.constant 0 : i32
    %c0_i32_1 = arith.constant 0 : i32
    return %c0_i32, %c0_i32_0 : i32, i32
  }
  func.func @transform_27(%arg0: i32) -> (i32, i32) {
    %c0_i32 = arith.constant 0 : i32
    %c0_i32_0 = arith.constant 0 : i32
    %c0_i32_1 = arith.constant 0 : i32
    return %c0_i32, %c0_i32_0 : i32, i32
  }
  func.func @transform_28(%arg0: i32) -> (i32, i32) {
    %c0_i32 = arith.constant 0 : i32
    %c0_i32_0 = arith.constant 0 : i32
    %c0_i32_1 = arith.constant 0 : i32
    return %c0_i32, %c0_i32_0 : i32, i32
  }
  func.func @transform_29(%arg0: i32) -> (i32, i32) {
    %c0_i32 = arith.constant 0 : i32
    %c0_i32_0 = arith.constant 0 : i32
    %c0_i32_1 = arith.constant 0 : i32
    return %c0_i32, %c0_i32_0 : i32, i32
  }
  func.func @transform_30(%arg0: i32) -> (i32, i32, i32) {
    %c0_i32 = arith.constant 0 : i32
    %c0_i32_0 = arith.constant 0 : i32
    %c0_i32_1 = arith.constant 0 : i32
    return %arg0, %c0_i32, %c0_i32_0 : i32, i32, i32
  }
  func.func @transform_31(%arg0: i32) -> (i32, i32, i32, i32) {
    %c0_i32 = arith.constant 0 : i32
    %c0_i32_0 = arith.constant 0 : i32
    %c0_i32_1 = arith.constant 0 : i32
    %c0_i32_2 = arith.constant 0 : i32
    return %arg0, %c0_i32, %c0_i32_0, %c0_i32_1 : i32, i32, i32, i32
  }
}

</mosaic_0001>

<llo_original>
// kernel: decoder_forward.5
$region0: #{decoder_forward.5}
  #allocation0 [shape = 'u32[]', space=smem, size = 0x4, offset = 0x4, fixed_abs, tag = 'smem constant byte address 0x4 - core index']
  #allocation1 [shape = 'u32[144,128]{1,0:T(1,128)}', space=vmem, size = 0x12000, scoped, tag = 'internal scratch']
  %s0 = inlined_call_operand.vmem [shape: f32[16,32], index: 0, kind: input, shape index: {}]
  %s1 = inlined_call_operand.vmem [shape: f32[32,128], index: 1, kind: input, shape index: {}]
  %s2 = inlined_call_operand.vmem [shape: f32[1,128], index: 2, kind: input, shape index: {}]
  %s3 = inlined_call_operand.vmem [shape: f32[16,128], index: 3, kind: output, shape index: {}]
  %s4 = sld [smem:[#allocation0]]
  $region22: #{decoder_forward.5} parent=0
    _
  %s6 = ssub.s32 1, %s4
  %s7 = scalar_select 0, %s6, %s4
  // Predicated region
  $region2: #{decoder_forward.5} parent=0 // pred_check
    _
  $region3: #{decoder_forward.5} parent=0 // pred_check_branch
    %9 = sbr.rel (0) target = $region5
  $region4: #{decoder_forward.5} parent=0 // pred_region
    _
  $region5: #{decoder_forward.5} parent=0 // pred_fallthru
    _
  // Predicated region
  $region6: #{decoder_forward.5} parent=0 // pred_check
    _
  $region7: #{decoder_forward.5} parent=0 // pred_check_branch
    %11 = sbr.rel (0) target = $region9
  $region8: #{decoder_forward.5} parent=0 // pred_region
    _
  $region9: #{decoder_forward.5} parent=0 // pred_fallthru
    _
  // Predicated region
  $region10: #{decoder_forward.5} parent=0 // pred_check
    _
  $region11: #{decoder_forward.5} parent=0 // pred_check_branch
    %13 = sbr.rel (0) target = $region13
  $region12: #{decoder_forward.5} parent=0 // pred_region
    _
  $region13: #{decoder_forward.5} parent=0 // pred_fallthru
    _
  %v14 = vld [vmem:[%s0] sm:$0xff]
  %v15 = vld [vmem:[%s0 + $0x8] sm:$0xff]
  %v16 = vld [vmem:[%s1] sm:$0xff]
  %v17 = vld [vmem:[%s1 + $0x8] sm:$0xff]
  %v18 = vld [vmem:[%s1 + $0x10] sm:$0xff]
  %v19 = vld [vmem:[%s1 + $0x18] sm:$0xff]
  %v20 = vld [vmem:[%s2] sm:$0x1]
  %v22 = vlaneseq
  %v23 = vshrl.u32 %v22, 7
  %v24 = vsub.s32 0, %v23
  %v25 = vrot.slane %v20, %v24
  %vm27 = vcmask 261120
  %v29 = vsel %vm27, %v14, 0
  %v32 = vsel %vm27, %v15, 0
  %34 = vmatprep.subr.mxu0 0.0
  %35 = vmatpush1.msra.mxu0 %v16
  %36 = vmatprep.subr.mxu0 0.0
  %37 = vmatpush1.msra.mxu0 %v17
  %38 = vmatprep.subr.mxu0 0.0
  %39 = vmatpush1.msra.mxu0 %v18
  %40 = vmatprep.subr.mxu0 0.0
  %41 = vmatpush1.msra.mxu0 %v19
  %42 = vmatprep.subr.mxu0 0.0
  %43 = vmatpush1.msra.mxu0 0.0
  %44 = vmatprep.subr.mxu0 0.0
  %45 = vmatpush1.msra.mxu0 0.0
  %46 = vmatprep.subr.mxu0 0.0
  %47 = vmatpush1.msra.mxu0 0.0
  %48 = vmatprep.subr.mxu0 0.0
  %49 = vmatpush1.msra.mxu0 0.0
  %50 = vmatprep.subr.mxu0 0.0
  %51 = vmatpush1.msra.mxu0 0.0
  %52 = vmatprep.subr.mxu0 0.0
  %53 = vmatpush1.msra.mxu0 0.0
  %54 = vmatprep.subr.mxu0 0.0
  %55 = vmatpush1.msra.mxu0 0.0
  %56 = vmatprep.subr.mxu0 0.0
  %57 = vmatpush1.msra.mxu0 0.0
  %58 = vmatprep.subr.mxu0 0.0
  %59 = vmatpush1.msra.mxu0 0.0
  %60 = vmatprep.subr.mxu0 0.0
  %61 = vmatpush1.msra.mxu0 0.0
  %62 = vmatprep.subr.mxu0 0.0
  %63 = vmatpush1.msra.mxu0 0.0
  %64 = vmatprep.subr.mxu0 0.0
  %65 = vmatpush1.msra.mxu0 0.0
  %66 = vmatprep.subr.mxu0 0.0
  %67 = vmatpush1.msra.mxu0 0.0
  %68 = vmatprep.subr.mxu0 0.0
  %69 = vmatpush1.msra.mxu0 0.0
  %70 = vmatprep.subr.mxu0 0.0
  %71 = vmatpush1.msra.mxu0 0.0
  %72 = vmatprep.subr.mxu0 0.0
  %73 = vmatpush1.msra.mxu0 0.0
  %74 = vmatprep.subr.mxu0 0.0
  %75 = vmatpush1.msra.mxu0 0.0
  %76 = vmatprep.subr.mxu0 0.0
  %77 = vmatpush1.msra.mxu0 0.0
  %78 = vmatprep.subr.mxu0 0.0
  %79 = vmatpush1.msra.mxu0 0.0
  %80 = vmatprep.subr.mxu0 0.0
  %81 = vmatpush1.msra.mxu0 0.0
  %82 = vmatprep.subr.mxu0 0.0
  %83 = vmatpush1.msra.mxu0 0.0
  %84 = vmatprep.subr.mxu0 0.0
  %85 = vmatpush1.msra.mxu0 0.0
  %86 = vmatprep.subr.mxu0 0.0
  %87 = vmatpush1.msra.mxu0 0.0
  %88 = vmatprep.subr.mxu0 0.0
  %89 = vmatpush1.msra.mxu0 0.0
  %90 = vmatprep.subr.mxu0 0.0
  %91 = vmatpush1.msra.mxu0 0.0
  %92 = vmatprep.subr.mxu0 0.0
  %93 = vmatpush1.msra.mxu0 0.0
  %94 = vmatprep.subr.mxu0 0.0
  %95 = vmatpush1.msra.mxu0 0.0
  %96 = vmatprep.subr.mxu0 0.0
  %97 = vmatpush1.msra.mxu0 0.0
  %98 = vmatprep.mubr.f32.mxu0 0.0
  %99 = vmatmul.mubr.f32.gmra.mrb[0].mxu0 %v29
  %v100 = vpop.f32.mrb[0].mxu0
  %v101 = vadd.f32 %v25, %v100
  %v102 = vpop.f32.mrb[0].mxu0
  %103 = vmatprep.mubr.f32.mxu0 0.0
  %104 = vmatmul.mubr.f32.gmra.mrb[0].mxu0 %v32
  %v105 = vpop.f32.mrb[0].mxu0
  %v106 = vadd.f32 %v25, %v105
  %v107 = vpop.f32.mrb[0].mxu0
  %108 = vdwg.mxu0
  %109 = vst [vmem:[%s3] sm:$0xff] %v101
  %110 = vst [vmem:[%s3 + $0x8] sm:$0xff] %v106
  // Predicated region
  $region14: #{decoder_forward.5} parent=0 // pred_check
    _
  $region15: #{decoder_forward.5} parent=0 // pred_check_branch
    %112 = sbr.rel (0) target = $region17
  $region16: #{decoder_forward.5} parent=0 // pred_region
    _
  $region17: #{decoder_forward.5} parent=0 // pred_fallthru
    _
  // Predicated region
  $region18: #{decoder_forward.5} parent=0 // pred_check
    _
  $region19: #{decoder_forward.5} parent=0 // pred_check_branch
    %114 = sbr.rel (0) target = $region21
  $region20: #{decoder_forward.5} parent=0 // pred_region
    _
  $region21: #{decoder_forward.5} parent=0 // pred_fallthru
    _

// kernel: decoder_forward.3
$region0: #{decoder_forward.3}
  #allocation0 [shape = 'u32[]', space=smem, size = 0x4, offset = 0x4, fixed_abs, tag = 'smem constant byte address 0x4 - core index']
  #allocation1 [shape = 'u32[144,128]{1,0:T(1,128)}', space=vmem, size = 0x12000, scoped, tag = 'internal scratch']
  #allocation2 [shape = 'f32[8,32]{1,0:T(8,128)}', space=vmem, size = 0x1000, scoped, tag = 'scratch operand']
  %s0 = inlined_call_operand.smem [shape: u32[31], index: -1, kind: input, shape index: {}]
  %s1 = sld [smem:[%s0]]
  %s2 = scalar_lea.smem %s0, 1
  %s3 = sld [smem:[%s2]]
  %s4 = scalar_lea.smem %s0, 2
  %s5 = sld [smem:[%s4]]
  %s6 = scalar_lea.smem %s0, 3
  %s7 = sld [smem:[%s6]]
  %s8 = scalar_lea.smem %s0, 4
  %s9 = sld [smem:[%s8]]
  %s10 = scalar_lea.smem %s0, 5
  %s11 = sld [smem:[%s10]]
  %s12 = scalar_lea.smem %s0, 6
  %s13 = sld [smem:[%s12]]
  %s14 = scalar_lea.smem %s0, 7
  %s15 = sld [smem:[%s14]]
  %s16 = scalar_lea.smem %s0, 8
  %s17 = sld [smem:[%s16]]
  %s18 = scalar_lea.smem %s0, 9
  %s19 = sld [smem:[%s18]]
  %s20 = scalar_lea.smem %s0, 10
  %s21 = sld [smem:[%s20]]
  %s22 = scalar_lea.smem %s0, 11
  %s23 = sld [smem:[%s22]]
  %s24 = scalar_lea.smem %s0, 12
  %s25 = sld [smem:[%s24]]
  %s26 = scalar_lea.smem %s0, 13
  %s27 = sld [smem:[%s26]]
  %s28 = scalar_lea.smem %s0, 14
  %s29 = sld [smem:[%s28]]
  %s30 = scalar_lea.smem %s0, 15
  %s31 = sld [smem:[%s30]]
  %s32 = scalar_lea.smem %s0, 16
  %s33 = sld [smem:[%s32]]
  %s34 = scalar_lea.smem %s0, 17
  %s35 = sld [smem:[%s34]]
  %s36 = scalar_lea.smem %s0, 18
  %s37 = sld [smem:[%s36]]
  %s38 = scalar_lea.smem %s0, 19
  %s39 = sld [smem:[%s38]]
  %s40 = scalar_lea.smem %s0, 20
  %s41 = sld [smem:[%s40]]
  %s42 = scalar_lea.smem %s0, 21
  %s43 = sld [smem:[%s42]]
  %s44 = scalar_lea.smem %s0, 22
  %s45 = sld [smem:[%s44]]
  %s46 = scalar_lea.smem %s0, 23
  %s47 = sld [smem:[%s46]]
  %s48 = scalar_lea.smem %s0, 24
  %s49 = sld [smem:[%s48]]
  %s50 = scalar_lea.smem %s0, 25
  %s51 = sld [smem:[%s50]]
  %s52 = scalar_lea.smem %s0, 26
  %s53 = sld [smem:[%s52]]
  %s54 = scalar_lea.smem %s0, 27
  %s55 = sld [smem:[%s54]]
  %s56 = scalar_lea.smem %s0, 28
  %s57 = sld [smem:[%s56]]
  %s58 = scalar_lea.smem %s0, 29
  %s59 = sld [smem:[%s58]]
  %s60 = scalar_lea.smem %s0, 30
  %s61 = sld [smem:[%s60]]
  %s62 = sld [smem:[#allocation0]]
  $region153: #{decoder_forward.3} parent=0
    _
  %s64 = ssub.s32 1, %s62
  %s65 = scalar_select 0, %s64, %s62
  loop: start=0, step=1, limit=4
  $region2: #{decoder_forward.3} parent=0 // loop_pre_header
    _
  $region3: #{decoder_forward.3} parent=0 // loop_header
    %s67 = sphi 0, %s71
    %p68 = scmp.ge.s32.totalorder %s67, 4
    %s77 = sphi 0, %s79
    %s80 = sphi 0, %s77
    %s81 = sphi 0, %s80
    %s97 = sphi 0, %s81
    %s103 = sphi 0, %s105
    %s106 = sphi 0, %s103
    %s107 = sphi 0, %s106
    %s123 = sphi 0, %s107
    %s129 = sphi 0, %s131
    %s132 = sphi 0, %s129
    %s133 = sphi 0, %s132
    %s149 = sphi 0, %s133
    %s155 = sphi 0, %s157
    %s158 = sphi 0, %s155
    %s159 = sphi 0, %s158
    %s175 = sphi 0, %s159
    %s179 = sphi 0, %s179
    %s181 = sphi 0, %s179
    %s182 = sphi 0, %s181
    %s196 = sphi 0, %s182
    %s200 = sphi 0, %s200
    %s202 = sphi 0, %s200
    %s203 = sphi 0, %s202
    %s217 = sphi 0, %s203
    %s221 = sphi 0, %s221
    %s223 = sphi 0, %s221
    %s224 = sphi 0, %s223
    %s238 = sphi 0, %s224
    %s242 = sphi 0, %s242
    %s244 = sphi 0, %s242
    %s245 = sphi 0, %s244
    %s259 = sphi 0, %s245
    %s263 = sphi 0, %s263
    %s265 = sphi 0, %s263
    %s266 = sphi 0, %s265
    %s280 = sphi 0, %s266
    %s284 = sphi 0, %s284
    %s286 = sphi 0, %s284
    %s287 = sphi 0, %s286
    %s301 = sphi 0, %s287
    %s305 = sphi 0, %s305
    %s307 = sphi 0, %s305
    %s308 = sphi 0, %s307
    %s322 = sphi 0, %s308
    %s326 = sphi 0, %s326
    %s328 = sphi 0, %s326
    %s329 = sphi 0, %s328
    %s343 = sphi 0, %s329
    %s347 = sphi 0, %s347
    %s349 = sphi 0, %s347
    %s350 = sphi 0, %s349
    %s364 = sphi 0, %s350
    %s368 = sphi 0, %s368
    %s370 = sphi 0, %s368
    %s371 = sphi 0, %s370
    %s385 = sphi 0, %s371
    %s389 = sphi 0, %s389
    %s391 = sphi 0, %s389
    %s392 = sphi 0, %s391
    %s406 = sphi 0, %s392
    %s410 = sphi 0, %s410
    %s412 = sphi 0, %s410
    %s413 = sphi 0, %s412
    %s427 = sphi 0, %s413
    %s431 = sphi 0, %s431
    %s433 = sphi 0, %s431
    %s434 = sphi 0, %s433
    %s448 = sphi 0, %s434
    %s452 = sphi 0, %s452
    %s454 = sphi 0, %s452
    %s455 = sphi 0, %s454
    %s469 = sphi 0, %s455
    %s473 = sphi 0, %s473
    %s475 = sphi 0, %s473
    %s476 = sphi 0, %s475
    %s490 = sphi 0, %s476
    %s494 = sphi 0, %s494
    %s496 = sphi 0, %s494
    %s497 = sphi 0, %s496
    %s511 = sphi 0, %s497
    %s515 = sphi 0, %s515
    %s517 = sphi 0, %s515
    %s518 = sphi 0, %s517
    %s532 = sphi 0, %s518
    %s536 = sphi 0, %s536
    %s538 = sphi 0, %s536
    %s539 = sphi 0, %s538
    %s553 = sphi 0, %s539
    %s557 = sphi 0, %s557
    %s559 = sphi 0, %s557
    %s560 = sphi 0, %s559
    %s574 = sphi 0, %s560
    %s578 = sphi 0, %s578
    %s580 = sphi 0, %s578
    %s581 = sphi 0, %s580
    %s595 = sphi 0, %s581
    %s599 = sphi 0, %s599
    %s601 = sphi 0, %s599
    %s602 = sphi 0, %s601
    %s616 = sphi 0, %s602
    %s620 = sphi 0, %s620
    %s622 = sphi 0, %s620
    %s623 = sphi 0, %s622
    %s637 = sphi 0, %s623
    %s641 = sphi 0, %s641
    %s643 = sphi 0, %s641
    %s644 = sphi 0, %s643
    %s658 = sphi 0, %s644
    %s662 = sphi 0, %s662
    %s664 = sphi 0, %s662
    %s665 = sphi 0, %s664
    %s679 = sphi 0, %s665
    %s683 = sphi 0, %s683
    %s685 = sphi 0, %s683
    %s686 = sphi 0, %s685
    %s700 = sphi 0, %s686
    %s704 = sphi 0, %s704
    %s706 = sphi 0, %s704
    %s707 = sphi 0, %s706
    %s721 = sphi 0, %s707
    %s727 = sphi 0, %s729
    %s730 = sphi 0, %s727
    %s731 = sphi 0, %s730
    %s747 = sphi 0, %s731
  $region4: #{decoder_forward.3} parent=0 // loop_header_branch
    %70 = sbr.rel (%p68) target = $region8
  $region5: #{decoder_forward.3} parent=0 // loop_body
    %s72 = ssub.s32 %s67, 1
    %s73 = ssub.s32 %s67, 2
    %s74 = sadd.s32 %s67, 1
    %s75 = ssub.s32 %s67, %s74
    %p76 = scmp.eq.s32.totalorder %s75, 0
    %s78 = sadd.s32 %s77, 1
    %s79 = scalar_select %p76, %s77, %s78
    %p82 = pneg %p76
    %p83 = scmp.eq.s32.totalorder %s67, 1
    %p84 = por %p82, %p83
    %p85 = scmp.ne.s32.totalorder %s77, %s80
    %p86 = scmp.eq.s32.totalorder %s67, 0
    %p87 = por %p85, %p86
    %p88 = scmp.ne.s32.totalorder %s77, %s80
    %p89 = scmp.eq.s32.totalorder %s72, 1
    %p90 = por %p88, %p89
    %p91 = scmp.ne.s32.totalorder %s80, %s81
    %p92 = scmp.eq.s32.totalorder %s72, 0
    %p93 = por %p91, %p92
    %p94 = scmp.ne.s32.totalorder %s80, %s81
    %p95 = scmp.eq.s32.totalorder %s73, 1
    %p96 = por %p94, %p95
    %p98 = scmp.ne.s32.totalorder %s81, %s97
    %p99 = scmp.eq.s32.totalorder %s73, 0
    %p100 = por %p98, %p99
    %s101 = ssub.s32 %s67, %s74
    %p102 = scmp.eq.s32.totalorder %s101, 0
    %s104 = sadd.s32 %s103, 1
    %s105 = scalar_select %p102, %s103, %s104
    %p108 = pneg %p102
    %p109 = scmp.eq.s32.totalorder %s67, 1
    %p110 = por %p108, %p109
    %p111 = scmp.ne.s32.totalorder %s103, %s106
    %p112 = scmp.eq.s32.totalorder %s67, 0
    %p113 = por %p111, %p112
    %p114 = scmp.ne.s32.totalorder %s103, %s106
    %p115 = scmp.eq.s32.totalorder %s72, 1
    %p116 = por %p114, %p115
    %p117 = scmp.ne.s32.totalorder %s106, %s107
    %p118 = scmp.eq.s32.totalorder %s72, 0
    %p119 = por %p117, %p118
    %p120 = scmp.ne.s32.totalorder %s106, %s107
    %p121 = scmp.eq.s32.totalorder %s73, 1
    %p122 = por %p120, %p121
    %p124 = scmp.ne.s32.totalorder %s107, %s123
    %p125 = scmp.eq.s32.totalorder %s73, 0
    %p126 = por %p124, %p125
    %s127 = ssub.s32 %s67, %s74
    %p128 = scmp.eq.s32.totalorder %s127, 0
    %s130 = sadd.s32 %s129, 1
    %s131 = scalar_select %p128, %s129, %s130
    %p134 = pneg %p128
    %p135 = scmp.eq.s32.totalorder %s67, 1
    %p136 = por %p134, %p135
    %p137 = scmp.ne.s32.totalorder %s129, %s132
    %p138 = scmp.eq.s32.totalorder %s67, 0
    %p139 = por %p137, %p138
    %p140 = scmp.ne.s32.totalorder %s129, %s132
    %p141 = scmp.eq.s32.totalorder %s72, 1
    %p142 = por %p140, %p141
    %p143 = scmp.ne.s32.totalorder %s132, %s133
    %p144 = scmp.eq.s32.totalorder %s72, 0
    %p145 = por %p143, %p144
    %p146 = scmp.ne.s32.totalorder %s132, %s133
    %p147 = scmp.eq.s32.totalorder %s73, 1
    %p148 = por %p146, %p147
    %p150 = scmp.ne.s32.totalorder %s133, %s149
    %p151 = scmp.eq.s32.totalorder %s73, 0
    %p152 = por %p150, %p151
    %s153 = ssub.s32 %s67, %s74
    %p154 = scmp.eq.s32.totalorder %s153, 0
    %s156 = sadd.s32 %s155, 1
    %s157 = scalar_select %p154, %s155, %s156
    %p160 = pneg %p154
    %p161 = scmp.eq.s32.totalorder %s67, 1
    %p162 = por %p160, %p161
    %p163 = scmp.ne.s32.totalorder %s155, %s158
    %p164 = scmp.eq.s32.totalorder %s67, 0
    %p165 = por %p163, %p164
    %p166 = scmp.ne.s32.totalorder %s155, %s158
    %p167 = scmp.eq.s32.totalorder %s72, 1
    %p168 = por %p166, %p167
    %p169 = scmp.ne.s32.totalorder %s158, %s159
    %p170 = scmp.eq.s32.totalorder %s72, 0
    %p171 = por %p169, %p170
    %p172 = scmp.ne.s32.totalorder %s158, %s159
    %p173 = scmp.eq.s32.totalorder %s73, 1
    %p174 = por %p172, %p173
    %p176 = scmp.ne.s32.totalorder %s159, %s175
    %p177 = scmp.eq.s32.totalorder %s73, 0
    %p178 = por %p176, %p177
    %s180 = sadd.s32 %s179, 1
    %p183 = scmp.eq.s32.totalorder %s67, 1
    %p184 = scmp.ne.s32.totalorder %s179, %s181
    %p185 = scmp.eq.s32.totalorder %s67, 0
    %p186 = por %p184, %p185
    %p187 = scmp.ne.s32.totalorder %s179, %s181
    %p188 = scmp.eq.s32.totalorder %s72, 1
    %p189 = por %p187, %p188
    %p190 = scmp.ne.s32.totalorder %s181, %s182
    %p191 = scmp.eq.s32.totalorder %s72, 0
    %p192 = por %p190, %p191
    %p193 = scmp.ne.s32.totalorder %s181, %s182
    %p194 = scmp.eq.s32.totalorder %s73, 1
    %p195 = por %p193, %p194
    %p197 = scmp.ne.s32.totalorder %s182, %s196
    %p198 = scmp.eq.s32.totalorder %s73, 0
    %p199 = por %p197, %p198
    %s201 = sadd.s32 %s200, 1
    %p204 = scmp.eq.s32.totalorder %s67, 1
    %p205 = scmp.ne.s32.totalorder %s200, %s202
    %p206 = scmp.eq.s32.totalorder %s67, 0
    %p207 = por %p205, %p206
    %p208 = scmp.ne.s32.totalorder %s200, %s202
    %p209 = scmp.eq.s32.totalorder %s72, 1
    %p210 = por %p208, %p209
    %p211 = scmp.ne.s32.totalorder %s202, %s203
    %p212 = scmp.eq.s32.totalorder %s72, 0
    %p213 = por %p211, %p212
    %p214 = scmp.ne.s32.totalorder %s202, %s203
    %p215 = scmp.eq.s32.totalorder %s73, 1
    %p216 = por %p214, %p215
    %p218 = scmp.ne.s32.totalorder %s203, %s217
    %p219 = scmp.eq.s32.totalorder %s73, 0
    %p220 = por %p218, %p219
    %s222 = sadd.s32 %s221, 1
    %p225 = scmp.eq.s32.totalorder %s67, 1
    %p226 = scmp.ne.s32.totalorder %s221, %s223
    %p227 = scmp.eq.s32.totalorder %s67, 0
    %p228 = por %p226, %p227
    %p229 = scmp.ne.s32.totalorder %s221, %s223
    %p230 = scmp.eq.s32.totalorder %s72, 1
    %p231 = por %p229, %p230
    %p232 = scmp.ne.s32.totalorder %s223, %s224
    %p233 = scmp.eq.s32.totalorder %s72, 0
    %p234 = por %p232, %p233
    %p235 = scmp.ne.s32.totalorder %s223, %s224
    %p236 = scmp.eq.s32.totalorder %s73, 1
    %p237 = por %p235, %p236
    %p239 = scmp.ne.s32.totalorder %s224, %s238
    %p240 = scmp.eq.s32.totalorder %s73, 0
    %p241 = por %p239, %p240
    %s243 = sadd.s32 %s242, 1
    %p246 = scmp.eq.s32.totalorder %s67, 1
    %p247 = scmp.ne.s32.totalorder %s242, %s244
    %p248 = scmp.eq.s32.totalorder %s67, 0
    %p249 = por %p247, %p248
    %p250 = scmp.ne.s32.totalorder %s242, %s244
    %p251 = scmp.eq.s32.totalorder %s72, 1
    %p252 = por %p250, %p251
    %p253 = scmp.ne.s32.totalorder %s244, %s245
    %p254 = scmp.eq.s32.totalorder %s72, 0
    %p255 = por %p253, %p254
    %p256 = scmp.ne.s32.totalorder %s244, %s245
    %p257 = scmp.eq.s32.totalorder %s73, 1
    %p258 = por %p256, %p257
    %p260 = scmp.ne.s32.totalorder %s245, %s259
    %p261 = scmp.eq.s32.totalorder %s73, 0
    %p262 = por %p260, %p261
    %s264 = sadd.s32 %s263, 1
    %p267 = scmp.eq.s32.totalorder %s67, 1
    %p268 = scmp.ne.s32.totalorder %s263, %s265
    %p269 = scmp.eq.s32.totalorder %s67, 0
    %p270 = por %p268, %p269
    %p271 = scmp.ne.s32.totalorder %s263, %s265
    %p272 = scmp.eq.s32.totalorder %s72, 1
    %p273 = por %p271, %p272
    %p274 = scmp.ne.s32.totalorder %s265, %s266
    %p275 = scmp.eq.s32.totalorder %s72, 0
    %p276 = por %p274, %p275
    %p277 = scmp.ne.s32.totalorder %s265, %s266
    %p278 = scmp.eq.s32.totalorder %s73, 1
    %p279 = por %p277, %p278
    %p281 = scmp.ne.s32.totalorder %s266, %s280
    %p282 = scmp.eq.s32.totalorder %s73, 0
    %p283 = por %p281, %p282
    %s285 = sadd.s32 %s284, 1
    %p288 = scmp.eq.s32.totalorder %s67, 1
    %p289 = scmp.ne.s32.totalorder %s284, %s286
    %p290 = scmp.eq.s32.totalorder %s67, 0
    %p291 = por %p289, %p290
    %p292 = scmp.ne.s32.totalorder %s284, %s286
    %p293 = scmp.eq.s32.totalorder %s72, 1
    %p294 = por %p292, %p293
    %p295 = scmp.ne.s32.totalorder %s286, %s287
    %p296 = scmp.eq.s32.totalorder %s72, 0
    %p297 = por %p295, %p296
    %p298 = scmp.ne.s32.totalorder %s286, %s287
    %p299 = scmp.eq.s32.totalorder %s73, 1
    %p300 = por %p298, %p299
    %p302 = scmp.ne.s32.totalorder %s287, %s301
    %p303 = scmp.eq.s32.totalorder %s73, 0
    %p304 = por %p302, %p303
    %s306 = sadd.s32 %s305, 1
    %p309 = scmp.eq.s32.totalorder %s67, 1
    %p310 = scmp.ne.s32.totalorder %s305, %s307
    %p311 = scmp.eq.s32.totalorder %s67, 0
    %p312 = por %p310, %p311
    %p313 = scmp.ne.s32.totalorder %s305, %s307
    %p314 = scmp.eq.s32.totalorder %s72, 1
    %p315 = por %p313, %p314
    %p316 = scmp.ne.s32.totalorder %s307, %s308
    %p317 = scmp.eq.s32.totalorder %s72, 0
    %p318 = por %p316, %p317
    %p319 = scmp.ne.s32.totalorder %s307, %s308
    %p320 = scmp.eq.s32.totalorder %s73, 1
    %p321 = por %p319, %p320
    %p323 = scmp.ne.s32.totalorder %s308, %s322
    %p324 = scmp.eq.s32.totalorder %s73, 0
    %p325 = por %p323, %p324
    %s327 = sadd.s32 %s326, 1
    %p330 = scmp.eq.s32.totalorder %s67, 1
    %p331 = scmp.ne.s32.totalorder %s326, %s328
    %p332 = scmp.eq.s32.totalorder %s67, 0
    %p333 = por %p331, %p332
    %p334 = scmp.ne.s32.totalorder %s326, %s328
    %p335 = scmp.eq.s32.totalorder %s72, 1
    %p336 = por %p334, %p335
    %p337 = scmp.ne.s32.totalorder %s328, %s329
    %p338 = scmp.eq.s32.totalorder %s72, 0
    %p339 = por %p337, %p338
    %p340 = scmp.ne.s32.totalorder %s328, %s329
    %p341 = scmp.eq.s32.totalorder %s73, 1
    %p342 = por %p340, %p341
    %p344 = scmp.ne.s32.totalorder %s329, %s343
    %p345 = scmp.eq.s32.totalorder %s73, 0
    %p346 = por %p344, %p345
    %s348 = sadd.s32 %s347, 1
    %p351 = scmp.eq.s32.totalorder %s67, 1
    %p352 = scmp.ne.s32.totalorder %s347, %s349
    %p353 = scmp.eq.s32.totalorder %s67, 0
    %p354 = por %p352, %p353
    %p355 = scmp.ne.s32.totalorder %s347, %s349
    %p356 = scmp.eq.s32.totalorder %s72, 1
    %p357 = por %p355, %p356
    %p358 = scmp.ne.s32.totalorder %s349, %s350
    %p359 = scmp.eq.s32.totalorder %s72, 0
    %p360 = por %p358, %p359
    %p361 = scmp.ne.s32.totalorder %s349, %s350
    %p362 = scmp.eq.s32.totalorder %s73, 1
    %p363 = por %p361, %p362
    %p365 = scmp.ne.s32.totalorder %s350, %s364
    %p366 = scmp.eq.s32.totalorder %s73, 0
    %p367 = por %p365, %p366
    %s369 = sadd.s32 %s368, 1
    %p372 = scmp.eq.s32.totalorder %s67, 1
    %p373 = scmp.ne.s32.totalorder %s368, %s370
    %p374 = scmp.eq.s32.totalorder %s67, 0
    %p375 = por %p373, %p374
    %p376 = scmp.ne.s32.totalorder %s368, %s370
    %p377 = scmp.eq.s32.totalorder %s72, 1
    %p378 = por %p376, %p377
    %p379 = scmp.ne.s32.totalorder %s370, %s371
    %p380 = scmp.eq.s32.totalorder %s72, 0
    %p381 = por %p379, %p380
    %p382 = scmp.ne.s32.totalorder %s370, %s371
    %p383 = scmp.eq.s32.totalorder %s73, 1
    %p384 = por %p382, %p383
    %p386 = scmp.ne.s32.totalorder %s371, %s385
    %p387 = scmp.eq.s32.totalorder %s73, 0
    %p388 = por %p386, %p387
    %s390 = sadd.s32 %s389, 1
    %p393 = scmp.eq.s32.totalorder %s67, 1
    %p394 = scmp.ne.s32.totalorder %s389, %s391
    %p395 = scmp.eq.s32.totalorder %s67, 0
    %p396 = por %p394, %p395
    %p397 = scmp.ne.s32.totalorder %s389, %s391
    %p398 = scmp.eq.s32.totalorder %s72, 1
    %p399 = por %p397, %p398
    %p400 = scmp.ne.s32.totalorder %s391, %s392
    %p401 = scmp.eq.s32.totalorder %s72, 0
    %p402 = por %p400, %p401
    %p403 = scmp.ne.s32.totalorder %s391, %s392
    %p404 = scmp.eq.s32.totalorder %s73, 1
    %p405 = por %p403, %p404
    %p407 = scmp.ne.s32.totalorder %s392, %s406
    %p408 = scmp.eq.s32.totalorder %s73, 0
    %p409 = por %p407, %p408
    %s411 = sadd.s32 %s410, 1
    %p414 = scmp.eq.s32.totalorder %s67, 1
    %p415 = scmp.ne.s32.totalorder %s410, %s412
    %p416 = scmp.eq.s32.totalorder %s67, 0
    %p417 = por %p415, %p416
    %p418 = scmp.ne.s32.totalorder %s410, %s412
    %p419 = scmp.eq.s32.totalorder %s72, 1
    %p420 = por %p418, %p419
    %p421 = scmp.ne.s32.totalorder %s412, %s413
    %p422 = scmp.eq.s32.totalorder %s72, 0
    %p423 = por %p421, %p422
    %p424 = scmp.ne.s32.totalorder %s412, %s413
    %p425 = scmp.eq.s32.totalorder %s73, 1
    %p426 = por %p424, %p425
    %p428 = scmp.ne.s32.totalorder %s413, %s427
    %p429 = scmp.eq.s32.totalorder %s73, 0
    %p430 = por %p428, %p429
    %s432 = sadd.s32 %s431, 1
    %p435 = scmp.eq.s32.totalorder %s67, 1
    %p436 = scmp.ne.s32.totalorder %s431, %s433
    %p437 = scmp.eq.s32.totalorder %s67, 0
    %p438 = por %p436, %p437
    %p439 = scmp.ne.s32.totalorder %s431, %s433
    %p440 = scmp.eq.s32.totalorder %s72, 1
    %p441 = por %p439, %p440
    %p442 = scmp.ne.s32.totalorder %s433, %s434
    %p443 = scmp.eq.s32.totalorder %s72, 0
    %p444 = por %p442, %p443
    %p445 = scmp.ne.s32.totalorder %s433, %s434
    %p446 = scmp.eq.s32.totalorder %s73, 1
    %p447 = por %p445, %p446
    %p449 = scmp.ne.s32.totalorder %s434, %s448
    %p450 = scmp.eq.s32.totalorder %s73, 0
    %p451 = por %p449, %p450
    %s453 = sadd.s32 %s452, 1
    %p456 = scmp.eq.s32.totalorder %s67, 1
    %p457 = scmp.ne.s32.totalorder %s452, %s454
    %p458 = scmp.eq.s32.totalorder %s67, 0
    %p459 = por %p457, %p458
    %p460 = scmp.ne.s32.totalorder %s452, %s454
    %p461 = scmp.eq.s32.totalorder %s72, 1
    %p462 = por %p460, %p461
    %p463 = scmp.ne.s32.totalorder %s454, %s455
    %p464 = scmp.eq.s32.totalorder %s72, 0
    %p465 = por %p463, %p464
    %p466 = scmp.ne.s32.totalorder %s454, %s455
    %p467 = scmp.eq.s32.totalorder %s73, 1
    %p468 = por %p466, %p467
    %p470 = scmp.ne.s32.totalorder %s455, %s469
    %p471 = scmp.eq.s32.totalorder %s73, 0
    %p472 = por %p470, %p471
    %s474 = sadd.s32 %s473, 1
    %p477 = scmp.eq.s32.totalorder %s67, 1
    %p478 = scmp.ne.s32.totalorder %s473, %s475
    %p479 = scmp.eq.s32.totalorder %s67, 0
    %p480 = por %p478, %p479
    %p481 = scmp.ne.s32.totalorder %s473, %s475
    %p482 = scmp.eq.s32.totalorder %s72, 1
    %p483 = por %p481, %p482
    %p484 = scmp.ne.s32.totalorder %s475, %s476
    %p485 = scmp.eq.s32.totalorder %s72, 0
    %p486 = por %p484, %p485
    %p487 = scmp.ne.s32.totalorder %s475, %s476
    %p488 = scmp.eq.s32.totalorder %s73, 1
    %p489 = por %p487, %p488
    %p491 = scmp.ne.s32.totalorder %s476, %s490
    %p492 = scmp.eq.s32.totalorder %s73, 0
    %p493 = por %p491, %p492
    %s495 = sadd.s32 %s494, 1
    %p498 = scmp.eq.s32.totalorder %s67, 1
    %p499 = scmp.ne.s32.totalorder %s494, %s496
    %p500 = scmp.eq.s32.totalorder %s67, 0
    %p501 = por %p499, %p500
    %p502 = scmp.ne.s32.totalorder %s494, %s496
    %p503 = scmp.eq.s32.totalorder %s72, 1
    %p504 = por %p502, %p503
    %p505 = scmp.ne.s32.totalorder %s496, %s497
    %p506 = scmp.eq.s32.totalorder %s72, 0
    %p507 = por %p505, %p506
    %p508 = scmp.ne.s32.totalorder %s496, %s497
    %p509 = scmp.eq.s32.totalorder %s73, 1
    %p510 = por %p508, %p509
    %p512 = scmp.ne.s32.totalorder %s497, %s511
    %p513 = scmp.eq.s32.totalorder %s73, 0
    %p514 = por %p512, %p513
    %s516 = sadd.s32 %s515, 1
    %p519 = scmp.eq.s32.totalorder %s67, 1
    %p520 = scmp.ne.s32.totalorder %s515, %s517
    %p521 = scmp.eq.s32.totalorder %s67, 0
    %p522 = por %p520, %p521
    %p523 = scmp.ne.s32.totalorder %s515, %s517
    %p524 = scmp.eq.s32.totalorder %s72, 1
    %p525 = por %p523, %p524
    %p526 = scmp.ne.s32.totalorder %s517, %s518
    %p527 = scmp.eq.s32.totalorder %s72, 0
    %p528 = por %p526, %p527
    %p529 = scmp.ne.s32.totalorder %s517, %s518
    %p530 = scmp.eq.s32.totalorder %s73, 1
    %p531 = por %p529, %p530
    %p533 = scmp.ne.s32.totalorder %s518, %s532
    %p534 = scmp.eq.s32.totalorder %s73, 0
    %p535 = por %p533, %p534
    %s537 = sadd.s32 %s536, 1
    %p540 = scmp.eq.s32.totalorder %s67, 1
    %p541 = scmp.ne.s32.totalorder %s536, %s538
    %p542 = scmp.eq.s32.totalorder %s67, 0
    %p543 = por %p541, %p542
    %p544 = scmp.ne.s32.totalorder %s536, %s538
    %p545 = scmp.eq.s32.totalorder %s72, 1
    %p546 = por %p544, %p545
    %p547 = scmp.ne.s32.totalorder %s538, %s539
    %p548 = scmp.eq.s32.totalorder %s72, 0
    %p549 = por %p547, %p548
    %p550 = scmp.ne.s32.totalorder %s538, %s539
    %p551 = scmp.eq.s32.totalorder %s73, 1
    %p552 = por %p550, %p551
    %p554 = scmp.ne.s32.totalorder %s539, %s553
    %p555 = scmp.eq.s32.totalorder %s73, 0
    %p556 = por %p554, %p555
    %s558 = sadd.s32 %s557, 1
    %p561 = scmp.eq.s32.totalorder %s67, 1
    %p562 = scmp.ne.s32.totalorder %s557, %s559
    %p563 = scmp.eq.s32.totalorder %s67, 0
    %p564 = por %p562, %p563
    %p565 = scmp.ne.s32.totalorder %s557, %s559
    %p566 = scmp.eq.s32.totalorder %s72, 1
    %p567 = por %p565, %p566
    %p568 = scmp.ne.s32.totalorder %s559, %s560
    %p569 = scmp.eq.s32.totalorder %s72, 0
    %p570 = por %p568, %p569
    %p571 = scmp.ne.s32.totalorder %s559, %s560
    %p572 = scmp.eq.s32.totalorder %s73, 1
    %p573 = por %p571, %p572
    %p575 = scmp.ne.s32.totalorder %s560, %s574
    %p576 = scmp.eq.s32.totalorder %s73, 0
    %p577 = por %p575, %p576
    %s579 = sadd.s32 %s578, 1
    %p582 = scmp.eq.s32.totalorder %s67, 1
    %p583 = scmp.ne.s32.totalorder %s578, %s580
    %p584 = scmp.eq.s32.totalorder %s67, 0
    %p585 = por %p583, %p584
    %p586 = scmp.ne.s32.totalorder %s578, %s580
    %p587 = scmp.eq.s32.totalorder %s72, 1
    %p588 = por %p586, %p587
    %p589 = scmp.ne.s32.totalorder %s580, %s581
    %p590 = scmp.eq.s32.totalorder %s72, 0
    %p591 = por %p589, %p590
    %p592 = scmp.ne.s32.totalorder %s580, %s581
    %p593 = scmp.eq.s32.totalorder %s73, 1
    %p594 = por %p592, %p593
    %p596 = scmp.ne.s32.totalorder %s581, %s595
    %p597 = scmp.eq.s32.totalorder %s73, 0
    %p598 = por %p596, %p597
    %s600 = sadd.s32 %s599, 1
    %p603 = scmp.eq.s32.totalorder %s67, 1
    %p604 = scmp.ne.s32.totalorder %s599, %s601
    %p605 = scmp.eq.s32.totalorder %s67, 0
    %p606 = por %p604, %p605
    %p607 = scmp.ne.s32.totalorder %s599, %s601
    %p608 = scmp.eq.s32.totalorder %s72, 1
    %p609 = por %p607, %p608
    %p610 = scmp.ne.s32.totalorder %s601, %s602
    %p611 = scmp.eq.s32.totalorder %s72, 0
    %p612 = por %p610, %p611
    %p613 = scmp.ne.s32.totalorder %s601, %s602
    %p614 = scmp.eq.s32.totalorder %s73, 1
    %p615 = por %p613, %p614
    %p617 = scmp.ne.s32.totalorder %s602, %s616
    %p618 = scmp.eq.s32.totalorder %s73, 0
    %p619 = por %p617, %p618
    %s621 = sadd.s32 %s620, 1
    %p624 = scmp.eq.s32.totalorder %s67, 1
    %p625 = scmp.ne.s32.totalorder %s620, %s622
    %p626 = scmp.eq.s32.totalorder %s67, 0
    %p627 = por %p625, %p626
    %p628 = scmp.ne.s32.totalorder %s620, %s622
    %p629 = scmp.eq.s32.totalorder %s72, 1
    %p630 = por %p628, %p629
    %p631 = scmp.ne.s32.totalorder %s622, %s623
    %p632 = scmp.eq.s32.totalorder %s72, 0
    %p633 = por %p631, %p632
    %p634 = scmp.ne.s32.totalorder %s622, %s623
    %p635 = scmp.eq.s32.totalorder %s73, 1
    %p636 = por %p634, %p635
    %p638 = scmp.ne.s32.totalorder %s623, %s637
    %p639 = scmp.eq.s32.totalorder %s73, 0
    %p640 = por %p638, %p639
    %s642 = sadd.s32 %s641, 1
    %p645 = scmp.eq.s32.totalorder %s67, 1
    %p646 = scmp.ne.s32.totalorder %s641, %s643
    %p647 = scmp.eq.s32.totalorder %s67, 0
    %p648 = por %p646, %p647
    %p649 = scmp.ne.s32.totalorder %s641, %s643
    %p650 = scmp.eq.s32.totalorder %s72, 1
    %p651 = por %p649, %p650
    %p652 = scmp.ne.s32.totalorder %s643, %s644
    %p653 = scmp.eq.s32.totalorder %s72, 0
    %p654 = por %p652, %p653
    %p655 = scmp.ne.s32.totalorder %s643, %s644
    %p656 = scmp.eq.s32.totalorder %s73, 1
    %p657 = por %p655, %p656
    %p659 = scmp.ne.s32.totalorder %s644, %s658
    %p660 = scmp.eq.s32.totalorder %s73, 0
    %p661 = por %p659, %p660
    %s663 = sadd.s32 %s662, 1
    %p666 = scmp.eq.s32.totalorder %s67, 1
    %p667 = scmp.ne.s32.totalorder %s662, %s664
    %p668 = scmp.eq.s32.totalorder %s67, 0
    %p669 = por %p667, %p668
    %p670 = scmp.ne.s32.totalorder %s662, %s664
    %p671 = scmp.eq.s32.totalorder %s72, 1
    %p672 = por %p670, %p671
    %p673 = scmp.ne.s32.totalorder %s664, %s665
    %p674 = scmp.eq.s32.totalorder %s72, 0
    %p675 = por %p673, %p674
    %p676 = scmp.ne.s32.totalorder %s664, %s665
    %p677 = scmp.eq.s32.totalorder %s73, 1
    %p678 = por %p676, %p677
    %p680 = scmp.ne.s32.totalorder %s665, %s679
    %p681 = scmp.eq.s32.totalorder %s73, 0
    %p682 = por %p680, %p681
    %s684 = sadd.s32 %s683, 1
    %p687 = scmp.eq.s32.totalorder %s67, 1
    %p688 = scmp.ne.s32.totalorder %s683, %s685
    %p689 = scmp.eq.s32.totalorder %s67, 0
    %p690 = por %p688, %p689
    %p691 = scmp.ne.s32.totalorder %s683, %s685
    %p692 = scmp.eq.s32.totalorder %s72, 1
    %p693 = por %p691, %p692
    %p694 = scmp.ne.s32.totalorder %s685, %s686
    %p695 = scmp.eq.s32.totalorder %s72, 0
    %p696 = por %p694, %p695
    %p697 = scmp.ne.s32.totalorder %s685, %s686
    %p698 = scmp.eq.s32.totalorder %s73, 1
    %p699 = por %p697, %p698
    %p701 = scmp.ne.s32.totalorder %s686, %s700
    %p702 = scmp.eq.s32.totalorder %s73, 0
    %p703 = por %p701, %p702
    %s705 = sadd.s32 %s704, 1
    %p708 = scmp.eq.s32.totalorder %s67, 1
    %p709 = scmp.ne.s32.totalorder %s704, %s706
    %p710 = scmp.eq.s32.totalorder %s67, 0
    %p711 = por %p709, %p710
    %p712 = scmp.ne.s32.totalorder %s704, %s706
    %p713 = scmp.eq.s32.totalorder %s72, 1
    %p714 = por %p712, %p713
    %p715 = scmp.ne.s32.totalorder %s706, %s707
    %p716 = scmp.eq.s32.totalorder %s72, 0
    %p717 = por %p715, %p716
    %p718 = scmp.ne.s32.totalorder %s706, %s707
    %p719 = scmp.eq.s32.totalorder %s73, 1
    %p720 = por %p718, %p719
    %p722 = scmp.ne.s32.totalorder %s707, %s721
    %p723 = scmp.eq.s32.totalorder %s73, 0
    %p724 = por %p722, %p723
    %s725 = ssub.s32 %s67, %s74
    %p726 = scmp.eq.s32.totalorder %s725, 0
    %s728 = sadd.s32 %s727, 1
    %s729 = scalar_select %p726, %s727, %s728
    %p732 = pneg %p726
    %p733 = scmp.eq.s32.totalorder %s67, 1
    %p734 = por %p732, %p733
    %p735 = scmp.ne.s32.totalorder %s727, %s730
    %p736 = scmp.eq.s32.totalorder %s67, 0
    %p737 = por %p735, %p736
    %p738 = scmp.ne.s32.totalorder %s727, %s730
    %p739 = scmp.eq.s32.totalorder %s72, 1
    %p740 = por %p738, %p739
    %p741 = scmp.ne.s32.totalorder %s730, %s731
    %p742 = scmp.eq.s32.totalorder %s72, 0
    %p743 = por %p741, %p742
    %p744 = scmp.ne.s32.totalorder %s730, %s731
    %p745 = scmp.eq.s32.totalorder %s73, 1
    %p746 = por %p744, %p745
    %p748 = scmp.ne.s32.totalorder %s731, %s747
    %p749 = scmp.eq.s32.totalorder %s73, 0
    %p750 = por %p748, %p749
    %p751 = scmp.le.s32.totalorder 1, %s67
    %p752 = scmp.lt.s32.totalorder %s67, 3
    %p753 = pnand %p751, %p752
    %p754 = pneg %p753
    // Predicated region
    $region9: #{decoder_forward.3} parent=5 // pred_check
      _
    $region10: #{decoder_forward.3} parent=5 // pred_check_branch
      %756 = sbr.rel (%p753) target = $region12
    $region11: #{decoder_forward.3} parent=5 // pred_region
      %s757 = ssub.s32 %s67, 1
      // Predicated region
      $region13: #{decoder_forward.3} parent=11 // pred_check
        %p758 = pneg %p192
      $region14: #{decoder_forward.3} parent=11 // pred_check_branch
        %760 = sbr.rel (%p758) target = $region16
      $region15: #{decoder_forward.3} parent=11 // pred_region
        _
      $region16: #{decoder_forward.3} parent=11 // pred_fallthru
        _
      // Predicated region
      $region17: #{decoder_forward.3} parent=11 // pred_check
        %p761 = pneg %p213
      $region18: #{decoder_forward.3} parent=11 // pred_check_branch
        %763 = sbr.rel (%p761) target = $region20
      $region19: #{decoder_forward.3} parent=11 // pred_region
        _
      $region20: #{decoder_forward.3} parent=11 // pred_fallthru
        _
      // Predicated region
      $region21: #{decoder_forward.3} parent=11 // pred_check
        %p764 = pneg %p234
      $region22: #{decoder_forward.3} parent=11 // pred_check_branch
        %766 = sbr.rel (%p764) target = $region24
      $region23: #{decoder_forward.3} parent=11 // pred_region
        _
      $region24: #{decoder_forward.3} parent=11 // pred_fallthru
        _
      // Predicated region
      $region25: #{decoder_forward.3} parent=11 // pred_check
        %p767 = pneg %p255
      $region26: #{decoder_forward.3} parent=11 // pred_check_branch
        %769 = sbr.rel (%p767) target = $region28
      $region27: #{decoder_forward.3} parent=11 // pred_region
        _
      $region28: #{decoder_forward.3} parent=11 // pred_fallthru
        _
      // Predicated region
      $region29: #{decoder_forward.3} parent=11 // pred_check
        %p770 = pneg %p276
      $region30: #{decoder_forward.3} parent=11 // pred_check_branch
        %772 = sbr.rel (%p770) target = $region32
      $region31: #{decoder_forward.3} parent=11 // pred_region
        _
      $region32: #{decoder_forward.3} parent=11 // pred_fallthru
        _
      // Predicated region
      $region33: #{decoder_forward.3} parent=11 // pred_check
        %p773 = pneg %p297
      $region34: #{decoder_forward.3} parent=11 // pred_check_branch
        %775 = sbr.rel (%p773) target = $region36
      $region35: #{decoder_forward.3} parent=11 // pred_region
        _
      $region36: #{decoder_forward.3} parent=11 // pred_fallthru
        _
      // Predicated region
      $region37: #{decoder_forward.3} parent=11 // pred_check
        %p776 = pneg %p318
      $region38: #{decoder_forward.3} parent=11 // pred_check_branch
        %778 = sbr.rel (%p776) target = $region40
      $region39: #{decoder_forward.3} parent=11 // pred_region
        _
      $region40: #{decoder_forward.3} parent=11 // pred_fallthru
        _
      // Predicated region
      $region41: #{decoder_forward.3} parent=11 // pred_check
        %p779 = pneg %p339
      $region42: #{decoder_forward.3} parent=11 // pred_check_branch
        %781 = sbr.rel (%p779) target = $region44
      $region43: #{decoder_forward.3} parent=11 // pred_region
        _
      $region44: #{decoder_forward.3} parent=11 // pred_fallthru
        _
      // Predicated region
      $region45: #{decoder_forward.3} parent=11 // pred_check
        %p782 = pneg %p360
      $region46: #{decoder_forward.3} parent=11 // pred_check_branch
        %784 = sbr.rel (%p782) target = $region48
      $region47: #{decoder_forward.3} parent=11 // pred_region
        _
      $region48: #{decoder_forward.3} parent=11 // pred_fallthru
        _
      // Predicated region
      $region49: #{decoder_forward.3} parent=11 // pred_check
        %p785 = pneg %p381
      $region50: #{decoder_forward.3} parent=11 // pred_check_branch
        %787 = sbr.rel (%p785) target = $region52
      $region51: #{decoder_forward.3} parent=11 // pred_region
        _
      $region52: #{decoder_forward.3} parent=11 // pred_fallthru
        _
      // Predicated region
      $region53: #{decoder_forward.3} parent=11 // pred_check
        %p788 = pneg %p402
      $region54: #{decoder_forward.3} parent=11 // pred_check_branch
        %790 = sbr.rel (%p788) target = $region56
      $region55: #{decoder_forward.3} parent=11 // pred_region
        _
      $region56: #{decoder_forward.3} parent=11 // pred_fallthru
        _
      // Predicated region
      $region57: #{decoder_forward.3} parent=11 // pred_check
        %p791 = pneg %p423
      $region58: #{decoder_forward.3} parent=11 // pred_check_branch
        %793 = sbr.rel (%p791) target = $region60
      $region59: #{decoder_forward.3} parent=11 // pred_region
        _
      $region60: #{decoder_forward.3} parent=11 // pred_fallthru
        _
      // Predicated region
      $region61: #{decoder_forward.3} parent=11 // pred_check
        %p794 = pneg %p444
      $region62: #{decoder_forward.3} parent=11 // pred_check_branch
        %796 = sbr.rel (%p794) target = $region64
      $region63: #{decoder_forward.3} parent=11 // pred_region
        _
      $region64: #{decoder_forward.3} parent=11 // pred_fallthru
        _
      // Predicated region
      $region65: #{decoder_forward.3} parent=11 // pred_check
        %p797 = pneg %p465
      $region66: #{decoder_forward.3} parent=11 // pred_check_branch
        %799 = sbr.rel (%p797) target = $region68
      $region67: #{decoder_forward.3} parent=11 // pred_region
        _
      $region68: #{decoder_forward.3} parent=11 // pred_fallthru
        _
      // Predicated region
      $region69: #{decoder_forward.3} parent=11 // pred_check
        %p800 = pneg %p486
      $region70: #{decoder_forward.3} parent=11 // pred_check_branch
        %802 = sbr.rel (%p800) target = $region72
      $region71: #{decoder_forward.3} parent=11 // pred_region
        _
      $region72: #{decoder_forward.3} parent=11 // pred_fallthru
        _
      // Predicated region
      $region73: #{decoder_forward.3} parent=11 // pred_check
        %p803 = pneg %p507
      $region74: #{decoder_forward.3} parent=11 // pred_check_branch
        %805 = sbr.rel (%p803) target = $region76
      $region75: #{decoder_forward.3} parent=11 // pred_region
        _
      $region76: #{decoder_forward.3} parent=11 // pred_fallthru
        _
      // Predicated region
      $region77: #{decoder_forward.3} parent=11 // pred_check
        %p806 = pneg %p528
      $region78: #{decoder_forward.3} parent=11 // pred_check_branch
        %808 = sbr.rel (%p806) target = $region80
      $region79: #{decoder_forward.3} parent=11 // pred_region
        _
      $region80: #{decoder_forward.3} parent=11 // pred_fallthru
        _
      // Predicated region
      $region81: #{decoder_forward.3} parent=11 // pred_check
        %p809 = pneg %p549
      $region82: #{decoder_forward.3} parent=11 // pred_check_branch
        %811 = sbr.rel (%p809) target = $region84
      $region83: #{decoder_forward.3} parent=11 // pred_region
        _
      $region84: #{decoder_forward.3} parent=11 // pred_fallthru
        _
      // Predicated region
      $region85: #{decoder_forward.3} parent=11 // pred_check
        %p812 = pneg %p570
      $region86: #{decoder_forward.3} parent=11 // pred_check_branch
        %814 = sbr.rel (%p812) target = $region88
      $region87: #{decoder_forward.3} parent=11 // pred_region
        _
      $region88: #{decoder_forward.3} parent=11 // pred_fallthru
        _
      // Predicated region
      $region89: #{decoder_forward.3} parent=11 // pred_check
        %p815 = pneg %p591
      $region90: #{decoder_forward.3} parent=11 // pred_check_branch
        %817 = sbr.rel (%p815) target = $region92
      $region91: #{decoder_forward.3} parent=11 // pred_region
        _
      $region92: #{decoder_forward.3} parent=11 // pred_fallthru
        _
      // Predicated region
      $region93: #{decoder_forward.3} parent=11 // pred_check
        %p818 = pneg %p612
      $region94: #{decoder_forward.3} parent=11 // pred_check_branch
        %820 = sbr.rel (%p818) target = $region96
      $region95: #{decoder_forward.3} parent=11 // pred_region
        _
      $region96: #{decoder_forward.3} parent=11 // pred_fallthru
        _
      // Predicated region
      $region97: #{decoder_forward.3} parent=11 // pred_check
        %p821 = pneg %p633
      $region98: #{decoder_forward.3} parent=11 // pred_check_branch
        %823 = sbr.rel (%p821) target = $region100
      $region99: #{decoder_forward.3} parent=11 // pred_region
        _
      $region100: #{decoder_forward.3} parent=11 // pred_fallthru
        _
      // Predicated region
      $region101: #{decoder_forward.3} parent=11 // pred_check
        %p824 = pneg %p654
      $region102: #{decoder_forward.3} parent=11 // pred_check_branch
        %826 = sbr.rel (%p824) target = $region104
      $region103: #{decoder_forward.3} parent=11 // pred_region
        _
      $region104: #{decoder_forward.3} parent=11 // pred_fallthru
        _
      // Predicated region
      $region105: #{decoder_forward.3} parent=11 // pred_check
        %p827 = pneg %p675
      $region106: #{decoder_forward.3} parent=11 // pred_check_branch
        %829 = sbr.rel (%p827) target = $region108
      $region107: #{decoder_forward.3} parent=11 // pred_region
        _
      $region108: #{decoder_forward.3} parent=11 // pred_fallthru
        _
      // Predicated region
      $region109: #{decoder_forward.3} parent=11 // pred_check
        %p830 = pneg %p696
      $region110: #{decoder_forward.3} parent=11 // pred_check_branch
        %832 = sbr.rel (%p830) target = $region112
      $region111: #{decoder_forward.3} parent=11 // pred_region
        _
      $region112: #{decoder_forward.3} parent=11 // pred_fallthru
        _
      // Predicated region
      $region113: #{decoder_forward.3} parent=11 // pred_check
        %p833 = pneg %p717
      $region114: #{decoder_forward.3} parent=11 // pred_check_branch
        %835 = sbr.rel (%p833) target = $region116
      $region115: #{decoder_forward.3} parent=11 // pred_region
        _
      $region116: #{decoder_forward.3} parent=11 // pred_fallthru
        _
    $region12: #{decoder_forward.3} parent=5 // pred_fallthru
      _
    %p836 = scmp.lt.s32.totalorder %s67, 2
    // Predicated region
    $region117: #{decoder_forward.3} parent=5 // pred_check
      %p837 = pneg %p836
    $region118: #{decoder_forward.3} parent=5 // pred_check_branch
      %839 = sbr.rel (%p837) target = $region120
    $region119: #{decoder_forward.3} parent=5 // pred_region
      // Predicated region
      $region121: #{decoder_forward.3} parent=119 // pred_check
        %p840 = pneg %p87
      $region122: #{decoder_forward.3} parent=119 // pred_check_branch
        %842 = sbr.rel (%p840) target = $region124
      $region123: #{decoder_forward.3} parent=119 // pred_region
        %p843 = scmp.lt.s32.totalorder %s67, 1
        %s844 = scalar_select %p843, %s67, 1
        %s845 = smul.addr %s844, 8
        %s846 = scalar_lea.vmem %s1, %s845
      $region124: #{decoder_forward.3} parent=119 // pred_fallthru
        _
      // Predicated region
      $region125: #{decoder_forward.3} parent=119 // pred_check
        %p847 = pneg %p113
      $region126: #{decoder_forward.3} parent=119 // pred_check_branch
        %849 = sbr.rel (%p847) target = $region128
      $region127: #{decoder_forward.3} parent=119 // pred_region
        %p850 = scmp.lt.s32.totalorder %s67, 1
        %s851 = scalar_select %p850, %s67, 1
        %s852 = smul.addr %s851, 8
        %s853 = scalar_lea.vmem %s3, %s852
      $region128: #{decoder_forward.3} parent=119 // pred_fallthru
        _
      // Predicated region
      $region129: #{decoder_forward.3} parent=119 // pred_check
        %p854 = pneg %p139
      $region130: #{decoder_forward.3} parent=119 // pred_check_branch
        %856 = sbr.rel (%p854) target = $region132
      $region131: #{decoder_forward.3} parent=119 // pred_region
        %p857 = scmp.lt.s32.totalorder %s67, 1
        %s858 = scalar_select %p857, %s67, 1
        %s859 = smul.addr %s858, 8
        %s860 = scalar_lea.vmem %s5, %s859
      $region132: #{decoder_forward.3} parent=119 // pred_fallthru
        _
      // Predicated region
      $region133: #{decoder_forward.3} parent=119 // pred_check
        %p861 = pneg %p165
      $region134: #{decoder_forward.3} parent=119 // pred_check_branch
        %863 = sbr.rel (%p861) target = $region136
      $region135: #{decoder_forward.3} parent=119 // pred_region
        %p864 = scmp.lt.s32.totalorder %s67, 1
        %s865 = scalar_select %p864, %s67, 1
        %s866 = scalar_lea.vmem %s7, %s865
      $region136: #{decoder_forward.3} parent=119 // pred_fallthru
        _
    $region120: #{decoder_forward.3} parent=5 // pred_fallthru
      _
    %p867 = scmp.le.s32.totalorder 1, %s67
    %p868 = scmp.lt.s32.totalorder %s67, 3
    %p869 = pnand %p867, %p868
    %p870 = pneg %p869
    // Predicated region
    $region137: #{decoder_forward.3} parent=5 // pred_check
      _
    $region138: #{decoder_forward.3} parent=5 // pred_check_branch
      %872 = sbr.rel (%p869) target = $region140
    $region139: #{decoder_forward.3} parent=5 // pred_region
      %s873 = ssub.s32 %s67, 1
      %p874 = scmp.lt.s32.totalorder %s72, 1
      %s875 = scalar_select %p874, %s72, 1
      %s876 = smul.addr %s875, 8
      %s877 = scalar_lea.vmem %s1, %s876
      %p878 = pneg %p93
      %p879 = pneg %p90
      %p880 = scmp.lt.s32.totalorder %s72, 1
      %s881 = scalar_select %p880, %s72, 1
      %s882 = smul.addr %s881, 8
      %s883 = scalar_lea.vmem %s3, %s882
      %p884 = pneg %p119
      %p885 = pneg %p116
      %p886 = scmp.lt.s32.totalorder %s72, 1
      %s887 = scalar_select %p886, %s72, 1
      %s888 = smul.addr %s887, 8
      %s889 = scalar_lea.vmem %s5, %s888
      %p890 = pneg %p145
      %p891 = pneg %p142
      %p892 = scmp.lt.s32.totalorder %s72, 1
      %s893 = scalar_select %p892, %s72, 1
      %s894 = scalar_lea.vmem %s7, %s893
      %p895 = pneg %p171
      %p896 = pneg %p168
      %p897 = pneg %p192
      %p898 = pneg %p189
      %p899 = pneg %p213
      %p900 = pneg %p210
      %p901 = pneg %p234
      %p902 = pneg %p231
      %p903 = pneg %p255
      %p904 = pneg %p252
      %p905 = pneg %p276
      %p906 = pneg %p273
      %p907 = pneg %p297
      %p908 = pneg %p294
      %p909 = pneg %p318
      %p910 = pneg %p315
      %p911 = pneg %p339
      %p912 = pneg %p336
      %p913 = pneg %p360
      %p914 = pneg %p357
      %p915 = pneg %p381
      %p916 = pneg %p378
      %p917 = pneg %p402
      %p918 = pneg %p399
      %p919 = pneg %p423
      %p920 = pneg %p420
      %p921 = pneg %p444
      %p922 = pneg %p441
      %p923 = pneg %p465
      %p924 = pneg %p462
      %p925 = pneg %p486
      %p926 = pneg %p483
      %p927 = pneg %p507
      %p928 = pneg %p504
      %p929 = pneg %p528
      %p930 = pneg %p525
      %p931 = pneg %p549
      %p932 = pneg %p546
      %p933 = pneg %p570
      %p934 = pneg %p567
      %p935 = pneg %p591
      %p936 = pneg %p588
      %p937 = pneg %p612
      %p938 = pneg %p609
      %p939 = pneg %p633
      %p940 = pneg %p630
      %p941 = pneg %p654
      %p942 = pneg %p651
      %p943 = pneg %p675
      %p944 = pneg %p672
      %p945 = pneg %p696
      %p946 = pneg %p693
      %p947 = pneg %p717
      %p948 = pneg %p714
      %p949 = pneg %p743
      %p950 = pneg %p740
      %p951 = scmp.lt.s32.totalorder %s72, 1
      %s952 = scalar_select %p951, %s72, 1
      %s953 = smul.addr %s952, 8
      %s954 = scalar_lea.vmem %s61, %s953
      %p955 = scmp.lt.s32.totalorder %s72, 1
      %s956 = scalar_select %p955, %s72, 1
      %s957 = smul.addr %s956, 8
      %s958 = scalar_lea.vmem %s1, %s957
      %p959 = scmp.lt.s32.totalorder %s72, 1
      %s960 = scalar_select %p959, %s72, 1
      %s961 = smul.addr %s960, 8
      %s962 = scalar_lea.vmem %s3, %s961
      %p963 = scmp.lt.s32.totalorder %s72, 1
      %s964 = scalar_select %p963, %s72, 1
      %s965 = smul.addr %s964, 8
      %s966 = scalar_lea.vmem %s5, %s965
      %p967 = scmp.lt.s32.totalorder %s72, 1
      %s968 = scalar_select %p967, %s72, 1
      %s969 = scalar_lea.vmem %s7, %s968
      %p970 = scmp.lt.s32.totalorder %s72, 1
      %s971 = scalar_select %p970, %s72, 1
      %s972 = smul.addr %s971, 8
      %s973 = scalar_lea.vmem %s61, %s972
      %v974 = vld [vmem:[%s958] sm:$0xff]
      %v975 = vld [vmem:[%s962] sm:$0xff]
      %v976 = vld [vmem:[%s966] sm:$0xff]
      %v977 = vld [vmem:[%s969] sm:$0x1]
      %v978 = vld [vmem:[%s9] sm:$0xff]
      %v979 = vld [vmem:[%s9 + $0x8] sm:$0xff]
      %v980 = vld [vmem:[%s9 + $0x10] sm:$0xff]
      %v981 = vld [vmem:[%s9 + $0x18] sm:$0xff]
      %v982 = vld [vmem:[%s11] sm:$0x1]
      %v984 = vlaneseq
      %v985 = vshrl.u32 %v984, 7
      %v986 = vsub.s32 0, %v985
      %v987 = vrot.slane %v982, %v986
      %vm989 = vcmask 261120
      %v991 = vsel %vm989, %v974, 0
      %993 = vmatprep.subr.mxu0 0.0
      %994 = vmatpush1.msra.mxu0 %v978
      %995 = vmatprep.subr.mxu0 0.0
      %996 = vmatpush1.msra.mxu0 %v979
      %997 = vmatprep.subr.mxu0 0.0
      %998 = vmatpush1.msra.mxu0 %v980
      %999 = vmatprep.subr.mxu0 0.0
      %1000 = vmatpush1.msra.mxu0 %v981
      %1001 = vmatprep.subr.mxu0 0.0
      %1002 = vmatpush1.msra.mxu0 0.0
      %1003 = vmatprep.subr.mxu0 0.0
      %1004 = vmatpush1.msra.mxu0 0.0
      %1005 = vmatprep.subr.mxu0 0.0
      %1006 = vmatpush1.msra.mxu0 0.0
      %1007 = vmatprep.subr.mxu0 0.0
      %1008 = vmatpush1.msra.mxu0 0.0
      %1009 = vmatprep.subr.mxu0 0.0
      %1010 = vmatpush1.msra.mxu0 0.0
      %1011 = vmatprep.subr.mxu0 0.0
      %1012 = vmatpush1.msra.mxu0 0.0
      %1013 = vmatprep.subr.mxu0 0.0
      %1014 = vmatpush1.msra.mxu0 0.0
      %1015 = vmatprep.subr.mxu0 0.0
      %1016 = vmatpush1.msra.mxu0 0.0
      %1017 = vmatprep.subr.mxu0 0.0
      %1018 = vmatpush1.msra.mxu0 0.0
      %1019 = vmatprep.subr.mxu0 0.0
      %1020 = vmatpush1.msra.mxu0 0.0
      %1021 = vmatprep.subr.mxu0 0.0
      %1022 = vmatpush1.msra.mxu0 0.0
      %1023 = vmatprep.subr.mxu0 0.0
      %1024 = vmatpush1.msra.mxu0 0.0
      %1025 = vmatprep.subr.mxu0 0.0
      %1026 = vmatpush1.msra.mxu0 0.0
      %1027 = vmatprep.subr.mxu0 0.0
      %1028 = vmatpush1.msra.mxu0 0.0
      %1029 = vmatprep.subr.mxu0 0.0
      %1030 = vmatpush1.msra.mxu0 0.0
      %1031 = vmatprep.subr.mxu0 0.0
      %1032 = vmatpush1.msra.mxu0 0.0
      %1033 = vmatprep.subr.mxu0 0.0
      %1034 = vmatpush1.msra.mxu0 0.0
      %1035 = vmatprep.subr.mxu0 0.0
      %1036 = vmatpush1.msra.mxu0 0.0
      %1037 = vmatprep.subr.mxu0 0.0
      %1038 = vmatpush1.msra.mxu0 0.0
      %1039 = vmatprep.subr.mxu0 0.0
      %1040 = vmatpush1.msra.mxu0 0.0
      %1041 = vmatprep.subr.mxu0 0.0
      %1042 = vmatpush1.msra.mxu0 0.0
      %1043 = vmatprep.subr.mxu0 0.0
      %1044 = vmatpush1.msra.mxu0 0.0
      %1045 = vmatprep.subr.mxu0 0.0
      %1046 = vmatpush1.msra.mxu0 0.0
      %1047 = vmatprep.subr.mxu0 0.0
      %1048 = vmatpush1.msra.mxu0 0.0
      %1049 = vmatprep.subr.mxu0 0.0
      %1050 = vmatpush1.msra.mxu0 0.0
      %1051 = vmatprep.subr.mxu0 0.0
      %1052 = vmatpush1.msra.mxu0 0.0
      %1053 = vmatprep.subr.mxu0 0.0
      %1054 = vmatpush1.msra.mxu0 0.0
      %1055 = vmatprep.subr.mxu0 0.0
      %1056 = vmatpush1.msra.mxu0 0.0
      %1057 = vmatprep.mubr.f32.mxu0 0.0
      %1058 = vmatmul.mubr.f32.gmra.mrb[0].mxu0 %v991
      %v1059 = vpop.f32.mrb[0].mxu0
      %v1060 = vadd.f32 %v987, %v1059
      %v1061 = vpop.f32.mrb[0].mxu0
      %1062 = vdwg.mxu0
      %v1063 = vld [vmem:[%s13] sm:$0xff]
      %v1064 = vld [vmem:[%s13 + $0x8] sm:$0xff]
      %v1065 = vld [vmem:[%s13 + $0x10] sm:$0xff]
      %v1066 = vld [vmem:[%s13 + $0x18] sm:$0xff]
      %v1067 = vld [vmem:[%s15] sm:$0x1]
      %v1069 = vlaneseq
      %v1070 = vshrl.u32 %v1069, 7
      %v1071 = vsub.s32 0, %v1070
      %v1072 = vrot.slane %v1067, %v1071
      %1074 = vmatprep.subr.mxu0 0.0
      %1075 = vmatpush1.msra.mxu0 %v1063
      %1076 = vmatprep.subr.mxu0 0.0
      %1077 = vmatpush1.msra.mxu0 %v1064
      %1078 = vmatprep.subr.mxu0 0.0
      %1079 = vmatpush1.msra.mxu0 %v1065
      %1080 = vmatprep.subr.mxu0 0.0
      %1081 = vmatpush1.msra.mxu0 %v1066
      %1082 = vmatprep.subr.mxu0 0.0
      %1083 = vmatpush1.msra.mxu0 0.0
      %1084 = vmatprep.subr.mxu0 0.0
      %1085 = vmatpush1.msra.mxu0 0.0
      %1086 = vmatprep.subr.mxu0 0.0
      %1087 = vmatpush1.msra.mxu0 0.0
      %1088 = vmatprep.subr.mxu0 0.0
      %1089 = vmatpush1.msra.mxu0 0.0
      %1090 = vmatprep.subr.mxu0 0.0
      %1091 = vmatpush1.msra.mxu0 0.0
      %1092 = vmatprep.subr.mxu0 0.0
      %1093 = vmatpush1.msra.mxu0 0.0
      %1094 = vmatprep.subr.mxu0 0.0
      %1095 = vmatpush1.msra.mxu0 0.0
      %1096 = vmatprep.subr.mxu0 0.0
      %1097 = vmatpush1.msra.mxu0 0.0
      %1098 = vmatprep.subr.mxu0 0.0
      %1099 = vmatpush1.msra.mxu0 0.0
      %1100 = vmatprep.subr.mxu0 0.0
      %1101 = vmatpush1.msra.mxu0 0.0
      %1102 = vmatprep.subr.mxu0 0.0
      %1103 = vmatpush1.msra.mxu0 0.0
      %1104 = vmatprep.subr.mxu0 0.0
      %1105 = vmatpush1.msra.mxu0 0.0
      %1106 = vmatprep.subr.mxu0 0.0
      %1107 = vmatpush1.msra.mxu0 0.0
      %1108 = vmatprep.subr.mxu0 0.0
      %1109 = vmatpush1.msra.mxu0 0.0
      %1110 = vmatprep.subr.mxu0 0.0
      %1111 = vmatpush1.msra.mxu0 0.0
      %1112 = vmatprep.subr.mxu0 0.0
      %1113 = vmatpush1.msra.mxu0 0.0
      %1114 = vmatprep.subr.mxu0 0.0
      %1115 = vmatpush1.msra.mxu0 0.0
      %1116 = vmatprep.subr.mxu0 0.0
      %1117 = vmatpush1.msra.mxu0 0.0
      %1118 = vmatprep.subr.mxu0 0.0
      %1119 = vmatpush1.msra.mxu0 0.0
      %1120 = vmatprep.subr.mxu0 0.0
      %1121 = vmatpush1.msra.mxu0 0.0
      %1122 = vmatprep.subr.mxu0 0.0
      %1123 = vmatpush1.msra.mxu0 0.0
      %1124 = vmatprep.subr.mxu0 0.0
      %1125 = vmatpush1.msra.mxu0 0.0
      %1126 = vmatprep.subr.mxu0 0.0
      %1127 = vmatpush1.msra.mxu0 0.0
      %1128 = vmatprep.subr.mxu0 0.0
      %1129 = vmatpush1.msra.mxu0 0.0
      %1130 = vmatprep.subr.mxu0 0.0
      %1131 = vmatpush1.msra.mxu0 0.0
      %1132 = vmatprep.subr.mxu0 0.0
      %1133 = vmatpush1.msra.mxu0 0.0
      %1134 = vmatprep.subr.mxu0 0.0
      %1135 = vmatpush1.msra.mxu0 0.0
      %1136 = vmatprep.subr.mxu0 0.0
      %1137 = vmatpush1.msra.mxu0 0.0
      %1138 = vmatprep.mubr.f32.mxu0 0.0
      %1139 = vmatmul.mubr.f32.gmra.mrb[0].mxu0 %v991
      %v1140 = vpop.f32.mrb[0].mxu0
      %v1141 = vadd.f32 %v1072, %v1140
      %v1142 = vpop.f32.mrb[0].mxu0
      %1143 = vdwg.mxu0
      %v1144 = vld [vmem:[%s17] sm:$0xff]
      %v1145 = vld [vmem:[%s17 + $0x8] sm:$0xff]
      %v1146 = vld [vmem:[%s17 + $0x10] sm:$0xff]
      %v1147 = vld [vmem:[%s17 + $0x18] sm:$0xff]
      %v1148 = vld [vmem:[%s19] sm:$0x1]
      %v1150 = vlaneseq
      %v1151 = vshrl.u32 %v1150, 7
      %v1152 = vsub.s32 0, %v1151
      %v1153 = vrot.slane %v1148, %v1152
      %1155 = vmatprep.subr.mxu0 0.0
      %1156 = vmatpush1.msra.mxu0 %v1144
      %1157 = vmatprep.subr.mxu0 0.0
      %1158 = vmatpush1.msra.mxu0 %v1145
      %1159 = vmatprep.subr.mxu0 0.0
      %1160 = vmatpush1.msra.mxu0 %v1146
      %1161 = vmatprep.subr.mxu0 0.0
      %1162 = vmatpush1.msra.mxu0 %v1147
      %1163 = vmatprep.subr.mxu0 0.0
      %1164 = vmatpush1.msra.mxu0 0.0
      %1165 = vmatprep.subr.mxu0 0.0
      %1166 = vmatpush1.msra.mxu0 0.0
      %1167 = vmatprep.subr.mxu0 0.0
      %1168 = vmatpush1.msra.mxu0 0.0
      %1169 = vmatprep.subr.mxu0 0.0
      %1170 = vmatpush1.msra.mxu0 0.0
      %1171 = vmatprep.subr.mxu0 0.0
      %1172 = vmatpush1.msra.mxu0 0.0
      %1173 = vmatprep.subr.mxu0 0.0
      %1174 = vmatpush1.msra.mxu0 0.0
      %1175 = vmatprep.subr.mxu0 0.0
      %1176 = vmatpush1.msra.mxu0 0.0
      %1177 = vmatprep.subr.mxu0 0.0
      %1178 = vmatpush1.msra.mxu0 0.0
      %1179 = vmatprep.subr.mxu0 0.0
      %1180 = vmatpush1.msra.mxu0 0.0
      %1181 = vmatprep.subr.mxu0 0.0
      %1182 = vmatpush1.msra.mxu0 0.0
      %1183 = vmatprep.subr.mxu0 0.0
      %1184 = vmatpush1.msra.mxu0 0.0
      %1185 = vmatprep.subr.mxu0 0.0
      %1186 = vmatpush1.msra.mxu0 0.0
      %1187 = vmatprep.subr.mxu0 0.0
      %1188 = vmatpush1.msra.mxu0 0.0
      %1189 = vmatprep.subr.mxu0 0.0
      %1190 = vmatpush1.msra.mxu0 0.0
      %1191 = vmatprep.subr.mxu0 0.0
      %1192 = vmatpush1.msra.mxu0 0.0
      %1193 = vmatprep.subr.mxu0 0.0
      %1194 = vmatpush1.msra.mxu0 0.0
      %1195 = vmatprep.subr.mxu0 0.0
      %1196 = vmatpush1.msra.mxu0 0.0
      %1197 = vmatprep.subr.mxu0 0.0
      %1198 = vmatpush1.msra.mxu0 0.0
      %1199 = vmatprep.subr.mxu0 0.0
      %1200 = vmatpush1.msra.mxu0 0.0
      %1201 = vmatprep.subr.mxu0 0.0
      %1202 = vmatpush1.msra.mxu0 0.0
      %1203 = vmatprep.subr.mxu0 0.0
      %1204 = vmatpush1.msra.mxu0 0.0
      %1205 = vmatprep.subr.mxu0 0.0
      %1206 = vmatpush1.msra.mxu0 0.0
      %1207 = vmatprep.subr.mxu0 0.0
      %1208 = vmatpush1.msra.mxu0 0.0
      %1209 = vmatprep.subr.mxu0 0.0
      %1210 = vmatpush1.msra.mxu0 0.0
      %1211 = vmatprep.subr.mxu0 0.0
      %1212 = vmatpush1.msra.mxu0 0.0
      %1213 = vmatprep.subr.mxu0 0.0
      %1214 = vmatpush1.msra.mxu0 0.0
      %1215 = vmatprep.subr.mxu0 0.0
      %1216 = vmatpush1.msra.mxu0 0.0
      %1217 = vmatprep.subr.mxu0 0.0
      %1218 = vmatpush1.msra.mxu0 0.0
      %1219 = vmatprep.mubr.f32.mxu0 0.0
      %1220 = vmatmul.mubr.f32.gmra.mrb[0].mxu0 %v991
      %v1221 = vpop.f32.mrb[0].mxu0
      %v1222 = vadd.f32 %v1153, %v1221
      %v1223 = vpop.f32.mrb[0].mxu0
      %1224 = vdwg.mxu0
      %vm1225 = vcmask 64512
      %v1227 = vsel %vm1225, %v1060, 0
      %v1230 = vsel %vm1225, %v1141, 0
      %1232 = vmatprep.subr.mxu0 0.0
      %1233 = vmatpush1.xpose.msra.mxu0 %v1230
      %1234 = vmatprep.subr.mxu0 0.0
      %1235 = vmatpush1.xpose.msra.mxu0 0.0
      %1236 = vmatprep.subr.mxu0 0.0
      %1237 = vmatpush1.xpose.msra.mxu0 0.0
      %1238 = vmatprep.subr.mxu0 0.0
      %1239 = vmatpush1.xpose.msra.mxu0 0.0
      %1240 = vmatprep.subr.mxu0 0.0
      %1241 = vmatpush1.xpose.msra.mxu0 0.0
      %1242 = vmatprep.subr.mxu0 0.0
      %1243 = vmatpush1.xpose.msra.mxu0 0.0
      %1244 = vmatprep.subr.mxu0 0.0
      %1245 = vmatpush1.xpose.msra.mxu0 0.0
      %1246 = vmatprep.subr.mxu0 0.0
      %1247 = vmatpush1.xpose.msra.mxu0 0.0
      %1248 = vmatprep.subr.mxu0 0.0
      %1249 = vmatpush1.xpose.msra.mxu0 0.0
      %1250 = vmatprep.subr.mxu0 0.0
      %1251 = vmatpush1.xpose.msra.mxu0 0.0
      %1252 = vmatprep.subr.mxu0 0.0
      %1253 = vmatpush1.xpose.msra.mxu0 0.0
      %1254 = vmatprep.subr.mxu0 0.0
      %1255 = vmatpush1.xpose.msra.mxu0 0.0
      %1256 = vmatprep.subr.mxu0 0.0
      %1257 = vmatpush1.xpose.msra.mxu0 0.0
      %1258 = vmatprep.subr.mxu0 0.0
      %1259 = vmatpush1.xpose.msra.mxu0 0.0
      %1260 = vmatprep.subr.mxu0 0.0
      %1261 = vmatpush1.xpose.msra.mxu0 0.0
      %1262 = vmatprep.subr.mxu0 0.0
      %1263 = vmatpush1.xpose.msra.mxu0 0.0
      %1264 = vmatprep.subr.mxu0 0.0
      %1265 = vmatpush1.xpose.msra.mxu0 0.0
      %1266 = vmatprep.subr.mxu0 0.0
      %1267 = vmatpush1.xpose.msra.mxu0 0.0
      %1268 = vmatprep.subr.mxu0 0.0
      %1269 = vmatpush1.xpose.msra.mxu0 0.0
      %1270 = vmatprep.subr.mxu0 0.0
      %1271 = vmatpush1.xpose.msra.mxu0 0.0
      %1272 = vmatprep.subr.mxu0 0.0
      %1273 = vmatpush1.xpose.msra.mxu0 0.0
      %1274 = vmatprep.subr.mxu0 0.0
      %1275 = vmatpush1.xpose.msra.mxu0 0.0
      %1276 = vmatprep.subr.mxu0 0.0
      %1277 = vmatpush1.xpose.msra.mxu0 0.0
      %1278 = vmatprep.subr.mxu0 0.0
      %1279 = vmatpush1.xpose.msra.mxu0 0.0
      %1280 = vmatprep.subr.mxu0 0.0
      %1281 = vmatpush1.xpose.msra.mxu0 0.0
      %1282 = vmatprep.subr.mxu0 0.0
      %1283 = vmatpush1.xpose.msra.mxu0 0.0
      %1284 = vmatprep.subr.mxu0 0.0
      %1285 = vmatpush1.xpose.msra.mxu0 0.0
      %1286 = vmatprep.subr.mxu0 0.0
      %1287 = vmatpush1.xpose.msra.mxu0 0.0
      %1288 = vmatprep.subr.mxu0 0.0
      %1289 = vmatpush1.xpose.msra.mxu0 0.0
      %1290 = vmatprep.subr.mxu0 0.0
      %1291 = vmatpush1.xpose.msra.mxu0 0.0
      %1292 = vmatprep.subr.mxu0 0.0
      %1293 = vmatpush1.xpose.msra.mxu0 0.0
      %1294 = vmatprep.subr.mxu0 0.0
      %1295 = vmatpush1.xpose.msra.mxu0 0.0
      %1296 = vmatprep.mubr.f32.mxu0 0.0
      %1297 = vmatmul.mubr.f32.gmra.mrb[0].mxu0 %v1227
      %v1298 = vpop.f32.mrb[0].mxu0
      %v1299 = vadd.f32 0.0, %v1298
      %v1300 = vpop.f32.mrb[0].mxu0
      %1301 = vdwg.mxu0
      %v1302 = vmul.f32 %v1299, 0.35355338
      %v1303 = vadd.f32 %v1302, %v976
      %v1304 = vsel %vm1225, %v1303, -inf
      %1305 = vmax.xlane.f32.xlu0 %v1304
      %v1306 = vpop.xlane.xlu0 %1305
      %v1307 = vsub.f32 %v1303, %v1306
      %v1308 = vmul.f32 %v1307, 1.442695
      %v1309 = vpow.pop %v1308
      %v1310 = vsel %vm1225, %v1309, 0.0
      %1311 = vadd.xlane.f32.xlu0 %v1310
      %v1312 = vpop.xlane.xlu0 %1311
      %v1313 = vrcp.pop %v1312
      %v1314 = vmul.f32 %v1309, %v1313
      %v1316 = vsel %vm1225, %v1314, 0
      %1318 = vmatprep.subr.mxu0 0.0
      %1319 = vmatpush1.msra.mxu0 %v1222
      %1320 = vmatprep.subr.mxu0 0.0
      %1321 = vmatpush1.msra.mxu0 0.0
      %1322 = vmatprep.subr.mxu0 0.0
      %1323 = vmatpush1.msra.mxu0 0.0
      %1324 = vmatprep.subr.mxu0 0.0
      %1325 = vmatpush1.msra.mxu0 0.0
      %1326 = vmatprep.subr.mxu0 0.0
      %1327 = vmatpush1.msra.mxu0 0.0
      %1328 = vmatprep.subr.mxu0 0.0
      %1329 = vmatpush1.msra.mxu0 0.0
      %1330 = vmatprep.subr.mxu0 0.0
      %1331 = vmatpush1.msra.mxu0 0.0
      %1332 = vmatprep.subr.mxu0 0.0
      %1333 = vmatpush1.msra.mxu0 0.0
      %1334 = vmatprep.subr.mxu0 0.0
      %1335 = vmatpush1.msra.mxu0 0.0
      %1336 = vmatprep.subr.mxu0 0.0
      %1337 = vmatpush1.msra.mxu0 0.0
      %1338 = vmatprep.subr.mxu0 0.0
      %1339 = vmatpush1.msra.mxu0 0.0
      %1340 = vmatprep.subr.mxu0 0.0
      %1341 = vmatpush1.msra.mxu0 0.0
      %1342 = vmatprep.subr.mxu0 0.0
      %1343 = vmatpush1.msra.mxu0 0.0
      %1344 = vmatprep.subr.mxu0 0.0
      %1345 = vmatpush1.msra.mxu0 0.0
      %1346 = vmatprep.subr.mxu0 0.0
      %1347 = vmatpush1.msra.mxu0 0.0
      %1348 = vmatprep.subr.mxu0 0.0
      %1349 = vmatpush1.msra.mxu0 0.0
      %1350 = vmatprep.subr.mxu0 0.0
      %1351 = vmatpush1.msra.mxu0 0.0
      %1352 = vmatprep.subr.mxu0 0.0
      %1353 = vmatpush1.msra.mxu0 0.0
      %1354 = vmatprep.subr.mxu0 0.0
      %1355 = vmatpush1.msra.mxu0 0.0
      %1356 = vmatprep.subr.mxu0 0.0
      %1357 = vmatpush1.msra.mxu0 0.0
      %1358 = vmatprep.subr.mxu0 0.0
      %1359 = vmatpush1.msra.mxu0 0.0
      %1360 = vmatprep.subr.mxu0 0.0
      %1361 = vmatpush1.msra.mxu0 0.0
      %1362 = vmatprep.subr.mxu0 0.0
      %1363 = vmatpush1.msra.mxu0 0.0
      %1364 = vmatprep.subr.mxu0 0.0
      %1365 = vmatpush1.msra.mxu0 0.0
      %1366 = vmatprep.subr.mxu0 0.0
      %1367 = vmatpush1.msra.mxu0 0.0
      %1368 = vmatprep.subr.mxu0 0.0
      %1369 = vmatpush1.msra.mxu0 0.0
      %1370 = vmatprep.subr.mxu0 0.0
      %1371 = vmatpush1.msra.mxu0 0.0
      %1372 = vmatprep.subr.mxu0 0.0
      %1373 = vmatpush1.msra.mxu0 0.0
      %1374 = vmatprep.subr.mxu0 0.0
      %1375 = vmatpush1.msra.mxu0 0.0
      %1376 = vmatprep.subr.mxu0 0.0
      %1377 = vmatpush1.msra.mxu0 0.0
      %1378 = vmatprep.subr.mxu0 0.0
      %1379 = vmatpush1.msra.mxu0 0.0
      %1380 = vmatprep.subr.mxu0 0.0
      %1381 = vmatpush1.msra.mxu0 0.0
      %1382 = vmatprep.mubr.f32.mxu0 0.0
      %1383 = vmatmul.mubr.f32.gmra.mrb[0].mxu0 %v1316
      %v1384 = vpop.f32.mrb[0].mxu0
      %v1385 = vadd.f32 0.0, %v1384
      %v1386 = vpop.f32.mrb[0].mxu0
      %1387 = vdwg.mxu0
      %1388 = vst.msk [vmem:[#allocation2] sm:$0xff] %vm1225, %v1385
      %1389 = vrot.lane.b32.xlu0 %v1060, 120
      %v1390 = vpop.permute.xlu0 %1389
      %1391 = vrot.lane.b32.xlu0 %v1141, 120
      %v1392 = vpop.permute.xlu0 %1391
      %v1393 = vsel %vm1225, %v1390, 0
      %v1395 = vsel %vm1225, %v1392, 0
      %1397 = vmatprep.subr.mxu0 0.0
      %1398 = vmatpush1.xpose.msra.mxu0 %v1395
      %1399 = vmatprep.subr.mxu0 0.0
      %1400 = vmatpush1.xpose.msra.mxu0 0.0
      %1401 = vmatprep.subr.mxu0 0.0
      %1402 = vmatpush1.xpose.msra.mxu0 0.0
      %1403 = vmatprep.subr.mxu0 0.0
      %1404 = vmatpush1.xpose.msra.mxu0 0.0
      %1405 = vmatprep.subr.mxu0 0.0
      %1406 = vmatpush1.xpose.msra.mxu0 0.0
      %1407 = vmatprep.subr.mxu0 0.0
      %1408 = vmatpush1.xpose.msra.mxu0 0.0
      %1409 = vmatprep.subr.mxu0 0.0
      %1410 = vmatpush1.xpose.msra.mxu0 0.0
      %1411 = vmatprep.subr.mxu0 0.0
      %1412 = vmatpush1.xpose.msra.mxu0 0.0
      %1413 = vmatprep.subr.mxu0 0.0
      %1414 = vmatpush1.xpose.msra.mxu0 0.0
      %1415 = vmatprep.subr.mxu0 0.0
      %1416 = vmatpush1.xpose.msra.mxu0 0.0
      %1417 = vmatprep.subr.mxu0 0.0
      %1418 = vmatpush1.xpose.msra.mxu0 0.0
      %1419 = vmatprep.subr.mxu0 0.0
      %1420 = vmatpush1.xpose.msra.mxu0 0.0
      %1421 = vmatprep.subr.mxu0 0.0
      %1422 = vmatpush1.xpose.msra.mxu0 0.0
      %1423 = vmatprep.subr.mxu0 0.0
      %1424 = vmatpush1.xpose.msra.mxu0 0.0
      %1425 = vmatprep.subr.mxu0 0.0
      %1426 = vmatpush1.xpose.msra.mxu0 0.0
      %1427 = vmatprep.subr.mxu0 0.0
      %1428 = vmatpush1.xpose.msra.mxu0 0.0
      %1429 = vmatprep.subr.mxu0 0.0
      %1430 = vmatpush1.xpose.msra.mxu0 0.0
      %1431 = vmatprep.subr.mxu0 0.0
      %1432 = vmatpush1.xpose.msra.mxu0 0.0
      %1433 = vmatprep.subr.mxu0 0.0
      %1434 = vmatpush1.xpose.msra.mxu0 0.0
      %1435 = vmatprep.subr.mxu0 0.0
      %1436 = vmatpush1.xpose.msra.mxu0 0.0
      %1437 = vmatprep.subr.mxu0 0.0
      %1438 = vmatpush1.xpose.msra.mxu0 0.0
      %1439 = vmatprep.subr.mxu0 0.0
      %1440 = vmatpush1.xpose.msra.mxu0 0.0
      %1441 = vmatprep.subr.mxu0 0.0
      %1442 = vmatpush1.xpose.msra.mxu0 0.0
      %1443 = vmatprep.subr.mxu0 0.0
      %1444 = vmatpush1.xpose.msra.mxu0 0.0
      %1445 = vmatprep.subr.mxu0 0.0
      %1446 = vmatpush1.xpose.msra.mxu0 0.0
      %1447 = vmatprep.subr.mxu0 0.0
      %1448 = vmatpush1.xpose.msra.mxu0 0.0
      %1449 = vmatprep.subr.mxu0 0.0
      %1450 = vmatpush1.xpose.msra.mxu0 0.0
      %1451 = vmatprep.subr.mxu0 0.0
      %1452 = vmatpush1.xpose.msra.mxu0 0.0
      %1453 = vmatprep.subr.mxu0 0.0
      %1454 = vmatpush1.xpose.msra.mxu0 0.0
      %1455 = vmatprep.subr.mxu0 0.0
      %1456 = vmatpush1.xpose.msra.mxu0 0.0
      %1457 = vmatprep.subr.mxu0 0.0
      %1458 = vmatpush1.xpose.msra.mxu0 0.0
      %1459 = vmatprep.subr.mxu0 0.0
      %1460 = vmatpush1.xpose.msra.mxu0 0.0
      %1461 = vmatprep.mubr.f32.mxu0 0.0
      %1462 = vmatmul.mubr.f32.gmra.mrb[0].mxu0 %v1393
      %v1463 = vpop.f32.mrb[0].mxu0
      %v1464 = vadd.f32 0.0, %v1463
      %v1465 = vpop.f32.mrb[0].mxu0
      %1466 = vdwg.mxu0
      %v1467 = vmul.f32 %v1464, 0.35355338
      %v1468 = vadd.f32 %v1467, %v976
      %v1469 = vsel %vm1225, %v1468, -inf
      %1470 = vmax.xlane.f32.xlu0 %v1469
      %v1471 = vpop.xlane.xlu0 %1470
      %v1472 = vsub.f32 %v1468, %v1471
      %v1473 = vmul.f32 %v1472, 1.442695
      %v1474 = vpow.pop %v1473
      %v1475 = vsel %vm1225, %v1474, 0.0
      %1476 = vadd.xlane.f32.xlu0 %v1475
      %v1477 = vpop.xlane.xlu0 %1476
      %v1478 = vrcp.pop %v1477
      %v1479 = vmul.f32 %v1474, %v1478
      %1481 = vrot.lane.b32.xlu0 %v1222, 120
      %v1482 = vpop.permute.xlu0 %1481
      %v1485 = vsel %vm1225, %v1479, 0
      %1487 = vmatprep.subr.mxu0 0.0
      %1488 = vmatpush1.msra.mxu0 %v1482
      %1489 = vmatprep.subr.mxu0 0.0
      %1490 = vmatpush1.msra.mxu0 0.0
      %1491 = vmatprep.subr.mxu0 0.0
      %1492 = vmatpush1.msra.mxu0 0.0
      %1493 = vmatprep.subr.mxu0 0.0
      %1494 = vmatpush1.msra.mxu0 0.0
      %1495 = vmatprep.subr.mxu0 0.0
      %1496 = vmatpush1.msra.mxu0 0.0
      %1497 = vmatprep.subr.mxu0 0.0
      %1498 = vmatpush1.msra.mxu0 0.0
      %1499 = vmatprep.subr.mxu0 0.0
      %1500 = vmatpush1.msra.mxu0 0.0
      %1501 = vmatprep.subr.mxu0 0.0
      %1502 = vmatpush1.msra.mxu0 0.0
      %1503 = vmatprep.subr.mxu0 0.0
      %1504 = vmatpush1.msra.mxu0 0.0
      %1505 = vmatprep.subr.mxu0 0.0
      %1506 = vmatpush1.msra.mxu0 0.0
      %1507 = vmatprep.subr.mxu0 0.0
      %1508 = vmatpush1.msra.mxu0 0.0
      %1509 = vmatprep.subr.mxu0 0.0
      %1510 = vmatpush1.msra.mxu0 0.0
      %1511 = vmatprep.subr.mxu0 0.0
      %1512 = vmatpush1.msra.mxu0 0.0
      %1513 = vmatprep.subr.mxu0 0.0
      %1514 = vmatpush1.msra.mxu0 0.0
      %1515 = vmatprep.subr.mxu0 0.0
      %1516 = vmatpush1.msra.mxu0 0.0
      %1517 = vmatprep.subr.mxu0 0.0
      %1518 = vmatpush1.msra.mxu0 0.0
      %1519 = vmatprep.subr.mxu0 0.0
      %1520 = vmatpush1.msra.mxu0 0.0
      %1521 = vmatprep.subr.mxu0 0.0
      %1522 = vmatpush1.msra.mxu0 0.0
      %1523 = vmatprep.subr.mxu0 0.0
      %1524 = vmatpush1.msra.mxu0 0.0
      %1525 = vmatprep.subr.mxu0 0.0
      %1526 = vmatpush1.msra.mxu0 0.0
      %1527 = vmatprep.subr.mxu0 0.0
      %1528 = vmatpush1.msra.mxu0 0.0
      %1529 = vmatprep.subr.mxu0 0.0
      %1530 = vmatpush1.msra.mxu0 0.0
      %1531 = vmatprep.subr.mxu0 0.0
      %1532 = vmatpush1.msra.mxu0 0.0
      %1533 = vmatprep.subr.mxu0 0.0
      %1534 = vmatpush1.msra.mxu0 0.0
      %1535 = vmatprep.subr.mxu0 0.0
      %1536 = vmatpush1.msra.mxu0 0.0
      %1537 = vmatprep.subr.mxu0 0.0
      %1538 = vmatpush1.msra.mxu0 0.0
      %1539 = vmatprep.subr.mxu0 0.0
      %1540 = vmatpush1.msra.mxu0 0.0
      %1541 = vmatprep.subr.mxu0 0.0
      %1542 = vmatpush1.msra.mxu0 0.0
      %1543 = vmatprep.subr.mxu0 0.0
      %1544 = vmatpush1.msra.mxu0 0.0
      %1545 = vmatprep.subr.mxu0 0.0
      %1546 = vmatpush1.msra.mxu0 0.0
      %1547 = vmatprep.subr.mxu0 0.0
      %1548 = vmatpush1.msra.mxu0 0.0
      %1549 = vmatprep.subr.mxu0 0.0
      %1550 = vmatpush1.msra.mxu0 0.0
      %1551 = vmatprep.mubr.f32.mxu0 0.0
      %1552 = vmatmul.mubr.f32.gmra.mrb[0].mxu0 %v1485
      %v1553 = vpop.f32.mrb[0].mxu0
      %v1554 = vadd.f32 0.0, %v1553
      %v1555 = vpop.f32.mrb[0].mxu0
      %1556 = vdwg.mxu0
      %1558 = vrot.lane.b32.xlu0 %v1554, 8
      %v1559 = vpop.permute.xlu0 %1558
      %vm1561 = vcmask 130112
      %1562 = vst.msk [vmem:[#allocation2] sm:$0xff] %vm1561, %v1559
      %1563 = vrot.lane.b32.xlu0 %v1060, 112
      %v1564 = vpop.permute.xlu0 %1563
      %1565 = vrot.lane.b32.xlu0 %v1141, 112
      %v1566 = vpop.permute.xlu0 %1565
      %v1567 = vsel %vm1225, %v1564, 0
      %v1569 = vsel %vm1225, %v1566, 0
      %1571 = vmatprep.subr.mxu0 0.0
      %1572 = vmatpush1.xpose.msra.mxu0 %v1569
      %1573 = vmatprep.subr.mxu0 0.0
      %1574 = vmatpush1.xpose.msra.mxu0 0.0
      %1575 = vmatprep.subr.mxu0 0.0
      %1576 = vmatpush1.xpose.msra.mxu0 0.0
      %1577 = vmatprep.subr.mxu0 0.0
      %1578 = vmatpush1.xpose.msra.mxu0 0.0
      %1579 = vmatprep.subr.mxu0 0.0
      %1580 = vmatpush1.xpose.msra.mxu0 0.0
      %1581 = vmatprep.subr.mxu0 0.0
      %1582 = vmatpush1.xpose.msra.mxu0 0.0
      %1583 = vmatprep.subr.mxu0 0.0
      %1584 = vmatpush1.xpose.msra.mxu0 0.0
      %1585 = vmatprep.subr.mxu0 0.0
      %1586 = vmatpush1.xpose.msra.mxu0 0.0
      %1587 = vmatprep.subr.mxu0 0.0
      %1588 = vmatpush1.xpose.msra.mxu0 0.0
      %1589 = vmatprep.subr.mxu0 0.0
      %1590 = vmatpush1.xpose.msra.mxu0 0.0
      %1591 = vmatprep.subr.mxu0 0.0
      %1592 = vmatpush1.xpose.msra.mxu0 0.0
      %1593 = vmatprep.subr.mxu0 0.0
      %1594 = vmatpush1.xpose.msra.mxu0 0.0
      %1595 = vmatprep.subr.mxu0 0.0
      %1596 = vmatpush1.xpose.msra.mxu0 0.0
      %1597 = vmatprep.subr.mxu0 0.0
      %1598 = vmatpush1.xpose.msra.mxu0 0.0
      %1599 = vmatprep.subr.mxu0 0.0
      %1600 = vmatpush1.xpose.msra.mxu0 0.0
      %1601 = vmatprep.subr.mxu0 0.0
      %1602 = vmatpush1.xpose.msra.mxu0 0.0
      %1603 = vmatprep.subr.mxu0 0.0
      %1604 = vmatpush1.xpose.msra.mxu0 0.0
      %1605 = vmatprep.subr.mxu0 0.0
      %1606 = vmatpush1.xpose.msra.mxu0 0.0
      %1607 = vmatprep.subr.mxu0 0.0
      %1608 = vmatpush1.xpose.msra.mxu0 0.0
      %1609 = vmatprep.subr.mxu0 0.0
      %1610 = vmatpush1.xpose.msra.mxu0 0.0
      %1611 = vmatprep.subr.mxu0 0.0
      %1612 = vmatpush1.xpose.msra.mxu0 0.0
      %1613 = vmatprep.subr.mxu0 0.0
      %1614 = vmatpush1.xpose.msra.mxu0 0.0
      %1615 = vmatprep.subr.mxu0 0.0
      %1616 = vmatpush1.xpose.msra.mxu0 0.0
      %1617 = vmatprep.subr.mxu0 0.0
      %1618 = vmatpush1.xpose.msra.mxu0 0.0
      %1619 = vmatprep.subr.mxu0 0.0
      %1620 = vmatpush1.xpose.msra.mxu0 0.0
      %1621 = vmatprep.subr.mxu0 0.0
      %1622 = vmatpush1.xpose.msra.mxu0 0.0
      %1623 = vmatprep.subr.mxu0 0.0
      %1624 = vmatpush1.xpose.msra.mxu0 0.0
      %1625 = vmatprep.subr.mxu0 0.0
      %1626 = vmatpush1.xpose.msra.mxu0 0.0
      %1627 = vmatprep.subr.mxu0 0.0
      %1628 = vmatpush1.xpose.msra.mxu0 0.0
      %1629 = vmatprep.subr.mxu0 0.0
      %1630 = vmatpush1.xpose.msra.mxu0 0.0
      %1631 = vmatprep.subr.mxu0 0.0
      %1632 = vmatpush1.xpose.msra.mxu0 0.0
      %1633 = vmatprep.subr.mxu0 0.0
      %1634 = vmatpush1.xpose.msra.mxu0 0.0
      %1635 = vmatprep.mubr.f32.mxu0 0.0
      %1636 = vmatmul.mubr.f32.gmra.mrb[0].mxu0 %v1567
      %v1637 = vpop.f32.mrb[0].mxu0
      %v1638 = vadd.f32 0.0, %v1637
      %v1639 = vpop.f32.mrb[0].mxu0
      %1640 = vdwg.mxu0
      %v1641 = vmul.f32 %v1638, 0.35355338
      %v1642 = vadd.f32 %v1641, %v976
      %v1643 = vsel %vm1225, %v1642, -inf
      %1644 = vmax.xlane.f32.xlu0 %v1643
      %v1645 = vpop.xlane.xlu0 %1644
      %v1646 = vsub.f32 %v1642, %v1645
      %v1647 = vmul.f32 %v1646, 1.442695
      %v1648 = vpow.pop %v1647
      %v1649 = vsel %vm1225, %v1648, 0.0
      %1650 = vadd.xlane.f32.xlu0 %v1649
      %v1651 = vpop.xlane.xlu0 %1650
      %v1652 = vrcp.pop %v1651
      %v1653 = vmul.f32 %v1648, %v1652
      %1654 = vrot.lane.b32.xlu0 %v1222, 112
      %v1655 = vpop.permute.xlu0 %1654
      %v1658 = vsel %vm1225, %v1653, 0
      %1660 = vmatprep.subr.mxu0 0.0
      %1661 = vmatpush1.msra.mxu0 %v1655
      %1662 = vmatprep.subr.mxu0 0.0
      %1663 = vmatpush1.msra.mxu0 0.0
      %1664 = vmatprep.subr.mxu0 0.0
      %1665 = vmatpush1.msra.mxu0 0.0
      %1666 = vmatprep.subr.mxu0 0.0
      %1667 = vmatpush1.msra.mxu0 0.0
      %1668 = vmatprep.subr.mxu0 0.0
      %1669 = vmatpush1.msra.mxu0 0.0
      %1670 = vmatprep.subr.mxu0 0.0
      %1671 = vmatpush1.msra.mxu0 0.0
      %1672 = vmatprep.subr.mxu0 0.0
      %1673 = vmatpush1.msra.mxu0 0.0
      %1674 = vmatprep.subr.mxu0 0.0
      %1675 = vmatpush1.msra.mxu0 0.0
      %1676 = vmatprep.subr.mxu0 0.0
      %1677 = vmatpush1.msra.mxu0 0.0
      %1678 = vmatprep.subr.mxu0 0.0
      %1679 = vmatpush1.msra.mxu0 0.0
      %1680 = vmatprep.subr.mxu0 0.0
      %1681 = vmatpush1.msra.mxu0 0.0
      %1682 = vmatprep.subr.mxu0 0.0
      %1683 = vmatpush1.msra.mxu0 0.0
      %1684 = vmatprep.subr.mxu0 0.0
      %1685 = vmatpush1.msra.mxu0 0.0
      %1686 = vmatprep.subr.mxu0 0.0
      %1687 = vmatpush1.msra.mxu0 0.0
      %1688 = vmatprep.subr.mxu0 0.0
      %1689 = vmatpush1.msra.mxu0 0.0
      %1690 = vmatprep.subr.mxu0 0.0
      %1691 = vmatpush1.msra.mxu0 0.0
      %1692 = vmatprep.subr.mxu0 0.0
      %1693 = vmatpush1.msra.mxu0 0.0
      %1694 = vmatprep.subr.mxu0 0.0
      %1695 = vmatpush1.msra.mxu0 0.0
      %1696 = vmatprep.subr.mxu0 0.0
      %1697 = vmatpush1.msra.mxu0 0.0
      %1698 = vmatprep.subr.mxu0 0.0
      %1699 = vmatpush1.msra.mxu0 0.0
      %1700 = vmatprep.subr.mxu0 0.0
      %1701 = vmatpush1.msra.mxu0 0.0
      %1702 = vmatprep.subr.mxu0 0.0
      %1703 = vmatpush1.msra.mxu0 0.0
      %1704 = vmatprep.subr.mxu0 0.0
      %1705 = vmatpush1.msra.mxu0 0.0
      %1706 = vmatprep.subr.mxu0 0.0
      %1707 = vmatpush1.msra.mxu0 0.0
      %1708 = vmatprep.subr.mxu0 0.0
      %1709 = vmatpush1.msra.mxu0 0.0
      %1710 = vmatprep.subr.mxu0 0.0
      %1711 = vmatpush1.msra.mxu0 0.0
      %1712 = vmatprep.subr.mxu0 0.0
      %1713 = vmatpush1.msra.mxu0 0.0
      %1714 = vmatprep.subr.mxu0 0.0
      %1715 = vmatpush1.msra.mxu0 0.0
      %1716 = vmatprep.subr.mxu0 0.0
      %1717 = vmatpush1.msra.mxu0 0.0
      %1718 = vmatprep.subr.mxu0 0.0
      %1719 = vmatpush1.msra.mxu0 0.0
      %1720 = vmatprep.subr.mxu0 0.0
      %1721 = vmatpush1.msra.mxu0 0.0
      %1722 = vmatprep.subr.mxu0 0.0
      %1723 = vmatpush1.msra.mxu0 0.0
      %1724 = vmatprep.mubr.f32.mxu0 0.0
      %1725 = vmatmul.mubr.f32.gmra.mrb[0].mxu0 %v1658
      %v1726 = vpop.f32.mrb[0].mxu0
      %v1727 = vadd.f32 0.0, %v1726
      %v1728 = vpop.f32.mrb[0].mxu0
      %1729 = vdwg.mxu0
      %1731 = vrot.lane.b32.xlu0 %v1727, 16
      %v1732 = vpop.permute.xlu0 %1731
      %vm1734 = vcmask 195712
      %1735 = vst.msk [vmem:[#allocation2] sm:$0xff] %vm1734, %v1732
      %1736 = vrot.lane.b32.xlu0 %v1060, 104
      %v1737 = vpop.permute.xlu0 %1736
      %1738 = vrot.lane.b32.xlu0 %v1141, 104
      %v1739 = vpop.permute.xlu0 %1738
      %v1740 = vsel %vm1225, %v1737, 0
      %v1742 = vsel %vm1225, %v1739, 0
      %1744 = vmatprep.subr.mxu0 0.0
      %1745 = vmatpush1.xpose.msra.mxu0 %v1742
      %1746 = vmatprep.subr.mxu0 0.0
      %1747 = vmatpush1.xpose.msra.mxu0 0.0
      %1748 = vmatprep.subr.mxu0 0.0
      %1749 = vmatpush1.xpose.msra.mxu0 0.0
      %1750 = vmatprep.subr.mxu0 0.0
      %1751 = vmatpush1.xpose.msra.mxu0 0.0
      %1752 = vmatprep.subr.mxu0 0.0
      %1753 = vmatpush1.xpose.msra.mxu0 0.0
      %1754 = vmatprep.subr.mxu0 0.0
      %1755 = vmatpush1.xpose.msra.mxu0 0.0
      %1756 = vmatprep.subr.mxu0 0.0
      %1757 = vmatpush1.xpose.msra.mxu0 0.0
      %1758 = vmatprep.subr.mxu0 0.0
      %1759 = vmatpush1.xpose.msra.mxu0 0.0
      %1760 = vmatprep.subr.mxu0 0.0
      %1761 = vmatpush1.xpose.msra.mxu0 0.0
      %1762 = vmatprep.subr.mxu0 0.0
      %1763 = vmatpush1.xpose.msra.mxu0 0.0
      %1764 = vmatprep.subr.mxu0 0.0
      %1765 = vmatpush1.xpose.msra.mxu0 0.0
      %1766 = vmatprep.subr.mxu0 0.0
      %1767 = vmatpush1.xpose.msra.mxu0 0.0
      %1768 = vmatprep.subr.mxu0 0.0
      %1769 = vmatpush1.xpose.msra.mxu0 0.0
      %1770 = vmatprep.subr.mxu0 0.0
      %1771 = vmatpush1.xpose.msra.mxu0 0.0
      %1772 = vmatprep.subr.mxu0 0.0
      %1773 = vmatpush1.xpose.msra.mxu0 0.0
      %1774 = vmatprep.subr.mxu0 0.0
      %1775 = vmatpush1.xpose.msra.mxu0 0.0
      %1776 = vmatprep.subr.mxu0 0.0
      %1777 = vmatpush1.xpose.msra.mxu0 0.0
      %1778 = vmatprep.subr.mxu0 0.0
      %1779 = vmatpush1.xpose.msra.mxu0 0.0
      %1780 = vmatprep.subr.mxu0 0.0
      %1781 = vmatpush1.xpose.msra.mxu0 0.0
      %1782 = vmatprep.subr.mxu0 0.0
      %1783 = vmatpush1.xpose.msra.mxu0 0.0
      %1784 = vmatprep.subr.mxu0 0.0
      %1785 = vmatpush1.xpose.msra.mxu0 0.0
      %1786 = vmatprep.subr.mxu0 0.0
      %1787 = vmatpush1.xpose.msra.mxu0 0.0
      %1788 = vmatprep.subr.mxu0 0.0
      %1789 = vmatpush1.xpose.msra.mxu0 0.0
      %1790 = vmatprep.subr.mxu0 0.0
      %1791 = vmatpush1.xpose.msra.mxu0 0.0
      %1792 = vmatprep.subr.mxu0 0.0
      %1793 = vmatpush1.xpose.msra.mxu0 0.0
      %1794 = vmatprep.subr.mxu0 0.0
      %1795 = vmatpush1.xpose.msra.mxu0 0.0
      %1796 = vmatprep.subr.mxu0 0.0
      %1797 = vmatpush1.xpose.msra.mxu0 0.0
      %1798 = vmatprep.subr.mxu0 0.0
      %1799 = vmatpush1.xpose.msra.mxu0 0.0
      %1800 = vmatprep.subr.mxu0 0.0
      %1801 = vmatpush1.xpose.msra.mxu0 0.0
      %1802 = vmatprep.subr.mxu0 0.0
      %1803 = vmatpush1.xpose.msra.mxu0 0.0
      %1804 = vmatprep.subr.mxu0 0.0
      %1805 = vmatpush1.xpose.msra.mxu0 0.0
      %1806 = vmatprep.subr.mxu0 0.0
      %1807 = vmatpush1.xpose.msra.mxu0 0.0
      %1808 = vmatprep.mubr.f32.mxu0 0.0
      %1809 = vmatmul.mubr.f32.gmra.mrb[0].mxu0 %v1740
      %v1810 = vpop.f32.mrb[0].mxu0
      %v1811 = vadd.f32 0.0, %v1810
      %v1812 = vpop.f32.mrb[0].mxu0
      %1813 = vdwg.mxu0
      %v1814 = vmul.f32 %v1811, 0.35355338
      %v1815 = vadd.f32 %v1814, %v976
      %v1816 = vsel %vm1225, %v1815, -inf
      %1817 = vmax.xlane.f32.xlu0 %v1816
      %v1818 = vpop.xlane.xlu0 %1817
      %v1819 = vsub.f32 %v1815, %v1818
      %v1820 = vmul.f32 %v1819, 1.442695
      %v1821 = vpow.pop %v1820
      %v1822 = vsel %vm1225, %v1821, 0.0
      %1823 = vadd.xlane.f32.xlu0 %v1822
      %v1824 = vpop.xlane.xlu0 %1823
      %v1825 = vrcp.pop %v1824
      %v1826 = vmul.f32 %v1821, %v1825
      %1827 = vrot.lane.b32.xlu0 %v1222, 104
      %v1828 = vpop.permute.xlu0 %1827
      %v1831 = vsel %vm1225, %v1826, 0
      %1833 = vmatprep.subr.mxu0 0.0
      %1834 = vmatpush1.msra.mxu0 %v1828
      %1835 = vmatprep.subr.mxu0 0.0
      %1836 = vmatpush1.msra.mxu0 0.0
      %1837 = vmatprep.subr.mxu0 0.0
      %1838 = vmatpush1.msra.mxu0 0.0
      %1839 = vmatprep.subr.mxu0 0.0
      %1840 = vmatpush1.msra.mxu0 0.0
      %1841 = vmatprep.subr.mxu0 0.0
      %1842 = vmatpush1.msra.mxu0 0.0
      %1843 = vmatprep.subr.mxu0 0.0
      %1844 = vmatpush1.msra.mxu0 0.0
      %1845 = vmatprep.subr.mxu0 0.0
      %1846 = vmatpush1.msra.mxu0 0.0
      %1847 = vmatprep.subr.mxu0 0.0
      %1848 = vmatpush1.msra.mxu0 0.0
      %1849 = vmatprep.subr.mxu0 0.0
      %1850 = vmatpush1.msra.mxu0 0.0
      %1851 = vmatprep.subr.mxu0 0.0
      %1852 = vmatpush1.msra.mxu0 0.0
      %1853 = vmatprep.subr.mxu0 0.0
      %1854 = vmatpush1.msra.mxu0 0.0
      %1855 = vmatprep.subr.mxu0 0.0
      %1856 = vmatpush1.msra.mxu0 0.0
      %1857 = vmatprep.subr.mxu0 0.0
      %1858 = vmatpush1.msra.mxu0 0.0
      %1859 = vmatprep.subr.mxu0 0.0
      %1860 = vmatpush1.msra.mxu0 0.0
      %1861 = vmatprep.subr.mxu0 0.0
      %1862 = vmatpush1.msra.mxu0 0.0
      %1863 = vmatprep.subr.mxu0 0.0
      %1864 = vmatpush1.msra.mxu0 0.0
      %1865 = vmatprep.subr.mxu0 0.0
      %1866 = vmatpush1.msra.mxu0 0.0
      %1867 = vmatprep.subr.mxu0 0.0
      %1868 = vmatpush1.msra.mxu0 0.0
      %1869 = vmatprep.subr.mxu0 0.0
      %1870 = vmatpush1.msra.mxu0 0.0
      %1871 = vmatprep.subr.mxu0 0.0
      %1872 = vmatpush1.msra.mxu0 0.0
      %1873 = vmatprep.subr.mxu0 0.0
      %1874 = vmatpush1.msra.mxu0 0.0
      %1875 = vmatprep.subr.mxu0 0.0
      %1876 = vmatpush1.msra.mxu0 0.0
      %1877 = vmatprep.subr.mxu0 0.0
      %1878 = vmatpush1.msra.mxu0 0.0
      %1879 = vmatprep.subr.mxu0 0.0
      %1880 = vmatpush1.msra.mxu0 0.0
      %1881 = vmatprep.subr.mxu0 0.0
      %1882 = vmatpush1.msra.mxu0 0.0
      %1883 = vmatprep.subr.mxu0 0.0
      %1884 = vmatpush1.msra.mxu0 0.0
      %1885 = vmatprep.subr.mxu0 0.0
      %1886 = vmatpush1.msra.mxu0 0.0
      %1887 = vmatprep.subr.mxu0 0.0
      %1888 = vmatpush1.msra.mxu0 0.0
      %1889 = vmatprep.subr.mxu0 0.0
      %1890 = vmatpush1.msra.mxu0 0.0
      %1891 = vmatprep.subr.mxu0 0.0
      %1892 = vmatpush1.msra.mxu0 0.0
      %1893 = vmatprep.subr.mxu0 0.0
      %1894 = vmatpush1.msra.mxu0 0.0
      %1895 = vmatprep.subr.mxu0 0.0
      %1896 = vmatpush1.msra.mxu0 0.0
      %1897 = vmatprep.mubr.f32.mxu0 0.0
      %1898 = vmatmul.mubr.f32.gmra.mrb[0].mxu0 %v1831
      %v1899 = vpop.f32.mrb[0].mxu0
      %v1900 = vadd.f32 0.0, %v1899
      %v1901 = vpop.f32.mrb[0].mxu0
      %1902 = vdwg.mxu0
      %1904 = vrot.lane.b32.xlu0 %v1900, 24
      %v1905 = vpop.permute.xlu0 %1904
      %vm1907 = vcmask 261312
      %1908 = vst.msk [vmem:[#allocation2] sm:$0xff] %vm1907, %v1905
      %v1909 = vld [vmem:[#allocation2] sm:$0xff]
      %v1910 = vld [vmem:[%s21] sm:$0xff]
      %v1911 = vld [vmem:[%s21 + $0x8] sm:$0xff]
      %v1912 = vld [vmem:[%s21 + $0x10] sm:$0xff]
      %v1913 = vld [vmem:[%s21 + $0x18] sm:$0xff]
      %v1914 = vld [vmem:[%s23] sm:$0x1]
      %v1916 = vlaneseq
      %v1917 = vshrl.u32 %v1916, 7
      %v1918 = vsub.s32 0, %v1917
      %v1919 = vrot.slane %v1914, %v1918
      %v1922 = vsel %vm989, %v1909, 0
      %1924 = vmatprep.subr.mxu0 0.0
      %1925 = vmatpush1.msra.mxu0 %v1910
      %1926 = vmatprep.subr.mxu0 0.0
      %1927 = vmatpush1.msra.mxu0 %v1911
      %1928 = vmatprep.subr.mxu0 0.0
      %1929 = vmatpush1.msra.mxu0 %v1912
      %1930 = vmatprep.subr.mxu0 0.0
      %1931 = vmatpush1.msra.mxu0 %v1913
      %1932 = vmatprep.subr.mxu0 0.0
      %1933 = vmatpush1.msra.mxu0 0.0
      %1934 = vmatprep.subr.mxu0 0.0
      %1935 = vmatpush1.msra.mxu0 0.0
      %1936 = vmatprep.subr.mxu0 0.0
      %1937 = vmatpush1.msra.mxu0 0.0
      %1938 = vmatprep.subr.mxu0 0.0
      %1939 = vmatpush1.msra.mxu0 0.0
      %1940 = vmatprep.subr.mxu0 0.0
      %1941 = vmatpush1.msra.mxu0 0.0
      %1942 = vmatprep.subr.mxu0 0.0
      %1943 = vmatpush1.msra.mxu0 0.0
      %1944 = vmatprep.subr.mxu0 0.0
      %1945 = vmatpush1.msra.mxu0 0.0
      %1946 = vmatprep.subr.mxu0 0.0
      %1947 = vmatpush1.msra.mxu0 0.0
      %1948 = vmatprep.subr.mxu0 0.0
      %1949 = vmatpush1.msra.mxu0 0.0
      %1950 = vmatprep.subr.mxu0 0.0
      %1951 = vmatpush1.msra.mxu0 0.0
      %1952 = vmatprep.subr.mxu0 0.0
      %1953 = vmatpush1.msra.mxu0 0.0
      %1954 = vmatprep.subr.mxu0 0.0
      %1955 = vmatpush1.msra.mxu0 0.0
      %1956 = vmatprep.subr.mxu0 0.0
      %1957 = vmatpush1.msra.mxu0 0.0
      %1958 = vmatprep.subr.mxu0 0.0
      %1959 = vmatpush1.msra.mxu0 0.0
      %1960 = vmatprep.subr.mxu0 0.0
      %1961 = vmatpush1.msra.mxu0 0.0
      %1962 = vmatprep.subr.mxu0 0.0
      %1963 = vmatpush1.msra.mxu0 0.0
      %1964 = vmatprep.subr.mxu0 0.0
      %1965 = vmatpush1.msra.mxu0 0.0
      %1966 = vmatprep.subr.mxu0 0.0
      %1967 = vmatpush1.msra.mxu0 0.0
      %1968 = vmatprep.subr.mxu0 0.0
      %1969 = vmatpush1.msra.mxu0 0.0
      %1970 = vmatprep.subr.mxu0 0.0
      %1971 = vmatpush1.msra.mxu0 0.0
      %1972 = vmatprep.subr.mxu0 0.0
      %1973 = vmatpush1.msra.mxu0 0.0
      %1974 = vmatprep.subr.mxu0 0.0
      %1975 = vmatpush1.msra.mxu0 0.0
      %1976 = vmatprep.subr.mxu0 0.0
      %1977 = vmatpush1.msra.mxu0 0.0
      %1978 = vmatprep.subr.mxu0 0.0
      %1979 = vmatpush1.msra.mxu0 0.0
      %1980 = vmatprep.subr.mxu0 0.0
      %1981 = vmatpush1.msra.mxu0 0.0
      %1982 = vmatprep.subr.mxu0 0.0
      %1983 = vmatpush1.msra.mxu0 0.0
      %1984 = vmatprep.subr.mxu0 0.0
      %1985 = vmatpush1.msra.mxu0 0.0
      %1986 = vmatprep.subr.mxu0 0.0
      %1987 = vmatpush1.msra.mxu0 0.0
      %1988 = vmatprep.mubr.f32.mxu0 0.0
      %1989 = vmatmul.mubr.f32.gmra.mrb[0].mxu0 %v1922
      %v1990 = vpop.f32.mrb[0].mxu0
      %v1991 = vadd.f32 %v1919, %v1990
      %v1992 = vpop.f32.mrb[0].mxu0
      %1993 = vdwg.mxu0
      %v1994 = vadd.f32 %v974, %v1991
      %v1995 = vsel %vm989, %v1994, 0.0
      %1996 = vadd.xlane.f32.xlu0 %v1995
      %v1997 = vpop.xlane.xlu0 %1996
      %v1998 = vrcp.pop 32.0
      %v1999 = vmul.f32 %v1997, %v1998
      %v2000 = vsub.f32 %v1994, %v1999
      %v2001 = vmul.f32 %v2000, %v2000
      %v2002 = vsel %vm989, %v2001, 0.0
      %2003 = vadd.xlane.f32.xlu0 %v2002
      %v2004 = vpop.xlane.xlu0 %2003
      %v2005 = vmul.f32 %v2004, %v1998
      %v2006 = vadd.f32 %v2005, 1e-05
      %v2007 = vrsqrt.pop %v2006
      %v2008 = vmul.f32 %v2000, %v2007
      %v2009 = vld [vmem:[%s49] sm:$0x1]
      %v2011 = vlaneseq
      %v2012 = vshrl.u32 %v2011, 7
      %v2013 = vsub.s32 0, %v2012
      %v2014 = vrot.slane %v2009, %v2013
      %v2016 = vmul.f32 %v2008, %v2014
      %v2017 = vld [vmem:[%s51] sm:$0x1]
      %v2019 = vlaneseq
      %v2020 = vshrl.u32 %v2019, 7
      %v2021 = vsub.s32 0, %v2020
      %v2022 = vrot.slane %v2017, %v2021
      %v2024 = vadd.f32 %v2016, %v2022
      %v2025 = vld [vmem:[%s25] sm:$0xff]
      %v2026 = vld [vmem:[%s25 + $0x8] sm:$0xff]
      %v2027 = vld [vmem:[%s25 + $0x10] sm:$0xff]
      %v2028 = vld [vmem:[%s25 + $0x18] sm:$0xff]
      %v2029 = vld [vmem:[%s27] sm:$0x1]
      %v2031 = vlaneseq
      %v2032 = vshrl.u32 %v2031, 7
      %v2033 = vsub.s32 0, %v2032
      %v2034 = vrot.slane %v2029, %v2033
      %v2037 = vsel %vm989, %v2024, 0
      %2039 = vmatprep.subr.mxu0 0.0
      %2040 = vmatpush1.msra.mxu0 %v2025
      %2041 = vmatprep.subr.mxu0 0.0
      %2042 = vmatpush1.msra.mxu0 %v2026
      %2043 = vmatprep.subr.mxu0 0.0
      %2044 = vmatpush1.msra.mxu0 %v2027
      %2045 = vmatprep.subr.mxu0 0.0
      %2046 = vmatpush1.msra.mxu0 %v2028
      %2047 = vmatprep.subr.mxu0 0.0
      %2048 = vmatpush1.msra.mxu0 0.0
      %2049 = vmatprep.subr.mxu0 0.0
      %2050 = vmatpush1.msra.mxu0 0.0
      %2051 = vmatprep.subr.mxu0 0.0
      %2052 = vmatpush1.msra.mxu0 0.0
      %2053 = vmatprep.subr.mxu0 0.0
      %2054 = vmatpush1.msra.mxu0 0.0
      %2055 = vmatprep.subr.mxu0 0.0
      %2056 = vmatpush1.msra.mxu0 0.0
      %2057 = vmatprep.subr.mxu0 0.0
      %2058 = vmatpush1.msra.mxu0 0.0
      %2059 = vmatprep.subr.mxu0 0.0
      %2060 = vmatpush1.msra.mxu0 0.0
      %2061 = vmatprep.subr.mxu0 0.0
      %2062 = vmatpush1.msra.mxu0 0.0
      %2063 = vmatprep.subr.mxu0 0.0
      %2064 = vmatpush1.msra.mxu0 0.0
      %2065 = vmatprep.subr.mxu0 0.0
      %2066 = vmatpush1.msra.mxu0 0.0
      %2067 = vmatprep.subr.mxu0 0.0
      %2068 = vmatpush1.msra.mxu0 0.0
      %2069 = vmatprep.subr.mxu0 0.0
      %2070 = vmatpush1.msra.mxu0 0.0
      %2071 = vmatprep.subr.mxu0 0.0
      %2072 = vmatpush1.msra.mxu0 0.0
      %2073 = vmatprep.subr.mxu0 0.0
      %2074 = vmatpush1.msra.mxu0 0.0
      %2075 = vmatprep.subr.mxu0 0.0
      %2076 = vmatpush1.msra.mxu0 0.0
      %2077 = vmatprep.subr.mxu0 0.0
      %2078 = vmatpush1.msra.mxu0 0.0
      %2079 = vmatprep.subr.mxu0 0.0
      %2080 = vmatpush1.msra.mxu0 0.0
      %2081 = vmatprep.subr.mxu0 0.0
      %2082 = vmatpush1.msra.mxu0 0.0
      %2083 = vmatprep.subr.mxu0 0.0
      %2084 = vmatpush1.msra.mxu0 0.0
      %2085 = vmatprep.subr.mxu0 0.0
      %2086 = vmatpush1.msra.mxu0 0.0
      %2087 = vmatprep.subr.mxu0 0.0
      %2088 = vmatpush1.msra.mxu0 0.0
      %2089 = vmatprep.subr.mxu0 0.0
      %2090 = vmatpush1.msra.mxu0 0.0
      %2091 = vmatprep.subr.mxu0 0.0
      %2092 = vmatpush1.msra.mxu0 0.0
      %2093 = vmatprep.subr.mxu0 0.0
      %2094 = vmatpush1.msra.mxu0 0.0
      %2095 = vmatprep.subr.mxu0 0.0
      %2096 = vmatpush1.msra.mxu0 0.0
      %2097 = vmatprep.subr.mxu0 0.0
      %2098 = vmatpush1.msra.mxu0 0.0
      %2099 = vmatprep.subr.mxu0 0.0
      %2100 = vmatpush1.msra.mxu0 0.0
      %2101 = vmatprep.subr.mxu0 0.0
      %2102 = vmatpush1.msra.mxu0 0.0
      %2103 = vmatprep.mubr.f32.mxu0 0.0
      %2104 = vmatmul.mubr.f32.gmra.mrb[0].mxu0 %v2037
      %v2105 = vpop.f32.mrb[0].mxu0
      %v2106 = vadd.f32 %v2034, %v2105
      %v2107 = vpop.f32.mrb[0].mxu0
      %2108 = vdwg.mxu0
      %v2109 = vld [vmem:[%s29] sm:$0xff]
      %v2110 = vld [vmem:[%s29 + $0x8] sm:$0xff]
      %v2111 = vld [vmem:[%s29 + $0x10] sm:$0xff]
      %v2112 = vld [vmem:[%s29 + $0x18] sm:$0xff]
      %v2113 = vld [vmem:[%s31] sm:$0x1]
      %v2115 = vlaneseq
      %v2116 = vshrl.u32 %v2115, 7
      %v2117 = vsub.s32 0, %v2116
      %v2118 = vrot.slane %v2113, %v2117
      %v2121 = vsel %vm989, %v975, 0
      %2123 = vmatprep.subr.mxu0 0.0
      %2124 = vmatpush1.msra.mxu0 %v2109
      %2125 = vmatprep.subr.mxu0 0.0
      %2126 = vmatpush1.msra.mxu0 %v2110
      %2127 = vmatprep.subr.mxu0 0.0
      %2128 = vmatpush1.msra.mxu0 %v2111
      %2129 = vmatprep.subr.mxu0 0.0
      %2130 = vmatpush1.msra.mxu0 %v2112
      %2131 = vmatprep.subr.mxu0 0.0
      %2132 = vmatpush1.msra.mxu0 0.0
      %2133 = vmatprep.subr.mxu0 0.0
      %2134 = vmatpush1.msra.mxu0 0.0
      %2135 = vmatprep.subr.mxu0 0.0
      %2136 = vmatpush1.msra.mxu0 0.0
      %2137 = vmatprep.subr.mxu0 0.0
      %2138 = vmatpush1.msra.mxu0 0.0
      %2139 = vmatprep.subr.mxu0 0.0
      %2140 = vmatpush1.msra.mxu0 0.0
      %2141 = vmatprep.subr.mxu0 0.0
      %2142 = vmatpush1.msra.mxu0 0.0
      %2143 = vmatprep.subr.mxu0 0.0
      %2144 = vmatpush1.msra.mxu0 0.0
      %2145 = vmatprep.subr.mxu0 0.0
      %2146 = vmatpush1.msra.mxu0 0.0
      %2147 = vmatprep.subr.mxu0 0.0
      %2148 = vmatpush1.msra.mxu0 0.0
      %2149 = vmatprep.subr.mxu0 0.0
      %2150 = vmatpush1.msra.mxu0 0.0
      %2151 = vmatprep.subr.mxu0 0.0
      %2152 = vmatpush1.msra.mxu0 0.0
      %2153 = vmatprep.subr.mxu0 0.0
      %2154 = vmatpush1.msra.mxu0 0.0
      %2155 = vmatprep.subr.mxu0 0.0
      %2156 = vmatpush1.msra.mxu0 0.0
      %2157 = vmatprep.subr.mxu0 0.0
      %2158 = vmatpush1.msra.mxu0 0.0
      %2159 = vmatprep.subr.mxu0 0.0
      %2160 = vmatpush1.msra.mxu0 0.0
      %2161 = vmatprep.subr.mxu0 0.0
      %2162 = vmatpush1.msra.mxu0 0.0
      %2163 = vmatprep.subr.mxu0 0.0
      %2164 = vmatpush1.msra.mxu0 0.0
      %2165 = vmatprep.subr.mxu0 0.0
      %2166 = vmatpush1.msra.mxu0 0.0
      %2167 = vmatprep.subr.mxu0 0.0
      %2168 = vmatpush1.msra.mxu0 0.0
      %2169 = vmatprep.subr.mxu0 0.0
      %2170 = vmatpush1.msra.mxu0 0.0
      %2171 = vmatprep.subr.mxu0 0.0
      %2172 = vmatpush1.msra.mxu0 0.0
      %2173 = vmatprep.subr.mxu0 0.0
      %2174 = vmatpush1.msra.mxu0 0.0
      %2175 = vmatprep.subr.mxu0 0.0
      %2176 = vmatpush1.msra.mxu0 0.0
      %2177 = vmatprep.subr.mxu0 0.0
      %2178 = vmatpush1.msra.mxu0 0.0
      %2179 = vmatprep.subr.mxu0 0.0
      %2180 = vmatpush1.msra.mxu0 0.0
      %2181 = vmatprep.subr.mxu0 0.0
      %2182 = vmatpush1.msra.mxu0 0.0
      %2183 = vmatprep.subr.mxu0 0.0
      %2184 = vmatpush1.msra.mxu0 0.0
      %2185 = vmatprep.subr.mxu0 0.0
      %2186 = vmatpush1.msra.mxu0 0.0
      %2187 = vmatprep.mubr.f32.mxu0 0.0
      %2188 = vmatmul.mubr.f32.gmra.mrb[0].mxu0 %v2121
      %v2189 = vpop.f32.mrb[0].mxu0
      %v2190 = vadd.f32 %v2118, %v2189
      %v2191 = vpop.f32.mrb[0].mxu0
      %2192 = vdwg.mxu0
      %v2193 = vld [vmem:[%s33] sm:$0xff]
      %v2194 = vld [vmem:[%s33 + $0x8] sm:$0xff]
      %v2195 = vld [vmem:[%s33 + $0x10] sm:$0xff]
      %v2196 = vld [vmem:[%s33 + $0x18] sm:$0xff]
      %v2197 = vld [vmem:[%s35] sm:$0x1]
      %v2199 = vlaneseq
      %v2200 = vshrl.u32 %v2199, 7
      %v2201 = vsub.s32 0, %v2200
      %v2202 = vrot.slane %v2197, %v2201
      %2204 = vmatprep.subr.mxu0 0.0
      %2205 = vmatpush1.msra.mxu0 %v2193
      %2206 = vmatprep.subr.mxu0 0.0
      %2207 = vmatpush1.msra.mxu0 %v2194
      %2208 = vmatprep.subr.mxu0 0.0
      %2209 = vmatpush1.msra.mxu0 %v2195
      %2210 = vmatprep.subr.mxu0 0.0
      %2211 = vmatpush1.msra.mxu0 %v2196
      %2212 = vmatprep.subr.mxu0 0.0
      %2213 = vmatpush1.msra.mxu0 0.0
      %2214 = vmatprep.subr.mxu0 0.0
      %2215 = vmatpush1.msra.mxu0 0.0
      %2216 = vmatprep.subr.mxu0 0.0
      %2217 = vmatpush1.msra.mxu0 0.0
      %2218 = vmatprep.subr.mxu0 0.0
      %2219 = vmatpush1.msra.mxu0 0.0
      %2220 = vmatprep.subr.mxu0 0.0
      %2221 = vmatpush1.msra.mxu0 0.0
      %2222 = vmatprep.subr.mxu0 0.0
      %2223 = vmatpush1.msra.mxu0 0.0
      %2224 = vmatprep.subr.mxu0 0.0
      %2225 = vmatpush1.msra.mxu0 0.0
      %2226 = vmatprep.subr.mxu0 0.0
      %2227 = vmatpush1.msra.mxu0 0.0
      %2228 = vmatprep.subr.mxu0 0.0
      %2229 = vmatpush1.msra.mxu0 0.0
      %2230 = vmatprep.subr.mxu0 0.0
      %2231 = vmatpush1.msra.mxu0 0.0
      %2232 = vmatprep.subr.mxu0 0.0
      %2233 = vmatpush1.msra.mxu0 0.0
      %2234 = vmatprep.subr.mxu0 0.0
      %2235 = vmatpush1.msra.mxu0 0.0
      %2236 = vmatprep.subr.mxu0 0.0
      %2237 = vmatpush1.msra.mxu0 0.0
      %2238 = vmatprep.subr.mxu0 0.0
      %2239 = vmatpush1.msra.mxu0 0.0
      %2240 = vmatprep.subr.mxu0 0.0
      %2241 = vmatpush1.msra.mxu0 0.0
      %2242 = vmatprep.subr.mxu0 0.0
      %2243 = vmatpush1.msra.mxu0 0.0
      %2244 = vmatprep.subr.mxu0 0.0
      %2245 = vmatpush1.msra.mxu0 0.0
      %2246 = vmatprep.subr.mxu0 0.0
      %2247 = vmatpush1.msra.mxu0 0.0
      %2248 = vmatprep.subr.mxu0 0.0
      %2249 = vmatpush1.msra.mxu0 0.0
      %2250 = vmatprep.subr.mxu0 0.0
      %2251 = vmatpush1.msra.mxu0 0.0
      %2252 = vmatprep.subr.mxu0 0.0
      %2253 = vmatpush1.msra.mxu0 0.0
      %2254 = vmatprep.subr.mxu0 0.0
      %2255 = vmatpush1.msra.mxu0 0.0
      %2256 = vmatprep.subr.mxu0 0.0
      %2257 = vmatpush1.msra.mxu0 0.0
      %2258 = vmatprep.subr.mxu0 0.0
      %2259 = vmatpush1.msra.mxu0 0.0
      %2260 = vmatprep.subr.mxu0 0.0
      %2261 = vmatpush1.msra.mxu0 0.0
      %2262 = vmatprep.subr.mxu0 0.0
      %2263 = vmatpush1.msra.mxu0 0.0
      %2264 = vmatprep.subr.mxu0 0.0
      %2265 = vmatpush1.msra.mxu0 0.0
      %2266 = vmatprep.subr.mxu0 0.0
      %2267 = vmatpush1.msra.mxu0 0.0
      %2268 = vmatprep.mubr.f32.mxu0 0.0
      %2269 = vmatmul.mubr.f32.gmra.mrb[0].mxu0 %v2121
      %v2270 = vpop.f32.mrb[0].mxu0
      %v2271 = vadd.f32 %v2202, %v2270
      %v2272 = vpop.f32.mrb[0].mxu0
      %2273 = vdwg.mxu0
      %v2275 = vsel %vm1225, %v2106, 0
      %v2278 = vsel %vm1225, %v2190, 0
      %2280 = vmatprep.subr.mxu0 0.0
      %2281 = vmatpush1.xpose.msra.mxu0 %v2278
      %2282 = vmatprep.subr.mxu0 0.0
      %2283 = vmatpush1.xpose.msra.mxu0 0.0
      %2284 = vmatprep.subr.mxu0 0.0
      %2285 = vmatpush1.xpose.msra.mxu0 0.0
      %2286 = vmatprep.subr.mxu0 0.0
      %2287 = vmatpush1.xpose.msra.mxu0 0.0
      %2288 = vmatprep.subr.mxu0 0.0
      %2289 = vmatpush1.xpose.msra.mxu0 0.0
      %2290 = vmatprep.subr.mxu0 0.0
      %2291 = vmatpush1.xpose.msra.mxu0 0.0
      %2292 = vmatprep.subr.mxu0 0.0
      %2293 = vmatpush1.xpose.msra.mxu0 0.0
      %2294 = vmatprep.subr.mxu0 0.0
      %2295 = vmatpush1.xpose.msra.mxu0 0.0
      %2296 = vmatprep.subr.mxu0 0.0
      %2297 = vmatpush1.xpose.msra.mxu0 0.0
      %2298 = vmatprep.subr.mxu0 0.0
      %2299 = vmatpush1.xpose.msra.mxu0 0.0
      %2300 = vmatprep.subr.mxu0 0.0
      %2301 = vmatpush1.xpose.msra.mxu0 0.0
      %2302 = vmatprep.subr.mxu0 0.0
      %2303 = vmatpush1.xpose.msra.mxu0 0.0
      %2304 = vmatprep.subr.mxu0 0.0
      %2305 = vmatpush1.xpose.msra.mxu0 0.0
      %2306 = vmatprep.subr.mxu0 0.0
      %2307 = vmatpush1.xpose.msra.mxu0 0.0
      %2308 = vmatprep.subr.mxu0 0.0
      %2309 = vmatpush1.xpose.msra.mxu0 0.0
      %2310 = vmatprep.subr.mxu0 0.0
      %2311 = vmatpush1.xpose.msra.mxu0 0.0
      %2312 = vmatprep.subr.mxu0 0.0
      %2313 = vmatpush1.xpose.msra.mxu0 0.0
      %2314 = vmatprep.subr.mxu0 0.0
      %2315 = vmatpush1.xpose.msra.mxu0 0.0
      %2316 = vmatprep.subr.mxu0 0.0
      %2317 = vmatpush1.xpose.msra.mxu0 0.0
      %2318 = vmatprep.subr.mxu0 0.0
      %2319 = vmatpush1.xpose.msra.mxu0 0.0
      %2320 = vmatprep.subr.mxu0 0.0
      %2321 = vmatpush1.xpose.msra.mxu0 0.0
      %2322 = vmatprep.subr.mxu0 0.0
      %2323 = vmatpush1.xpose.msra.mxu0 0.0
      %2324 = vmatprep.subr.mxu0 0.0
      %2325 = vmatpush1.xpose.msra.mxu0 0.0
      %2326 = vmatprep.subr.mxu0 0.0
      %2327 = vmatpush1.xpose.msra.mxu0 0.0
      %2328 = vmatprep.subr.mxu0 0.0
      %2329 = vmatpush1.xpose.msra.mxu0 0.0
      %2330 = vmatprep.subr.mxu0 0.0
      %2331 = vmatpush1.xpose.msra.mxu0 0.0
      %2332 = vmatprep.subr.mxu0 0.0
      %2333 = vmatpush1.xpose.msra.mxu0 0.0
      %2334 = vmatprep.subr.mxu0 0.0
      %2335 = vmatpush1.xpose.msra.mxu0 0.0
      %2336 = vmatprep.subr.mxu0 0.0
      %2337 = vmatpush1.xpose.msra.mxu0 0.0
      %2338 = vmatprep.subr.mxu0 0.0
      %2339 = vmatpush1.xpose.msra.mxu0 0.0
      %2340 = vmatprep.subr.mxu0 0.0
      %2341 = vmatpush1.xpose.msra.mxu0 0.0
      %2342 = vmatprep.subr.mxu0 0.0
      %2343 = vmatpush1.xpose.msra.mxu0 0.0
      %2344 = vmatprep.mubr.f32.mxu0 0.0
      %2345 = vmatmul.mubr.f32.gmra.mrb[0].mxu0 %v2275
      %v2346 = vpop.f32.mrb[0].mxu0
      %v2347 = vadd.f32 0.0, %v2346
      %v2348 = vpop.f32.mrb[0].mxu0
      %2349 = vdwg.mxu0
      %v2350 = vmul.f32 %v2347, 0.35355338
      %v2352 = vlaneseq
      %v2353 = vshrl.u32 %v2352, 7
      %v2354 = vsub.s32 0, %v2353
      %v2355 = vrot.slane %v977, %v2354
      %v2357 = vadd.f32 %v2350, %v2355
      %v2358 = vsel %vm1225, %v2357, -inf
      %2359 = vmax.xlane.f32.xlu0 %v2358
      %v2360 = vpop.xlane.xlu0 %2359
      %v2361 = vsub.f32 %v2357, %v2360
      %v2362 = vmul.f32 %v2361, 1.442695
      %v2363 = vpow.pop %v2362
      %v2364 = vsel %vm1225, %v2363, 0.0
      %2365 = vadd.xlane.f32.xlu0 %v2364
      %v2366 = vpop.xlane.xlu0 %2365
      %v2367 = vrcp.pop %v2366
      %v2368 = vmul.f32 %v2363, %v2367
      %v2370 = vsel %vm1225, %v2368, 0
      %2372 = vmatprep.subr.mxu0 0.0
      %2373 = vmatpush1.msra.mxu0 %v2271
      %2374 = vmatprep.subr.mxu0 0.0
      %2375 = vmatpush1.msra.mxu0 0.0
      %2376 = vmatprep.subr.mxu0 0.0
      %2377 = vmatpush1.msra.mxu0 0.0
      %2378 = vmatprep.subr.mxu0 0.0
      %2379 = vmatpush1.msra.mxu0 0.0
      %2380 = vmatprep.subr.mxu0 0.0
      %2381 = vmatpush1.msra.mxu0 0.0
      %2382 = vmatprep.subr.mxu0 0.0
      %2383 = vmatpush1.msra.mxu0 0.0
      %2384 = vmatprep.subr.mxu0 0.0
      %2385 = vmatpush1.msra.mxu0 0.0
      %2386 = vmatprep.subr.mxu0 0.0
      %2387 = vmatpush1.msra.mxu0 0.0
      %2388 = vmatprep.subr.mxu0 0.0
      %2389 = vmatpush1.msra.mxu0 0.0
      %2390 = vmatprep.subr.mxu0 0.0
      %2391 = vmatpush1.msra.mxu0 0.0
      %2392 = vmatprep.subr.mxu0 0.0
      %2393 = vmatpush1.msra.mxu0 0.0
      %2394 = vmatprep.subr.mxu0 0.0
      %2395 = vmatpush1.msra.mxu0 0.0
      %2396 = vmatprep.subr.mxu0 0.0
      %2397 = vmatpush1.msra.mxu0 0.0
      %2398 = vmatprep.subr.mxu0 0.0
      %2399 = vmatpush1.msra.mxu0 0.0
      %2400 = vmatprep.subr.mxu0 0.0
      %2401 = vmatpush1.msra.mxu0 0.0
      %2402 = vmatprep.subr.mxu0 0.0
      %2403 = vmatpush1.msra.mxu0 0.0
      %2404 = vmatprep.subr.mxu0 0.0
      %2405 = vmatpush1.msra.mxu0 0.0
      %2406 = vmatprep.subr.mxu0 0.0
      %2407 = vmatpush1.msra.mxu0 0.0
      %2408 = vmatprep.subr.mxu0 0.0
      %2409 = vmatpush1.msra.mxu0 0.0
      %2410 = vmatprep.subr.mxu0 0.0
      %2411 = vmatpush1.msra.mxu0 0.0
      %2412 = vmatprep.subr.mxu0 0.0
      %2413 = vmatpush1.msra.mxu0 0.0
      %2414 = vmatprep.subr.mxu0 0.0
      %2415 = vmatpush1.msra.mxu0 0.0
      %2416 = vmatprep.subr.mxu0 0.0
      %2417 = vmatpush1.msra.mxu0 0.0
      %2418 = vmatprep.subr.mxu0 0.0
      %2419 = vmatpush1.msra.mxu0 0.0
      %2420 = vmatprep.subr.mxu0 0.0
      %2421 = vmatpush1.msra.mxu0 0.0
      %2422 = vmatprep.subr.mxu0 0.0
      %2423 = vmatpush1.msra.mxu0 0.0
      %2424 = vmatprep.subr.mxu0 0.0
      %2425 = vmatpush1.msra.mxu0 0.0
      %2426 = vmatprep.subr.mxu0 0.0
      %2427 = vmatpush1.msra.mxu0 0.0
      %2428 = vmatprep.subr.mxu0 0.0
      %2429 = vmatpush1.msra.mxu0 0.0
      %2430 = vmatprep.subr.mxu0 0.0
      %2431 = vmatpush1.msra.mxu0 0.0
      %2432 = vmatprep.subr.mxu0 0.0
      %2433 = vmatpush1.msra.mxu0 0.0
      %2434 = vmatprep.subr.mxu0 0.0
      %2435 = vmatpush1.msra.mxu0 0.0
      %2436 = vmatprep.mubr.f32.mxu0 0.0
      %2437 = vmatmul.mubr.f32.gmra.mrb[0].mxu0 %v2370
      %v2438 = vpop.f32.mrb[0].mxu0
      %v2439 = vadd.f32 0.0, %v2438
      %v2440 = vpop.f32.mrb[0].mxu0
      %2441 = vdwg.mxu0
      %2442 = vst.msk [vmem:[#allocation2] sm:$0xff] %vm1225, %v2439
      %2443 = vrot.lane.b32.xlu0 %v2106, 120
      %v2444 = vpop.permute.xlu0 %2443
      %2445 = vrot.lane.b32.xlu0 %v2190, 120
      %v2446 = vpop.permute.xlu0 %2445
      %v2447 = vsel %vm1225, %v2444, 0
      %v2449 = vsel %vm1225, %v2446, 0
      %2451 = vmatprep.subr.mxu0 0.0
      %2452 = vmatpush1.xpose.msra.mxu0 %v2449
      %2453 = vmatprep.subr.mxu0 0.0
      %2454 = vmatpush1.xpose.msra.mxu0 0.0
      %2455 = vmatprep.subr.mxu0 0.0
      %2456 = vmatpush1.xpose.msra.mxu0 0.0
      %2457 = vmatprep.subr.mxu0 0.0
      %2458 = vmatpush1.xpose.msra.mxu0 0.0
      %2459 = vmatprep.subr.mxu0 0.0
      %2460 = vmatpush1.xpose.msra.mxu0 0.0
      %2461 = vmatprep.subr.mxu0 0.0
      %2462 = vmatpush1.xpose.msra.mxu0 0.0
      %2463 = vmatprep.subr.mxu0 0.0
      %2464 = vmatpush1.xpose.msra.mxu0 0.0
      %2465 = vmatprep.subr.mxu0 0.0
      %2466 = vmatpush1.xpose.msra.mxu0 0.0
      %2467 = vmatprep.subr.mxu0 0.0
      %2468 = vmatpush1.xpose.msra.mxu0 0.0
      %2469 = vmatprep.subr.mxu0 0.0
      %2470 = vmatpush1.xpose.msra.mxu0 0.0
      %2471 = vmatprep.subr.mxu0 0.0
      %2472 = vmatpush1.xpose.msra.mxu0 0.0
      %2473 = vmatprep.subr.mxu0 0.0
      %2474 = vmatpush1.xpose.msra.mxu0 0.0
      %2475 = vmatprep.subr.mxu0 0.0
      %2476 = vmatpush1.xpose.msra.mxu0 0.0
      %2477 = vmatprep.subr.mxu0 0.0
      %2478 = vmatpush1.xpose.msra.mxu0 0.0
      %2479 = vmatprep.subr.mxu0 0.0
      %2480 = vmatpush1.xpose.msra.mxu0 0.0
      %2481 = vmatprep.subr.mxu0 0.0
      %2482 = vmatpush1.xpose.msra.mxu0 0.0
      %2483 = vmatprep.subr.mxu0 0.0
      %2484 = vmatpush1.xpose.msra.mxu0 0.0
      %2485 = vmatprep.subr.mxu0 0.0
      %2486 = vmatpush1.xpose.msra.mxu0 0.0
      %2487 = vmatprep.subr.mxu0 0.0
      %2488 = vmatpush1.xpose.msra.mxu0 0.0
      %2489 = vmatprep.subr.mxu0 0.0
      %2490 = vmatpush1.xpose.msra.mxu0 0.0
      %2491 = vmatprep.subr.mxu0 0.0
      %2492 = vmatpush1.xpose.msra.mxu0 0.0
      %2493 = vmatprep.subr.mxu0 0.0
      %2494 = vmatpush1.xpose.msra.mxu0 0.0
      %2495 = vmatprep.subr.mxu0 0.0
      %2496 = vmatpush1.xpose.msra.mxu0 0.0
      %2497 = vmatprep.subr.mxu0 0.0
      %2498 = vmatpush1.xpose.msra.mxu0 0.0
      %2499 = vmatprep.subr.mxu0 0.0
      %2500 = vmatpush1.xpose.msra.mxu0 0.0
      %2501 = vmatprep.subr.mxu0 0.0
      %2502 = vmatpush1.xpose.msra.mxu0 0.0
      %2503 = vmatprep.subr.mxu0 0.0
      %2504 = vmatpush1.xpose.msra.mxu0 0.0
      %2505 = vmatprep.subr.mxu0 0.0
      %2506 = vmatpush1.xpose.msra.mxu0 0.0
      %2507 = vmatprep.subr.mxu0 0.0
      %2508 = vmatpush1.xpose.msra.mxu0 0.0
      %2509 = vmatprep.subr.mxu0 0.0
      %2510 = vmatpush1.xpose.msra.mxu0 0.0
      %2511 = vmatprep.subr.mxu0 0.0
      %2512 = vmatpush1.xpose.msra.mxu0 0.0
      %2513 = vmatprep.subr.mxu0 0.0
      %2514 = vmatpush1.xpose.msra.mxu0 0.0
      %2515 = vmatprep.mubr.f32.mxu0 0.0
      %2516 = vmatmul.mubr.f32.gmra.mrb[0].mxu0 %v2447
      %v2517 = vpop.f32.mrb[0].mxu0
      %v2518 = vadd.f32 0.0, %v2517
      %v2519 = vpop.f32.mrb[0].mxu0
      %2520 = vdwg.mxu0
      %v2521 = vmul.f32 %v2518, 0.35355338
      %v2522 = vadd.f32 %v2521, %v2355
      %v2523 = vsel %vm1225, %v2522, -inf
      %2524 = vmax.xlane.f32.xlu0 %v2523
      %v2525 = vpop.xlane.xlu0 %2524
      %v2526 = vsub.f32 %v2522, %v2525
      %v2527 = vmul.f32 %v2526, 1.442695
      %v2528 = vpow.pop %v2527
      %v2529 = vsel %vm1225, %v2528, 0.0
      %2530 = vadd.xlane.f32.xlu0 %v2529
      %v2531 = vpop.xlane.xlu0 %2530
      %v2532 = vrcp.pop %v2531
      %v2533 = vmul.f32 %v2528, %v2532
      %2535 = vrot.lane.b32.xlu0 %v2271, 120
      %v2536 = vpop.permute.xlu0 %2535
      %v2539 = vsel %vm1225, %v2533, 0
      %2541 = vmatprep.subr.mxu0 0.0
      %2542 = vmatpush1.msra.mxu0 %v2536
      %2543 = vmatprep.subr.mxu0 0.0
      %2544 = vmatpush1.msra.mxu0 0.0
      %2545 = vmatprep.subr.mxu0 0.0
      %2546 = vmatpush1.msra.mxu0 0.0
      %2547 = vmatprep.subr.mxu0 0.0
      %2548 = vmatpush1.msra.mxu0 0.0
      %2549 = vmatprep.subr.mxu0 0.0
      %2550 = vmatpush1.msra.mxu0 0.0
      %2551 = vmatprep.subr.mxu0 0.0
      %2552 = vmatpush1.msra.mxu0 0.0
      %2553 = vmatprep.subr.mxu0 0.0
      %2554 = vmatpush1.msra.mxu0 0.0
      %2555 = vmatprep.subr.mxu0 0.0
      %2556 = vmatpush1.msra.mxu0 0.0
      %2557 = vmatprep.subr.mxu0 0.0
      %2558 = vmatpush1.msra.mxu0 0.0
      %2559 = vmatprep.subr.mxu0 0.0
      %2560 = vmatpush1.msra.mxu0 0.0
      %2561 = vmatprep.subr.mxu0 0.0
      %2562 = vmatpush1.msra.mxu0 0.0
      %2563 = vmatprep.subr.mxu0 0.0
      %2564 = vmatpush1.msra.mxu0 0.0
      %2565 = vmatprep.subr.mxu0 0.0
      %2566 = vmatpush1.msra.mxu0 0.0
      %2567 = vmatprep.subr.mxu0 0.0
      %2568 = vmatpush1.msra.mxu0 0.0
      %2569 = vmatprep.subr.mxu0 0.0
      %2570 = vmatpush1.msra.mxu0 0.0
      %2571 = vmatprep.subr.mxu0 0.0
      %2572 = vmatpush1.msra.mxu0 0.0
      %2573 = vmatprep.subr.mxu0 0.0
      %2574 = vmatpush1.msra.mxu0 0.0
      %2575 = vmatprep.subr.mxu0 0.0
      %2576 = vmatpush1.msra.mxu0 0.0
      %2577 = vmatprep.subr.mxu0 0.0
      %2578 = vmatpush1.msra.mxu0 0.0
      %2579 = vmatprep.subr.mxu0 0.0
      %2580 = vmatpush1.msra.mxu0 0.0
      %2581 = vmatprep.subr.mxu0 0.0
      %2582 = vmatpush1.msra.mxu0 0.0
      %2583 = vmatprep.subr.mxu0 0.0
      %2584 = vmatpush1.msra.mxu0 0.0
      %2585 = vmatprep.subr.mxu0 0.0
      %2586 = vmatpush1.msra.mxu0 0.0
      %2587 = vmatprep.subr.mxu0 0.0
      %2588 = vmatpush1.msra.mxu0 0.0
      %2589 = vmatprep.subr.mxu0 0.0
      %2590 = vmatpush1.msra.mxu0 0.0
      %2591 = vmatprep.subr.mxu0 0.0
      %2592 = vmatpush1.msra.mxu0 0.0
      %2593 = vmatprep.subr.mxu0 0.0
      %2594 = vmatpush1.msra.mxu0 0.0
      %2595 = vmatprep.subr.mxu0 0.0
      %2596 = vmatpush1.msra.mxu0 0.0
      %2597 = vmatprep.subr.mxu0 0.0
      %2598 = vmatpush1.msra.mxu0 0.0
      %2599 = vmatprep.subr.mxu0 0.0
      %2600 = vmatpush1.msra.mxu0 0.0
      %2601 = vmatprep.subr.mxu0 0.0
      %2602 = vmatpush1.msra.mxu0 0.0
      %2603 = vmatprep.subr.mxu0 0.0
      %2604 = vmatpush1.msra.mxu0 0.0
      %2605 = vmatprep.mubr.f32.mxu0 0.0
      %2606 = vmatmul.mubr.f32.gmra.mrb[0].mxu0 %v2539
      %v2607 = vpop.f32.mrb[0].mxu0
      %v2608 = vadd.f32 0.0, %v2607
      %v2609 = vpop.f32.mrb[0].mxu0
      %2610 = vdwg.mxu0
      %2612 = vrot.lane.b32.xlu0 %v2608, 8
      %v2613 = vpop.permute.xlu0 %2612
      %2615 = vst.msk [vmem:[#allocation2] sm:$0xff] %vm1561, %v2613
      %2616 = vrot.lane.b32.xlu0 %v2106, 112
      %v2617 = vpop.permute.xlu0 %2616
      %2618 = vrot.lane.b32.xlu0 %v2190, 112
      %v2619 = vpop.permute.xlu0 %2618
      %v2620 = vsel %vm1225, %v2617, 0
      %v2622 = vsel %vm1225, %v2619, 0
      %2624 = vmatprep.subr.mxu0 0.0
      %2625 = vmatpush1.xpose.msra.mxu0 %v2622
      %2626 = vmatprep.subr.mxu0 0.0
      %2627 = vmatpush1.xpose.msra.mxu0 0.0
      %2628 = vmatprep.subr.mxu0 0.0
      %2629 = vmatpush1.xpose.msra.mxu0 0.0
      %2630 = vmatprep.subr.mxu0 0.0
      %2631 = vmatpush1.xpose.msra.mxu0 0.0
      %2632 = vmatprep.subr.mxu0 0.0
      %2633 = vmatpush1.xpose.msra.mxu0 0.0
      %2634 = vmatprep.subr.mxu0 0.0
      %2635 = vmatpush1.xpose.msra.mxu0 0.0
      %2636 = vmatprep.subr.mxu0 0.0
      %2637 = vmatpush1.xpose.msra.mxu0 0.0
      %2638 = vmatprep.subr.mxu0 0.0
      %2639 = vmatpush1.xpose.msra.mxu0 0.0
      %2640 = vmatprep.subr.mxu0 0.0
      %2641 = vmatpush1.xpose.msra.mxu0 0.0
      %2642 = vmatprep.subr.mxu0 0.0
      %2643 = vmatpush1.xpose.msra.mxu0 0.0
      %2644 = vmatprep.subr.mxu0 0.0
      %2645 = vmatpush1.xpose.msra.mxu0 0.0
      %2646 = vmatprep.subr.mxu0 0.0
      %2647 = vmatpush1.xpose.msra.mxu0 0.0
      %2648 = vmatprep.subr.mxu0 0.0
      %2649 = vmatpush1.xpose.msra.mxu0 0.0
      %2650 = vmatprep.subr.mxu0 0.0
      %2651 = vmatpush1.xpose.msra.mxu0 0.0
      %2652 = vmatprep.subr.mxu0 0.0
      %2653 = vmatpush1.xpose.msra.mxu0 0.0
      %2654 = vmatprep.subr.mxu0 0.0
      %2655 = vmatpush1.xpose.msra.mxu0 0.0
      %2656 = vmatprep.subr.mxu0 0.0
      %2657 = vmatpush1.xpose.msra.mxu0 0.0
      %2658 = vmatprep.subr.mxu0 0.0
      %2659 = vmatpush1.xpose.msra.mxu0 0.0
      %2660 = vmatprep.subr.mxu0 0.0
      %2661 = vmatpush1.xpose.msra.mxu0 0.0
      %2662 = vmatprep.subr.mxu0 0.0
      %2663 = vmatpush1.xpose.msra.mxu0 0.0
      %2664 = vmatprep.subr.mxu0 0.0
      %2665 = vmatpush1.xpose.msra.mxu0 0.0
      %2666 = vmatprep.subr.mxu0 0.0
      %2667 = vmatpush1.xpose.msra.mxu0 0.0
      %2668 = vmatprep.subr.mxu0 0.0
      %2669 = vmatpush1.xpose.msra.mxu0 0.0
      %2670 = vmatprep.subr.mxu0 0.0
      %2671 = vmatpush1.xpose.msra.mxu0 0.0
      %2672 = vmatprep.subr.mxu0 0.0
      %2673 = vmatpush1.xpose.msra.mxu0 0.0
      %2674 = vmatprep.subr.mxu0 0.0
      %2675 = vmatpush1.xpose.msra.mxu0 0.0
      %2676 = vmatprep.subr.mxu0 0.0
      %2677 = vmatpush1.xpose.msra.mxu0 0.0
      %2678 = vmatprep.subr.mxu0 0.0
      %2679 = vmatpush1.xpose.msra.mxu0 0.0
      %2680 = vmatprep.subr.mxu0 0.0
      %2681 = vmatpush1.xpose.msra.mxu0 0.0
      %2682 = vmatprep.subr.mxu0 0.0
      %2683 = vmatpush1.xpose.msra.mxu0 0.0
      %2684 = vmatprep.subr.mxu0 0.0
      %2685 = vmatpush1.xpose.msra.mxu0 0.0
      %2686 = vmatprep.subr.mxu0 0.0
      %2687 = vmatpush1.xpose.msra.mxu0 0.0
      %2688 = vmatprep.mubr.f32.mxu0 0.0
      %2689 = vmatmul.mubr.f32.gmra.mrb[0].mxu0 %v2620
      %v2690 = vpop.f32.mrb[0].mxu0
      %v2691 = vadd.f32 0.0, %v2690
      %v2692 = vpop.f32.mrb[0].mxu0
      %2693 = vdwg.mxu0
      %v2694 = vmul.f32 %v2691, 0.35355338
      %v2695 = vadd.f32 %v2694, %v2355
      %v2696 = vsel %vm1225, %v2695, -inf
      %2697 = vmax.xlane.f32.xlu0 %v2696
      %v2698 = vpop.xlane.xlu0 %2697
      %v2699 = vsub.f32 %v2695, %v2698
      %v2700 = vmul.f32 %v2699, 1.442695
      %v2701 = vpow.pop %v2700
      %v2702 = vsel %vm1225, %v2701, 0.0
      %2703 = vadd.xlane.f32.xlu0 %v2702
      %v2704 = vpop.xlane.xlu0 %2703
      %v2705 = vrcp.pop %v2704
      %v2706 = vmul.f32 %v2701, %v2705
      %2707 = vrot.lane.b32.xlu0 %v2271, 112
      %v2708 = vpop.permute.xlu0 %2707
      %v2711 = vsel %vm1225, %v2706, 0
      %2713 = vmatprep.subr.mxu0 0.0
      %2714 = vmatpush1.msra.mxu0 %v2708
      %2715 = vmatprep.subr.mxu0 0.0
      %2716 = vmatpush1.msra.mxu0 0.0
      %2717 = vmatprep.subr.mxu0 0.0
      %2718 = vmatpush1.msra.mxu0 0.0
      %2719 = vmatprep.subr.mxu0 0.0
      %2720 = vmatpush1.msra.mxu0 0.0
      %2721 = vmatprep.subr.mxu0 0.0
      %2722 = vmatpush1.msra.mxu0 0.0
      %2723 = vmatprep.subr.mxu0 0.0
      %2724 = vmatpush1.msra.mxu0 0.0
      %2725 = vmatprep.subr.mxu0 0.0
      %2726 = vmatpush1.msra.mxu0 0.0
      %2727 = vmatprep.subr.mxu0 0.0
      %2728 = vmatpush1.msra.mxu0 0.0
      %2729 = vmatprep.subr.mxu0 0.0
      %2730 = vmatpush1.msra.mxu0 0.0
      %2731 = vmatprep.subr.mxu0 0.0
      %2732 = vmatpush1.msra.mxu0 0.0
      %2733 = vmatprep.subr.mxu0 0.0
      %2734 = vmatpush1.msra.mxu0 0.0
      %2735 = vmatprep.subr.mxu0 0.0
      %2736 = vmatpush1.msra.mxu0 0.0
      %2737 = vmatprep.subr.mxu0 0.0
      %2738 = vmatpush1.msra.mxu0 0.0
      %2739 = vmatprep.subr.mxu0 0.0
      %2740 = vmatpush1.msra.mxu0 0.0
      %2741 = vmatprep.subr.mxu0 0.0
      %2742 = vmatpush1.msra.mxu0 0.0
      %2743 = vmatprep.subr.mxu0 0.0
      %2744 = vmatpush1.msra.mxu0 0.0
      %2745 = vmatprep.subr.mxu0 0.0
      %2746 = vmatpush1.msra.mxu0 0.0
      %2747 = vmatprep.subr.mxu0 0.0
      %2748 = vmatpush1.msra.mxu0 0.0
      %2749 = vmatprep.subr.mxu0 0.0
      %2750 = vmatpush1.msra.mxu0 0.0
      %2751 = vmatprep.subr.mxu0 0.0
      %2752 = vmatpush1.msra.mxu0 0.0
      %2753 = vmatprep.subr.mxu0 0.0
      %2754 = vmatpush1.msra.mxu0 0.0
      %2755 = vmatprep.subr.mxu0 0.0
      %2756 = vmatpush1.msra.mxu0 0.0
      %2757 = vmatprep.subr.mxu0 0.0
      %2758 = vmatpush1.msra.mxu0 0.0
      %2759 = vmatprep.subr.mxu0 0.0
      %2760 = vmatpush1.msra.mxu0 0.0
      %2761 = vmatprep.subr.mxu0 0.0
      %2762 = vmatpush1.msra.mxu0 0.0
      %2763 = vmatprep.subr.mxu0 0.0
      %2764 = vmatpush1.msra.mxu0 0.0
      %2765 = vmatprep.subr.mxu0 0.0
      %2766 = vmatpush1.msra.mxu0 0.0
      %2767 = vmatprep.subr.mxu0 0.0
      %2768 = vmatpush1.msra.mxu0 0.0
      %2769 = vmatprep.subr.mxu0 0.0
      %2770 = vmatpush1.msra.mxu0 0.0
      %2771 = vmatprep.subr.mxu0 0.0
      %2772 = vmatpush1.msra.mxu0 0.0
      %2773 = vmatprep.subr.mxu0 0.0
      %2774 = vmatpush1.msra.mxu0 0.0
      %2775 = vmatprep.subr.mxu0 0.0
      %2776 = vmatpush1.msra.mxu0 0.0
      %2777 = vmatprep.mubr.f32.mxu0 0.0
      %2778 = vmatmul.mubr.f32.gmra.mrb[0].mxu0 %v2711
      %v2779 = vpop.f32.mrb[0].mxu0
      %v2780 = vadd.f32 0.0, %v2779
      %v2781 = vpop.f32.mrb[0].mxu0
      %2782 = vdwg.mxu0
      %2784 = vrot.lane.b32.xlu0 %v2780, 16
      %v2785 = vpop.permute.xlu0 %2784
      %2787 = vst.msk [vmem:[#allocation2] sm:$0xff] %vm1734, %v2785
      %2788 = vrot.lane.b32.xlu0 %v2106, 104
      %v2789 = vpop.permute.xlu0 %2788
      %2790 = vrot.lane.b32.xlu0 %v2190, 104
      %v2791 = vpop.permute.xlu0 %2790
      %v2792 = vsel %vm1225, %v2789, 0
      %v2794 = vsel %vm1225, %v2791, 0
      %2796 = vmatprep.subr.mxu0 0.0
      %2797 = vmatpush1.xpose.msra.mxu0 %v2794
      %2798 = vmatprep.subr.mxu0 0.0
      %2799 = vmatpush1.xpose.msra.mxu0 0.0
      %2800 = vmatprep.subr.mxu0 0.0
      %2801 = vmatpush1.xpose.msra.mxu0 0.0
      %2802 = vmatprep.subr.mxu0 0.0
      %2803 = vmatpush1.xpose.msra.mxu0 0.0
      %2804 = vmatprep.subr.mxu0 0.0
      %2805 = vmatpush1.xpose.msra.mxu0 0.0
      %2806 = vmatprep.subr.mxu0 0.0
      %2807 = vmatpush1.xpose.msra.mxu0 0.0
      %2808 = vmatprep.subr.mxu0 0.0
      %2809 = vmatpush1.xpose.msra.mxu0 0.0
      %2810 = vmatprep.subr.mxu0 0.0
      %2811 = vmatpush1.xpose.msra.mxu0 0.0
      %2812 = vmatprep.subr.mxu0 0.0
      %2813 = vmatpush1.xpose.msra.mxu0 0.0
      %2814 = vmatprep.subr.mxu0 0.0
      %2815 = vmatpush1.xpose.msra.mxu0 0.0
      %2816 = vmatprep.subr.mxu0 0.0
      %2817 = vmatpush1.xpose.msra.mxu0 0.0
      %2818 = vmatprep.subr.mxu0 0.0
      %2819 = vmatpush1.xpose.msra.mxu0 0.0
      %2820 = vmatprep.subr.mxu0 0.0
      %2821 = vmatpush1.xpose.msra.mxu0 0.0
      %2822 = vmatprep.subr.mxu0 0.0
      %2823 = vmatpush1.xpose.msra.mxu0 0.0
      %2824 = vmatprep.subr.mxu0 0.0
      %2825 = vmatpush1.xpose.msra.mxu0 0.0
      %2826 = vmatprep.subr.mxu0 0.0
      %2827 = vmatpush1.xpose.msra.mxu0 0.0
      %2828 = vmatprep.subr.mxu0 0.0
      %2829 = vmatpush1.xpose.msra.mxu0 0.0
      %2830 = vmatprep.subr.mxu0 0.0
      %2831 = vmatpush1.xpose.msra.mxu0 0.0
      %2832 = vmatprep.subr.mxu0 0.0
      %2833 = vmatpush1.xpose.msra.mxu0 0.0
      %2834 = vmatprep.subr.mxu0 0.0
      %2835 = vmatpush1.xpose.msra.mxu0 0.0
      %2836 = vmatprep.subr.mxu0 0.0
      %2837 = vmatpush1.xpose.msra.mxu0 0.0
      %2838 = vmatprep.subr.mxu0 0.0
      %2839 = vmatpush1.xpose.msra.mxu0 0.0
      %2840 = vmatprep.subr.mxu0 0.0
      %2841 = vmatpush1.xpose.msra.mxu0 0.0
      %2842 = vmatprep.subr.mxu0 0.0
      %2843 = vmatpush1.xpose.msra.mxu0 0.0
      %2844 = vmatprep.subr.mxu0 0.0
      %2845 = vmatpush1.xpose.msra.mxu0 0.0
      %2846 = vmatprep.subr.mxu0 0.0
      %2847 = vmatpush1.xpose.msra.mxu0 0.0
      %2848 = vmatprep.subr.mxu0 0.0
      %2849 = vmatpush1.xpose.msra.mxu0 0.0
      %2850 = vmatprep.subr.mxu0 0.0
      %2851 = vmatpush1.xpose.msra.mxu0 0.0
      %2852 = vmatprep.subr.mxu0 0.0
      %2853 = vmatpush1.xpose.msra.mxu0 0.0
      %2854 = vmatprep.subr.mxu0 0.0
      %2855 = vmatpush1.xpose.msra.mxu0 0.0
      %2856 = vmatprep.subr.mxu0 0.0
      %2857 = vmatpush1.xpose.msra.mxu0 0.0
      %2858 = vmatprep.subr.mxu0 0.0
      %2859 = vmatpush1.xpose.msra.mxu0 0.0
      %2860 = vmatprep.mubr.f32.mxu0 0.0
      %2861 = vmatmul.mubr.f32.gmra.mrb[0].mxu0 %v2792
      %v2862 = vpop.f32.mrb[0].mxu0
      %v2863 = vadd.f32 0.0, %v2862
      %v2864 = vpop.f32.mrb[0].mxu0
      %2865 = vdwg.mxu0
      %v2866 = vmul.f32 %v2863, 0.35355338
      %v2867 = vadd.f32 %v2866, %v2355
      %v2868 = vsel %vm1225, %v2867, -inf
      %2869 = vmax.xlane.f32.xlu0 %v2868
      %v2870 = vpop.xlane.xlu0 %2869
      %v2871 = vsub.f32 %v2867, %v2870
      %v2872 = vmul.f32 %v2871, 1.442695
      %v2873 = vpow.pop %v2872
      %v2874 = vsel %vm1225, %v2873, 0.0
      %2875 = vadd.xlane.f32.xlu0 %v2874
      %v2876 = vpop.xlane.xlu0 %2875
      %v2877 = vrcp.pop %v2876
      %v2878 = vmul.f32 %v2873, %v2877
      %2879 = vrot.lane.b32.xlu0 %v2271, 104
      %v2880 = vpop.permute.xlu0 %2879
      %v2883 = vsel %vm1225, %v2878, 0
      %2885 = vmatprep.subr.mxu0 0.0
      %2886 = vmatpush1.msra.mxu0 %v2880
      %2887 = vmatprep.subr.mxu0 0.0
      %2888 = vmatpush1.msra.mxu0 0.0
      %2889 = vmatprep.subr.mxu0 0.0
      %2890 = vmatpush1.msra.mxu0 0.0
      %2891 = vmatprep.subr.mxu0 0.0
      %2892 = vmatpush1.msra.mxu0 0.0
      %2893 = vmatprep.subr.mxu0 0.0
      %2894 = vmatpush1.msra.mxu0 0.0
      %2895 = vmatprep.subr.mxu0 0.0
      %2896 = vmatpush1.msra.mxu0 0.0
      %2897 = vmatprep.subr.mxu0 0.0
      %2898 = vmatpush1.msra.mxu0 0.0
      %2899 = vmatprep.subr.mxu0 0.0
      %2900 = vmatpush1.msra.mxu0 0.0
      %2901 = vmatprep.subr.mxu0 0.0
      %2902 = vmatpush1.msra.mxu0 0.0
      %2903 = vmatprep.subr.mxu0 0.0
      %2904 = vmatpush1.msra.mxu0 0.0
      %2905 = vmatprep.subr.mxu0 0.0
      %2906 = vmatpush1.msra.mxu0 0.0
      %2907 = vmatprep.subr.mxu0 0.0
      %2908 = vmatpush1.msra.mxu0 0.0
      %2909 = vmatprep.subr.mxu0 0.0
      %2910 = vmatpush1.msra.mxu0 0.0
      %2911 = vmatprep.subr.mxu0 0.0
      %2912 = vmatpush1.msra.mxu0 0.0
      %2913 = vmatprep.subr.mxu0 0.0
      %2914 = vmatpush1.msra.mxu0 0.0
      %2915 = vmatprep.subr.mxu0 0.0
      %2916 = vmatpush1.msra.mxu0 0.0
      %2917 = vmatprep.subr.mxu0 0.0
      %2918 = vmatpush1.msra.mxu0 0.0
      %2919 = vmatprep.subr.mxu0 0.0
      %2920 = vmatpush1.msra.mxu0 0.0
      %2921 = vmatprep.subr.mxu0 0.0
      %2922 = vmatpush1.msra.mxu0 0.0
      %2923 = vmatprep.subr.mxu0 0.0
      %2924 = vmatpush1.msra.mxu0 0.0
      %2925 = vmatprep.subr.mxu0 0.0
      %2926 = vmatpush1.msra.mxu0 0.0
      %2927 = vmatprep.subr.mxu0 0.0
      %2928 = vmatpush1.msra.mxu0 0.0
      %2929 = vmatprep.subr.mxu0 0.0
      %2930 = vmatpush1.msra.mxu0 0.0
      %2931 = vmatprep.subr.mxu0 0.0
      %2932 = vmatpush1.msra.mxu0 0.0
      %2933 = vmatprep.subr.mxu0 0.0
      %2934 = vmatpush1.msra.mxu0 0.0
      %2935 = vmatprep.subr.mxu0 0.0
      %2936 = vmatpush1.msra.mxu0 0.0
      %2937 = vmatprep.subr.mxu0 0.0
      %2938 = vmatpush1.msra.mxu0 0.0
      %2939 = vmatprep.subr.mxu0 0.0
      %2940 = vmatpush1.msra.mxu0 0.0
      %2941 = vmatprep.subr.mxu0 0.0
      %2942 = vmatpush1.msra.mxu0 0.0
      %2943 = vmatprep.subr.mxu0 0.0
      %2944 = vmatpush1.msra.mxu0 0.0
      %2945 = vmatprep.subr.mxu0 0.0
      %2946 = vmatpush1.msra.mxu0 0.0
      %2947 = vmatprep.subr.mxu0 0.0
      %2948 = vmatpush1.msra.mxu0 0.0
      %2949 = vmatprep.mubr.f32.mxu0 0.0
      %2950 = vmatmul.mubr.f32.gmra.mrb[0].mxu0 %v2883
      %v2951 = vpop.f32.mrb[0].mxu0
      %v2952 = vadd.f32 0.0, %v2951
      %v2953 = vpop.f32.mrb[0].mxu0
      %2954 = vdwg.mxu0
      %2956 = vrot.lane.b32.xlu0 %v2952, 24
      %v2957 = vpop.permute.xlu0 %2956
      %2959 = vst.msk [vmem:[#allocation2] sm:$0xff] %vm1907, %v2957
      %v2960 = vld [vmem:[#allocation2] sm:$0xff]
      %v2961 = vld [vmem:[%s37] sm:$0xff]
      %v2962 = vld [vmem:[%s37 + $0x8] sm:$0xff]
      %v2963 = vld [vmem:[%s37 + $0x10] sm:$0xff]
      %v2964 = vld [vmem:[%s37 + $0x18] sm:$0xff]
      %v2965 = vld [vmem:[%s39] sm:$0x1]
      %v2967 = vlaneseq
      %v2968 = vshrl.u32 %v2967, 7
      %v2969 = vsub.s32 0, %v2968
      %v2970 = vrot.slane %v2965, %v2969
      %v2973 = vsel %vm989, %v2960, 0
      %2975 = vmatprep.subr.mxu0 0.0
      %2976 = vmatpush1.msra.mxu0 %v2961
      %2977 = vmatprep.subr.mxu0 0.0
      %2978 = vmatpush1.msra.mxu0 %v2962
      %2979 = vmatprep.subr.mxu0 0.0
      %2980 = vmatpush1.msra.mxu0 %v2963
      %2981 = vmatprep.subr.mxu0 0.0
      %2982 = vmatpush1.msra.mxu0 %v2964
      %2983 = vmatprep.subr.mxu0 0.0
      %2984 = vmatpush1.msra.mxu0 0.0
      %2985 = vmatprep.subr.mxu0 0.0
      %2986 = vmatpush1.msra.mxu0 0.0
      %2987 = vmatprep.subr.mxu0 0.0
      %2988 = vmatpush1.msra.mxu0 0.0
      %2989 = vmatprep.subr.mxu0 0.0
      %2990 = vmatpush1.msra.mxu0 0.0
      %2991 = vmatprep.subr.mxu0 0.0
      %2992 = vmatpush1.msra.mxu0 0.0
      %2993 = vmatprep.subr.mxu0 0.0
      %2994 = vmatpush1.msra.mxu0 0.0
      %2995 = vmatprep.subr.mxu0 0.0
      %2996 = vmatpush1.msra.mxu0 0.0
      %2997 = vmatprep.subr.mxu0 0.0
      %2998 = vmatpush1.msra.mxu0 0.0
      %2999 = vmatprep.subr.mxu0 0.0
      %3000 = vmatpush1.msra.mxu0 0.0
      %3001 = vmatprep.subr.mxu0 0.0
      %3002 = vmatpush1.msra.mxu0 0.0
      %3003 = vmatprep.subr.mxu0 0.0
      %3004 = vmatpush1.msra.mxu0 0.0
      %3005 = vmatprep.subr.mxu0 0.0
      %3006 = vmatpush1.msra.mxu0 0.0
      %3007 = vmatprep.subr.mxu0 0.0
      %3008 = vmatpush1.msra.mxu0 0.0
      %3009 = vmatprep.subr.mxu0 0.0
      %3010 = vmatpush1.msra.mxu0 0.0
      %3011 = vmatprep.subr.mxu0 0.0
      %3012 = vmatpush1.msra.mxu0 0.0
      %3013 = vmatprep.subr.mxu0 0.0
      %3014 = vmatpush1.msra.mxu0 0.0
      %3015 = vmatprep.subr.mxu0 0.0
      %3016 = vmatpush1.msra.mxu0 0.0
      %3017 = vmatprep.subr.mxu0 0.0
      %3018 = vmatpush1.msra.mxu0 0.0
      %3019 = vmatprep.subr.mxu0 0.0
      %3020 = vmatpush1.msra.mxu0 0.0
      %3021 = vmatprep.subr.mxu0 0.0
      %3022 = vmatpush1.msra.mxu0 0.0
      %3023 = vmatprep.subr.mxu0 0.0
      %3024 = vmatpush1.msra.mxu0 0.0
      %3025 = vmatprep.subr.mxu0 0.0
      %3026 = vmatpush1.msra.mxu0 0.0
      %3027 = vmatprep.subr.mxu0 0.0
      %3028 = vmatpush1.msra.mxu0 0.0
      %3029 = vmatprep.subr.mxu0 0.0
      %3030 = vmatpush1.msra.mxu0 0.0
      %3031 = vmatprep.subr.mxu0 0.0
      %3032 = vmatpush1.msra.mxu0 0.0
      %3033 = vmatprep.subr.mxu0 0.0
      %3034 = vmatpush1.msra.mxu0 0.0
      %3035 = vmatprep.subr.mxu0 0.0
      %3036 = vmatpush1.msra.mxu0 0.0
      %3037 = vmatprep.subr.mxu0 0.0
      %3038 = vmatpush1.msra.mxu0 0.0
      %3039 = vmatprep.mubr.f32.mxu0 0.0
      %3040 = vmatmul.mubr.f32.gmra.mrb[0].mxu0 %v2973
      %v3041 = vpop.f32.mrb[0].mxu0
      %v3042 = vadd.f32 %v2970, %v3041
      %v3043 = vpop.f32.mrb[0].mxu0
      %3044 = vdwg.mxu0
      %v3045 = vadd.f32 %v2024, %v3042
      %v3046 = vsel %vm989, %v3045, 0.0
      %3047 = vadd.xlane.f32.xlu0 %v3046
      %v3048 = vpop.xlane.xlu0 %3047
      %v3049 = vmul.f32 %v3048, %v1998
      %v3050 = vsub.f32 %v3045, %v3049
      %v3051 = vmul.f32 %v3050, %v3050
      %v3052 = vsel %vm989, %v3051, 0.0
      %3053 = vadd.xlane.f32.xlu0 %v3052
      %v3054 = vpop.xlane.xlu0 %3053
      %v3055 = vmul.f32 %v3054, %v1998
      %v3056 = vadd.f32 %v3055, 1e-05
      %v3057 = vrsqrt.pop %v3056
      %v3058 = vmul.f32 %v3050, %v3057
      %v3059 = vld [vmem:[%s53] sm:$0x1]
      %v3061 = vlaneseq
      %v3062 = vshrl.u32 %v3061, 7
      %v3063 = vsub.s32 0, %v3062
      %v3064 = vrot.slane %v3059, %v3063
      %v3066 = vmul.f32 %v3058, %v3064
      %v3067 = vld [vmem:[%s55] sm:$0x1]
      %v3069 = vlaneseq
      %v3070 = vshrl.u32 %v3069, 7
      %v3071 = vsub.s32 0, %v3070
      %v3072 = vrot.slane %v3067, %v3071
      %v3074 = vadd.f32 %v3066, %v3072
      %v3075 = vld [vmem:[%s41] sm:$0xff]
      %v3076 = vld [vmem:[%s41 + $0x8] sm:$0xff]
      %v3077 = vld [vmem:[%s41 + $0x10] sm:$0xff]
      %v3078 = vld [vmem:[%s41 + $0x18] sm:$0xff]
      %v3079 = vld [vmem:[%s43] sm:$0x1]
      %v3081 = vlaneseq
      %v3082 = vshrl.u32 %v3081, 7
      %v3083 = vsub.s32 0, %v3082
      %v3084 = vrot.slane %v3079, %v3083
      %v3087 = vsel %vm989, %v3074, 0
      %3089 = vmatprep.subr.mxu0 0.0
      %3090 = vmatpush1.msra.mxu0 %v3075
      %3091 = vmatprep.subr.mxu0 0.0
      %3092 = vmatpush1.msra.mxu0 %v3076
      %3093 = vmatprep.subr.mxu0 0.0
      %3094 = vmatpush1.msra.mxu0 %v3077
      %3095 = vmatprep.subr.mxu0 0.0
      %3096 = vmatpush1.msra.mxu0 %v3078
      %3097 = vmatprep.subr.mxu0 0.0
      %3098 = vmatpush1.msra.mxu0 0.0
      %3099 = vmatprep.subr.mxu0 0.0
      %3100 = vmatpush1.msra.mxu0 0.0
      %3101 = vmatprep.subr.mxu0 0.0
      %3102 = vmatpush1.msra.mxu0 0.0
      %3103 = vmatprep.subr.mxu0 0.0
      %3104 = vmatpush1.msra.mxu0 0.0
      %3105 = vmatprep.subr.mxu0 0.0
      %3106 = vmatpush1.msra.mxu0 0.0
      %3107 = vmatprep.subr.mxu0 0.0
      %3108 = vmatpush1.msra.mxu0 0.0
      %3109 = vmatprep.subr.mxu0 0.0
      %3110 = vmatpush1.msra.mxu0 0.0
      %3111 = vmatprep.subr.mxu0 0.0
      %3112 = vmatpush1.msra.mxu0 0.0
      %3113 = vmatprep.subr.mxu0 0.0
      %3114 = vmatpush1.msra.mxu0 0.0
      %3115 = vmatprep.subr.mxu0 0.0
      %3116 = vmatpush1.msra.mxu0 0.0
      %3117 = vmatprep.subr.mxu0 0.0
      %3118 = vmatpush1.msra.mxu0 0.0
      %3119 = vmatprep.subr.mxu0 0.0
      %3120 = vmatpush1.msra.mxu0 0.0
      %3121 = vmatprep.subr.mxu0 0.0
      %3122 = vmatpush1.msra.mxu0 0.0
      %3123 = vmatprep.subr.mxu0 0.0
      %3124 = vmatpush1.msra.mxu0 0.0
      %3125 = vmatprep.subr.mxu0 0.0
      %3126 = vmatpush1.msra.mxu0 0.0
      %3127 = vmatprep.subr.mxu0 0.0
      %3128 = vmatpush1.msra.mxu0 0.0
      %3129 = vmatprep.subr.mxu0 0.0
      %3130 = vmatpush1.msra.mxu0 0.0
      %3131 = vmatprep.subr.mxu0 0.0
      %3132 = vmatpush1.msra.mxu0 0.0
      %3133 = vmatprep.subr.mxu0 0.0
      %3134 = vmatpush1.msra.mxu0 0.0
      %3135 = vmatprep.subr.mxu0 0.0
      %3136 = vmatpush1.msra.mxu0 0.0
      %3137 = vmatprep.subr.mxu0 0.0
      %3138 = vmatpush1.msra.mxu0 0.0
      %3139 = vmatprep.subr.mxu0 0.0
      %3140 = vmatpush1.msra.mxu0 0.0
      %3141 = vmatprep.subr.mxu0 0.0
      %3142 = vmatpush1.msra.mxu0 0.0
      %3143 = vmatprep.subr.mxu0 0.0
      %3144 = vmatpush1.msra.mxu0 0.0
      %3145 = vmatprep.subr.mxu0 0.0
      %3146 = vmatpush1.msra.mxu0 0.0
      %3147 = vmatprep.subr.mxu0 0.0
      %3148 = vmatpush1.msra.mxu0 0.0
      %3149 = vmatprep.subr.mxu0 0.0
      %3150 = vmatpush1.msra.mxu0 0.0
      %3151 = vmatprep.subr.mxu0 0.0
      %3152 = vmatpush1.msra.mxu0 0.0
      %3153 = vmatprep.mubr.f32.mxu0 0.0
      %3154 = vmatmul.mubr.f32.gmra.mrb[0].mxu0 %v3087
      %v3155 = vpop.f32.mrb[0].mxu0
      %v3156 = vadd.f32 %v3084, %v3155
      %v3157 = vpop.f32.mrb[0].mxu0
      %3158 = vdwg.mxu0
      %v3159 = vmax.f32 %v3156, 0.0
      %v3160 = vld [vmem:[%s45] sm:$0xff]
      %v3161 = vld [vmem:[%s45 + $0x8] sm:$0xff]
      %v3162 = vld [vmem:[%s45 + $0x10] sm:$0xff]
      %v3163 = vld [vmem:[%s45 + $0x18] sm:$0xff]
      %v3164 = vld [vmem:[%s45 + $0x20] sm:$0xff]
      %v3165 = vld [vmem:[%s45 + $0x28] sm:$0xff]
      %v3166 = vld [vmem:[%s45 + $0x30] sm:$0xff]
      %v3167 = vld [vmem:[%s45 + $0x38] sm:$0xff]
      %v3168 = vld [vmem:[%s47] sm:$0x1]
      %v3170 = vlaneseq
      %v3171 = vshrl.u32 %v3170, 7
      %v3172 = vsub.s32 0, %v3171
      %v3173 = vrot.slane %v3168, %v3172
      %vm3175 = vcmask 523264
      %v3177 = vsel %vm3175, %v3159, 0
      %3179 = vmatprep.subr.mxu0 0.0
      %3180 = vmatpush1.msra.mxu0 %v3160
      %3181 = vmatprep.subr.mxu0 0.0
      %3182 = vmatpush1.msra.mxu0 %v3161
      %3183 = vmatprep.subr.mxu0 0.0
      %3184 = vmatpush1.msra.mxu0 %v3162
      %3185 = vmatprep.subr.mxu0 0.0
      %3186 = vmatpush1.msra.mxu0 %v3163
      %3187 = vmatprep.subr.mxu0 0.0
      %3188 = vmatpush1.msra.mxu0 %v3164
      %3189 = vmatprep.subr.mxu0 0.0
      %3190 = vmatpush1.msra.mxu0 %v3165
      %3191 = vmatprep.subr.mxu0 0.0
      %3192 = vmatpush1.msra.mxu0 %v3166
      %3193 = vmatprep.subr.mxu0 0.0
      %3194 = vmatpush1.msra.mxu0 %v3167
      %3195 = vmatprep.subr.mxu0 0.0
      %3196 = vmatpush1.msra.mxu0 0.0
      %3197 = vmatprep.subr.mxu0 0.0
      %3198 = vmatpush1.msra.mxu0 0.0
      %3199 = vmatprep.subr.mxu0 0.0
      %3200 = vmatpush1.msra.mxu0 0.0
      %3201 = vmatprep.subr.mxu0 0.0
      %3202 = vmatpush1.msra.mxu0 0.0
      %3203 = vmatprep.subr.mxu0 0.0
      %3204 = vmatpush1.msra.mxu0 0.0
      %3205 = vmatprep.subr.mxu0 0.0
      %3206 = vmatpush1.msra.mxu0 0.0
      %3207 = vmatprep.subr.mxu0 0.0
      %3208 = vmatpush1.msra.mxu0 0.0
      %3209 = vmatprep.subr.mxu0 0.0
      %3210 = vmatpush1.msra.mxu0 0.0
      %3211 = vmatprep.subr.mxu0 0.0
      %3212 = vmatpush1.msra.mxu0 0.0
      %3213 = vmatprep.subr.mxu0 0.0
      %3214 = vmatpush1.msra.mxu0 0.0
      %3215 = vmatprep.subr.mxu0 0.0
      %3216 = vmatpush1.msra.mxu0 0.0
      %3217 = vmatprep.subr.mxu0 0.0
      %3218 = vmatpush1.msra.mxu0 0.0
      %3219 = vmatprep.subr.mxu0 0.0
      %3220 = vmatpush1.msra.mxu0 0.0
      %3221 = vmatprep.subr.mxu0 0.0
      %3222 = vmatpush1.msra.mxu0 0.0
      %3223 = vmatprep.subr.mxu0 0.0
      %3224 = vmatpush1.msra.mxu0 0.0
      %3225 = vmatprep.subr.mxu0 0.0
      %3226 = vmatpush1.msra.mxu0 0.0
      %3227 = vmatprep.subr.mxu0 0.0
      %3228 = vmatpush1.msra.mxu0 0.0
      %3229 = vmatprep.subr.mxu0 0.0
      %3230 = vmatpush1.msra.mxu0 0.0
      %3231 = vmatprep.subr.mxu0 0.0
      %3232 = vmatpush1.msra.mxu0 0.0
      %3233 = vmatprep.subr.mxu0 0.0
      %3234 = vmatpush1.msra.mxu0 0.0
      %3235 = vmatprep.subr.mxu0 0.0
      %3236 = vmatpush1.msra.mxu0 0.0
      %3237 = vmatprep.subr.mxu0 0.0
      %3238 = vmatpush1.msra.mxu0 0.0
      %3239 = vmatprep.subr.mxu0 0.0
      %3240 = vmatpush1.msra.mxu0 0.0
      %3241 = vmatprep.subr.mxu0 0.0
      %3242 = vmatpush1.msra.mxu0 0.0
      %3243 = vmatprep.mubr.f32.mxu0 0.0
      %3244 = vmatmul.mubr.f32.gmra.mrb[0].mxu0 %v3177
      %v3245 = vpop.f32.mrb[0].mxu0
      %v3246 = vadd.f32 %v3173, %v3245
      %v3247 = vpop.f32.mrb[0].mxu0
      %3248 = vdwg.mxu0
      %v3249 = vadd.f32 %v3074, %v3246
      %v3250 = vsel %vm989, %v3249, 0.0
      %3251 = vadd.xlane.f32.xlu0 %v3250
      %v3252 = vpop.xlane.xlu0 %3251
      %v3253 = vmul.f32 %v3252, %v1998
      %v3254 = vsub.f32 %v3249, %v3253
      %v3255 = vmul.f32 %v3254, %v3254
      %v3256 = vsel %vm989, %v3255, 0.0
      %3257 = vadd.xlane.f32.xlu0 %v3256
      %v3258 = vpop.xlane.xlu0 %3257
      %v3259 = vmul.f32 %v3258, %v1998
      %v3260 = vadd.f32 %v3259, 1e-05
      %v3261 = vrsqrt.pop %v3260
      %v3262 = vmul.f32 %v3254, %v3261
      %v3263 = vld [vmem:[%s57] sm:$0x1]
      %v3265 = vlaneseq
      %v3266 = vshrl.u32 %v3265, 7
      %v3267 = vsub.s32 0, %v3266
      %v3268 = vrot.slane %v3263, %v3267
      %v3270 = vmul.f32 %v3262, %v3268
      %v3271 = vld [vmem:[%s59] sm:$0x1]
      %v3273 = vlaneseq
      %v3274 = vshrl.u32 %v3273, 7
      %v3275 = vsub.s32 0, %v3274
      %v3276 = vrot.slane %v3271, %v3275
      %v3278 = vadd.f32 %v3270, %v3276
      %3279 = vst.msk [vmem:[%s973] sm:$0xff] %vm989, %v3278
      %p3280 = scmp.lt.s32.totalorder %s72, 1
      %s3281 = scalar_select %p3280, %s72, 1
      %s3282 = smul.addr %s3281, 8
      %s3283 = scalar_lea.vmem %s61, %s3282
      // Predicated region
      $region141: #{decoder_forward.3} parent=139 // pred_check
        %p3284 = pneg %p740
      $region142: #{decoder_forward.3} parent=139 // pred_check_branch
        %3286 = sbr.rel (%p3284) target = $region144
      $region143: #{decoder_forward.3} parent=139 // pred_region
        _
      $region144: #{decoder_forward.3} parent=139 // pred_fallthru
        _
    $region140: #{decoder_forward.3} parent=5 // pred_fallthru
      _
    %p3287 = scmp.le.s32.totalorder 2, %s67
    // Predicated region
    $region145: #{decoder_forward.3} parent=5 // pred_check
      %p3288 = pneg %p3287
    $region146: #{decoder_forward.3} parent=5 // pred_check_branch
      %3290 = sbr.rel (%p3288) target = $region148
    $region147: #{decoder_forward.3} parent=5 // pred_region
      %s3291 = ssub.s32 %s67, 2
      // Predicated region
      $region149: #{decoder_forward.3} parent=147 // pred_check
        %p3292 = pneg %p746
      $region150: #{decoder_forward.3} parent=147 // pred_check_branch
        %3294 = sbr.rel (%p3292) target = $region152
      $region151: #{decoder_forward.3} parent=147 // pred_region
        %p3295 = scmp.lt.s32.totalorder %s73, 1
        %s3296 = scalar_select %p3295, %s73, 1
        %s3297 = smul.addr %s3296, 8
        %s3298 = scalar_lea.vmem %s61, %s3297
      $region152: #{decoder_forward.3} parent=147 // pred_fallthru
        _
    $region148: #{decoder_forward.3} parent=5 // pred_fallthru
      _
  $region6: #{decoder_forward.3} parent=0 // loop_footer
    %s71 = sadd.s32 1, %s67
  $region7: #{decoder_forward.3} parent=0 // loop_footer_branch
    %66 = sbr.rel target = $region3
  $region8: #{decoder_forward.3} parent=0 // loop_exit
    _

// kernel: decoder_forward.4
$region0: #{decoder_forward.4}
  #allocation0 [shape = 'u32[]', space=smem, size = 0x4, offset = 0x4, fixed_abs, tag = 'smem constant byte address 0x4 - core index']
  #allocation1 [shape = 'u32[144,128]{1,0:T(1,128)}', space=vmem, size = 0x12000, scoped, tag = 'internal scratch']
  #allocation2 [shape = 'f32[8,32]{1,0:T(8,128)}', space=vmem, size = 0x1000, scoped, tag = 'scratch operand']
  %s0 = inlined_call_operand.smem [shape: u32[32], index: -1, kind: input, shape index: {}]
  %s1 = sld [smem:[%s0]]
  %s2 = scalar_lea.smem %s0, 1
  %s3 = sld [smem:[%s2]]
  %s4 = scalar_lea.smem %s0, 2
  %s5 = sld [smem:[%s4]]
  %s6 = scalar_lea.smem %s0, 3
  %s7 = sld [smem:[%s6]]
  %s8 = scalar_lea.smem %s0, 4
  %s9 = sld [smem:[%s8]]
  %s10 = scalar_lea.smem %s0, 5
  %s11 = sld [smem:[%s10]]
  %s12 = scalar_lea.smem %s0, 6
  %s13 = sld [smem:[%s12]]
  %s14 = scalar_lea.smem %s0, 7
  %s15 = sld [smem:[%s14]]
  %s16 = scalar_lea.smem %s0, 8
  %s17 = sld [smem:[%s16]]
  %s18 = scalar_lea.smem %s0, 9
  %s19 = sld [smem:[%s18]]
  %s20 = scalar_lea.smem %s0, 10
  %s21 = sld [smem:[%s20]]
  %s22 = scalar_lea.smem %s0, 11
  %s23 = sld [smem:[%s22]]
  %s24 = scalar_lea.smem %s0, 12
  %s25 = sld [smem:[%s24]]
  %s26 = scalar_lea.smem %s0, 13
  %s27 = sld [smem:[%s26]]
  %s28 = scalar_lea.smem %s0, 14
  %s29 = sld [smem:[%s28]]
  %s30 = scalar_lea.smem %s0, 15
  %s31 = sld [smem:[%s30]]
  %s32 = scalar_lea.smem %s0, 16
  %s33 = sld [smem:[%s32]]
  %s34 = scalar_lea.smem %s0, 17
  %s35 = sld [smem:[%s34]]
  %s36 = scalar_lea.smem %s0, 18
  %s37 = sld [smem:[%s36]]
  %s38 = scalar_lea.smem %s0, 19
  %s39 = sld [smem:[%s38]]
  %s40 = scalar_lea.smem %s0, 20
  %s41 = sld [smem:[%s40]]
  %s42 = scalar_lea.smem %s0, 21
  %s43 = sld [smem:[%s42]]
  %s44 = scalar_lea.smem %s0, 22
  %s45 = sld [smem:[%s44]]
  %s46 = scalar_lea.smem %s0, 23
  %s47 = sld [smem:[%s46]]
  %s48 = scalar_lea.smem %s0, 24
  %s49 = sld [smem:[%s48]]
  %s50 = scalar_lea.smem %s0, 25
  %s51 = sld [smem:[%s50]]
  %s52 = scalar_lea.smem %s0, 26
  %s53 = sld [smem:[%s52]]
  %s54 = scalar_lea.smem %s0, 27
  %s55 = sld [smem:[%s54]]
  %s56 = scalar_lea.smem %s0, 28
  %s57 = sld [smem:[%s56]]
  %s58 = scalar_lea.smem %s0, 29
  %s59 = sld [smem:[%s58]]
  %s60 = scalar_lea.smem %s0, 30
  %s61 = sld [smem:[%s60]]
  %s62 = scalar_lea.smem %s0, 31
  %s63 = sld [smem:[%s62]]
  %64 = xla_tuple %s61, %s63
  %s65 = sld [smem:[#allocation0]]
  $region217: #{decoder_forward.4} parent=0
    _
  %s67 = ssub.s32 1, %s65
  %s68 = scalar_select 0, %s67, %s65
  $region1: #{decoder_forward.4} parent=0
    #allocation3 [shape = 'u8[512]{0}', space=vmem, size = 0x400, scoped, tag = 'input window, operand 9, single buffered']
    #allocation4 [shape = 's32[2]{0}', space=sflag, size = 0x8, scoped, tag = 'scoped memory for decoder_forward.4']
    #allocation5 [shape = 's32[2]{0}', space=sflag, size = 0x8, scoped, tag = 'scoped memory for decoder_forward.4']
    #allocation6 [shape = 'u8[512]{0}', space=vmem, size = 0x400, scoped, tag = 'input window, operand 11, single buffered']
    #allocation7 [shape = 's32[1]{0}', space=sflag, size = 0x4, scoped, tag = 'scoped memory for decoder_forward.4']
    #allocation8 [shape = 'u8[512]{0}', space=vmem, size = 0x400, scoped, tag = 'input window, operand 13, single buffered']
    #allocation9 [shape = 'u8[512]{0}', space=vmem, size = 0x400, scoped, tag = 'input window, operand 15, single buffered']
    #allocation10 [shape = 's32[1]{0}', space=sflag, size = 0x4, scoped, tag = 'scoped memory for decoder_forward.4']
    #allocation11 [shape = 'u8[512]{0}', space=vmem, size = 0x400, scoped, tag = 'input window, operand 17, single buffered']
    #allocation12 [shape = 'u8[512]{0}', space=vmem, size = 0x400, scoped, tag = 'input window, operand 19, single buffered']
    #allocation13 [shape = 's32[1]{0}', space=sflag, size = 0x4, scoped, tag = 'scoped memory for decoder_forward.4']
    #allocation14 [shape = 'u8[512]{0}', space=vmem, size = 0x400, scoped, tag = 'input window, operand 21, single buffered']
    #allocation15 [shape = 'u8[512]{0}', space=vmem, size = 0x400, scoped, tag = 'input window, operand 23, single buffered']
    #allocation16 [shape = 's32[1]{0}', space=sflag, size = 0x4, scoped, tag = 'scoped memory for decoder_forward.4']
    #allocation17 [shape = 'u8[512]{0}', space=vmem, size = 0x400, scoped, tag = 'input window, operand 24, single buffered']
    #allocation18 [shape = 'u8[512]{0}', space=vmem, size = 0x400, scoped, tag = 'input window, operand 25, single buffered']
    #allocation19 [shape = 's32[1]{0}', space=sflag, size = 0x4, scoped, tag = 'scoped memory for decoder_forward.4']
    #allocation20 [shape = 'u8[512]{0}', space=vmem, size = 0x400, scoped, tag = 'input window, operand 26, single buffered']
    #allocation21 [shape = 'u8[512]{0}', space=vmem, size = 0x400, scoped, tag = 'input window, operand 27, single buffered']
    #allocation22 [shape = 's32[1]{0}', space=sflag, size = 0x4, scoped, tag = 'scoped memory for decoder_forward.4']
    #allocation23 [shape = 'u8[512]{0}', space=vmem, size = 0x400, scoped, tag = 'input window, operand 28, single buffered']
    #allocation24 [shape = 'u8[512]{0}', space=vmem, size = 0x400, scoped, tag = 'input window, operand 29, single buffered']
    #allocation25 [shape = 's32[1]{0}', space=sflag, size = 0x4, scoped, tag = 'scoped memory for decoder_forward.4']
    #allocation26 [shape = 'u8[32768]{0}', space=vmem, size = 0x8000, scoped, tag = 'output window, operand 1']
    %69 = vsyncpa [#allocation4], 0
    %70 = vsyncpa [#allocation7], 0
    %71 = vsyncpa [#allocation10], 0
    %72 = vsyncpa [#allocation13], 0
    %73 = vsyncpa [#allocation16], 0
    %74 = vsyncpa [#allocation19], 0
    %75 = vsyncpa [#allocation22], 0
    %76 = vsyncpa [#allocation25], 0
    %77 = vsyncpa [#allocation5], 0
    %s78 = scalar_lea.sflag [#allocation5], 1
    %79 = vsyncpa %s78, 0
    loop: start=0, step=1, limit=4
    $region2: #{decoder_forward.4} parent=1 // loop_pre_header
      _
    $region3: #{decoder_forward.4} parent=1 // loop_header
      %s81 = sphi 0, %s85
      %p82 = scmp.ge.s32.totalorder %s81, 4
      %s91 = sphi 0, %s93
      %s94 = sphi 0, %s91
      %s95 = sphi 0, %s94
      %s111 = sphi 0, %s95
      %s117 = sphi 0, %s119
      %s120 = sphi 0, %s117
      %s121 = sphi 0, %s120
      %s137 = sphi 0, %s121
      %s143 = sphi 0, %s145
      %s146 = sphi 0, %s143
      %s147 = sphi 0, %s146
      %s163 = sphi 0, %s147
      %s169 = sphi 0, %s171
      %s172 = sphi 0, %s169
      %s173 = sphi 0, %s172
      %s189 = sphi 0, %s173
      %s193 = sphi 0, %s193
      %s195 = sphi 0, %s193
      %s196 = sphi 0, %s195
      %s210 = sphi 0, %s196
      %s214 = sphi 0, %s214
      %s216 = sphi 0, %s214
      %s217 = sphi 0, %s216
      %s231 = sphi 0, %s217
      %s235 = sphi 0, %s235
      %s237 = sphi 0, %s235
      %s238 = sphi 0, %s237
      %s252 = sphi 0, %s238
      %s256 = sphi 0, %s256
      %s258 = sphi 0, %s256
      %s259 = sphi 0, %s258
      %s273 = sphi 0, %s259
      %s277 = sphi 0, %s277
      %s279 = sphi 0, %s277
      %s280 = sphi 0, %s279
      %s294 = sphi 0, %s280
      %s298 = sphi 0, %s298
      %s300 = sphi 0, %s298
      %s301 = sphi 0, %s300
      %s315 = sphi 0, %s301
      %s319 = sphi 0, %s319
      %s321 = sphi 0, %s319
      %s322 = sphi 0, %s321
      %s336 = sphi 0, %s322
      %s340 = sphi 0, %s340
      %s342 = sphi 0, %s340
      %s343 = sphi 0, %s342
      %s357 = sphi 0, %s343
      %s361 = sphi 0, %s361
      %s363 = sphi 0, %s361
      %s364 = sphi 0, %s363
      %s378 = sphi 0, %s364
      %s382 = sphi 0, %s382
      %s384 = sphi 0, %s382
      %s385 = sphi 0, %s384
      %s399 = sphi 0, %s385
      %s403 = sphi 0, %s403
      %s405 = sphi 0, %s403
      %s406 = sphi 0, %s405
      %s420 = sphi 0, %s406
      %s424 = sphi 0, %s424
      %s426 = sphi 0, %s424
      %s427 = sphi 0, %s426
      %s441 = sphi 0, %s427
      %s445 = sphi 0, %s445
      %s447 = sphi 0, %s445
      %s448 = sphi 0, %s447
      %s462 = sphi 0, %s448
      %s466 = sphi 0, %s466
      %s468 = sphi 0, %s466
      %s469 = sphi 0, %s468
      %s483 = sphi 0, %s469
      %s487 = sphi 0, %s487
      %s489 = sphi 0, %s487
      %s490 = sphi 0, %s489
      %s504 = sphi 0, %s490
      %s508 = sphi 0, %s508
      %s510 = sphi 0, %s508
      %s511 = sphi 0, %s510
      %s525 = sphi 0, %s511
      %s529 = sphi 0, %s529
      %s531 = sphi 0, %s529
      %s532 = sphi 0, %s531
      %s546 = sphi 0, %s532
      %s550 = sphi 0, %s550
      %s552 = sphi 0, %s550
      %s553 = sphi 0, %s552
      %s567 = sphi 0, %s553
      %s571 = sphi 0, %s571
      %s573 = sphi 0, %s571
      %s574 = sphi 0, %s573
      %s588 = sphi 0, %s574
      %s592 = sphi 0, %s592
      %s594 = sphi 0, %s592
      %s595 = sphi 0, %s594
      %s609 = sphi 0, %s595
      %s613 = sphi 0, %s613
      %s615 = sphi 0, %s613
      %s616 = sphi 0, %s615
      %s630 = sphi 0, %s616
      %s634 = sphi 0, %s634
      %s636 = sphi 0, %s634
      %s637 = sphi 0, %s636
      %s651 = sphi 0, %s637
      %s655 = sphi 0, %s655
      %s657 = sphi 0, %s655
      %s658 = sphi 0, %s657
      %s672 = sphi 0, %s658
      %s676 = sphi 0, %s676
      %s678 = sphi 0, %s676
      %s679 = sphi 0, %s678
      %s693 = sphi 0, %s679
      %s697 = sphi 0, %s697
      %s699 = sphi 0, %s697
      %s700 = sphi 0, %s699
      %s714 = sphi 0, %s700
      %s718 = sphi 0, %s718
      %s720 = sphi 0, %s718
      %s721 = sphi 0, %s720
      %s735 = sphi 0, %s721
      %s741 = sphi 0, %s743
      %s744 = sphi 0, %s741
      %s745 = sphi 0, %s744
      %s761 = sphi 0, %s745
      %s767 = sphi 0, %s769
      %s770 = sphi 0, %s767
      %s771 = sphi 0, %s770
      %s787 = sphi 0, %s771
    $region4: #{decoder_forward.4} parent=1 // loop_header_branch
      %84 = sbr.rel (%p82) target = $region8
    $region5: #{decoder_forward.4} parent=1 // loop_body
      %s86 = ssub.s32 %s81, 1
      %s87 = ssub.s32 %s81, 2
      %s88 = sadd.s32 %s81, 1
      %s89 = ssub.s32 %s81, %s88
      %p90 = scmp.eq.s32.totalorder %s89, 0
      %s92 = sadd.s32 %s91, 1
      %s93 = scalar_select %p90, %s91, %s92
      %p96 = pneg %p90
      %p97 = scmp.eq.s32.totalorder %s81, 1
      %p98 = por %p96, %p97
      %p99 = scmp.ne.s32.totalorder %s91, %s94
      %p100 = scmp.eq.s32.totalorder %s81, 0
      %p101 = por %p99, %p100
      %p102 = scmp.ne.s32.totalorder %s91, %s94
      %p103 = scmp.eq.s32.totalorder %s86, 1
      %p104 = por %p102, %p103
      %p105 = scmp.ne.s32.totalorder %s94, %s95
      %p106 = scmp.eq.s32.totalorder %s86, 0
      %p107 = por %p105, %p106
      %p108 = scmp.ne.s32.totalorder %s94, %s95
      %p109 = scmp.eq.s32.totalorder %s87, 1
      %p110 = por %p108, %p109
      %p112 = scmp.ne.s32.totalorder %s95, %s111
      %p113 = scmp.eq.s32.totalorder %s87, 0
      %p114 = por %p112, %p113
      %s115 = ssub.s32 %s81, %s88
      %p116 = scmp.eq.s32.totalorder %s115, 0
      %s118 = sadd.s32 %s117, 1
      %s119 = scalar_select %p116, %s117, %s118
      %p122 = pneg %p116
      %p123 = scmp.eq.s32.totalorder %s81, 1
      %p124 = por %p122, %p123
      %p125 = scmp.ne.s32.totalorder %s117, %s120
      %p126 = scmp.eq.s32.totalorder %s81, 0
      %p127 = por %p125, %p126
      %p128 = scmp.ne.s32.totalorder %s117, %s120
      %p129 = scmp.eq.s32.totalorder %s86, 1
      %p130 = por %p128, %p129
      %p131 = scmp.ne.s32.totalorder %s120, %s121
      %p132 = scmp.eq.s32.totalorder %s86, 0
      %p133 = por %p131, %p132
      %p134 = scmp.ne.s32.totalorder %s120, %s121
      %p135 = scmp.eq.s32.totalorder %s87, 1
      %p136 = por %p134, %p135
      %p138 = scmp.ne.s32.totalorder %s121, %s137
      %p139 = scmp.eq.s32.totalorder %s87, 0
      %p140 = por %p138, %p139
      %s141 = ssub.s32 %s81, %s88
      %p142 = scmp.eq.s32.totalorder %s141, 0
      %s144 = sadd.s32 %s143, 1
      %s145 = scalar_select %p142, %s143, %s144
      %p148 = pneg %p142
      %p149 = scmp.eq.s32.totalorder %s81, 1
      %p150 = por %p148, %p149
      %p151 = scmp.ne.s32.totalorder %s143, %s146
      %p152 = scmp.eq.s32.totalorder %s81, 0
      %p153 = por %p151, %p152
      %p154 = scmp.ne.s32.totalorder %s143, %s146
      %p155 = scmp.eq.s32.totalorder %s86, 1
      %p156 = por %p154, %p155
      %p157 = scmp.ne.s32.totalorder %s146, %s147
      %p158 = scmp.eq.s32.totalorder %s86, 0
      %p159 = por %p157, %p158
      %p160 = scmp.ne.s32.totalorder %s146, %s147
      %p161 = scmp.eq.s32.totalorder %s87, 1
      %p162 = por %p160, %p161
      %p164 = scmp.ne.s32.totalorder %s147, %s163
      %p165 = scmp.eq.s32.totalorder %s87, 0
      %p166 = por %p164, %p165
      %s167 = ssub.s32 %s81, %s88
      %p168 = scmp.eq.s32.totalorder %s167, 0
      %s170 = sadd.s32 %s169, 1
      %s171 = scalar_select %p168, %s169, %s170
      %p174 = pneg %p168
      %p175 = scmp.eq.s32.totalorder %s81, 1
      %p176 = por %p174, %p175
      %p177 = scmp.ne.s32.totalorder %s169, %s172
      %p178 = scmp.eq.s32.totalorder %s81, 0
      %p179 = por %p177, %p178
      %p180 = scmp.ne.s32.totalorder %s169, %s172
      %p181 = scmp.eq.s32.totalorder %s86, 1
      %p182 = por %p180, %p181
      %p183 = scmp.ne.s32.totalorder %s172, %s173
      %p184 = scmp.eq.s32.totalorder %s86, 0
      %p185 = por %p183, %p184
      %p186 = scmp.ne.s32.totalorder %s172, %s173
      %p187 = scmp.eq.s32.totalorder %s87, 1
      %p188 = por %p186, %p187
      %p190 = scmp.ne.s32.totalorder %s173, %s189
      %p191 = scmp.eq.s32.totalorder %s87, 0
      %p192 = por %p190, %p191
      %s194 = sadd.s32 %s193, 1
      %p197 = scmp.eq.s32.totalorder %s81, 1
      %p198 = scmp.ne.s32.totalorder %s193, %s195
      %p199 = scmp.eq.s32.totalorder %s81, 0
      %p200 = por %p198, %p199
      %p201 = scmp.ne.s32.totalorder %s193, %s195
      %p202 = scmp.eq.s32.totalorder %s86, 1
      %p203 = por %p201, %p202
      %p204 = scmp.ne.s32.totalorder %s195, %s196
      %p205 = scmp.eq.s32.totalorder %s86, 0
      %p206 = por %p204, %p205
      %p207 = scmp.ne.s32.totalorder %s195, %s196
      %p208 = scmp.eq.s32.totalorder %s87, 1
      %p209 = por %p207, %p208
      %p211 = scmp.ne.s32.totalorder %s196, %s210
      %p212 = scmp.eq.s32.totalorder %s87, 0
      %p213 = por %p211, %p212
      %s215 = sadd.s32 %s214, 1
      %p218 = scmp.eq.s32.totalorder %s81, 1
      %p219 = scmp.ne.s32.totalorder %s214, %s216
      %p220 = scmp.eq.s32.totalorder %s81, 0
      %p221 = por %p219, %p220
      %p222 = scmp.ne.s32.totalorder %s214, %s216
      %p223 = scmp.eq.s32.totalorder %s86, 1
      %p224 = por %p222, %p223
      %p225 = scmp.ne.s32.totalorder %s216, %s217
      %p226 = scmp.eq.s32.totalorder %s86, 0
      %p227 = por %p225, %p226
      %p228 = scmp.ne.s32.totalorder %s216, %s217
      %p229 = scmp.eq.s32.totalorder %s87, 1
      %p230 = por %p228, %p229
      %p232 = scmp.ne.s32.totalorder %s217, %s231
      %p233 = scmp.eq.s32.totalorder %s87, 0
      %p234 = por %p232, %p233
      %s236 = sadd.s32 %s235, 1
      %p239 = scmp.eq.s32.totalorder %s81, 1
      %p240 = scmp.ne.s32.totalorder %s235, %s237
      %p241 = scmp.eq.s32.totalorder %s81, 0
      %p242 = por %p240, %p241
      %p243 = scmp.ne.s32.totalorder %s235, %s237
      %p244 = scmp.eq.s32.totalorder %s86, 1
      %p245 = por %p243, %p244
      %p246 = scmp.ne.s32.totalorder %s237, %s238
      %p247 = scmp.eq.s32.totalorder %s86, 0
      %p248 = por %p246, %p247
      %p249 = scmp.ne.s32.totalorder %s237, %s238
      %p250 = scmp.eq.s32.totalorder %s87, 1
      %p251 = por %p249, %p250
      %p253 = scmp.ne.s32.totalorder %s238, %s252
      %p254 = scmp.eq.s32.totalorder %s87, 0
      %p255 = por %p253, %p254
      %s257 = sadd.s32 %s256, 1
      %p260 = scmp.eq.s32.totalorder %s81, 1
      %p261 = scmp.ne.s32.totalorder %s256, %s258
      %p262 = scmp.eq.s32.totalorder %s81, 0
      %p263 = por %p261, %p262
      %p264 = scmp.ne.s32.totalorder %s256, %s258
      %p265 = scmp.eq.s32.totalorder %s86, 1
      %p266 = por %p264, %p265
      %p267 = scmp.ne.s32.totalorder %s258, %s259
      %p268 = scmp.eq.s32.totalorder %s86, 0
      %p269 = por %p267, %p268
      %p270 = scmp.ne.s32.totalorder %s258, %s259
      %p271 = scmp.eq.s32.totalorder %s87, 1
      %p272 = por %p270, %p271
      %p274 = scmp.ne.s32.totalorder %s259, %s273
      %p275 = scmp.eq.s32.totalorder %s87, 0
      %p276 = por %p274, %p275
      %s278 = sadd.s32 %s277, 1
      %p281 = scmp.eq.s32.totalorder %s81, 1
      %p282 = scmp.ne.s32.totalorder %s277, %s279
      %p283 = scmp.eq.s32.totalorder %s81, 0
      %p284 = por %p282, %p283
      %p285 = scmp.ne.s32.totalorder %s277, %s279
      %p286 = scmp.eq.s32.totalorder %s86, 1
      %p287 = por %p285, %p286
      %p288 = scmp.ne.s32.totalorder %s279, %s280
      %p289 = scmp.eq.s32.totalorder %s86, 0
      %p290 = por %p288, %p289
      %p291 = scmp.ne.s32.totalorder %s279, %s280
      %p292 = scmp.eq.s32.totalorder %s87, 1
      %p293 = por %p291, %p292
      %p295 = scmp.ne.s32.totalorder %s280, %s294
      %p296 = scmp.eq.s32.totalorder %s87, 0
      %p297 = por %p295, %p296
      %s299 = sadd.s32 %s298, 1
      %p302 = scmp.eq.s32.totalorder %s81, 1
      %p303 = scmp.ne.s32.totalorder %s298, %s300
      %p304 = scmp.eq.s32.totalorder %s81, 0
      %p305 = por %p303, %p304
      %p306 = scmp.ne.s32.totalorder %s298, %s300
      %p307 = scmp.eq.s32.totalorder %s86, 1
      %p308 = por %p306, %p307
      %p309 = scmp.ne.s32.totalorder %s300, %s301
      %p310 = scmp.eq.s32.totalorder %s86, 0
      %p311 = por %p309, %p310
      %p312 = scmp.ne.s32.totalorder %s300, %s301
      %p313 = scmp.eq.s32.totalorder %s87, 1
      %p314 = por %p312, %p313
      %p316 = scmp.ne.s32.totalorder %s301, %s315
      %p317 = scmp.eq.s32.totalorder %s87, 0
      %p318 = por %p316, %p317
      %s320 = sadd.s32 %s319, 1
      %p323 = scmp.eq.s32.totalorder %s81, 1
      %p324 = scmp.ne.s32.totalorder %s319, %s321
      %p325 = scmp.eq.s32.totalorder %s81, 0
      %p326 = por %p324, %p325
      %p327 = scmp.ne.s32.totalorder %s319, %s321
      %p328 = scmp.eq.s32.totalorder %s86, 1
      %p329 = por %p327, %p328
      %p330 = scmp.ne.s32.totalorder %s321, %s322
      %p331 = scmp.eq.s32.totalorder %s86, 0
      %p332 = por %p330, %p331
      %p333 = scmp.ne.s32.totalorder %s321, %s322
      %p334 = scmp.eq.s32.totalorder %s87, 1
      %p335 = por %p333, %p334
      %p337 = scmp.ne.s32.totalorder %s322, %s336
      %p338 = scmp.eq.s32.totalorder %s87, 0
      %p339 = por %p337, %p338
      %s341 = sadd.s32 %s340, 1
      %p344 = scmp.eq.s32.totalorder %s81, 1
      %p345 = scmp.ne.s32.totalorder %s340, %s342
      %p346 = scmp.eq.s32.totalorder %s81, 0
      %p347 = por %p345, %p346
      %p348 = scmp.ne.s32.totalorder %s340, %s342
      %p349 = scmp.eq.s32.totalorder %s86, 1
      %p350 = por %p348, %p349
      %p351 = scmp.ne.s32.totalorder %s342, %s343
      %p352 = scmp.eq.s32.totalorder %s86, 0
      %p353 = por %p351, %p352
      %p354 = scmp.ne.s32.totalorder %s342, %s343
      %p355 = scmp.eq.s32.totalorder %s87, 1
      %p356 = por %p354, %p355
      %p358 = scmp.ne.s32.totalorder %s343, %s357
      %p359 = scmp.eq.s32.totalorder %s87, 0
      %p360 = por %p358, %p359
      %s362 = sadd.s32 %s361, 1
      %p365 = scmp.eq.s32.totalorder %s81, 1
      %p366 = scmp.ne.s32.totalorder %s361, %s363
      %p367 = scmp.eq.s32.totalorder %s81, 0
      %p368 = por %p366, %p367
      %p369 = scmp.ne.s32.totalorder %s361, %s363
      %p370 = scmp.eq.s32.totalorder %s86, 1
      %p371 = por %p369, %p370
      %p372 = scmp.ne.s32.totalorder %s363, %s364
      %p373 = scmp.eq.s32.totalorder %s86, 0
      %p374 = por %p372, %p373
      %p375 = scmp.ne.s32.totalorder %s363, %s364
      %p376 = scmp.eq.s32.totalorder %s87, 1
      %p377 = por %p375, %p376
      %p379 = scmp.ne.s32.totalorder %s364, %s378
      %p380 = scmp.eq.s32.totalorder %s87, 0
      %p381 = por %p379, %p380
      %s383 = sadd.s32 %s382, 1
      %p386 = scmp.eq.s32.totalorder %s81, 1
      %p387 = scmp.ne.s32.totalorder %s382, %s384
      %p388 = scmp.eq.s32.totalorder %s81, 0
      %p389 = por %p387, %p388
      %p390 = scmp.ne.s32.totalorder %s382, %s384
      %p391 = scmp.eq.s32.totalorder %s86, 1
      %p392 = por %p390, %p391
      %p393 = scmp.ne.s32.totalorder %s384, %s385
      %p394 = scmp.eq.s32.totalorder %s86, 0
      %p395 = por %p393, %p394
      %p396 = scmp.ne.s32.totalorder %s384, %s385
      %p397 = scmp.eq.s32.totalorder %s87, 1
      %p398 = por %p396, %p397
      %p400 = scmp.ne.s32.totalorder %s385, %s399
      %p401 = scmp.eq.s32.totalorder %s87, 0
      %p402 = por %p400, %p401
      %s404 = sadd.s32 %s403, 1
      %p407 = scmp.eq.s32.totalorder %s81, 1
      %p408 = scmp.ne.s32.totalorder %s403, %s405
      %p409 = scmp.eq.s32.totalorder %s81, 0
      %p410 = por %p408, %p409
      %p411 = scmp.ne.s32.totalorder %s403, %s405
      %p412 = scmp.eq.s32.totalorder %s86, 1
      %p413 = por %p411, %p412
      %p414 = scmp.ne.s32.totalorder %s405, %s406
      %p415 = scmp.eq.s32.totalorder %s86, 0
      %p416 = por %p414, %p415
      %p417 = scmp.ne.s32.totalorder %s405, %s406
      %p418 = scmp.eq.s32.totalorder %s87, 1
      %p419 = por %p417, %p418
      %p421 = scmp.ne.s32.totalorder %s406, %s420
      %p422 = scmp.eq.s32.totalorder %s87, 0
      %p423 = por %p421, %p422
      %s425 = sadd.s32 %s424, 1
      %p428 = scmp.eq.s32.totalorder %s81, 1
      %p429 = scmp.ne.s32.totalorder %s424, %s426
      %p430 = scmp.eq.s32.totalorder %s81, 0
      %p431 = por %p429, %p430
      %p432 = scmp.ne.s32.totalorder %s424, %s426
      %p433 = scmp.eq.s32.totalorder %s86, 1
      %p434 = por %p432, %p433
      %p435 = scmp.ne.s32.totalorder %s426, %s427
      %p436 = scmp.eq.s32.totalorder %s86, 0
      %p437 = por %p435, %p436
      %p438 = scmp.ne.s32.totalorder %s426, %s427
      %p439 = scmp.eq.s32.totalorder %s87, 1
      %p440 = por %p438, %p439
      %p442 = scmp.ne.s32.totalorder %s427, %s441
      %p443 = scmp.eq.s32.totalorder %s87, 0
      %p444 = por %p442, %p443
      %s446 = sadd.s32 %s445, 1
      %p449 = scmp.eq.s32.totalorder %s81, 1
      %p450 = scmp.ne.s32.totalorder %s445, %s447
      %p451 = scmp.eq.s32.totalorder %s81, 0
      %p452 = por %p450, %p451
      %p453 = scmp.ne.s32.totalorder %s445, %s447
      %p454 = scmp.eq.s32.totalorder %s86, 1
      %p455 = por %p453, %p454
      %p456 = scmp.ne.s32.totalorder %s447, %s448
      %p457 = scmp.eq.s32.totalorder %s86, 0
      %p458 = por %p456, %p457
      %p459 = scmp.ne.s32.totalorder %s447, %s448
      %p460 = scmp.eq.s32.totalorder %s87, 1
      %p461 = por %p459, %p460
      %p463 = scmp.ne.s32.totalorder %s448, %s462
      %p464 = scmp.eq.s32.totalorder %s87, 0
      %p465 = por %p463, %p464
      %s467 = sadd.s32 %s466, 1
      %p470 = scmp.eq.s32.totalorder %s81, 1
      %p471 = scmp.ne.s32.totalorder %s466, %s468
      %p472 = scmp.eq.s32.totalorder %s81, 0
      %p473 = por %p471, %p472
      %p474 = scmp.ne.s32.totalorder %s466, %s468
      %p475 = scmp.eq.s32.totalorder %s86, 1
      %p476 = por %p474, %p475
      %p477 = scmp.ne.s32.totalorder %s468, %s469
      %p478 = scmp.eq.s32.totalorder %s86, 0
      %p479 = por %p477, %p478
      %p480 = scmp.ne.s32.totalorder %s468, %s469
      %p481 = scmp.eq.s32.totalorder %s87, 1
      %p482 = por %p480, %p481
      %p484 = scmp.ne.s32.totalorder %s469, %s483
      %p485 = scmp.eq.s32.totalorder %s87, 0
      %p486 = por %p484, %p485
      %s488 = sadd.s32 %s487, 1
      %p491 = scmp.eq.s32.totalorder %s81, 1
      %p492 = scmp.ne.s32.totalorder %s487, %s489
      %p493 = scmp.eq.s32.totalorder %s81, 0
      %p494 = por %p492, %p493
      %p495 = scmp.ne.s32.totalorder %s487, %s489
      %p496 = scmp.eq.s32.totalorder %s86, 1
      %p497 = por %p495, %p496
      %p498 = scmp.ne.s32.totalorder %s489, %s490
      %p499 = scmp.eq.s32.totalorder %s86, 0
      %p500 = por %p498, %p499
      %p501 = scmp.ne.s32.totalorder %s489, %s490
      %p502 = scmp.eq.s32.totalorder %s87, 1
      %p503 = por %p501, %p502
      %p505 = scmp.ne.s32.totalorder %s490, %s504
      %p506 = scmp.eq.s32.totalorder %s87, 0
      %p507 = por %p505, %p506
      %s509 = sadd.s32 %s508, 1
      %p512 = scmp.eq.s32.totalorder %s81, 1
      %p513 = scmp.ne.s32.totalorder %s508, %s510
      %p514 = scmp.eq.s32.totalorder %s81, 0
      %p515 = por %p513, %p514
      %p516 = scmp.ne.s32.totalorder %s508, %s510
      %p517 = scmp.eq.s32.totalorder %s86, 1
      %p518 = por %p516, %p517
      %p519 = scmp.ne.s32.totalorder %s510, %s511
      %p520 = scmp.eq.s32.totalorder %s86, 0
      %p521 = por %p519, %p520
      %p522 = scmp.ne.s32.totalorder %s510, %s511
      %p523 = scmp.eq.s32.totalorder %s87, 1
      %p524 = por %p522, %p523
      %p526 = scmp.ne.s32.totalorder %s511, %s525
      %p527 = scmp.eq.s32.totalorder %s87, 0
      %p528 = por %p526, %p527
      %s530 = sadd.s32 %s529, 1
      %p533 = scmp.eq.s32.totalorder %s81, 1
      %p534 = scmp.ne.s32.totalorder %s529, %s531
      %p535 = scmp.eq.s32.totalorder %s81, 0
      %p536 = por %p534, %p535
      %p537 = scmp.ne.s32.totalorder %s529, %s531
      %p538 = scmp.eq.s32.totalorder %s86, 1
      %p539 = por %p537, %p538
      %p540 = scmp.ne.s32.totalorder %s531, %s532
      %p541 = scmp.eq.s32.totalorder %s86, 0
      %p542 = por %p540, %p541
      %p543 = scmp.ne.s32.totalorder %s531, %s532
      %p544 = scmp.eq.s32.totalorder %s87, 1
      %p545 = por %p543, %p544
      %p547 = scmp.ne.s32.totalorder %s532, %s546
      %p548 = scmp.eq.s32.totalorder %s87, 0
      %p549 = por %p547, %p548
      %s551 = sadd.s32 %s550, 1
      %p554 = scmp.eq.s32.totalorder %s81, 1
      %p555 = scmp.ne.s32.totalorder %s550, %s552
      %p556 = scmp.eq.s32.totalorder %s81, 0
      %p557 = por %p555, %p556
      %p558 = scmp.ne.s32.totalorder %s550, %s552
      %p559 = scmp.eq.s32.totalorder %s86, 1
      %p560 = por %p558, %p559
      %p561 = scmp.ne.s32.totalorder %s552, %s553
      %p562 = scmp.eq.s32.totalorder %s86, 0
      %p563 = por %p561, %p562
      %p564 = scmp.ne.s32.totalorder %s552, %s553
      %p565 = scmp.eq.s32.totalorder %s87, 1
      %p566 = por %p564, %p565
      %p568 = scmp.ne.s32.totalorder %s553, %s567
      %p569 = scmp.eq.s32.totalorder %s87, 0
      %p570 = por %p568, %p569
      %s572 = sadd.s32 %s571, 1
      %p575 = scmp.eq.s32.totalorder %s81, 1
      %p576 = scmp.ne.s32.totalorder %s571, %s573
      %p577 = scmp.eq.s32.totalorder %s81, 0
      %p578 = por %p576, %p577
      %p579 = scmp.ne.s32.totalorder %s571, %s573
      %p580 = scmp.eq.s32.totalorder %s86, 1
      %p581 = por %p579, %p580
      %p582 = scmp.ne.s32.totalorder %s573, %s574
      %p583 = scmp.eq.s32.totalorder %s86, 0
      %p584 = por %p582, %p583
      %p585 = scmp.ne.s32.totalorder %s573, %s574
      %p586 = scmp.eq.s32.totalorder %s87, 1
      %p587 = por %p585, %p586
      %p589 = scmp.ne.s32.totalorder %s574, %s588
      %p590 = scmp.eq.s32.totalorder %s87, 0
      %p591 = por %p589, %p590
      %s593 = sadd.s32 %s592, 1
      %p596 = scmp.eq.s32.totalorder %s81, 1
      %p597 = scmp.ne.s32.totalorder %s592, %s594
      %p598 = scmp.eq.s32.totalorder %s81, 0
      %p599 = por %p597, %p598
      %p600 = scmp.ne.s32.totalorder %s592, %s594
      %p601 = scmp.eq.s32.totalorder %s86, 1
      %p602 = por %p600, %p601
      %p603 = scmp.ne.s32.totalorder %s594, %s595
      %p604 = scmp.eq.s32.totalorder %s86, 0
      %p605 = por %p603, %p604
      %p606 = scmp.ne.s32.totalorder %s594, %s595
      %p607 = scmp.eq.s32.totalorder %s87, 1
      %p608 = por %p606, %p607
      %p610 = scmp.ne.s32.totalorder %s595, %s609
      %p611 = scmp.eq.s32.totalorder %s87, 0
      %p612 = por %p610, %p611
      %s614 = sadd.s32 %s613, 1
      %p617 = scmp.eq.s32.totalorder %s81, 1
      %p618 = scmp.ne.s32.totalorder %s613, %s615
      %p619 = scmp.eq.s32.totalorder %s81, 0
      %p620 = por %p618, %p619
      %p621 = scmp.ne.s32.totalorder %s613, %s615
      %p622 = scmp.eq.s32.totalorder %s86, 1
      %p623 = por %p621, %p622
      %p624 = scmp.ne.s32.totalorder %s615, %s616
      %p625 = scmp.eq.s32.totalorder %s86, 0
      %p626 = por %p624, %p625
      %p627 = scmp.ne.s32.totalorder %s615, %s616
      %p628 = scmp.eq.s32.totalorder %s87, 1
      %p629 = por %p627, %p628
      %p631 = scmp.ne.s32.totalorder %s616, %s630
      %p632 = scmp.eq.s32.totalorder %s87, 0
      %p633 = por %p631, %p632
      %s635 = sadd.s32 %s634, 1
      %p638 = scmp.eq.s32.totalorder %s81, 1
      %p639 = scmp.ne.s32.totalorder %s634, %s636
      %p640 = scmp.eq.s32.totalorder %s81, 0
      %p641 = por %p639, %p640
      %p642 = scmp.ne.s32.totalorder %s634, %s636
      %p643 = scmp.eq.s32.totalorder %s86, 1
      %p644 = por %p642, %p643
      %p645 = scmp.ne.s32.totalorder %s636, %s637
      %p646 = scmp.eq.s32.totalorder %s86, 0
      %p647 = por %p645, %p646
      %p648 = scmp.ne.s32.totalorder %s636, %s637
      %p649 = scmp.eq.s32.totalorder %s87, 1
      %p650 = por %p648, %p649
      %p652 = scmp.ne.s32.totalorder %s637, %s651
      %p653 = scmp.eq.s32.totalorder %s87, 0
      %p654 = por %p652, %p653
      %s656 = sadd.s32 %s655, 1
      %p659 = scmp.eq.s32.totalorder %s81, 1
      %p660 = scmp.ne.s32.totalorder %s655, %s657
      %p661 = scmp.eq.s32.totalorder %s81, 0
      %p662 = por %p660, %p661
      %p663 = scmp.ne.s32.totalorder %s655, %s657
      %p664 = scmp.eq.s32.totalorder %s86, 1
      %p665 = por %p663, %p664
      %p666 = scmp.ne.s32.totalorder %s657, %s658
      %p667 = scmp.eq.s32.totalorder %s86, 0
      %p668 = por %p666, %p667
      %p669 = scmp.ne.s32.totalorder %s657, %s658
      %p670 = scmp.eq.s32.totalorder %s87, 1
      %p671 = por %p669, %p670
      %p673 = scmp.ne.s32.totalorder %s658, %s672
      %p674 = scmp.eq.s32.totalorder %s87, 0
      %p675 = por %p673, %p674
      %s677 = sadd.s32 %s676, 1
      %p680 = scmp.eq.s32.totalorder %s81, 1
      %p681 = scmp.ne.s32.totalorder %s676, %s678
      %p682 = scmp.eq.s32.totalorder %s81, 0
      %p683 = por %p681, %p682
      %p684 = scmp.ne.s32.totalorder %s676, %s678
      %p685 = scmp.eq.s32.totalorder %s86, 1
      %p686 = por %p684, %p685
      %p687 = scmp.ne.s32.totalorder %s678, %s679
      %p688 = scmp.eq.s32.totalorder %s86, 0
      %p689 = por %p687, %p688
      %p690 = scmp.ne.s32.totalorder %s678, %s679
      %p691 = scmp.eq.s32.totalorder %s87, 1
      %p692 = por %p690, %p691
      %p694 = scmp.ne.s32.totalorder %s679, %s693
      %p695 = scmp.eq.s32.totalorder %s87, 0
      %p696 = por %p694, %p695
      %s698 = sadd.s32 %s697, 1
      %p701 = scmp.eq.s32.totalorder %s81, 1
      %p702 = scmp.ne.s32.totalorder %s697, %s699
      %p703 = scmp.eq.s32.totalorder %s81, 0
      %p704 = por %p702, %p703
      %p705 = scmp.ne.s32.totalorder %s697, %s699
      %p706 = scmp.eq.s32.totalorder %s86, 1
      %p707 = por %p705, %p706
      %p708 = scmp.ne.s32.totalorder %s699, %s700
      %p709 = scmp.eq.s32.totalorder %s86, 0
      %p710 = por %p708, %p709
      %p711 = scmp.ne.s32.totalorder %s699, %s700
      %p712 = scmp.eq.s32.totalorder %s87, 1
      %p713 = por %p711, %p712
      %p715 = scmp.ne.s32.totalorder %s700, %s714
      %p716 = scmp.eq.s32.totalorder %s87, 0
      %p717 = por %p715, %p716
      %s719 = sadd.s32 %s718, 1
      %p722 = scmp.eq.s32.totalorder %s81, 1
      %p723 = scmp.ne.s32.totalorder %s718, %s720
      %p724 = scmp.eq.s32.totalorder %s81, 0
      %p725 = por %p723, %p724
      %p726 = scmp.ne.s32.totalorder %s718, %s720
      %p727 = scmp.eq.s32.totalorder %s86, 1
      %p728 = por %p726, %p727
      %p729 = scmp.ne.s32.totalorder %s720, %s721
      %p730 = scmp.eq.s32.totalorder %s86, 0
      %p731 = por %p729, %p730
      %p732 = scmp.ne.s32.totalorder %s720, %s721
      %p733 = scmp.eq.s32.totalorder %s87, 1
      %p734 = por %p732, %p733
      %p736 = scmp.ne.s32.totalorder %s721, %s735
      %p737 = scmp.eq.s32.totalorder %s87, 0
      %p738 = por %p736, %p737
      %s739 = ssub.s32 %s81, %s88
      %p740 = scmp.eq.s32.totalorder %s739, 0
      %s742 = sadd.s32 %s741, 1
      %s743 = scalar_select %p740, %s741, %s742
      %p746 = pneg %p740
      %p747 = scmp.eq.s32.totalorder %s81, 1
      %p748 = por %p746, %p747
      %p749 = scmp.ne.s32.totalorder %s741, %s744
      %p750 = scmp.eq.s32.totalorder %s81, 0
      %p751 = por %p749, %p750
      %p752 = scmp.ne.s32.totalorder %s741, %s744
      %p753 = scmp.eq.s32.totalorder %s86, 1
      %p754 = por %p752, %p753
      %p755 = scmp.ne.s32.totalorder %s744, %s745
      %p756 = scmp.eq.s32.totalorder %s86, 0
      %p757 = por %p755, %p756
      %p758 = scmp.ne.s32.totalorder %s744, %s745
      %p759 = scmp.eq.s32.totalorder %s87, 1
      %p760 = por %p758, %p759
      %p762 = scmp.ne.s32.totalorder %s745, %s761
      %p763 = scmp.eq.s32.totalorder %s87, 0
      %p764 = por %p762, %p763
      %s765 = ssub.s32 %s81, %s88
      %p766 = scmp.eq.s32.totalorder %s765, 0
      %s768 = sadd.s32 %s767, 1
      %s769 = scalar_select %p766, %s767, %s768
      %p772 = pneg %p766
      %p773 = scmp.eq.s32.totalorder %s81, 1
      %p774 = por %p772, %p773
      %p775 = scmp.ne.s32.totalorder %s767, %s770
      %p776 = scmp.eq.s32.totalorder %s81, 0
      %p777 = por %p775, %p776
      %p778 = scmp.ne.s32.totalorder %s767, %s770
      %p779 = scmp.eq.s32.totalorder %s86, 1
      %p780 = por %p778, %p779
      %p781 = scmp.ne.s32.totalorder %s770, %s771
      %p782 = scmp.eq.s32.totalorder %s86, 0
      %p783 = por %p781, %p782
      %p784 = scmp.ne.s32.totalorder %s770, %s771
      %p785 = scmp.eq.s32.totalorder %s87, 1
      %p786 = por %p784, %p785
      %p788 = scmp.ne.s32.totalorder %s771, %s787
      %p789 = scmp.eq.s32.totalorder %s87, 0
      %p790 = por %p788, %p789
      %p791 = scmp.le.s32.totalorder 1, %s81
      %p792 = scmp.lt.s32.totalorder %s81, 3
      %p793 = pnand %p791, %p792
      %p794 = pneg %p793
      // Predicated region
      $region9: #{decoder_forward.4} parent=5 // pred_check
        _
      $region10: #{decoder_forward.4} parent=5 // pred_check_branch
        %796 = sbr.rel (%p793) target = $region12
      $region11: #{decoder_forward.4} parent=5 // pred_region
        %s797 = ssub.s32 %s81, 1
        // Predicated region
        $region13: #{decoder_forward.4} parent=11 // pred_check
          %p798 = pneg %p206
        $region14: #{decoder_forward.4} parent=11 // pred_check_branch
          %800 = sbr.rel (%p798) target = $region16
        $region15: #{decoder_forward.4} parent=11 // pred_region
          _
        $region16: #{decoder_forward.4} parent=11 // pred_fallthru
          _
        // Predicated region
        $region17: #{decoder_forward.4} parent=11 // pred_check
          %p801 = pneg %p227
        $region18: #{decoder_forward.4} parent=11 // pred_check_branch
          %803 = sbr.rel (%p801) target = $region20
        $region19: #{decoder_forward.4} parent=11 // pred_region
          _
        $region20: #{decoder_forward.4} parent=11 // pred_fallthru
          _
        // Predicated region
        $region21: #{decoder_forward.4} parent=11 // pred_check
          %p804 = pneg %p248
        $region22: #{decoder_forward.4} parent=11 // pred_check_branch
          %806 = sbr.rel (%p804) target = $region24
        $region23: #{decoder_forward.4} parent=11 // pred_region
          _
        $region24: #{decoder_forward.4} parent=11 // pred_fallthru
          _
        // Predicated region
        $region25: #{decoder_forward.4} parent=11 // pred_check
          %p807 = pneg %p269
        $region26: #{decoder_forward.4} parent=11 // pred_check_branch
          %809 = sbr.rel (%p807) target = $region28
        $region27: #{decoder_forward.4} parent=11 // pred_region
          _
        $region28: #{decoder_forward.4} parent=11 // pred_fallthru
          _
        // Predicated region
        $region29: #{decoder_forward.4} parent=11 // pred_check
          %p810 = pneg %p290
        $region30: #{decoder_forward.4} parent=11 // pred_check_branch
          %812 = sbr.rel (%p810) target = $region32
        $region31: #{decoder_forward.4} parent=11 // pred_region
          _
        $region32: #{decoder_forward.4} parent=11 // pred_fallthru
          _
        // Predicated region
        $region33: #{decoder_forward.4} parent=11 // pred_check
          %p813 = pneg %p311
        $region34: #{decoder_forward.4} parent=11 // pred_check_branch
          %815 = sbr.rel (%p813) target = $region36
        $region35: #{decoder_forward.4} parent=11 // pred_region
          %s817 = ssub.s32 16, 16
          %818 = vsyncadd [#allocation4], %s817
          %s820 = sshll.u32 [#allocation3], 4
          %s821 = int_to_ptr.vmem [resolvable:$true] %s820
          %823 = dma.hbm_to_vmem [thread:$0]  %s19, 16, %s821, [#allocation4]
        $region36: #{decoder_forward.4} parent=11 // pred_fallthru
          _
        // Predicated region
        $region37: #{decoder_forward.4} parent=11 // pred_check
          %p824 = pneg %p332
        $region38: #{decoder_forward.4} parent=11 // pred_check_branch
          %826 = sbr.rel (%p824) target = $region40
        $region39: #{decoder_forward.4} parent=11 // pred_region
          _
        $region40: #{decoder_forward.4} parent=11 // pred_fallthru
          _
        // Predicated region
        $region41: #{decoder_forward.4} parent=11 // pred_check
          %p827 = pneg %p353
        $region42: #{decoder_forward.4} parent=11 // pred_check_branch
          %829 = sbr.rel (%p827) target = $region44
        $region43: #{decoder_forward.4} parent=11 // pred_region
          %s831 = ssub.s32 16, 16
          %832 = vsyncadd [#allocation7], %s831
          %s834 = sshll.u32 [#allocation6], 4
          %s835 = int_to_ptr.vmem [resolvable:$true] %s834
          %837 = dma.hbm_to_vmem [thread:$0]  %s23, 16, %s835, [#allocation7]
        $region44: #{decoder_forward.4} parent=11 // pred_fallthru
          _
        // Predicated region
        $region45: #{decoder_forward.4} parent=11 // pred_check
          %p838 = pneg %p374
        $region46: #{decoder_forward.4} parent=11 // pred_check_branch
          %840 = sbr.rel (%p838) target = $region48
        $region47: #{decoder_forward.4} parent=11 // pred_region
          _
        $region48: #{decoder_forward.4} parent=11 // pred_fallthru
          _
        // Predicated region
        $region49: #{decoder_forward.4} parent=11 // pred_check
          %p841 = pneg %p395
        $region50: #{decoder_forward.4} parent=11 // pred_check_branch
          %843 = sbr.rel (%p841) target = $region52
        $region51: #{decoder_forward.4} parent=11 // pred_region
          %s845 = ssub.s32 16, 16
          %846 = vsyncadd [#allocation7], %s845
          %s848 = sshll.u32 [#allocation8], 4
          %s849 = int_to_ptr.vmem [resolvable:$true] %s848
          %851 = dma.hbm_to_vmem [thread:$0]  %s27, 16, %s849, [#allocation7]
        $region52: #{decoder_forward.4} parent=11 // pred_fallthru
          _
        // Predicated region
        $region53: #{decoder_forward.4} parent=11 // pred_check
          %p852 = pneg %p416
        $region54: #{decoder_forward.4} parent=11 // pred_check_branch
          %854 = sbr.rel (%p852) target = $region56
        $region55: #{decoder_forward.4} parent=11 // pred_region
          _
        $region56: #{decoder_forward.4} parent=11 // pred_fallthru
          _
        // Predicated region
        $region57: #{decoder_forward.4} parent=11 // pred_check
          %p855 = pneg %p437
        $region58: #{decoder_forward.4} parent=11 // pred_check_branch
          %857 = sbr.rel (%p855) target = $region60
        $region59: #{decoder_forward.4} parent=11 // pred_region
          %s859 = ssub.s32 16, 16
          %860 = vsyncadd [#allocation10], %s859
          %s862 = sshll.u32 [#allocation9], 4
          %s863 = int_to_ptr.vmem [resolvable:$true] %s862
          %865 = dma.hbm_to_vmem [thread:$0]  %s31, 16, %s863, [#allocation10]
        $region60: #{decoder_forward.4} parent=11 // pred_fallthru
          _
        // Predicated region
        $region61: #{decoder_forward.4} parent=11 // pred_check
          %p866 = pneg %p458
        $region62: #{decoder_forward.4} parent=11 // pred_check_branch
          %868 = sbr.rel (%p866) target = $region64
        $region63: #{decoder_forward.4} parent=11 // pred_region
          _
        $region64: #{decoder_forward.4} parent=11 // pred_fallthru
          _
        // Predicated region
        $region65: #{decoder_forward.4} parent=11 // pred_check
          %p869 = pneg %p479
        $region66: #{decoder_forward.4} parent=11 // pred_check_branch
          %871 = sbr.rel (%p869) target = $region68
        $region67: #{decoder_forward.4} parent=11 // pred_region
          %s873 = ssub.s32 16, 16
          %874 = vsyncadd [#allocation10], %s873
          %s876 = sshll.u32 [#allocation11], 4
          %s877 = int_to_ptr.vmem [resolvable:$true] %s876
          %879 = dma.hbm_to_vmem [thread:$0]  %s35, 16, %s877, [#allocation10]
        $region68: #{decoder_forward.4} parent=11 // pred_fallthru
          _
        // Predicated region
        $region69: #{decoder_forward.4} parent=11 // pred_check
          %p880 = pneg %p500
        $region70: #{decoder_forward.4} parent=11 // pred_check_branch
          %882 = sbr.rel (%p880) target = $region72
        $region71: #{decoder_forward.4} parent=11 // pred_region
          _
        $region72: #{decoder_forward.4} parent=11 // pred_fallthru
          _
        // Predicated region
        $region73: #{decoder_forward.4} parent=11 // pred_check
          %p883 = pneg %p521
        $region74: #{decoder_forward.4} parent=11 // pred_check_branch
          %885 = sbr.rel (%p883) target = $region76
        $region75: #{decoder_forward.4} parent=11 // pred_region
          %s887 = ssub.s32 16, 16
          %888 = vsyncadd [#allocation13], %s887
          %s890 = sshll.u32 [#allocation12], 4
          %s891 = int_to_ptr.vmem [resolvable:$true] %s890
          %893 = dma.hbm_to_vmem [thread:$0]  %s39, 16, %s891, [#allocation13]
        $region76: #{decoder_forward.4} parent=11 // pred_fallthru
          _
        // Predicated region
        $region77: #{decoder_forward.4} parent=11 // pred_check
          %p894 = pneg %p542
        $region78: #{decoder_forward.4} parent=11 // pred_check_branch
          %896 = sbr.rel (%p894) target = $region80
        $region79: #{decoder_forward.4} parent=11 // pred_region
          _
        $region80: #{decoder_forward.4} parent=11 // pred_fallthru
          _
        // Predicated region
        $region81: #{decoder_forward.4} parent=11 // pred_check
          %p897 = pneg %p563
        $region82: #{decoder_forward.4} parent=11 // pred_check_branch
          %899 = sbr.rel (%p897) target = $region84
        $region83: #{decoder_forward.4} parent=11 // pred_region
          %s901 = ssub.s32 16, 16
          %902 = vsyncadd [#allocation13], %s901
          %s904 = sshll.u32 [#allocation14], 4
          %s905 = int_to_ptr.vmem [resolvable:$true] %s904
          %907 = dma.hbm_to_vmem [thread:$0]  %s43, 16, %s905, [#allocation13]
        $region84: #{decoder_forward.4} parent=11 // pred_fallthru
          _
        // Predicated region
        $region85: #{decoder_forward.4} parent=11 // pred_check
          %p908 = pneg %p584
        $region86: #{decoder_forward.4} parent=11 // pred_check_branch
          %910 = sbr.rel (%p908) target = $region88
        $region87: #{decoder_forward.4} parent=11 // pred_region
          _
        $region88: #{decoder_forward.4} parent=11 // pred_fallthru
          _
        // Predicated region
        $region89: #{decoder_forward.4} parent=11 // pred_check
          %p911 = pneg %p605
        $region90: #{decoder_forward.4} parent=11 // pred_check_branch
          %913 = sbr.rel (%p911) target = $region92
        $region91: #{decoder_forward.4} parent=11 // pred_region
          %s915 = ssub.s32 16, 16
          %916 = vsyncadd [#allocation16], %s915
          %s918 = sshll.u32 [#allocation15], 4
          %s919 = int_to_ptr.vmem [resolvable:$true] %s918
          %921 = dma.hbm_to_vmem [thread:$0]  %s47, 16, %s919, [#allocation16]
        $region92: #{decoder_forward.4} parent=11 // pred_fallthru
          _
        // Predicated region
        $region93: #{decoder_forward.4} parent=11 // pred_check
          %p922 = pneg %p626
        $region94: #{decoder_forward.4} parent=11 // pred_check_branch
          %924 = sbr.rel (%p922) target = $region96
        $region95: #{decoder_forward.4} parent=11 // pred_region
          %s926 = ssub.s32 16, 16
          %927 = vsyncadd [#allocation16], %s926
          %s929 = sshll.u32 [#allocation17], 4
          %s930 = int_to_ptr.vmem [resolvable:$true] %s929
          %932 = dma.hbm_to_vmem [thread:$0]  %s49, 16, %s930, [#allocation16]
        $region96: #{decoder_forward.4} parent=11 // pred_fallthru
          _
        // Predicated region
        $region97: #{decoder_forward.4} parent=11 // pred_check
          %p933 = pneg %p647
        $region98: #{decoder_forward.4} parent=11 // pred_check_branch
          %935 = sbr.rel (%p933) target = $region100
        $region99: #{decoder_forward.4} parent=11 // pred_region
          %s937 = ssub.s32 16, 16
          %938 = vsyncadd [#allocation19], %s937
          %s940 = sshll.u32 [#allocation18], 4
          %s941 = int_to_ptr.vmem [resolvable:$true] %s940
          %943 = dma.hbm_to_vmem [thread:$0]  %s51, 16, %s941, [#allocation19]
        $region100: #{decoder_forward.4} parent=11 // pred_fallthru
          _
        // Predicated region
        $region101: #{decoder_forward.4} parent=11 // pred_check
          %p944 = pneg %p668
        $region102: #{decoder_forward.4} parent=11 // pred_check_branch
          %946 = sbr.rel (%p944) target = $region104
        $region103: #{decoder_forward.4} parent=11 // pred_region
          %s948 = ssub.s32 16, 16
          %949 = vsyncadd [#allocation19], %s948
          %s951 = sshll.u32 [#allocation20], 4
          %s952 = int_to_ptr.vmem [resolvable:$true] %s951
          %954 = dma.hbm_to_vmem [thread:$0]  %s53, 16, %s952, [#allocation19]
        $region104: #{decoder_forward.4} parent=11 // pred_fallthru
          _
        // Predicated region
        $region105: #{decoder_forward.4} parent=11 // pred_check
          %p955 = pneg %p689
        $region106: #{decoder_forward.4} parent=11 // pred_check_branch
          %957 = sbr.rel (%p955) target = $region108
        $region107: #{decoder_forward.4} parent=11 // pred_region
          %s959 = ssub.s32 16, 16
          %960 = vsyncadd [#allocation22], %s959
          %s962 = sshll.u32 [#allocation21], 4
          %s963 = int_to_ptr.vmem [resolvable:$true] %s962
          %965 = dma.hbm_to_vmem [thread:$0]  %s55, 16, %s963, [#allocation22]
        $region108: #{decoder_forward.4} parent=11 // pred_fallthru
          _
        // Predicated region
        $region109: #{decoder_forward.4} parent=11 // pred_check
          %p966 = pneg %p710
        $region110: #{decoder_forward.4} parent=11 // pred_check_branch
          %968 = sbr.rel (%p966) target = $region112
        $region111: #{decoder_forward.4} parent=11 // pred_region
          %s970 = ssub.s32 16, 16
          %971 = vsyncadd [#allocation22], %s970
          %s973 = sshll.u32 [#allocation23], 4
          %s974 = int_to_ptr.vmem [resolvable:$true] %s973
          %976 = dma.hbm_to_vmem [thread:$0]  %s57, 16, %s974, [#allocation22]
        $region112: #{decoder_forward.4} parent=11 // pred_fallthru
          _
        // Predicated region
        $region113: #{decoder_forward.4} parent=11 // pred_check
          %p977 = pneg %p731
        $region114: #{decoder_forward.4} parent=11 // pred_check_branch
          %979 = sbr.rel (%p977) target = $region116
        $region115: #{decoder_forward.4} parent=11 // pred_region
          %s981 = ssub.s32 16, 16
          %982 = vsyncadd [#allocation25], %s981
          %s984 = sshll.u32 [#allocation24], 4
          %s985 = int_to_ptr.vmem [resolvable:$true] %s984
          %987 = dma.hbm_to_vmem [thread:$0]  %s59, 16, %s985, [#allocation25]
        $region116: #{decoder_forward.4} parent=11 // pred_fallthru
          _
      $region12: #{decoder_forward.4} parent=5 // pred_fallthru
        _
      %p988 = scmp.lt.s32.totalorder %s81, 2
      // Predicated region
      $region117: #{decoder_forward.4} parent=5 // pred_check
        %p989 = pneg %p988
      $region118: #{decoder_forward.4} parent=5 // pred_check_branch
        %991 = sbr.rel (%p989) target = $region120
      $region119: #{decoder_forward.4} parent=5 // pred_region
        // Predicated region
        $region121: #{decoder_forward.4} parent=119 // pred_check
          %p992 = pneg %p101
        $region122: #{decoder_forward.4} parent=119 // pred_check_branch
          %994 = sbr.rel (%p992) target = $region124
        $region123: #{decoder_forward.4} parent=119 // pred_region
          %p995 = scmp.lt.s32.totalorder %s81, 1
          %s996 = scalar_select %p995, %s81, 1
          %s997 = smul.addr %s996, 8
          %s998 = scalar_lea.vmem %s1, %s997
        $region124: #{decoder_forward.4} parent=119 // pred_fallthru
          _
        // Predicated region
        $region125: #{decoder_forward.4} parent=119 // pred_check
          %p999 = pneg %p127
        $region126: #{decoder_forward.4} parent=119 // pred_check_branch
          %1001 = sbr.rel (%p999) target = $region128
        $region127: #{decoder_forward.4} parent=119 // pred_region
          %p1002 = scmp.lt.s32.totalorder %s81, 1
          %s1003 = scalar_select %p1002, %s81, 1
          %s1004 = smul.addr %s1003, 8
          %s1005 = scalar_lea.vmem %s3, %s1004
        $region128: #{decoder_forward.4} parent=119 // pred_fallthru
          _
        // Predicated region
        $region129: #{decoder_forward.4} parent=119 // pred_check
          %p1006 = pneg %p153
        $region130: #{decoder_forward.4} parent=119 // pred_check_branch
          %1008 = sbr.rel (%p1006) target = $region132
        $region131: #{decoder_forward.4} parent=119 // pred_region
          %p1009 = scmp.lt.s32.totalorder %s81, 1
          %s1010 = scalar_select %p1009, %s81, 1
          %s1011 = smul.addr %s1010, 8
          %s1012 = scalar_lea.vmem %s5, %s1011
        $region132: #{decoder_forward.4} parent=119 // pred_fallthru
          _
        // Predicated region
        $region133: #{decoder_forward.4} parent=119 // pred_check
          %p1013 = pneg %p179
        $region134: #{decoder_forward.4} parent=119 // pred_check_branch
          %1015 = sbr.rel (%p1013) target = $region136
        $region135: #{decoder_forward.4} parent=119 // pred_region
          %p1016 = scmp.lt.s32.totalorder %s81, 1
          %s1017 = scalar_select %p1016, %s81, 1
          %s1018 = scalar_lea.vmem %s7, %s1017
        $region136: #{decoder_forward.4} parent=119 // pred_fallthru
          _
      $region120: #{decoder_forward.4} parent=5 // pred_fallthru
        _
      %p1019 = scmp.le.s32.totalorder 1, %s81
      %p1020 = scmp.lt.s32.totalorder %s81, 3
      %p1021 = pnand %p1019, %p1020
      %p1022 = pneg %p1021
      // Predicated region
      $region137: #{decoder_forward.4} parent=5 // pred_check
        _
      $region138: #{decoder_forward.4} parent=5 // pred_check_branch
        %1024 = sbr.rel (%p1021) target = $region140
      $region139: #{decoder_forward.4} parent=5 // pred_region
        %s1025 = ssub.s32 %s81, 1
        // Predicated region
        $region141: #{decoder_forward.4} parent=139 // pred_check
          %p1026 = pneg %p311
        $region142: #{decoder_forward.4} parent=139 // pred_check_branch
          %1028 = sbr.rel (%p1026) target = $region144
        $region143: #{decoder_forward.4} parent=139 // pred_region
          %1029 = dma.done [#allocation4], 16
        $region144: #{decoder_forward.4} parent=139 // pred_fallthru
          _
        // Predicated region
        $region145: #{decoder_forward.4} parent=139 // pred_check
          %p1030 = pneg %p353
        $region146: #{decoder_forward.4} parent=139 // pred_check_branch
          %1032 = sbr.rel (%p1030) target = $region148
        $region147: #{decoder_forward.4} parent=139 // pred_region
          %1033 = dma.done [#allocation7], 16
        $region148: #{decoder_forward.4} parent=139 // pred_fallthru
          _
        // Predicated region
        $region149: #{decoder_forward.4} parent=139 // pred_check
          %p1034 = pneg %p395
        $region150: #{decoder_forward.4} parent=139 // pred_check_branch
          %1036 = sbr.rel (%p1034) target = $region152
        $region151: #{decoder_forward.4} parent=139 // pred_region
          %1037 = dma.done [#allocation7], 16
        $region152: #{decoder_forward.4} parent=139 // pred_fallthru
          _
        // Predicated region
        $region153: #{decoder_forward.4} parent=139 // pred_check
          %p1038 = pneg %p437
        $region154: #{decoder_forward.4} parent=139 // pred_check_branch
          %1040 = sbr.rel (%p1038) target = $region156
        $region155: #{decoder_forward.4} parent=139 // pred_region
          %1041 = dma.done [#allocation10], 16
        $region156: #{decoder_forward.4} parent=139 // pred_fallthru
          _
        // Predicated region
        $region157: #{decoder_forward.4} parent=139 // pred_check
          %p1042 = pneg %p479
        $region158: #{decoder_forward.4} parent=139 // pred_check_branch
          %1044 = sbr.rel (%p1042) target = $region160
        $region159: #{decoder_forward.4} parent=139 // pred_region
          %1045 = dma.done [#allocation10], 16
        $region160: #{decoder_forward.4} parent=139 // pred_fallthru
          _
        // Predicated region
        $region161: #{decoder_forward.4} parent=139 // pred_check
          %p1046 = pneg %p521
        $region162: #{decoder_forward.4} parent=139 // pred_check_branch
          %1048 = sbr.rel (%p1046) target = $region164
        $region163: #{decoder_forward.4} parent=139 // pred_region
          %1049 = dma.done [#allocation13], 16
        $region164: #{decoder_forward.4} parent=139 // pred_fallthru
          _
        // Predicated region
        $region165: #{decoder_forward.4} parent=139 // pred_check
          %p1050 = pneg %p563
        $region166: #{decoder_forward.4} parent=139 // pred_check_branch
          %1052 = sbr.rel (%p1050) target = $region168
        $region167: #{decoder_forward.4} parent=139 // pred_region
          %1053 = dma.done [#allocation13], 16
        $region168: #{decoder_forward.4} parent=139 // pred_fallthru
          _
        // Predicated region
        $region169: #{decoder_forward.4} parent=139 // pred_check
          %p1054 = pneg %p605
        $region170: #{decoder_forward.4} parent=139 // pred_check_branch
          %1056 = sbr.rel (%p1054) target = $region172
        $region171: #{decoder_forward.4} parent=139 // pred_region
          %1057 = dma.done [#allocation16], 16
        $region172: #{decoder_forward.4} parent=139 // pred_fallthru
          _
        // Predicated region
        $region173: #{decoder_forward.4} parent=139 // pred_check
          %p1058 = pneg %p626
        $region174: #{decoder_forward.4} parent=139 // pred_check_branch
          %1060 = sbr.rel (%p1058) target = $region176
        $region175: #{decoder_forward.4} parent=139 // pred_region
          %1061 = dma.done [#allocation16], 16
        $region176: #{decoder_forward.4} parent=139 // pred_fallthru
          _
        // Predicated region
        $region177: #{decoder_forward.4} parent=139 // pred_check
          %p1062 = pneg %p647
        $region178: #{decoder_forward.4} parent=139 // pred_check_branch
          %1064 = sbr.rel (%p1062) target = $region180
        $region179: #{decoder_forward.4} parent=139 // pred_region
          %1065 = dma.done [#allocation19], 16
        $region180: #{decoder_forward.4} parent=139 // pred_fallthru
          _
        // Predicated region
        $region181: #{decoder_forward.4} parent=139 // pred_check
          %p1066 = pneg %p668
        $region182: #{decoder_forward.4} parent=139 // pred_check_branch
          %1068 = sbr.rel (%p1066) target = $region184
        $region183: #{decoder_forward.4} parent=139 // pred_region
          %1069 = dma.done [#allocation19], 16
        $region184: #{decoder_forward.4} parent=139 // pred_fallthru
          _
        // Predicated region
        $region185: #{decoder_forward.4} parent=139 // pred_check
          %p1070 = pneg %p689
        $region186: #{decoder_forward.4} parent=139 // pred_check_branch
          %1072 = sbr.rel (%p1070) target = $region188
        $region187: #{decoder_forward.4} parent=139 // pred_region
          %1073 = dma.done [#allocation22], 16
        $region188: #{decoder_forward.4} parent=139 // pred_fallthru
          _
        // Predicated region
        $region189: #{decoder_forward.4} parent=139 // pred_check
          %p1074 = pneg %p710
        $region190: #{decoder_forward.4} parent=139 // pred_check_branch
          %1076 = sbr.rel (%p1074) target = $region192
        $region191: #{decoder_forward.4} parent=139 // pred_region
          %1077 = dma.done [#allocation22], 16
        $region192: #{decoder_forward.4} parent=139 // pred_fallthru
          _
        // Predicated region
        $region193: #{decoder_forward.4} parent=139 // pred_check
          %p1078 = pneg %p731
        $region194: #{decoder_forward.4} parent=139 // pred_check_branch
          %1080 = sbr.rel (%p1078) target = $region196
        $region195: #{decoder_forward.4} parent=139 // pred_region
          %1081 = dma.done [#allocation25], 16
        $region196: #{decoder_forward.4} parent=139 // pred_fallthru
          _
        %p1082 = scmp.lt.s32.totalorder %s86, 1
        %s1083 = scalar_select %p1082, %s86, 1
        %s1084 = smul.addr %s1083, 8
        %s1085 = scalar_lea.vmem %s1, %s1084
        %p1086 = pneg %p107
        %p1087 = pneg %p104
        %p1088 = scmp.lt.s32.totalorder %s86, 1
        %s1089 = scalar_select %p1088, %s86, 1
        %s1090 = smul.addr %s1089, 8
        %s1091 = scalar_lea.vmem %s3, %s1090
        %p1092 = pneg %p133
        %p1093 = pneg %p130
        %p1094 = scmp.lt.s32.totalorder %s86, 1
        %s1095 = scalar_select %p1094, %s86, 1
        %s1096 = smul.addr %s1095, 8
        %s1097 = scalar_lea.vmem %s5, %s1096
        %p1098 = pneg %p159
        %p1099 = pneg %p156
        %p1100 = scmp.lt.s32.totalorder %s86, 1
        %s1101 = scalar_select %p1100, %s86, 1
        %s1102 = scalar_lea.vmem %s7, %s1101
        %p1103 = pneg %p185
        %p1104 = pneg %p182
        %p1105 = pneg %p206
        %p1106 = pneg %p203
        %p1107 = pneg %p227
        %p1108 = pneg %p224
        %p1109 = pneg %p248
        %p1110 = pneg %p245
        %p1111 = pneg %p269
        %p1112 = pneg %p266
        %p1113 = pneg %p290
        %p1114 = pneg %p287
        %p1115 = pneg %p311
        %p1116 = pneg %p308
        %p1117 = pneg %p332
        %p1118 = pneg %p329
        %p1119 = pneg %p353
        %p1120 = pneg %p350
        %p1121 = pneg %p374
        %p1122 = pneg %p371
        %p1123 = pneg %p395
        %p1124 = pneg %p392
        %p1125 = pneg %p416
        %p1126 = pneg %p413
        %p1127 = pneg %p437
        %p1128 = pneg %p434
        %p1129 = pneg %p458
        %p1130 = pneg %p455
        %p1131 = pneg %p479
        %p1132 = pneg %p476
        %p1133 = pneg %p500
        %p1134 = pneg %p497
        %p1135 = pneg %p521
        %p1136 = pneg %p518
        %p1137 = pneg %p542
        %p1138 = pneg %p539
        %p1139 = pneg %p563
        %p1140 = pneg %p560
        %p1141 = pneg %p584
        %p1142 = pneg %p581
        %p1143 = pneg %p605
        %p1144 = pneg %p602
        %p1145 = pneg %p626
        %p1146 = pneg %p623
        %p1147 = pneg %p647
        %p1148 = pneg %p644
        %p1149 = pneg %p668
        %p1150 = pneg %p665
        %p1151 = pneg %p689
        %p1152 = pneg %p686
        %p1153 = pneg %p710
        %p1154 = pneg %p707
        %p1155 = pneg %p731
        %p1156 = pneg %p728
        %p1157 = pneg %p757
        %p1158 = pneg %p754
        %p1159 = scmp.lt.s32.totalorder %s86, 1
        %s1160 = scalar_select %p1159, %s86, 1
        %s1161 = smul.addr %s1160, 8
        %s1162 = scalar_lea.vmem %s61, %s1161
        %p1163 = pneg %p783
        %p1164 = pneg %p780
        %s1165 = sand.u32 %s770, 1
        %s1166 = scalar_lea.sflag [#allocation5], %s1165
        %s1167 = sand.u32 %s770, 1
        %s1168 = smul.addr %s1167, 32
        %s1169 = scalar_lea.vmem [#allocation26], %s1168
        %p1170 = scmp.lt.s32.totalorder %s86, 1
        %s1171 = scalar_select %p1170, %s86, 1
        %s1172 = smul.addr %s1171, 8
        %s1173 = scalar_lea.vmem %s1, %s1172
        %p1174 = scmp.lt.s32.totalorder %s86, 1
        %s1175 = scalar_select %p1174, %s86, 1
        %s1176 = smul.addr %s1175, 8
        %s1177 = scalar_lea.vmem %s3, %s1176
        %p1178 = scmp.lt.s32.totalorder %s86, 1
        %s1179 = scalar_select %p1178, %s86, 1
        %s1180 = smul.addr %s1179, 8
        %s1181 = scalar_lea.vmem %s5, %s1180
        %p1182 = scmp.lt.s32.totalorder %s86, 1
        %s1183 = scalar_select %p1182, %s86, 1
        %s1184 = scalar_lea.vmem %s7, %s1183
        %p1185 = scmp.lt.s32.totalorder %s86, 1
        %s1186 = scalar_select %p1185, %s86, 1
        %s1187 = smul.addr %s1186, 8
        %s1188 = scalar_lea.vmem %s61, %s1187
        %v1189 = vld [vmem:[%s1173] sm:$0xff]
        %v1190 = vld [vmem:[%s1177] sm:$0xff]
        %v1191 = vld [vmem:[%s1181] sm:$0xff]
        %v1192 = vld [vmem:[%s1184] sm:$0x1]
        %v1193 = vld [vmem:[%s9] sm:$0xff]
        %v1194 = vld [vmem:[%s9 + $0x8] sm:$0xff]
        %v1195 = vld [vmem:[%s9 + $0x10] sm:$0xff]
        %v1196 = vld [vmem:[%s9 + $0x18] sm:$0xff]
        %v1197 = vld [vmem:[%s11] sm:$0x1]
        %v1199 = vlaneseq
        %v1200 = vshrl.u32 %v1199, 7
        %v1201 = vsub.s32 0, %v1200
        %v1202 = vrot.slane %v1197, %v1201
        %vm1204 = vcmask 261120
        %v1206 = vsel %vm1204, %v1189, 0
        %1208 = vmatprep.subr.mxu0 0.0
        %1209 = vmatpush1.msra.mxu0 %v1193
        %1210 = vmatprep.subr.mxu0 0.0
        %1211 = vmatpush1.msra.mxu0 %v1194
        %1212 = vmatprep.subr.mxu0 0.0
        %1213 = vmatpush1.msra.mxu0 %v1195
        %1214 = vmatprep.subr.mxu0 0.0
        %1215 = vmatpush1.msra.mxu0 %v1196
        %1216 = vmatprep.subr.mxu0 0.0
        %1217 = vmatpush1.msra.mxu0 0.0
        %1218 = vmatprep.subr.mxu0 0.0
        %1219 = vmatpush1.msra.mxu0 0.0
        %1220 = vmatprep.subr.mxu0 0.0
        %1221 = vmatpush1.msra.mxu0 0.0
        %1222 = vmatprep.subr.mxu0 0.0
        %1223 = vmatpush1.msra.mxu0 0.0
        %1224 = vmatprep.subr.mxu0 0.0
        %1225 = vmatpush1.msra.mxu0 0.0
        %1226 = vmatprep.subr.mxu0 0.0
        %1227 = vmatpush1.msra.mxu0 0.0
        %1228 = vmatprep.subr.mxu0 0.0
        %1229 = vmatpush1.msra.mxu0 0.0
        %1230 = vmatprep.subr.mxu0 0.0
        %1231 = vmatpush1.msra.mxu0 0.0
        %1232 = vmatprep.subr.mxu0 0.0
        %1233 = vmatpush1.msra.mxu0 0.0
        %1234 = vmatprep.subr.mxu0 0.0
        %1235 = vmatpush1.msra.mxu0 0.0
        %1236 = vmatprep.subr.mxu0 0.0
        %1237 = vmatpush1.msra.mxu0 0.0
        %1238 = vmatprep.subr.mxu0 0.0
        %1239 = vmatpush1.msra.mxu0 0.0
        %1240 = vmatprep.subr.mxu0 0.0
        %1241 = vmatpush1.msra.mxu0 0.0
        %1242 = vmatprep.subr.mxu0 0.0
        %1243 = vmatpush1.msra.mxu0 0.0
        %1244 = vmatprep.subr.mxu0 0.0
        %1245 = vmatpush1.msra.mxu0 0.0
        %1246 = vmatprep.subr.mxu0 0.0
        %1247 = vmatpush1.msra.mxu0 0.0
        %1248 = vmatprep.subr.mxu0 0.0
        %1249 = vmatpush1.msra.mxu0 0.0
        %1250 = vmatprep.subr.mxu0 0.0
        %1251 = vmatpush1.msra.mxu0 0.0
        %1252 = vmatprep.subr.mxu0 0.0
        %1253 = vmatpush1.msra.mxu0 0.0
        %1254 = vmatprep.subr.mxu0 0.0
        %1255 = vmatpush1.msra.mxu0 0.0
        %1256 = vmatprep.subr.mxu0 0.0
        %1257 = vmatpush1.msra.mxu0 0.0
        %1258 = vmatprep.subr.mxu0 0.0
        %1259 = vmatpush1.msra.mxu0 0.0
        %1260 = vmatprep.subr.mxu0 0.0
        %1261 = vmatpush1.msra.mxu0 0.0
        %1262 = vmatprep.subr.mxu0 0.0
        %1263 = vmatpush1.msra.mxu0 0.0
        %1264 = vmatprep.subr.mxu0 0.0
        %1265 = vmatpush1.msra.mxu0 0.0
        %1266 = vmatprep.subr.mxu0 0.0
        %1267 = vmatpush1.msra.mxu0 0.0
        %1268 = vmatprep.subr.mxu0 0.0
        %1269 = vmatpush1.msra.mxu0 0.0
        %1270 = vmatprep.subr.mxu0 0.0
        %1271 = vmatpush1.msra.mxu0 0.0
        %1272 = vmatprep.mubr.f32.mxu0 0.0
        %1273 = vmatmul.mubr.f32.gmra.mrb[0].mxu0 %v1206
        %v1274 = vpop.f32.mrb[0].mxu0
        %v1275 = vadd.f32 %v1202, %v1274
        %v1276 = vpop.f32.mrb[0].mxu0
        %1277 = vdwg.mxu0
        %v1278 = vld [vmem:[%s13] sm:$0xff]
        %v1279 = vld [vmem:[%s13 + $0x8] sm:$0xff]
        %v1280 = vld [vmem:[%s13 + $0x10] sm:$0xff]
        %v1281 = vld [vmem:[%s13 + $0x18] sm:$0xff]
        %v1282 = vld [vmem:[%s15] sm:$0x1]
        %v1284 = vlaneseq
        %v1285 = vshrl.u32 %v1284, 7
        %v1286 = vsub.s32 0, %v1285
        %v1287 = vrot.slane %v1282, %v1286
        %1289 = vmatprep.subr.mxu0 0.0
        %1290 = vmatpush1.msra.mxu0 %v1278
        %1291 = vmatprep.subr.mxu0 0.0
        %1292 = vmatpush1.msra.mxu0 %v1279
        %1293 = vmatprep.subr.mxu0 0.0
        %1294 = vmatpush1.msra.mxu0 %v1280
        %1295 = vmatprep.subr.mxu0 0.0
        %1296 = vmatpush1.msra.mxu0 %v1281
        %1297 = vmatprep.subr.mxu0 0.0
        %1298 = vmatpush1.msra.mxu0 0.0
        %1299 = vmatprep.subr.mxu0 0.0
        %1300 = vmatpush1.msra.mxu0 0.0
        %1301 = vmatprep.subr.mxu0 0.0
        %1302 = vmatpush1.msra.mxu0 0.0
        %1303 = vmatprep.subr.mxu0 0.0
        %1304 = vmatpush1.msra.mxu0 0.0
        %1305 = vmatprep.subr.mxu0 0.0
        %1306 = vmatpush1.msra.mxu0 0.0
        %1307 = vmatprep.subr.mxu0 0.0
        %1308 = vmatpush1.msra.mxu0 0.0
        %1309 = vmatprep.subr.mxu0 0.0
        %1310 = vmatpush1.msra.mxu0 0.0
        %1311 = vmatprep.subr.mxu0 0.0
        %1312 = vmatpush1.msra.mxu0 0.0
        %1313 = vmatprep.subr.mxu0 0.0
        %1314 = vmatpush1.msra.mxu0 0.0
        %1315 = vmatprep.subr.mxu0 0.0
        %1316 = vmatpush1.msra.mxu0 0.0
        %1317 = vmatprep.subr.mxu0 0.0
        %1318 = vmatpush1.msra.mxu0 0.0
        %1319 = vmatprep.subr.mxu0 0.0
        %1320 = vmatpush1.msra.mxu0 0.0
        %1321 = vmatprep.subr.mxu0 0.0
        %1322 = vmatpush1.msra.mxu0 0.0
        %1323 = vmatprep.subr.mxu0 0.0
        %1324 = vmatpush1.msra.mxu0 0.0
        %1325 = vmatprep.subr.mxu0 0.0
        %1326 = vmatpush1.msra.mxu0 0.0
        %1327 = vmatprep.subr.mxu0 0.0
        %1328 = vmatpush1.msra.mxu0 0.0
        %1329 = vmatprep.subr.mxu0 0.0
        %1330 = vmatpush1.msra.mxu0 0.0
        %1331 = vmatprep.subr.mxu0 0.0
        %1332 = vmatpush1.msra.mxu0 0.0
        %1333 = vmatprep.subr.mxu0 0.0
        %1334 = vmatpush1.msra.mxu0 0.0
        %1335 = vmatprep.subr.mxu0 0.0
        %1336 = vmatpush1.msra.mxu0 0.0
        %1337 = vmatprep.subr.mxu0 0.0
        %1338 = vmatpush1.msra.mxu0 0.0
        %1339 = vmatprep.subr.mxu0 0.0
        %1340 = vmatpush1.msra.mxu0 0.0
        %1341 = vmatprep.subr.mxu0 0.0
        %1342 = vmatpush1.msra.mxu0 0.0
        %1343 = vmatprep.subr.mxu0 0.0
        %1344 = vmatpush1.msra.mxu0 0.0
        %1345 = vmatprep.subr.mxu0 0.0
        %1346 = vmatpush1.msra.mxu0 0.0
        %1347 = vmatprep.subr.mxu0 0.0
        %1348 = vmatpush1.msra.mxu0 0.0
        %1349 = vmatprep.subr.mxu0 0.0
        %1350 = vmatpush1.msra.mxu0 0.0
        %1351 = vmatprep.subr.mxu0 0.0
        %1352 = vmatpush1.msra.mxu0 0.0
        %1353 = vmatprep.mubr.f32.mxu0 0.0
        %1354 = vmatmul.mubr.f32.gmra.mrb[0].mxu0 %v1206
        %v1355 = vpop.f32.mrb[0].mxu0
        %v1356 = vadd.f32 %v1287, %v1355
        %v1357 = vpop.f32.mrb[0].mxu0
        %1358 = vdwg.mxu0
        %v1359 = vld [vmem:[%s17] sm:$0xff]
        %v1360 = vld [vmem:[%s17 + $0x8] sm:$0xff]
        %v1361 = vld [vmem:[%s17 + $0x10] sm:$0xff]
        %v1362 = vld [vmem:[%s17 + $0x18] sm:$0xff]
        %v1363 = vld [vmem:[#allocation3] sm:$0x1]
        %v1365 = vlaneseq
        %v1366 = vshrl.u32 %v1365, 7
        %v1367 = vsub.s32 0, %v1366
        %v1368 = vrot.slane %v1363, %v1367
        %1370 = vmatprep.subr.mxu0 0.0
        %1371 = vmatpush1.msra.mxu0 %v1359
        %1372 = vmatprep.subr.mxu0 0.0
        %1373 = vmatpush1.msra.mxu0 %v1360
        %1374 = vmatprep.subr.mxu0 0.0
        %1375 = vmatpush1.msra.mxu0 %v1361
        %1376 = vmatprep.subr.mxu0 0.0
        %1377 = vmatpush1.msra.mxu0 %v1362
        %1378 = vmatprep.subr.mxu0 0.0
        %1379 = vmatpush1.msra.mxu0 0.0
        %1380 = vmatprep.subr.mxu0 0.0
        %1381 = vmatpush1.msra.mxu0 0.0
        %1382 = vmatprep.subr.mxu0 0.0
        %1383 = vmatpush1.msra.mxu0 0.0
        %1384 = vmatprep.subr.mxu0 0.0
        %1385 = vmatpush1.msra.mxu0 0.0
        %1386 = vmatprep.subr.mxu0 0.0
        %1387 = vmatpush1.msra.mxu0 0.0
        %1388 = vmatprep.subr.mxu0 0.0
        %1389 = vmatpush1.msra.mxu0 0.0
        %1390 = vmatprep.subr.mxu0 0.0
        %1391 = vmatpush1.msra.mxu0 0.0
        %1392 = vmatprep.subr.mxu0 0.0
        %1393 = vmatpush1.msra.mxu0 0.0
        %1394 = vmatprep.subr.mxu0 0.0
        %1395 = vmatpush1.msra.mxu0 0.0
        %1396 = vmatprep.subr.mxu0 0.0
        %1397 = vmatpush1.msra.mxu0 0.0
        %1398 = vmatprep.subr.mxu0 0.0
        %1399 = vmatpush1.msra.mxu0 0.0
        %1400 = vmatprep.subr.mxu0 0.0
        %1401 = vmatpush1.msra.mxu0 0.0
        %1402 = vmatprep.subr.mxu0 0.0
        %1403 = vmatpush1.msra.mxu0 0.0
        %1404 = vmatprep.subr.mxu0 0.0
        %1405 = vmatpush1.msra.mxu0 0.0
        %1406 = vmatprep.subr.mxu0 0.0
        %1407 = vmatpush1.msra.mxu0 0.0
        %1408 = vmatprep.subr.mxu0 0.0
        %1409 = vmatpush1.msra.mxu0 0.0
        %1410 = vmatprep.subr.mxu0 0.0
        %1411 = vmatpush1.msra.mxu0 0.0
        %1412 = vmatprep.subr.mxu0 0.0
        %1413 = vmatpush1.msra.mxu0 0.0
        %1414 = vmatprep.subr.mxu0 0.0
        %1415 = vmatpush1.msra.mxu0 0.0
        %1416 = vmatprep.subr.mxu0 0.0
        %1417 = vmatpush1.msra.mxu0 0.0
        %1418 = vmatprep.subr.mxu0 0.0
        %1419 = vmatpush1.msra.mxu0 0.0
        %1420 = vmatprep.subr.mxu0 0.0
        %1421 = vmatpush1.msra.mxu0 0.0
        %1422 = vmatprep.subr.mxu0 0.0
        %1423 = vmatpush1.msra.mxu0 0.0
        %1424 = vmatprep.subr.mxu0 0.0
        %1425 = vmatpush1.msra.mxu0 0.0
        %1426 = vmatprep.subr.mxu0 0.0
        %1427 = vmatpush1.msra.mxu0 0.0
        %1428 = vmatprep.subr.mxu0 0.0
        %1429 = vmatpush1.msra.mxu0 0.0
        %1430 = vmatprep.subr.mxu0 0.0
        %1431 = vmatpush1.msra.mxu0 0.0
        %1432 = vmatprep.subr.mxu0 0.0
        %1433 = vmatpush1.msra.mxu0 0.0
        %1434 = vmatprep.mubr.f32.mxu0 0.0
        %1435 = vmatmul.mubr.f32.gmra.mrb[0].mxu0 %v1206
        %v1436 = vpop.f32.mrb[0].mxu0
        %v1437 = vadd.f32 %v1368, %v1436
        %v1438 = vpop.f32.mrb[0].mxu0
        %1439 = vdwg.mxu0
        %vm1440 = vcmask 64512
        %v1442 = vsel %vm1440, %v1275, 0
        %v1445 = vsel %vm1440, %v1356, 0
        %1447 = vmatprep.subr.mxu0 0.0
        %1448 = vmatpush1.xpose.msra.mxu0 %v1445
        %1449 = vmatprep.subr.mxu0 0.0
        %1450 = vmatpush1.xpose.msra.mxu0 0.0
        %1451 = vmatprep.subr.mxu0 0.0
        %1452 = vmatpush1.xpose.msra.mxu0 0.0
        %1453 = vmatprep.subr.mxu0 0.0
        %1454 = vmatpush1.xpose.msra.mxu0 0.0
        %1455 = vmatprep.subr.mxu0 0.0
        %1456 = vmatpush1.xpose.msra.mxu0 0.0
        %1457 = vmatprep.subr.mxu0 0.0
        %1458 = vmatpush1.xpose.msra.mxu0 0.0
        %1459 = vmatprep.subr.mxu0 0.0
        %1460 = vmatpush1.xpose.msra.mxu0 0.0
        %1461 = vmatprep.subr.mxu0 0.0
        %1462 = vmatpush1.xpose.msra.mxu0 0.0
        %1463 = vmatprep.subr.mxu0 0.0
        %1464 = vmatpush1.xpose.msra.mxu0 0.0
        %1465 = vmatprep.subr.mxu0 0.0
        %1466 = vmatpush1.xpose.msra.mxu0 0.0
        %1467 = vmatprep.subr.mxu0 0.0
        %1468 = vmatpush1.xpose.msra.mxu0 0.0
        %1469 = vmatprep.subr.mxu0 0.0
        %1470 = vmatpush1.xpose.msra.mxu0 0.0
        %1471 = vmatprep.subr.mxu0 0.0
        %1472 = vmatpush1.xpose.msra.mxu0 0.0
        %1473 = vmatprep.subr.mxu0 0.0
        %1474 = vmatpush1.xpose.msra.mxu0 0.0
        %1475 = vmatprep.subr.mxu0 0.0
        %1476 = vmatpush1.xpose.msra.mxu0 0.0
        %1477 = vmatprep.subr.mxu0 0.0
        %1478 = vmatpush1.xpose.msra.mxu0 0.0
        %1479 = vmatprep.subr.mxu0 0.0
        %1480 = vmatpush1.xpose.msra.mxu0 0.0
        %1481 = vmatprep.subr.mxu0 0.0
        %1482 = vmatpush1.xpose.msra.mxu0 0.0
        %1483 = vmatprep.subr.mxu0 0.0
        %1484 = vmatpush1.xpose.msra.mxu0 0.0
        %1485 = vmatprep.subr.mxu0 0.0
        %1486 = vmatpush1.xpose.msra.mxu0 0.0
        %1487 = vmatprep.subr.mxu0 0.0
        %1488 = vmatpush1.xpose.msra.mxu0 0.0
        %1489 = vmatprep.subr.mxu0 0.0
        %1490 = vmatpush1.xpose.msra.mxu0 0.0
        %1491 = vmatprep.subr.mxu0 0.0
        %1492 = vmatpush1.xpose.msra.mxu0 0.0
        %1493 = vmatprep.subr.mxu0 0.0
        %1494 = vmatpush1.xpose.msra.mxu0 0.0
        %1495 = vmatprep.subr.mxu0 0.0
        %1496 = vmatpush1.xpose.msra.mxu0 0.0
        %1497 = vmatprep.subr.mxu0 0.0
        %1498 = vmatpush1.xpose.msra.mxu0 0.0
        %1499 = vmatprep.subr.mxu0 0.0
        %1500 = vmatpush1.xpose.msra.mxu0 0.0
        %1501 = vmatprep.subr.mxu0 0.0
        %1502 = vmatpush1.xpose.msra.mxu0 0.0
        %1503 = vmatprep.subr.mxu0 0.0
        %1504 = vmatpush1.xpose.msra.mxu0 0.0
        %1505 = vmatprep.subr.mxu0 0.0
        %1506 = vmatpush1.xpose.msra.mxu0 0.0
        %1507 = vmatprep.subr.mxu0 0.0
        %1508 = vmatpush1.xpose.msra.mxu0 0.0
        %1509 = vmatprep.subr.mxu0 0.0
        %1510 = vmatpush1.xpose.msra.mxu0 0.0
        %1511 = vmatprep.mubr.f32.mxu0 0.0
        %1512 = vmatmul.mubr.f32.gmra.mrb[0].mxu0 %v1442
        %v1513 = vpop.f32.mrb[0].mxu0
        %v1514 = vadd.f32 0.0, %v1513
        %v1515 = vpop.f32.mrb[0].mxu0
        %1516 = vdwg.mxu0
        %v1517 = vmul.f32 %v1514, 0.35355338
        %v1518 = vadd.f32 %v1517, %v1191
        %v1519 = vsel %vm1440, %v1518, -inf
        %1520 = vmax.xlane.f32.xlu0 %v1519
        %v1521 = vpop.xlane.xlu0 %1520
        %v1522 = vsub.f32 %v1518, %v1521
        %v1523 = vmul.f32 %v1522, 1.442695
        %v1524 = vpow.pop %v1523
        %v1525 = vsel %vm1440, %v1524, 0.0
        %1526 = vadd.xlane.f32.xlu0 %v1525
        %v1527 = vpop.xlane.xlu0 %1526
        %v1528 = vrcp.pop %v1527
        %v1529 = vmul.f32 %v1524, %v1528
        %v1531 = vsel %vm1440, %v1529, 0
        %1533 = vmatprep.subr.mxu0 0.0
        %1534 = vmatpush1.msra.mxu0 %v1437
        %1535 = vmatprep.subr.mxu0 0.0
        %1536 = vmatpush1.msra.mxu0 0.0
        %1537 = vmatprep.subr.mxu0 0.0
        %1538 = vmatpush1.msra.mxu0 0.0
        %1539 = vmatprep.subr.mxu0 0.0
        %1540 = vmatpush1.msra.mxu0 0.0
        %1541 = vmatprep.subr.mxu0 0.0
        %1542 = vmatpush1.msra.mxu0 0.0
        %1543 = vmatprep.subr.mxu0 0.0
        %1544 = vmatpush1.msra.mxu0 0.0
        %1545 = vmatprep.subr.mxu0 0.0
        %1546 = vmatpush1.msra.mxu0 0.0
        %1547 = vmatprep.subr.mxu0 0.0
        %1548 = vmatpush1.msra.mxu0 0.0
        %1549 = vmatprep.subr.mxu0 0.0
        %1550 = vmatpush1.msra.mxu0 0.0
        %1551 = vmatprep.subr.mxu0 0.0
        %1552 = vmatpush1.msra.mxu0 0.0
        %1553 = vmatprep.subr.mxu0 0.0
        %1554 = vmatpush1.msra.mxu0 0.0
        %1555 = vmatprep.subr.mxu0 0.0
        %1556 = vmatpush1.msra.mxu0 0.0
        %1557 = vmatprep.subr.mxu0 0.0
        %1558 = vmatpush1.msra.mxu0 0.0
        %1559 = vmatprep.subr.mxu0 0.0
        %1560 = vmatpush1.msra.mxu0 0.0
        %1561 = vmatprep.subr.mxu0 0.0
        %1562 = vmatpush1.msra.mxu0 0.0
        %1563 = vmatprep.subr.mxu0 0.0
        %1564 = vmatpush1.msra.mxu0 0.0
        %1565 = vmatprep.subr.mxu0 0.0
        %1566 = vmatpush1.msra.mxu0 0.0
        %1567 = vmatprep.subr.mxu0 0.0
        %1568 = vmatpush1.msra.mxu0 0.0
        %1569 = vmatprep.subr.mxu0 0.0
        %1570 = vmatpush1.msra.mxu0 0.0
        %1571 = vmatprep.subr.mxu0 0.0
        %1572 = vmatpush1.msra.mxu0 0.0
        %1573 = vmatprep.subr.mxu0 0.0
        %1574 = vmatpush1.msra.mxu0 0.0
        %1575 = vmatprep.subr.mxu0 0.0
        %1576 = vmatpush1.msra.mxu0 0.0
        %1577 = vmatprep.subr.mxu0 0.0
        %1578 = vmatpush1.msra.mxu0 0.0
        %1579 = vmatprep.subr.mxu0 0.0
        %1580 = vmatpush1.msra.mxu0 0.0
        %1581 = vmatprep.subr.mxu0 0.0
        %1582 = vmatpush1.msra.mxu0 0.0
        %1583 = vmatprep.subr.mxu0 0.0
        %1584 = vmatpush1.msra.mxu0 0.0
        %1585 = vmatprep.subr.mxu0 0.0
        %1586 = vmatpush1.msra.mxu0 0.0
        %1587 = vmatprep.subr.mxu0 0.0
        %1588 = vmatpush1.msra.mxu0 0.0
        %1589 = vmatprep.subr.mxu0 0.0
        %1590 = vmatpush1.msra.mxu0 0.0
        %1591 = vmatprep.subr.mxu0 0.0
        %1592 = vmatpush1.msra.mxu0 0.0
        %1593 = vmatprep.subr.mxu0 0.0
        %1594 = vmatpush1.msra.mxu0 0.0
        %1595 = vmatprep.subr.mxu0 0.0
        %1596 = vmatpush1.msra.mxu0 0.0
        %1597 = vmatprep.mubr.f32.mxu0 0.0
        %1598 = vmatmul.mubr.f32.gmra.mrb[0].mxu0 %v1531
        %v1599 = vpop.f32.mrb[0].mxu0
        %v1600 = vadd.f32 0.0, %v1599
        %v1601 = vpop.f32.mrb[0].mxu0
        %1602 = vdwg.mxu0
        %1603 = vst.msk [vmem:[#allocation2] sm:$0xff] %vm1440, %v1600
        %1604 = vrot.lane.b32.xlu0 %v1275, 120
        %v1605 = vpop.permute.xlu0 %1604
        %1606 = vrot.lane.b32.xlu0 %v1356, 120
        %v1607 = vpop.permute.xlu0 %1606
        %v1608 = vsel %vm1440, %v1605, 0
        %v1610 = vsel %vm1440, %v1607, 0
        %1612 = vmatprep.subr.mxu0 0.0
        %1613 = vmatpush1.xpose.msra.mxu0 %v1610
        %1614 = vmatprep.subr.mxu0 0.0
        %1615 = vmatpush1.xpose.msra.mxu0 0.0
        %1616 = vmatprep.subr.mxu0 0.0
        %1617 = vmatpush1.xpose.msra.mxu0 0.0
        %1618 = vmatprep.subr.mxu0 0.0
        %1619 = vmatpush1.xpose.msra.mxu0 0.0
        %1620 = vmatprep.subr.mxu0 0.0
        %1621 = vmatpush1.xpose.msra.mxu0 0.0
        %1622 = vmatprep.subr.mxu0 0.0
        %1623 = vmatpush1.xpose.msra.mxu0 0.0
        %1624 = vmatprep.subr.mxu0 0.0
        %1625 = vmatpush1.xpose.msra.mxu0 0.0
        %1626 = vmatprep.subr.mxu0 0.0
        %1627 = vmatpush1.xpose.msra.mxu0 0.0
        %1628 = vmatprep.subr.mxu0 0.0
        %1629 = vmatpush1.xpose.msra.mxu0 0.0
        %1630 = vmatprep.subr.mxu0 0.0
        %1631 = vmatpush1.xpose.msra.mxu0 0.0
        %1632 = vmatprep.subr.mxu0 0.0
        %1633 = vmatpush1.xpose.msra.mxu0 0.0
        %1634 = vmatprep.subr.mxu0 0.0
        %1635 = vmatpush1.xpose.msra.mxu0 0.0
        %1636 = vmatprep.subr.mxu0 0.0
        %1637 = vmatpush1.xpose.msra.mxu0 0.0
        %1638 = vmatprep.subr.mxu0 0.0
        %1639 = vmatpush1.xpose.msra.mxu0 0.0
        %1640 = vmatprep.subr.mxu0 0.0
        %1641 = vmatpush1.xpose.msra.mxu0 0.0
        %1642 = vmatprep.subr.mxu0 0.0
        %1643 = vmatpush1.xpose.msra.mxu0 0.0
        %1644 = vmatprep.subr.mxu0 0.0
        %1645 = vmatpush1.xpose.msra.mxu0 0.0
        %1646 = vmatprep.subr.mxu0 0.0
        %1647 = vmatpush1.xpose.msra.mxu0 0.0
        %1648 = vmatprep.subr.mxu0 0.0
        %1649 = vmatpush1.xpose.msra.mxu0 0.0
        %1650 = vmatprep.subr.mxu0 0.0
        %1651 = vmatpush1.xpose.msra.mxu0 0.0
        %1652 = vmatprep.subr.mxu0 0.0
        %1653 = vmatpush1.xpose.msra.mxu0 0.0
        %1654 = vmatprep.subr.mxu0 0.0
        %1655 = vmatpush1.xpose.msra.mxu0 0.0
        %1656 = vmatprep.subr.mxu0 0.0
        %1657 = vmatpush1.xpose.msra.mxu0 0.0
        %1658 = vmatprep.subr.mxu0 0.0
        %1659 = vmatpush1.xpose.msra.mxu0 0.0
        %1660 = vmatprep.subr.mxu0 0.0
        %1661 = vmatpush1.xpose.msra.mxu0 0.0
        %1662 = vmatprep.subr.mxu0 0.0
        %1663 = vmatpush1.xpose.msra.mxu0 0.0
        %1664 = vmatprep.subr.mxu0 0.0
        %1665 = vmatpush1.xpose.msra.mxu0 0.0
        %1666 = vmatprep.subr.mxu0 0.0
        %1667 = vmatpush1.xpose.msra.mxu0 0.0
        %1668 = vmatprep.subr.mxu0 0.0
        %1669 = vmatpush1.xpose.msra.mxu0 0.0
        %1670 = vmatprep.subr.mxu0 0.0
        %1671 = vmatpush1.xpose.msra.mxu0 0.0
        %1672 = vmatprep.subr.mxu0 0.0
        %1673 = vmatpush1.xpose.msra.mxu0 0.0
        %1674 = vmatprep.subr.mxu0 0.0
        %1675 = vmatpush1.xpose.msra.mxu0 0.0
        %1676 = vmatprep.mubr.f32.mxu0 0.0
        %1677 = vmatmul.mubr.f32.gmra.mrb[0].mxu0 %v1608
        %v1678 = vpop.f32.mrb[0].mxu0
        %v1679 = vadd.f32 0.0, %v1678
        %v1680 = vpop.f32.mrb[0].mxu0
        %1681 = vdwg.mxu0
        %v1682 = vmul.f32 %v1679, 0.35355338
        %v1683 = vadd.f32 %v1682, %v1191
        %v1684 = vsel %vm1440, %v1683, -inf
        %1685 = vmax.xlane.f32.xlu0 %v1684
        %v1686 = vpop.xlane.xlu0 %1685
        %v1687 = vsub.f32 %v1683, %v1686
        %v1688 = vmul.f32 %v1687, 1.442695
        %v1689 = vpow.pop %v1688
        %v1690 = vsel %vm1440, %v1689, 0.0
        %1691 = vadd.xlane.f32.xlu0 %v1690
        %v1692 = vpop.xlane.xlu0 %1691
        %v1693 = vrcp.pop %v1692
        %v1694 = vmul.f32 %v1689, %v1693
        %1696 = vrot.lane.b32.xlu0 %v1437, 120
        %v1697 = vpop.permute.xlu0 %1696
        %v1700 = vsel %vm1440, %v1694, 0
        %1702 = vmatprep.subr.mxu0 0.0
        %1703 = vmatpush1.msra.mxu0 %v1697
        %1704 = vmatprep.subr.mxu0 0.0
        %1705 = vmatpush1.msra.mxu0 0.0
        %1706 = vmatprep.subr.mxu0 0.0
        %1707 = vmatpush1.msra.mxu0 0.0
        %1708 = vmatprep.subr.mxu0 0.0
        %1709 = vmatpush1.msra.mxu0 0.0
        %1710 = vmatprep.subr.mxu0 0.0
        %1711 = vmatpush1.msra.mxu0 0.0
        %1712 = vmatprep.subr.mxu0 0.0
        %1713 = vmatpush1.msra.mxu0 0.0
        %1714 = vmatprep.subr.mxu0 0.0
        %1715 = vmatpush1.msra.mxu0 0.0
        %1716 = vmatprep.subr.mxu0 0.0
        %1717 = vmatpush1.msra.mxu0 0.0
        %1718 = vmatprep.subr.mxu0 0.0
        %1719 = vmatpush1.msra.mxu0 0.0
        %1720 = vmatprep.subr.mxu0 0.0
        %1721 = vmatpush1.msra.mxu0 0.0
        %1722 = vmatprep.subr.mxu0 0.0
        %1723 = vmatpush1.msra.mxu0 0.0
        %1724 = vmatprep.subr.mxu0 0.0
        %1725 = vmatpush1.msra.mxu0 0.0
        %1726 = vmatprep.subr.mxu0 0.0
        %1727 = vmatpush1.msra.mxu0 0.0
        %1728 = vmatprep.subr.mxu0 0.0
        %1729 = vmatpush1.msra.mxu0 0.0
        %1730 = vmatprep.subr.mxu0 0.0
        %1731 = vmatpush1.msra.mxu0 0.0
        %1732 = vmatprep.subr.mxu0 0.0
        %1733 = vmatpush1.msra.mxu0 0.0
        %1734 = vmatprep.subr.mxu0 0.0
        %1735 = vmatpush1.msra.mxu0 0.0
        %1736 = vmatprep.subr.mxu0 0.0
        %1737 = vmatpush1.msra.mxu0 0.0
        %1738 = vmatprep.subr.mxu0 0.0
        %1739 = vmatpush1.msra.mxu0 0.0
        %1740 = vmatprep.subr.mxu0 0.0
        %1741 = vmatpush1.msra.mxu0 0.0
        %1742 = vmatprep.subr.mxu0 0.0
        %1743 = vmatpush1.msra.mxu0 0.0
        %1744 = vmatprep.subr.mxu0 0.0
        %1745 = vmatpush1.msra.mxu0 0.0
        %1746 = vmatprep.subr.mxu0 0.0
        %1747 = vmatpush1.msra.mxu0 0.0
        %1748 = vmatprep.subr.mxu0 0.0
        %1749 = vmatpush1.msra.mxu0 0.0
        %1750 = vmatprep.subr.mxu0 0.0
        %1751 = vmatpush1.msra.mxu0 0.0
        %1752 = vmatprep.subr.mxu0 0.0
        %1753 = vmatpush1.msra.mxu0 0.0
        %1754 = vmatprep.subr.mxu0 0.0
        %1755 = vmatpush1.msra.mxu0 0.0
        %1756 = vmatprep.subr.mxu0 0.0
        %1757 = vmatpush1.msra.mxu0 0.0
        %1758 = vmatprep.subr.mxu0 0.0
        %1759 = vmatpush1.msra.mxu0 0.0
        %1760 = vmatprep.subr.mxu0 0.0
        %1761 = vmatpush1.msra.mxu0 0.0
        %1762 = vmatprep.subr.mxu0 0.0
        %1763 = vmatpush1.msra.mxu0 0.0
        %1764 = vmatprep.subr.mxu0 0.0
        %1765 = vmatpush1.msra.mxu0 0.0
        %1766 = vmatprep.mubr.f32.mxu0 0.0
        %1767 = vmatmul.mubr.f32.gmra.mrb[0].mxu0 %v1700
        %v1768 = vpop.f32.mrb[0].mxu0
        %v1769 = vadd.f32 0.0, %v1768
        %v1770 = vpop.f32.mrb[0].mxu0
        %1771 = vdwg.mxu0
        %1773 = vrot.lane.b32.xlu0 %v1769, 8
        %v1774 = vpop.permute.xlu0 %1773
        %vm1776 = vcmask 130112
        %1777 = vst.msk [vmem:[#allocation2] sm:$0xff] %vm1776, %v1774
        %1778 = vrot.lane.b32.xlu0 %v1275, 112
        %v1779 = vpop.permute.xlu0 %1778
        %1780 = vrot.lane.b32.xlu0 %v1356, 112
        %v1781 = vpop.permute.xlu0 %1780
        %v1782 = vsel %vm1440, %v1779, 0
        %v1784 = vsel %vm1440, %v1781, 0
        %1786 = vmatprep.subr.mxu0 0.0
        %1787 = vmatpush1.xpose.msra.mxu0 %v1784
        %1788 = vmatprep.subr.mxu0 0.0
        %1789 = vmatpush1.xpose.msra.mxu0 0.0
        %1790 = vmatprep.subr.mxu0 0.0
        %1791 = vmatpush1.xpose.msra.mxu0 0.0
        %1792 = vmatprep.subr.mxu0 0.0
        %1793 = vmatpush1.xpose.msra.mxu0 0.0
        %1794 = vmatprep.subr.mxu0 0.0
        %1795 = vmatpush1.xpose.msra.mxu0 0.0
        %1796 = vmatprep.subr.mxu0 0.0
        %1797 = vmatpush1.xpose.msra.mxu0 0.0
        %1798 = vmatprep.subr.mxu0 0.0
        %1799 = vmatpush1.xpose.msra.mxu0 0.0
        %1800 = vmatprep.subr.mxu0 0.0
        %1801 = vmatpush1.xpose.msra.mxu0 0.0
        %1802 = vmatprep.subr.mxu0 0.0
        %1803 = vmatpush1.xpose.msra.mxu0 0.0
        %1804 = vmatprep.subr.mxu0 0.0
        %1805 = vmatpush1.xpose.msra.mxu0 0.0
        %1806 = vmatprep.subr.mxu0 0.0
        %1807 = vmatpush1.xpose.msra.mxu0 0.0
        %1808 = vmatprep.subr.mxu0 0.0
        %1809 = vmatpush1.xpose.msra.mxu0 0.0
        %1810 = vmatprep.subr.mxu0 0.0
        %1811 = vmatpush1.xpose.msra.mxu0 0.0
        %1812 = vmatprep.subr.mxu0 0.0
        %1813 = vmatpush1.xpose.msra.mxu0 0.0
        %1814 = vmatprep.subr.mxu0 0.0
        %1815 = vmatpush1.xpose.msra.mxu0 0.0
        %1816 = vmatprep.subr.mxu0 0.0
        %1817 = vmatpush1.xpose.msra.mxu0 0.0
        %1818 = vmatprep.subr.mxu0 0.0
        %1819 = vmatpush1.xpose.msra.mxu0 0.0
        %1820 = vmatprep.subr.mxu0 0.0
        %1821 = vmatpush1.xpose.msra.mxu0 0.0
        %1822 = vmatprep.subr.mxu0 0.0
        %1823 = vmatpush1.xpose.msra.mxu0 0.0
        %1824 = vmatprep.subr.mxu0 0.0
        %1825 = vmatpush1.xpose.msra.mxu0 0.0
        %1826 = vmatprep.subr.mxu0 0.0
        %1827 = vmatpush1.xpose.msra.mxu0 0.0
        %1828 = vmatprep.subr.mxu0 0.0
        %1829 = vmatpush1.xpose.msra.mxu0 0.0
        %1830 = vmatprep.subr.mxu0 0.0
        %1831 = vmatpush1.xpose.msra.mxu0 0.0
        %1832 = vmatprep.subr.mxu0 0.0
        %1833 = vmatpush1.xpose.msra.mxu0 0.0
        %1834 = vmatprep.subr.mxu0 0.0
        %1835 = vmatpush1.xpose.msra.mxu0 0.0
        %1836 = vmatprep.subr.mxu0 0.0
        %1837 = vmatpush1.xpose.msra.mxu0 0.0
        %1838 = vmatprep.subr.mxu0 0.0
        %1839 = vmatpush1.xpose.msra.mxu0 0.0
        %1840 = vmatprep.subr.mxu0 0.0
        %1841 = vmatpush1.xpose.msra.mxu0 0.0
        %1842 = vmatprep.subr.mxu0 0.0
        %1843 = vmatpush1.xpose.msra.mxu0 0.0
        %1844 = vmatprep.subr.mxu0 0.0
        %1845 = vmatpush1.xpose.msra.mxu0 0.0
        %1846 = vmatprep.subr.mxu0 0.0
        %1847 = vmatpush1.xpose.msra.mxu0 0.0
        %1848 = vmatprep.subr.mxu0 0.0
        %1849 = vmatpush1.xpose.msra.mxu0 0.0
        %1850 = vmatprep.mubr.f32.mxu0 0.0
        %1851 = vmatmul.mubr.f32.gmra.mrb[0].mxu0 %v1782
        %v1852 = vpop.f32.mrb[0].mxu0
        %v1853 = vadd.f32 0.0, %v1852
        %v1854 = vpop.f32.mrb[0].mxu0
        %1855 = vdwg.mxu0
        %v1856 = vmul.f32 %v1853, 0.35355338
        %v1857 = vadd.f32 %v1856, %v1191
        %v1858 = vsel %vm1440, %v1857, -inf
        %1859 = vmax.xlane.f32.xlu0 %v1858
        %v1860 = vpop.xlane.xlu0 %1859
        %v1861 = vsub.f32 %v1857, %v1860
        %v1862 = vmul.f32 %v1861, 1.442695
        %v1863 = vpow.pop %v1862
        %v1864 = vsel %vm1440, %v1863, 0.0
        %1865 = vadd.xlane.f32.xlu0 %v1864
        %v1866 = vpop.xlane.xlu0 %1865
        %v1867 = vrcp.pop %v1866
        %v1868 = vmul.f32 %v1863, %v1867
        %1869 = vrot.lane.b32.xlu0 %v1437, 112
        %v1870 = vpop.permute.xlu0 %1869
        %v1873 = vsel %vm1440, %v1868, 0
        %1875 = vmatprep.subr.mxu0 0.0
        %1876 = vmatpush1.msra.mxu0 %v1870
        %1877 = vmatprep.subr.mxu0 0.0
        %1878 = vmatpush1.msra.mxu0 0.0
        %1879 = vmatprep.subr.mxu0 0.0
        %1880 = vmatpush1.msra.mxu0 0.0
        %1881 = vmatprep.subr.mxu0 0.0
        %1882 = vmatpush1.msra.mxu0 0.0
        %1883 = vmatprep.subr.mxu0 0.0
        %1884 = vmatpush1.msra.mxu0 0.0
        %1885 = vmatprep.subr.mxu0 0.0
        %1886 = vmatpush1.msra.mxu0 0.0
        %1887 = vmatprep.subr.mxu0 0.0
        %1888 = vmatpush1.msra.mxu0 0.0
        %1889 = vmatprep.subr.mxu0 0.0
        %1890 = vmatpush1.msra.mxu0 0.0
        %1891 = vmatprep.subr.mxu0 0.0
        %1892 = vmatpush1.msra.mxu0 0.0
        %1893 = vmatprep.subr.mxu0 0.0
        %1894 = vmatpush1.msra.mxu0 0.0
        %1895 = vmatprep.subr.mxu0 0.0
        %1896 = vmatpush1.msra.mxu0 0.0
        %1897 = vmatprep.subr.mxu0 0.0
        %1898 = vmatpush1.msra.mxu0 0.0
        %1899 = vmatprep.subr.mxu0 0.0
        %1900 = vmatpush1.msra.mxu0 0.0
        %1901 = vmatprep.subr.mxu0 0.0
        %1902 = vmatpush1.msra.mxu0 0.0
        %1903 = vmatprep.subr.mxu0 0.0
        %1904 = vmatpush1.msra.mxu0 0.0
        %1905 = vmatprep.subr.mxu0 0.0
        %1906 = vmatpush1.msra.mxu0 0.0
        %1907 = vmatprep.subr.mxu0 0.0
        %1908 = vmatpush1.msra.mxu0 0.0
        %1909 = vmatprep.subr.mxu0 0.0
        %1910 = vmatpush1.msra.mxu0 0.0
        %1911 = vmatprep.subr.mxu0 0.0
        %1912 = vmatpush1.msra.mxu0 0.0
        %1913 = vmatprep.subr.mxu0 0.0
        %1914 = vmatpush1.msra.mxu0 0.0
        %1915 = vmatprep.subr.mxu0 0.0
        %1916 = vmatpush1.msra.mxu0 0.0
        %1917 = vmatprep.subr.mxu0 0.0
        %1918 = vmatpush1.msra.mxu0 0.0
        %1919 = vmatprep.subr.mxu0 0.0
        %1920 = vmatpush1.msra.mxu0 0.0
        %1921 = vmatprep.subr.mxu0 0.0
        %1922 = vmatpush1.msra.mxu0 0.0
        %1923 = vmatprep.subr.mxu0 0.0
        %1924 = vmatpush1.msra.mxu0 0.0
        %1925 = vmatprep.subr.mxu0 0.0
        %1926 = vmatpush1.msra.mxu0 0.0
        %1927 = vmatprep.subr.mxu0 0.0
        %1928 = vmatpush1.msra.mxu0 0.0
        %1929 = vmatprep.subr.mxu0 0.0
        %1930 = vmatpush1.msra.mxu0 0.0
        %1931 = vmatprep.subr.mxu0 0.0
        %1932 = vmatpush1.msra.mxu0 0.0
        %1933 = vmatprep.subr.mxu0 0.0
        %1934 = vmatpush1.msra.mxu0 0.0
        %1935 = vmatprep.subr.mxu0 0.0
        %1936 = vmatpush1.msra.mxu0 0.0
        %1937 = vmatprep.subr.mxu0 0.0
        %1938 = vmatpush1.msra.mxu0 0.0
        %1939 = vmatprep.mubr.f32.mxu0 0.0
        %1940 = vmatmul.mubr.f32.gmra.mrb[0].mxu0 %v1873
        %v1941 = vpop.f32.mrb[0].mxu0
        %v1942 = vadd.f32 0.0, %v1941
        %v1943 = vpop.f32.mrb[0].mxu0
        %1944 = vdwg.mxu0
        %1946 = vrot.lane.b32.xlu0 %v1942, 16
        %v1947 = vpop.permute.xlu0 %1946
        %vm1949 = vcmask 195712
        %1950 = vst.msk [vmem:[#allocation2] sm:$0xff] %vm1949, %v1947
        %1951 = vrot.lane.b32.xlu0 %v1275, 104
        %v1952 = vpop.permute.xlu0 %1951
        %1953 = vrot.lane.b32.xlu0 %v1356, 104
        %v1954 = vpop.permute.xlu0 %1953
        %v1955 = vsel %vm1440, %v1952, 0
        %v1957 = vsel %vm1440, %v1954, 0
        %1959 = vmatprep.subr.mxu0 0.0
        %1960 = vmatpush1.xpose.msra.mxu0 %v1957
        %1961 = vmatprep.subr.mxu0 0.0
        %1962 = vmatpush1.xpose.msra.mxu0 0.0
        %1963 = vmatprep.subr.mxu0 0.0
        %1964 = vmatpush1.xpose.msra.mxu0 0.0
        %1965 = vmatprep.subr.mxu0 0.0
        %1966 = vmatpush1.xpose.msra.mxu0 0.0
        %1967 = vmatprep.subr.mxu0 0.0
        %1968 = vmatpush1.xpose.msra.mxu0 0.0
        %1969 = vmatprep.subr.mxu0 0.0
        %1970 = vmatpush1.xpose.msra.mxu0 0.0
        %1971 = vmatprep.subr.mxu0 0.0
        %1972 = vmatpush1.xpose.msra.mxu0 0.0
        %1973 = vmatprep.subr.mxu0 0.0
        %1974 = vmatpush1.xpose.msra.mxu0 0.0
        %1975 = vmatprep.subr.mxu0 0.0
        %1976 = vmatpush1.xpose.msra.mxu0 0.0
        %1977 = vmatprep.subr.mxu0 0.0
        %1978 = vmatpush1.xpose.msra.mxu0 0.0
        %1979 = vmatprep.subr.mxu0 0.0
        %1980 = vmatpush1.xpose.msra.mxu0 0.0
        %1981 = vmatprep.subr.mxu0 0.0
        %1982 = vmatpush1.xpose.msra.mxu0 0.0
        %1983 = vmatprep.subr.mxu0 0.0
        %1984 = vmatpush1.xpose.msra.mxu0 0.0
        %1985 = vmatprep.subr.mxu0 0.0
        %1986 = vmatpush1.xpose.msra.mxu0 0.0
        %1987 = vmatprep.subr.mxu0 0.0
        %1988 = vmatpush1.xpose.msra.mxu0 0.0
        %1989 = vmatprep.subr.mxu0 0.0
        %1990 = vmatpush1.xpose.msra.mxu0 0.0
        %1991 = vmatprep.subr.mxu0 0.0
        %1992 = vmatpush1.xpose.msra.mxu0 0.0
        %1993 = vmatprep.subr.mxu0 0.0
        %1994 = vmatpush1.xpose.msra.mxu0 0.0
        %1995 = vmatprep.subr.mxu0 0.0
        %1996 = vmatpush1.xpose.msra.mxu0 0.0
        %1997 = vmatprep.subr.mxu0 0.0
        %1998 = vmatpush1.xpose.msra.mxu0 0.0
        %1999 = vmatprep.subr.mxu0 0.0
        %2000 = vmatpush1.xpose.msra.mxu0 0.0
        %2001 = vmatprep.subr.mxu0 0.0
        %2002 = vmatpush1.xpose.msra.mxu0 0.0
        %2003 = vmatprep.subr.mxu0 0.0
        %2004 = vmatpush1.xpose.msra.mxu0 0.0
        %2005 = vmatprep.subr.mxu0 0.0
        %2006 = vmatpush1.xpose.msra.mxu0 0.0
        %2007 = vmatprep.subr.mxu0 0.0
        %2008 = vmatpush1.xpose.msra.mxu0 0.0
        %2009 = vmatprep.subr.mxu0 0.0
        %2010 = vmatpush1.xpose.msra.mxu0 0.0
        %2011 = vmatprep.subr.mxu0 0.0
        %2012 = vmatpush1.xpose.msra.mxu0 0.0
        %2013 = vmatprep.subr.mxu0 0.0
        %2014 = vmatpush1.xpose.msra.mxu0 0.0
        %2015 = vmatprep.subr.mxu0 0.0
        %2016 = vmatpush1.xpose.msra.mxu0 0.0
        %2017 = vmatprep.subr.mxu0 0.0
        %2018 = vmatpush1.xpose.msra.mxu0 0.0
        %2019 = vmatprep.subr.mxu0 0.0
        %2020 = vmatpush1.xpose.msra.mxu0 0.0
        %2021 = vmatprep.subr.mxu0 0.0
        %2022 = vmatpush1.xpose.msra.mxu0 0.0
        %2023 = vmatprep.mubr.f32.mxu0 0.0
        %2024 = vmatmul.mubr.f32.gmra.mrb[0].mxu0 %v1955
        %v2025 = vpop.f32.mrb[0].mxu0
        %v2026 = vadd.f32 0.0, %v2025
        %v2027 = vpop.f32.mrb[0].mxu0
        %2028 = vdwg.mxu0
        %v2029 = vmul.f32 %v2026, 0.35355338
        %v2030 = vadd.f32 %v2029, %v1191
        %v2031 = vsel %vm1440, %v2030, -inf
        %2032 = vmax.xlane.f32.xlu0 %v2031
        %v2033 = vpop.xlane.xlu0 %2032
        %v2034 = vsub.f32 %v2030, %v2033
        %v2035 = vmul.f32 %v2034, 1.442695
        %v2036 = vpow.pop %v2035
        %v2037 = vsel %vm1440, %v2036, 0.0
        %2038 = vadd.xlane.f32.xlu0 %v2037
        %v2039 = vpop.xlane.xlu0 %2038
        %v2040 = vrcp.pop %v2039
        %v2041 = vmul.f32 %v2036, %v2040
        %2042 = vrot.lane.b32.xlu0 %v1437, 104
        %v2043 = vpop.permute.xlu0 %2042
        %v2046 = vsel %vm1440, %v2041, 0
        %2048 = vmatprep.subr.mxu0 0.0
        %2049 = vmatpush1.msra.mxu0 %v2043
        %2050 = vmatprep.subr.mxu0 0.0
        %2051 = vmatpush1.msra.mxu0 0.0
        %2052 = vmatprep.subr.mxu0 0.0
        %2053 = vmatpush1.msra.mxu0 0.0
        %2054 = vmatprep.subr.mxu0 0.0
        %2055 = vmatpush1.msra.mxu0 0.0
        %2056 = vmatprep.subr.mxu0 0.0
        %2057 = vmatpush1.msra.mxu0 0.0
        %2058 = vmatprep.subr.mxu0 0.0
        %2059 = vmatpush1.msra.mxu0 0.0
        %2060 = vmatprep.subr.mxu0 0.0
        %2061 = vmatpush1.msra.mxu0 0.0
        %2062 = vmatprep.subr.mxu0 0.0
        %2063 = vmatpush1.msra.mxu0 0.0
        %2064 = vmatprep.subr.mxu0 0.0
        %2065 = vmatpush1.msra.mxu0 0.0
        %2066 = vmatprep.subr.mxu0 0.0
        %2067 = vmatpush1.msra.mxu0 0.0
        %2068 = vmatprep.subr.mxu0 0.0
        %2069 = vmatpush1.msra.mxu0 0.0
        %2070 = vmatprep.subr.mxu0 0.0
        %2071 = vmatpush1.msra.mxu0 0.0
        %2072 = vmatprep.subr.mxu0 0.0
        %2073 = vmatpush1.msra.mxu0 0.0
        %2074 = vmatprep.subr.mxu0 0.0
        %2075 = vmatpush1.msra.mxu0 0.0
        %2076 = vmatprep.subr.mxu0 0.0
        %2077 = vmatpush1.msra.mxu0 0.0
        %2078 = vmatprep.subr.mxu0 0.0
        %2079 = vmatpush1.msra.mxu0 0.0
        %2080 = vmatprep.subr.mxu0 0.0
        %2081 = vmatpush1.msra.mxu0 0.0
        %2082 = vmatprep.subr.mxu0 0.0
        %2083 = vmatpush1.msra.mxu0 0.0
        %2084 = vmatprep.subr.mxu0 0.0
        %2085 = vmatpush1.msra.mxu0 0.0
        %2086 = vmatprep.subr.mxu0 0.0
        %2087 = vmatpush1.msra.mxu0 0.0
        %2088 = vmatprep.subr.mxu0 0.0
        %2089 = vmatpush1.msra.mxu0 0.0
        %2090 = vmatprep.subr.mxu0 0.0
        %2091 = vmatpush1.msra.mxu0 0.0
        %2092 = vmatprep.subr.mxu0 0.0
        %2093 = vmatpush1.msra.mxu0 0.0
        %2094 = vmatprep.subr.mxu0 0.0
        %2095 = vmatpush1.msra.mxu0 0.0
        %2096 = vmatprep.subr.mxu0 0.0
        %2097 = vmatpush1.msra.mxu0 0.0
        %2098 = vmatprep.subr.mxu0 0.0
        %2099 = vmatpush1.msra.mxu0 0.0
        %2100 = vmatprep.subr.mxu0 0.0
        %2101 = vmatpush1.msra.mxu0 0.0
        %2102 = vmatprep.subr.mxu0 0.0
        %2103 = vmatpush1.msra.mxu0 0.0
        %2104 = vmatprep.subr.mxu0 0.0
        %2105 = vmatpush1.msra.mxu0 0.0
        %2106 = vmatprep.subr.mxu0 0.0
        %2107 = vmatpush1.msra.mxu0 0.0
        %2108 = vmatprep.subr.mxu0 0.0
        %2109 = vmatpush1.msra.mxu0 0.0
        %2110 = vmatprep.subr.mxu0 0.0
        %2111 = vmatpush1.msra.mxu0 0.0
        %2112 = vmatprep.mubr.f32.mxu0 0.0
        %2113 = vmatmul.mubr.f32.gmra.mrb[0].mxu0 %v2046
        %v2114 = vpop.f32.mrb[0].mxu0
        %v2115 = vadd.f32 0.0, %v2114
        %v2116 = vpop.f32.mrb[0].mxu0
        %2117 = vdwg.mxu0
        %2119 = vrot.lane.b32.xlu0 %v2115, 24
        %v2120 = vpop.permute.xlu0 %2119
        %vm2122 = vcmask 261312
        %2123 = vst.msk [vmem:[#allocation2] sm:$0xff] %vm2122, %v2120
        %v2124 = vld [vmem:[#allocation2] sm:$0xff]
        %v2125 = vld [vmem:[%s21] sm:$0xff]
        %v2126 = vld [vmem:[%s21 + $0x8] sm:$0xff]
        %v2127 = vld [vmem:[%s21 + $0x10] sm:$0xff]
        %v2128 = vld [vmem:[%s21 + $0x18] sm:$0xff]
        %v2129 = vld [vmem:[#allocation6] sm:$0x1]
        %v2131 = vlaneseq
        %v2132 = vshrl.u32 %v2131, 7
        %v2133 = vsub.s32 0, %v2132
        %v2134 = vrot.slane %v2129, %v2133
        %v2137 = vsel %vm1204, %v2124, 0
        %2139 = vmatprep.subr.mxu0 0.0
        %2140 = vmatpush1.msra.mxu0 %v2125
        %2141 = vmatprep.subr.mxu0 0.0
        %2142 = vmatpush1.msra.mxu0 %v2126
        %2143 = vmatprep.subr.mxu0 0.0
        %2144 = vmatpush1.msra.mxu0 %v2127
        %2145 = vmatprep.subr.mxu0 0.0
        %2146 = vmatpush1.msra.mxu0 %v2128
        %2147 = vmatprep.subr.mxu0 0.0
        %2148 = vmatpush1.msra.mxu0 0.0
        %2149 = vmatprep.subr.mxu0 0.0
        %2150 = vmatpush1.msra.mxu0 0.0
        %2151 = vmatprep.subr.mxu0 0.0
        %2152 = vmatpush1.msra.mxu0 0.0
        %2153 = vmatprep.subr.mxu0 0.0
        %2154 = vmatpush1.msra.mxu0 0.0
        %2155 = vmatprep.subr.mxu0 0.0
        %2156 = vmatpush1.msra.mxu0 0.0
        %2157 = vmatprep.subr.mxu0 0.0
        %2158 = vmatpush1.msra.mxu0 0.0
        %2159 = vmatprep.subr.mxu0 0.0
        %2160 = vmatpush1.msra.mxu0 0.0
        %2161 = vmatprep.subr.mxu0 0.0
        %2162 = vmatpush1.msra.mxu0 0.0
        %2163 = vmatprep.subr.mxu0 0.0
        %2164 = vmatpush1.msra.mxu0 0.0
        %2165 = vmatprep.subr.mxu0 0.0
        %2166 = vmatpush1.msra.mxu0 0.0
        %2167 = vmatprep.subr.mxu0 0.0
        %2168 = vmatpush1.msra.mxu0 0.0
        %2169 = vmatprep.subr.mxu0 0.0
        %2170 = vmatpush1.msra.mxu0 0.0
        %2171 = vmatprep.subr.mxu0 0.0
        %2172 = vmatpush1.msra.mxu0 0.0
        %2173 = vmatprep.subr.mxu0 0.0
        %2174 = vmatpush1.msra.mxu0 0.0
        %2175 = vmatprep.subr.mxu0 0.0
        %2176 = vmatpush1.msra.mxu0 0.0
        %2177 = vmatprep.subr.mxu0 0.0
        %2178 = vmatpush1.msra.mxu0 0.0
        %2179 = vmatprep.subr.mxu0 0.0
        %2180 = vmatpush1.msra.mxu0 0.0
        %2181 = vmatprep.subr.mxu0 0.0
        %2182 = vmatpush1.msra.mxu0 0.0
        %2183 = vmatprep.subr.mxu0 0.0
        %2184 = vmatpush1.msra.mxu0 0.0
        %2185 = vmatprep.subr.mxu0 0.0
        %2186 = vmatpush1.msra.mxu0 0.0
        %2187 = vmatprep.subr.mxu0 0.0
        %2188 = vmatpush1.msra.mxu0 0.0
        %2189 = vmatprep.subr.mxu0 0.0
        %2190 = vmatpush1.msra.mxu0 0.0
        %2191 = vmatprep.subr.mxu0 0.0
        %2192 = vmatpush1.msra.mxu0 0.0
        %2193 = vmatprep.subr.mxu0 0.0
        %2194 = vmatpush1.msra.mxu0 0.0
        %2195 = vmatprep.subr.mxu0 0.0
        %2196 = vmatpush1.msra.mxu0 0.0
        %2197 = vmatprep.subr.mxu0 0.0
        %2198 = vmatpush1.msra.mxu0 0.0
        %2199 = vmatprep.subr.mxu0 0.0
        %2200 = vmatpush1.msra.mxu0 0.0
        %2201 = vmatprep.subr.mxu0 0.0
        %2202 = vmatpush1.msra.mxu0 0.0
        %2203 = vmatprep.mubr.f32.mxu0 0.0
        %2204 = vmatmul.mubr.f32.gmra.mrb[0].mxu0 %v2137
        %v2205 = vpop.f32.mrb[0].mxu0
        %v2206 = vadd.f32 %v2134, %v2205
        %v2207 = vpop.f32.mrb[0].mxu0
        %2208 = vdwg.mxu0
        %v2209 = vadd.f32 %v1189, %v2206
        %v2210 = vsel %vm1204, %v2209, 0.0
        %2211 = vadd.xlane.f32.xlu0 %v2210
        %v2212 = vpop.xlane.xlu0 %2211
        %v2213 = vrcp.pop 32.0
        %v2214 = vmul.f32 %v2212, %v2213
        %v2215 = vsub.f32 %v2209, %v2214
        %v2216 = vmul.f32 %v2215, %v2215
        %v2217 = vsel %vm1204, %v2216, 0.0
        %2218 = vadd.xlane.f32.xlu0 %v2217
        %v2219 = vpop.xlane.xlu0 %2218
        %v2220 = vmul.f32 %v2219, %v2213
        %v2221 = vadd.f32 %v2220, 1e-05
        %v2222 = vrsqrt.pop %v2221
        %v2223 = vmul.f32 %v2215, %v2222
        %v2224 = vld [vmem:[#allocation17] sm:$0x1]
        %v2226 = vlaneseq
        %v2227 = vshrl.u32 %v2226, 7
        %v2228 = vsub.s32 0, %v2227
        %v2229 = vrot.slane %v2224, %v2228
        %v2231 = vmul.f32 %v2223, %v2229
        %v2232 = vld [vmem:[#allocation18] sm:$0x1]
        %v2234 = vlaneseq
        %v2235 = vshrl.u32 %v2234, 7
        %v2236 = vsub.s32 0, %v2235
        %v2237 = vrot.slane %v2232, %v2236
        %v2239 = vadd.f32 %v2231, %v2237
        %v2240 = vld [vmem:[%s25] sm:$0xff]
        %v2241 = vld [vmem:[%s25 + $0x8] sm:$0xff]
        %v2242 = vld [vmem:[%s25 + $0x10] sm:$0xff]
        %v2243 = vld [vmem:[%s25 + $0x18] sm:$0xff]
        %v2244 = vld [vmem:[#allocation8] sm:$0x1]
        %v2246 = vlaneseq
        %v2247 = vshrl.u32 %v2246, 7
        %v2248 = vsub.s32 0, %v2247
        %v2249 = vrot.slane %v2244, %v2248
        %v2252 = vsel %vm1204, %v2239, 0
        %2254 = vmatprep.subr.mxu0 0.0
        %2255 = vmatpush1.msra.mxu0 %v2240
        %2256 = vmatprep.subr.mxu0 0.0
        %2257 = vmatpush1.msra.mxu0 %v2241
        %2258 = vmatprep.subr.mxu0 0.0
        %2259 = vmatpush1.msra.mxu0 %v2242
        %2260 = vmatprep.subr.mxu0 0.0
        %2261 = vmatpush1.msra.mxu0 %v2243
        %2262 = vmatprep.subr.mxu0 0.0
        %2263 = vmatpush1.msra.mxu0 0.0
        %2264 = vmatprep.subr.mxu0 0.0
        %2265 = vmatpush1.msra.mxu0 0.0
        %2266 = vmatprep.subr.mxu0 0.0
        %2267 = vmatpush1.msra.mxu0 0.0
        %2268 = vmatprep.subr.mxu0 0.0
        %2269 = vmatpush1.msra.mxu0 0.0
        %2270 = vmatprep.subr.mxu0 0.0
        %2271 = vmatpush1.msra.mxu0 0.0
        %2272 = vmatprep.subr.mxu0 0.0
        %2273 = vmatpush1.msra.mxu0 0.0
        %2274 = vmatprep.subr.mxu0 0.0
        %2275 = vmatpush1.msra.mxu0 0.0
        %2276 = vmatprep.subr.mxu0 0.0
        %2277 = vmatpush1.msra.mxu0 0.0
        %2278 = vmatprep.subr.mxu0 0.0
        %2279 = vmatpush1.msra.mxu0 0.0
        %2280 = vmatprep.subr.mxu0 0.0
        %2281 = vmatpush1.msra.mxu0 0.0
        %2282 = vmatprep.subr.mxu0 0.0
        %2283 = vmatpush1.msra.mxu0 0.0
        %2284 = vmatprep.subr.mxu0 0.0
        %2285 = vmatpush1.msra.mxu0 0.0
        %2286 = vmatprep.subr.mxu0 0.0
        %2287 = vmatpush1.msra.mxu0 0.0
        %2288 = vmatprep.subr.mxu0 0.0
        %2289 = vmatpush1.msra.mxu0 0.0
        %2290 = vmatprep.subr.mxu0 0.0
        %2291 = vmatpush1.msra.mxu0 0.0
        %2292 = vmatprep.subr.mxu0 0.0
        %2293 = vmatpush1.msra.mxu0 0.0
        %2294 = vmatprep.subr.mxu0 0.0
        %2295 = vmatpush1.msra.mxu0 0.0
        %2296 = vmatprep.subr.mxu0 0.0
        %2297 = vmatpush1.msra.mxu0 0.0
        %2298 = vmatprep.subr.mxu0 0.0
        %2299 = vmatpush1.msra.mxu0 0.0
        %2300 = vmatprep.subr.mxu0 0.0
        %2301 = vmatpush1.msra.mxu0 0.0
        %2302 = vmatprep.subr.mxu0 0.0
        %2303 = vmatpush1.msra.mxu0 0.0
        %2304 = vmatprep.subr.mxu0 0.0
        %2305 = vmatpush1.msra.mxu0 0.0
        %2306 = vmatprep.subr.mxu0 0.0
        %2307 = vmatpush1.msra.mxu0 0.0
        %2308 = vmatprep.subr.mxu0 0.0
        %2309 = vmatpush1.msra.mxu0 0.0
        %2310 = vmatprep.subr.mxu0 0.0
        %2311 = vmatpush1.msra.mxu0 0.0
        %2312 = vmatprep.subr.mxu0 0.0
        %2313 = vmatpush1.msra.mxu0 0.0
        %2314 = vmatprep.subr.mxu0 0.0
        %2315 = vmatpush1.msra.mxu0 0.0
        %2316 = vmatprep.subr.mxu0 0.0
        %2317 = vmatpush1.msra.mxu0 0.0
        %2318 = vmatprep.mubr.f32.mxu0 0.0
        %2319 = vmatmul.mubr.f32.gmra.mrb[0].mxu0 %v2252
        %v2320 = vpop.f32.mrb[0].mxu0
        %v2321 = vadd.f32 %v2249, %v2320
        %v2322 = vpop.f32.mrb[0].mxu0
        %2323 = vdwg.mxu0
        %v2324 = vld [vmem:[%s29] sm:$0xff]
        %v2325 = vld [vmem:[%s29 + $0x8] sm:$0xff]
        %v2326 = vld [vmem:[%s29 + $0x10] sm:$0xff]
        %v2327 = vld [vmem:[%s29 + $0x18] sm:$0xff]
        %v2328 = vld [vmem:[#allocation9] sm:$0x1]
        %v2330 = vlaneseq
        %v2331 = vshrl.u32 %v2330, 7
        %v2332 = vsub.s32 0, %v2331
        %v2333 = vrot.slane %v2328, %v2332
        %v2336 = vsel %vm1204, %v1190, 0
        %2338 = vmatprep.subr.mxu0 0.0
        %2339 = vmatpush1.msra.mxu0 %v2324
        %2340 = vmatprep.subr.mxu0 0.0
        %2341 = vmatpush1.msra.mxu0 %v2325
        %2342 = vmatprep.subr.mxu0 0.0
        %2343 = vmatpush1.msra.mxu0 %v2326
        %2344 = vmatprep.subr.mxu0 0.0
        %2345 = vmatpush1.msra.mxu0 %v2327
        %2346 = vmatprep.subr.mxu0 0.0
        %2347 = vmatpush1.msra.mxu0 0.0
        %2348 = vmatprep.subr.mxu0 0.0
        %2349 = vmatpush1.msra.mxu0 0.0
        %2350 = vmatprep.subr.mxu0 0.0
        %2351 = vmatpush1.msra.mxu0 0.0
        %2352 = vmatprep.subr.mxu0 0.0
        %2353 = vmatpush1.msra.mxu0 0.0
        %2354 = vmatprep.subr.mxu0 0.0
        %2355 = vmatpush1.msra.mxu0 0.0
        %2356 = vmatprep.subr.mxu0 0.0
        %2357 = vmatpush1.msra.mxu0 0.0
        %2358 = vmatprep.subr.mxu0 0.0
        %2359 = vmatpush1.msra.mxu0 0.0
        %2360 = vmatprep.subr.mxu0 0.0
        %2361 = vmatpush1.msra.mxu0 0.0
        %2362 = vmatprep.subr.mxu0 0.0
        %2363 = vmatpush1.msra.mxu0 0.0
        %2364 = vmatprep.subr.mxu0 0.0
        %2365 = vmatpush1.msra.mxu0 0.0
        %2366 = vmatprep.subr.mxu0 0.0
        %2367 = vmatpush1.msra.mxu0 0.0
        %2368 = vmatprep.subr.mxu0 0.0
        %2369 = vmatpush1.msra.mxu0 0.0
        %2370 = vmatprep.subr.mxu0 0.0
        %2371 = vmatpush1.msra.mxu0 0.0
        %2372 = vmatprep.subr.mxu0 0.0
        %2373 = vmatpush1.msra.mxu0 0.0
        %2374 = vmatprep.subr.mxu0 0.0
        %2375 = vmatpush1.msra.mxu0 0.0
        %2376 = vmatprep.subr.mxu0 0.0
        %2377 = vmatpush1.msra.mxu0 0.0
        %2378 = vmatprep.subr.mxu0 0.0
        %2379 = vmatpush1.msra.mxu0 0.0
        %2380 = vmatprep.subr.mxu0 0.0
        %2381 = vmatpush1.msra.mxu0 0.0
        %2382 = vmatprep.subr.mxu0 0.0
        %2383 = vmatpush1.msra.mxu0 0.0
        %2384 = vmatprep.subr.mxu0 0.0
        %2385 = vmatpush1.msra.mxu0 0.0
        %2386 = vmatprep.subr.mxu0 0.0
        %2387 = vmatpush1.msra.mxu0 0.0
        %2388 = vmatprep.subr.mxu0 0.0
        %2389 = vmatpush1.msra.mxu0 0.0
        %2390 = vmatprep.subr.mxu0 0.0
        %2391 = vmatpush1.msra.mxu0 0.0
        %2392 = vmatprep.subr.mxu0 0.0
        %2393 = vmatpush1.msra.mxu0 0.0
        %2394 = vmatprep.subr.mxu0 0.0
        %2395 = vmatpush1.msra.mxu0 0.0
        %2396 = vmatprep.subr.mxu0 0.0
        %2397 = vmatpush1.msra.mxu0 0.0
        %2398 = vmatprep.subr.mxu0 0.0
        %2399 = vmatpush1.msra.mxu0 0.0
        %2400 = vmatprep.subr.mxu0 0.0
        %2401 = vmatpush1.msra.mxu0 0.0
        %2402 = vmatprep.mubr.f32.mxu0 0.0
        %2403 = vmatmul.mubr.f32.gmra.mrb[0].mxu0 %v2336
        %v2404 = vpop.f32.mrb[0].mxu0
        %v2405 = vadd.f32 %v2333, %v2404
        %v2406 = vpop.f32.mrb[0].mxu0
        %2407 = vdwg.mxu0
        %v2408 = vld [vmem:[%s33] sm:$0xff]
        %v2409 = vld [vmem:[%s33 + $0x8] sm:$0xff]
        %v2410 = vld [vmem:[%s33 + $0x10] sm:$0xff]
        %v2411 = vld [vmem:[%s33 + $0x18] sm:$0xff]
        %v2412 = vld [vmem:[#allocation11] sm:$0x1]
        %v2414 = vlaneseq
        %v2415 = vshrl.u32 %v2414, 7
        %v2416 = vsub.s32 0, %v2415
        %v2417 = vrot.slane %v2412, %v2416
        %2419 = vmatprep.subr.mxu0 0.0
        %2420 = vmatpush1.msra.mxu0 %v2408
        %2421 = vmatprep.subr.mxu0 0.0
        %2422 = vmatpush1.msra.mxu0 %v2409
        %2423 = vmatprep.subr.mxu0 0.0
        %2424 = vmatpush1.msra.mxu0 %v2410
        %2425 = vmatprep.subr.mxu0 0.0
        %2426 = vmatpush1.msra.mxu0 %v2411
        %2427 = vmatprep.subr.mxu0 0.0
        %2428 = vmatpush1.msra.mxu0 0.0
        %2429 = vmatprep.subr.mxu0 0.0
        %2430 = vmatpush1.msra.mxu0 0.0
        %2431 = vmatprep.subr.mxu0 0.0
        %2432 = vmatpush1.msra.mxu0 0.0
        %2433 = vmatprep.subr.mxu0 0.0
        %2434 = vmatpush1.msra.mxu0 0.0
        %2435 = vmatprep.subr.mxu0 0.0
        %2436 = vmatpush1.msra.mxu0 0.0
        %2437 = vmatprep.subr.mxu0 0.0
        %2438 = vmatpush1.msra.mxu0 0.0
        %2439 = vmatprep.subr.mxu0 0.0
        %2440 = vmatpush1.msra.mxu0 0.0
        %2441 = vmatprep.subr.mxu0 0.0
        %2442 = vmatpush1.msra.mxu0 0.0
        %2443 = vmatprep.subr.mxu0 0.0
        %2444 = vmatpush1.msra.mxu0 0.0
        %2445 = vmatprep.subr.mxu0 0.0
        %2446 = vmatpush1.msra.mxu0 0.0
        %2447 = vmatprep.subr.mxu0 0.0
        %2448 = vmatpush1.msra.mxu0 0.0
        %2449 = vmatprep.subr.mxu0 0.0
        %2450 = vmatpush1.msra.mxu0 0.0
        %2451 = vmatprep.subr.mxu0 0.0
        %2452 = vmatpush1.msra.mxu0 0.0
        %2453 = vmatprep.subr.mxu0 0.0
        %2454 = vmatpush1.msra.mxu0 0.0
        %2455 = vmatprep.subr.mxu0 0.0
        %2456 = vmatpush1.msra.mxu0 0.0
        %2457 = vmatprep.subr.mxu0 0.0
        %2458 = vmatpush1.msra.mxu0 0.0
        %2459 = vmatprep.subr.mxu0 0.0
        %2460 = vmatpush1.msra.mxu0 0.0
        %2461 = vmatprep.subr.mxu0 0.0
        %2462 = vmatpush1.msra.mxu0 0.0
        %2463 = vmatprep.subr.mxu0 0.0
        %2464 = vmatpush1.msra.mxu0 0.0
        %2465 = vmatprep.subr.mxu0 0.0
        %2466 = vmatpush1.msra.mxu0 0.0
        %2467 = vmatprep.subr.mxu0 0.0
        %2468 = vmatpush1.msra.mxu0 0.0
        %2469 = vmatprep.subr.mxu0 0.0
        %2470 = vmatpush1.msra.mxu0 0.0
        %2471 = vmatprep.subr.mxu0 0.0
        %2472 = vmatpush1.msra.mxu0 0.0
        %2473 = vmatprep.subr.mxu0 0.0
        %2474 = vmatpush1.msra.mxu0 0.0
        %2475 = vmatprep.subr.mxu0 0.0
        %2476 = vmatpush1.msra.mxu0 0.0
        %2477 = vmatprep.subr.mxu0 0.0
        %2478 = vmatpush1.msra.mxu0 0.0
        %2479 = vmatprep.subr.mxu0 0.0
        %2480 = vmatpush1.msra.mxu0 0.0
        %2481 = vmatprep.subr.mxu0 0.0
        %2482 = vmatpush1.msra.mxu0 0.0
        %2483 = vmatprep.mubr.f32.mxu0 0.0
        %2484 = vmatmul.mubr.f32.gmra.mrb[0].mxu0 %v2336
        %v2485 = vpop.f32.mrb[0].mxu0
        %v2486 = vadd.f32 %v2417, %v2485
        %v2487 = vpop.f32.mrb[0].mxu0
        %2488 = vdwg.mxu0
        %v2490 = vsel %vm1440, %v2321, 0
        %v2493 = vsel %vm1440, %v2405, 0
        %2495 = vmatprep.subr.mxu0 0.0
        %2496 = vmatpush1.xpose.msra.mxu0 %v2493
        %2497 = vmatprep.subr.mxu0 0.0
        %2498 = vmatpush1.xpose.msra.mxu0 0.0
        %2499 = vmatprep.subr.mxu0 0.0
        %2500 = vmatpush1.xpose.msra.mxu0 0.0
        %2501 = vmatprep.subr.mxu0 0.0
        %2502 = vmatpush1.xpose.msra.mxu0 0.0
        %2503 = vmatprep.subr.mxu0 0.0
        %2504 = vmatpush1.xpose.msra.mxu0 0.0
        %2505 = vmatprep.subr.mxu0 0.0
        %2506 = vmatpush1.xpose.msra.mxu0 0.0
        %2507 = vmatprep.subr.mxu0 0.0
        %2508 = vmatpush1.xpose.msra.mxu0 0.0
        %2509 = vmatprep.subr.mxu0 0.0
        %2510 = vmatpush1.xpose.msra.mxu0 0.0
        %2511 = vmatprep.subr.mxu0 0.0
        %2512 = vmatpush1.xpose.msra.mxu0 0.0
        %2513 = vmatprep.subr.mxu0 0.0
        %2514 = vmatpush1.xpose.msra.mxu0 0.0
        %2515 = vmatprep.subr.mxu0 0.0
        %2516 = vmatpush1.xpose.msra.mxu0 0.0
        %2517 = vmatprep.subr.mxu0 0.0
        %2518 = vmatpush1.xpose.msra.mxu0 0.0
        %2519 = vmatprep.subr.mxu0 0.0
        %2520 = vmatpush1.xpose.msra.mxu0 0.0
        %2521 = vmatprep.subr.mxu0 0.0
        %2522 = vmatpush1.xpose.msra.mxu0 0.0
        %2523 = vmatprep.subr.mxu0 0.0
        %2524 = vmatpush1.xpose.msra.mxu0 0.0
        %2525 = vmatprep.subr.mxu0 0.0
        %2526 = vmatpush1.xpose.msra.mxu0 0.0
        %2527 = vmatprep.subr.mxu0 0.0
        %2528 = vmatpush1.xpose.msra.mxu0 0.0
        %2529 = vmatprep.subr.mxu0 0.0
        %2530 = vmatpush1.xpose.msra.mxu0 0.0
        %2531 = vmatprep.subr.mxu0 0.0
        %2532 = vmatpush1.xpose.msra.mxu0 0.0
        %2533 = vmatprep.subr.mxu0 0.0
        %2534 = vmatpush1.xpose.msra.mxu0 0.0
        %2535 = vmatprep.subr.mxu0 0.0
        %2536 = vmatpush1.xpose.msra.mxu0 0.0
        %2537 = vmatprep.subr.mxu0 0.0
        %2538 = vmatpush1.xpose.msra.mxu0 0.0
        %2539 = vmatprep.subr.mxu0 0.0
        %2540 = vmatpush1.xpose.msra.mxu0 0.0
        %2541 = vmatprep.subr.mxu0 0.0
        %2542 = vmatpush1.xpose.msra.mxu0 0.0
        %2543 = vmatprep.subr.mxu0 0.0
        %2544 = vmatpush1.xpose.msra.mxu0 0.0
        %2545 = vmatprep.subr.mxu0 0.0
        %2546 = vmatpush1.xpose.msra.mxu0 0.0
        %2547 = vmatprep.subr.mxu0 0.0
        %2548 = vmatpush1.xpose.msra.mxu0 0.0
        %2549 = vmatprep.subr.mxu0 0.0
        %2550 = vmatpush1.xpose.msra.mxu0 0.0
        %2551 = vmatprep.subr.mxu0 0.0
        %2552 = vmatpush1.xpose.msra.mxu0 0.0
        %2553 = vmatprep.subr.mxu0 0.0
        %2554 = vmatpush1.xpose.msra.mxu0 0.0
        %2555 = vmatprep.subr.mxu0 0.0
        %2556 = vmatpush1.xpose.msra.mxu0 0.0
        %2557 = vmatprep.subr.mxu0 0.0
        %2558 = vmatpush1.xpose.msra.mxu0 0.0
        %2559 = vmatprep.mubr.f32.mxu0 0.0
        %2560 = vmatmul.mubr.f32.gmra.mrb[0].mxu0 %v2490
        %v2561 = vpop.f32.mrb[0].mxu0
        %v2562 = vadd.f32 0.0, %v2561
        %v2563 = vpop.f32.mrb[0].mxu0
        %2564 = vdwg.mxu0
        %v2565 = vmul.f32 %v2562, 0.35355338
        %v2567 = vlaneseq
        %v2568 = vshrl.u32 %v2567, 7
        %v2569 = vsub.s32 0, %v2568
        %v2570 = vrot.slane %v1192, %v2569
        %v2572 = vadd.f32 %v2565, %v2570
        %v2573 = vsel %vm1440, %v2572, -inf
        %2574 = vmax.xlane.f32.xlu0 %v2573
        %v2575 = vpop.xlane.xlu0 %2574
        %v2576 = vsub.f32 %v2572, %v2575
        %v2577 = vmul.f32 %v2576, 1.442695
        %v2578 = vpow.pop %v2577
        %v2579 = vsel %vm1440, %v2578, 0.0
        %2580 = vadd.xlane.f32.xlu0 %v2579
        %v2581 = vpop.xlane.xlu0 %2580
        %v2582 = vrcp.pop %v2581
        %v2583 = vmul.f32 %v2578, %v2582
        %v2585 = vsel %vm1440, %v2583, 0
        %2587 = vmatprep.subr.mxu0 0.0
        %2588 = vmatpush1.msra.mxu0 %v2486
        %2589 = vmatprep.subr.mxu0 0.0
        %2590 = vmatpush1.msra.mxu0 0.0
        %2591 = vmatprep.subr.mxu0 0.0
        %2592 = vmatpush1.msra.mxu0 0.0
        %2593 = vmatprep.subr.mxu0 0.0
        %2594 = vmatpush1.msra.mxu0 0.0
        %2595 = vmatprep.subr.mxu0 0.0
        %2596 = vmatpush1.msra.mxu0 0.0
        %2597 = vmatprep.subr.mxu0 0.0
        %2598 = vmatpush1.msra.mxu0 0.0
        %2599 = vmatprep.subr.mxu0 0.0
        %2600 = vmatpush1.msra.mxu0 0.0
        %2601 = vmatprep.subr.mxu0 0.0
        %2602 = vmatpush1.msra.mxu0 0.0
        %2603 = vmatprep.subr.mxu0 0.0
        %2604 = vmatpush1.msra.mxu0 0.0
        %2605 = vmatprep.subr.mxu0 0.0
        %2606 = vmatpush1.msra.mxu0 0.0
        %2607 = vmatprep.subr.mxu0 0.0
        %2608 = vmatpush1.msra.mxu0 0.0
        %2609 = vmatprep.subr.mxu0 0.0
        %2610 = vmatpush1.msra.mxu0 0.0
        %2611 = vmatprep.subr.mxu0 0.0
        %2612 = vmatpush1.msra.mxu0 0.0
        %2613 = vmatprep.subr.mxu0 0.0
        %2614 = vmatpush1.msra.mxu0 0.0
        %2615 = vmatprep.subr.mxu0 0.0
        %2616 = vmatpush1.msra.mxu0 0.0
        %2617 = vmatprep.subr.mxu0 0.0
        %2618 = vmatpush1.msra.mxu0 0.0
        %2619 = vmatprep.subr.mxu0 0.0
        %2620 = vmatpush1.msra.mxu0 0.0
        %2621 = vmatprep.subr.mxu0 0.0
        %2622 = vmatpush1.msra.mxu0 0.0
        %2623 = vmatprep.subr.mxu0 0.0
        %2624 = vmatpush1.msra.mxu0 0.0
        %2625 = vmatprep.subr.mxu0 0.0
        %2626 = vmatpush1.msra.mxu0 0.0
        %2627 = vmatprep.subr.mxu0 0.0
        %2628 = vmatpush1.msra.mxu0 0.0
        %2629 = vmatprep.subr.mxu0 0.0
        %2630 = vmatpush1.msra.mxu0 0.0
        %2631 = vmatprep.subr.mxu0 0.0
        %2632 = vmatpush1.msra.mxu0 0.0
        %2633 = vmatprep.subr.mxu0 0.0
        %2634 = vmatpush1.msra.mxu0 0.0
        %2635 = vmatprep.subr.mxu0 0.0
        %2636 = vmatpush1.msra.mxu0 0.0
        %2637 = vmatprep.subr.mxu0 0.0
        %2638 = vmatpush1.msra.mxu0 0.0
        %2639 = vmatprep.subr.mxu0 0.0
        %2640 = vmatpush1.msra.mxu0 0.0
        %2641 = vmatprep.subr.mxu0 0.0
        %2642 = vmatpush1.msra.mxu0 0.0
        %2643 = vmatprep.subr.mxu0 0.0
        %2644 = vmatpush1.msra.mxu0 0.0
        %2645 = vmatprep.subr.mxu0 0.0
        %2646 = vmatpush1.msra.mxu0 0.0
        %2647 = vmatprep.subr.mxu0 0.0
        %2648 = vmatpush1.msra.mxu0 0.0
        %2649 = vmatprep.subr.mxu0 0.0
        %2650 = vmatpush1.msra.mxu0 0.0
        %2651 = vmatprep.mubr.f32.mxu0 0.0
        %2652 = vmatmul.mubr.f32.gmra.mrb[0].mxu0 %v2585
        %v2653 = vpop.f32.mrb[0].mxu0
        %v2654 = vadd.f32 0.0, %v2653
        %v2655 = vpop.f32.mrb[0].mxu0
        %2656 = vdwg.mxu0
        %2657 = vst.msk [vmem:[#allocation2] sm:$0xff] %vm1440, %v2654
        %2658 = vst.msk [vmem:[%s1169] sm:$0xff] %vm1440, %v2583
        %2659 = vrot.lane.b32.xlu0 %v2321, 120
        %v2660 = vpop.permute.xlu0 %2659
        %2661 = vrot.lane.b32.xlu0 %v2405, 120
        %v2662 = vpop.permute.xlu0 %2661
        %v2663 = vsel %vm1440, %v2660, 0
        %v2665 = vsel %vm1440, %v2662, 0
        %2667 = vmatprep.subr.mxu0 0.0
        %2668 = vmatpush1.xpose.msra.mxu0 %v2665
        %2669 = vmatprep.subr.mxu0 0.0
        %2670 = vmatpush1.xpose.msra.mxu0 0.0
        %2671 = vmatprep.subr.mxu0 0.0
        %2672 = vmatpush1.xpose.msra.mxu0 0.0
        %2673 = vmatprep.subr.mxu0 0.0
        %2674 = vmatpush1.xpose.msra.mxu0 0.0
        %2675 = vmatprep.subr.mxu0 0.0
        %2676 = vmatpush1.xpose.msra.mxu0 0.0
        %2677 = vmatprep.subr.mxu0 0.0
        %2678 = vmatpush1.xpose.msra.mxu0 0.0
        %2679 = vmatprep.subr.mxu0 0.0
        %2680 = vmatpush1.xpose.msra.mxu0 0.0
        %2681 = vmatprep.subr.mxu0 0.0
        %2682 = vmatpush1.xpose.msra.mxu0 0.0
        %2683 = vmatprep.subr.mxu0 0.0
        %2684 = vmatpush1.xpose.msra.mxu0 0.0
        %2685 = vmatprep.subr.mxu0 0.0
        %2686 = vmatpush1.xpose.msra.mxu0 0.0
        %2687 = vmatprep.subr.mxu0 0.0
        %2688 = vmatpush1.xpose.msra.mxu0 0.0
        %2689 = vmatprep.subr.mxu0 0.0
        %2690 = vmatpush1.xpose.msra.mxu0 0.0
        %2691 = vmatprep.subr.mxu0 0.0
        %2692 = vmatpush1.xpose.msra.mxu0 0.0
        %2693 = vmatprep.subr.mxu0 0.0
        %2694 = vmatpush1.xpose.msra.mxu0 0.0
        %2695 = vmatprep.subr.mxu0 0.0
        %2696 = vmatpush1.xpose.msra.mxu0 0.0
        %2697 = vmatprep.subr.mxu0 0.0
        %2698 = vmatpush1.xpose.msra.mxu0 0.0
        %2699 = vmatprep.subr.mxu0 0.0
        %2700 = vmatpush1.xpose.msra.mxu0 0.0
        %2701 = vmatprep.subr.mxu0 0.0
        %2702 = vmatpush1.xpose.msra.mxu0 0.0
        %2703 = vmatprep.subr.mxu0 0.0
        %2704 = vmatpush1.xpose.msra.mxu0 0.0
        %2705 = vmatprep.subr.mxu0 0.0
        %2706 = vmatpush1.xpose.msra.mxu0 0.0
        %2707 = vmatprep.subr.mxu0 0.0
        %2708 = vmatpush1.xpose.msra.mxu0 0.0
        %2709 = vmatprep.subr.mxu0 0.0
        %2710 = vmatpush1.xpose.msra.mxu0 0.0
        %2711 = vmatprep.subr.mxu0 0.0
        %2712 = vmatpush1.xpose.msra.mxu0 0.0
        %2713 = vmatprep.subr.mxu0 0.0
        %2714 = vmatpush1.xpose.msra.mxu0 0.0
        %2715 = vmatprep.subr.mxu0 0.0
        %2716 = vmatpush1.xpose.msra.mxu0 0.0
        %2717 = vmatprep.subr.mxu0 0.0
        %2718 = vmatpush1.xpose.msra.mxu0 0.0
        %2719 = vmatprep.subr.mxu0 0.0
        %2720 = vmatpush1.xpose.msra.mxu0 0.0
        %2721 = vmatprep.subr.mxu0 0.0
        %2722 = vmatpush1.xpose.msra.mxu0 0.0
        %2723 = vmatprep.subr.mxu0 0.0
        %2724 = vmatpush1.xpose.msra.mxu0 0.0
        %2725 = vmatprep.subr.mxu0 0.0
        %2726 = vmatpush1.xpose.msra.mxu0 0.0
        %2727 = vmatprep.subr.mxu0 0.0
        %2728 = vmatpush1.xpose.msra.mxu0 0.0
        %2729 = vmatprep.subr.mxu0 0.0
        %2730 = vmatpush1.xpose.msra.mxu0 0.0
        %2731 = vmatprep.mubr.f32.mxu0 0.0
        %2732 = vmatmul.mubr.f32.gmra.mrb[0].mxu0 %v2663
        %v2733 = vpop.f32.mrb[0].mxu0
        %v2734 = vadd.f32 0.0, %v2733
        %v2735 = vpop.f32.mrb[0].mxu0
        %2736 = vdwg.mxu0
        %v2737 = vmul.f32 %v2734, 0.35355338
        %v2738 = vadd.f32 %v2737, %v2570
        %v2739 = vsel %vm1440, %v2738, -inf
        %2740 = vmax.xlane.f32.xlu0 %v2739
        %v2741 = vpop.xlane.xlu0 %2740
        %v2742 = vsub.f32 %v2738, %v2741
        %v2743 = vmul.f32 %v2742, 1.442695
        %v2744 = vpow.pop %v2743
        %v2745 = vsel %vm1440, %v2744, 0.0
        %2746 = vadd.xlane.f32.xlu0 %v2745
        %v2747 = vpop.xlane.xlu0 %2746
        %v2748 = vrcp.pop %v2747
        %v2749 = vmul.f32 %v2744, %v2748
        %2751 = vrot.lane.b32.xlu0 %v2486, 120
        %v2752 = vpop.permute.xlu0 %2751
        %v2755 = vsel %vm1440, %v2749, 0
        %2757 = vmatprep.subr.mxu0 0.0
        %2758 = vmatpush1.msra.mxu0 %v2752
        %2759 = vmatprep.subr.mxu0 0.0
        %2760 = vmatpush1.msra.mxu0 0.0
        %2761 = vmatprep.subr.mxu0 0.0
        %2762 = vmatpush1.msra.mxu0 0.0
        %2763 = vmatprep.subr.mxu0 0.0
        %2764 = vmatpush1.msra.mxu0 0.0
        %2765 = vmatprep.subr.mxu0 0.0
        %2766 = vmatpush1.msra.mxu0 0.0
        %2767 = vmatprep.subr.mxu0 0.0
        %2768 = vmatpush1.msra.mxu0 0.0
        %2769 = vmatprep.subr.mxu0 0.0
        %2770 = vmatpush1.msra.mxu0 0.0
        %2771 = vmatprep.subr.mxu0 0.0
        %2772 = vmatpush1.msra.mxu0 0.0
        %2773 = vmatprep.subr.mxu0 0.0
        %2774 = vmatpush1.msra.mxu0 0.0
        %2775 = vmatprep.subr.mxu0 0.0
        %2776 = vmatpush1.msra.mxu0 0.0
        %2777 = vmatprep.subr.mxu0 0.0
        %2778 = vmatpush1.msra.mxu0 0.0
        %2779 = vmatprep.subr.mxu0 0.0
        %2780 = vmatpush1.msra.mxu0 0.0
        %2781 = vmatprep.subr.mxu0 0.0
        %2782 = vmatpush1.msra.mxu0 0.0
        %2783 = vmatprep.subr.mxu0 0.0
        %2784 = vmatpush1.msra.mxu0 0.0
        %2785 = vmatprep.subr.mxu0 0.0
        %2786 = vmatpush1.msra.mxu0 0.0
        %2787 = vmatprep.subr.mxu0 0.0
        %2788 = vmatpush1.msra.mxu0 0.0
        %2789 = vmatprep.subr.mxu0 0.0
        %2790 = vmatpush1.msra.mxu0 0.0
        %2791 = vmatprep.subr.mxu0 0.0
        %2792 = vmatpush1.msra.mxu0 0.0
        %2793 = vmatprep.subr.mxu0 0.0
        %2794 = vmatpush1.msra.mxu0 0.0
        %2795 = vmatprep.subr.mxu0 0.0
        %2796 = vmatpush1.msra.mxu0 0.0
        %2797 = vmatprep.subr.mxu0 0.0
        %2798 = vmatpush1.msra.mxu0 0.0
        %2799 = vmatprep.subr.mxu0 0.0
        %2800 = vmatpush1.msra.mxu0 0.0
        %2801 = vmatprep.subr.mxu0 0.0
        %2802 = vmatpush1.msra.mxu0 0.0
        %2803 = vmatprep.subr.mxu0 0.0
        %2804 = vmatpush1.msra.mxu0 0.0
        %2805 = vmatprep.subr.mxu0 0.0
        %2806 = vmatpush1.msra.mxu0 0.0
        %2807 = vmatprep.subr.mxu0 0.0
        %2808 = vmatpush1.msra.mxu0 0.0
        %2809 = vmatprep.subr.mxu0 0.0
        %2810 = vmatpush1.msra.mxu0 0.0
        %2811 = vmatprep.subr.mxu0 0.0
        %2812 = vmatpush1.msra.mxu0 0.0
        %2813 = vmatprep.subr.mxu0 0.0
        %2814 = vmatpush1.msra.mxu0 0.0
        %2815 = vmatprep.subr.mxu0 0.0
        %2816 = vmatpush1.msra.mxu0 0.0
        %2817 = vmatprep.subr.mxu0 0.0
        %2818 = vmatpush1.msra.mxu0 0.0
        %2819 = vmatprep.subr.mxu0 0.0
        %2820 = vmatpush1.msra.mxu0 0.0
        %2821 = vmatprep.mubr.f32.mxu0 0.0
        %2822 = vmatmul.mubr.f32.gmra.mrb[0].mxu0 %v2755
        %v2823 = vpop.f32.mrb[0].mxu0
        %v2824 = vadd.f32 0.0, %v2823
        %v2825 = vpop.f32.mrb[0].mxu0
        %2826 = vdwg.mxu0
        %2828 = vrot.lane.b32.xlu0 %v2824, 8
        %v2829 = vpop.permute.xlu0 %2828
        %2831 = vst.msk [vmem:[#allocation2] sm:$0xff] %vm1776, %v2829
        %s2832 = scalar_lea.vmem %s1169, 8 [#allocation26]
        %2833 = vst.msk [vmem:[%s2832] sm:$0xff] %vm1440, %v2749
        %2834 = vrot.lane.b32.xlu0 %v2321, 112
        %v2835 = vpop.permute.xlu0 %2834
        %2836 = vrot.lane.b32.xlu0 %v2405, 112
        %v2837 = vpop.permute.xlu0 %2836
        %v2838 = vsel %vm1440, %v2835, 0
        %v2840 = vsel %vm1440, %v2837, 0
        %2842 = vmatprep.subr.mxu0 0.0
        %2843 = vmatpush1.xpose.msra.mxu0 %v2840
        %2844 = vmatprep.subr.mxu0 0.0
        %2845 = vmatpush1.xpose.msra.mxu0 0.0
        %2846 = vmatprep.subr.mxu0 0.0
        %2847 = vmatpush1.xpose.msra.mxu0 0.0
        %2848 = vmatprep.subr.mxu0 0.0
        %2849 = vmatpush1.xpose.msra.mxu0 0.0
        %2850 = vmatprep.subr.mxu0 0.0
        %2851 = vmatpush1.xpose.msra.mxu0 0.0
        %2852 = vmatprep.subr.mxu0 0.0
        %2853 = vmatpush1.xpose.msra.mxu0 0.0
        %2854 = vmatprep.subr.mxu0 0.0
        %2855 = vmatpush1.xpose.msra.mxu0 0.0
        %2856 = vmatprep.subr.mxu0 0.0
        %2857 = vmatpush1.xpose.msra.mxu0 0.0
        %2858 = vmatprep.subr.mxu0 0.0
        %2859 = vmatpush1.xpose.msra.mxu0 0.0
        %2860 = vmatprep.subr.mxu0 0.0
        %2861 = vmatpush1.xpose.msra.mxu0 0.0
        %2862 = vmatprep.subr.mxu0 0.0
        %2863 = vmatpush1.xpose.msra.mxu0 0.0
        %2864 = vmatprep.subr.mxu0 0.0
        %2865 = vmatpush1.xpose.msra.mxu0 0.0
        %2866 = vmatprep.subr.mxu0 0.0
        %2867 = vmatpush1.xpose.msra.mxu0 0.0
        %2868 = vmatprep.subr.mxu0 0.0
        %2869 = vmatpush1.xpose.msra.mxu0 0.0
        %2870 = vmatprep.subr.mxu0 0.0
        %2871 = vmatpush1.xpose.msra.mxu0 0.0
        %2872 = vmatprep.subr.mxu0 0.0
        %2873 = vmatpush1.xpose.msra.mxu0 0.0
        %2874 = vmatprep.subr.mxu0 0.0
        %2875 = vmatpush1.xpose.msra.mxu0 0.0
        %2876 = vmatprep.subr.mxu0 0.0
        %2877 = vmatpush1.xpose.msra.mxu0 0.0
        %2878 = vmatprep.subr.mxu0 0.0
        %2879 = vmatpush1.xpose.msra.mxu0 0.0
        %2880 = vmatprep.subr.mxu0 0.0
        %2881 = vmatpush1.xpose.msra.mxu0 0.0
        %2882 = vmatprep.subr.mxu0 0.0
        %2883 = vmatpush1.xpose.msra.mxu0 0.0
        %2884 = vmatprep.subr.mxu0 0.0
        %2885 = vmatpush1.xpose.msra.mxu0 0.0
        %2886 = vmatprep.subr.mxu0 0.0
        %2887 = vmatpush1.xpose.msra.mxu0 0.0
        %2888 = vmatprep.subr.mxu0 0.0
        %2889 = vmatpush1.xpose.msra.mxu0 0.0
        %2890 = vmatprep.subr.mxu0 0.0
        %2891 = vmatpush1.xpose.msra.mxu0 0.0
        %2892 = vmatprep.subr.mxu0 0.0
        %2893 = vmatpush1.xpose.msra.mxu0 0.0
        %2894 = vmatprep.subr.mxu0 0.0
        %2895 = vmatpush1.xpose.msra.mxu0 0.0
        %2896 = vmatprep.subr.mxu0 0.0
        %2897 = vmatpush1.xpose.msra.mxu0 0.0
        %2898 = vmatprep.subr.mxu0 0.0
        %2899 = vmatpush1.xpose.msra.mxu0 0.0
        %2900 = vmatprep.subr.mxu0 0.0
        %2901 = vmatpush1.xpose.msra.mxu0 0.0
        %2902 = vmatprep.subr.mxu0 0.0
        %2903 = vmatpush1.xpose.msra.mxu0 0.0
        %2904 = vmatprep.subr.mxu0 0.0
        %2905 = vmatpush1.xpose.msra.mxu0 0.0
        %2906 = vmatprep.mubr.f32.mxu0 0.0
        %2907 = vmatmul.mubr.f32.gmra.mrb[0].mxu0 %v2838
        %v2908 = vpop.f32.mrb[0].mxu0
        %v2909 = vadd.f32 0.0, %v2908
        %v2910 = vpop.f32.mrb[0].mxu0
        %2911 = vdwg.mxu0
        %v2912 = vmul.f32 %v2909, 0.35355338
        %v2913 = vadd.f32 %v2912, %v2570
        %v2914 = vsel %vm1440, %v2913, -inf
        %2915 = vmax.xlane.f32.xlu0 %v2914
        %v2916 = vpop.xlane.xlu0 %2915
        %v2917 = vsub.f32 %v2913, %v2916
        %v2918 = vmul.f32 %v2917, 1.442695
        %v2919 = vpow.pop %v2918
        %v2920 = vsel %vm1440, %v2919, 0.0
        %2921 = vadd.xlane.f32.xlu0 %v2920
        %v2922 = vpop.xlane.xlu0 %2921
        %v2923 = vrcp.pop %v2922
        %v2924 = vmul.f32 %v2919, %v2923
        %2925 = vrot.lane.b32.xlu0 %v2486, 112
        %v2926 = vpop.permute.xlu0 %2925
        %v2929 = vsel %vm1440, %v2924, 0
        %2931 = vmatprep.subr.mxu0 0.0
        %2932 = vmatpush1.msra.mxu0 %v2926
        %2933 = vmatprep.subr.mxu0 0.0
        %2934 = vmatpush1.msra.mxu0 0.0
        %2935 = vmatprep.subr.mxu0 0.0
        %2936 = vmatpush1.msra.mxu0 0.0
        %2937 = vmatprep.subr.mxu0 0.0
        %2938 = vmatpush1.msra.mxu0 0.0
        %2939 = vmatprep.subr.mxu0 0.0
        %2940 = vmatpush1.msra.mxu0 0.0
        %2941 = vmatprep.subr.mxu0 0.0
        %2942 = vmatpush1.msra.mxu0 0.0
        %2943 = vmatprep.subr.mxu0 0.0
        %2944 = vmatpush1.msra.mxu0 0.0
        %2945 = vmatprep.subr.mxu0 0.0
        %2946 = vmatpush1.msra.mxu0 0.0
        %2947 = vmatprep.subr.mxu0 0.0
        %2948 = vmatpush1.msra.mxu0 0.0
        %2949 = vmatprep.subr.mxu0 0.0
        %2950 = vmatpush1.msra.mxu0 0.0
        %2951 = vmatprep.subr.mxu0 0.0
        %2952 = vmatpush1.msra.mxu0 0.0
        %2953 = vmatprep.subr.mxu0 0.0
        %2954 = vmatpush1.msra.mxu0 0.0
        %2955 = vmatprep.subr.mxu0 0.0
        %2956 = vmatpush1.msra.mxu0 0.0
        %2957 = vmatprep.subr.mxu0 0.0
        %2958 = vmatpush1.msra.mxu0 0.0
        %2959 = vmatprep.subr.mxu0 0.0
        %2960 = vmatpush1.msra.mxu0 0.0
        %2961 = vmatprep.subr.mxu0 0.0
        %2962 = vmatpush1.msra.mxu0 0.0
        %2963 = vmatprep.subr.mxu0 0.0
        %2964 = vmatpush1.msra.mxu0 0.0
        %2965 = vmatprep.subr.mxu0 0.0
        %2966 = vmatpush1.msra.mxu0 0.0
        %2967 = vmatprep.subr.mxu0 0.0
        %2968 = vmatpush1.msra.mxu0 0.0
        %2969 = vmatprep.subr.mxu0 0.0
        %2970 = vmatpush1.msra.mxu0 0.0
        %2971 = vmatprep.subr.mxu0 0.0
        %2972 = vmatpush1.msra.mxu0 0.0
        %2973 = vmatprep.subr.mxu0 0.0
        %2974 = vmatpush1.msra.mxu0 0.0
        %2975 = vmatprep.subr.mxu0 0.0
        %2976 = vmatpush1.msra.mxu0 0.0
        %2977 = vmatprep.subr.mxu0 0.0
        %2978 = vmatpush1.msra.mxu0 0.0
        %2979 = vmatprep.subr.mxu0 0.0
        %2980 = vmatpush1.msra.mxu0 0.0
        %2981 = vmatprep.subr.mxu0 0.0
        %2982 = vmatpush1.msra.mxu0 0.0
        %2983 = vmatprep.subr.mxu0 0.0
        %2984 = vmatpush1.msra.mxu0 0.0
        %2985 = vmatprep.subr.mxu0 0.0
        %2986 = vmatpush1.msra.mxu0 0.0
        %2987 = vmatprep.subr.mxu0 0.0
        %2988 = vmatpush1.msra.mxu0 0.0
        %2989 = vmatprep.subr.mxu0 0.0
        %2990 = vmatpush1.msra.mxu0 0.0
        %2991 = vmatprep.subr.mxu0 0.0
        %2992 = vmatpush1.msra.mxu0 0.0
        %2993 = vmatprep.subr.mxu0 0.0
        %2994 = vmatpush1.msra.mxu0 0.0
        %2995 = vmatprep.mubr.f32.mxu0 0.0
        %2996 = vmatmul.mubr.f32.gmra.mrb[0].mxu0 %v2929
        %v2997 = vpop.f32.mrb[0].mxu0
        %v2998 = vadd.f32 0.0, %v2997
        %v2999 = vpop.f32.mrb[0].mxu0
        %3000 = vdwg.mxu0
        %3002 = vrot.lane.b32.xlu0 %v2998, 16
        %v3003 = vpop.permute.xlu0 %3002
        %3005 = vst.msk [vmem:[#allocation2] sm:$0xff] %vm1949, %v3003
        %s3006 = scalar_lea.vmem %s1169, 16 [#allocation26]
        %3007 = vst.msk [vmem:[%s3006] sm:$0xff] %vm1440, %v2924
        %3008 = vrot.lane.b32.xlu0 %v2321, 104
        %v3009 = vpop.permute.xlu0 %3008
        %3010 = vrot.lane.b32.xlu0 %v2405, 104
        %v3011 = vpop.permute.xlu0 %3010
        %v3012 = vsel %vm1440, %v3009, 0
        %v3014 = vsel %vm1440, %v3011, 0
        %3016 = vmatprep.subr.mxu0 0.0
        %3017 = vmatpush1.xpose.msra.mxu0 %v3014
        %3018 = vmatprep.subr.mxu0 0.0
        %3019 = vmatpush1.xpose.msra.mxu0 0.0
        %3020 = vmatprep.subr.mxu0 0.0
        %3021 = vmatpush1.xpose.msra.mxu0 0.0
        %3022 = vmatprep.subr.mxu0 0.0
        %3023 = vmatpush1.xpose.msra.mxu0 0.0
        %3024 = vmatprep.subr.mxu0 0.0
        %3025 = vmatpush1.xpose.msra.mxu0 0.0
        %3026 = vmatprep.subr.mxu0 0.0
        %3027 = vmatpush1.xpose.msra.mxu0 0.0
        %3028 = vmatprep.subr.mxu0 0.0
        %3029 = vmatpush1.xpose.msra.mxu0 0.0
        %3030 = vmatprep.subr.mxu0 0.0
        %3031 = vmatpush1.xpose.msra.mxu0 0.0
        %3032 = vmatprep.subr.mxu0 0.0
        %3033 = vmatpush1.xpose.msra.mxu0 0.0
        %3034 = vmatprep.subr.mxu0 0.0
        %3035 = vmatpush1.xpose.msra.mxu0 0.0
        %3036 = vmatprep.subr.mxu0 0.0
        %3037 = vmatpush1.xpose.msra.mxu0 0.0
        %3038 = vmatprep.subr.mxu0 0.0
        %3039 = vmatpush1.xpose.msra.mxu0 0.0
        %3040 = vmatprep.subr.mxu0 0.0
        %3041 = vmatpush1.xpose.msra.mxu0 0.0
        %3042 = vmatprep.subr.mxu0 0.0
        %3043 = vmatpush1.xpose.msra.mxu0 0.0
        %3044 = vmatprep.subr.mxu0 0.0
        %3045 = vmatpush1.xpose.msra.mxu0 0.0
        %3046 = vmatprep.subr.mxu0 0.0
        %3047 = vmatpush1.xpose.msra.mxu0 0.0
        %3048 = vmatprep.subr.mxu0 0.0
        %3049 = vmatpush1.xpose.msra.mxu0 0.0
        %3050 = vmatprep.subr.mxu0 0.0
        %3051 = vmatpush1.xpose.msra.mxu0 0.0
        %3052 = vmatprep.subr.mxu0 0.0
        %3053 = vmatpush1.xpose.msra.mxu0 0.0
        %3054 = vmatprep.subr.mxu0 0.0
        %3055 = vmatpush1.xpose.msra.mxu0 0.0
        %3056 = vmatprep.subr.mxu0 0.0
        %3057 = vmatpush1.xpose.msra.mxu0 0.0
        %3058 = vmatprep.subr.mxu0 0.0
        %3059 = vmatpush1.xpose.msra.mxu0 0.0
        %3060 = vmatprep.subr.mxu0 0.0
        %3061 = vmatpush1.xpose.msra.mxu0 0.0
        %3062 = vmatprep.subr.mxu0 0.0
        %3063 = vmatpush1.xpose.msra.mxu0 0.0
        %3064 = vmatprep.subr.mxu0 0.0
        %3065 = vmatpush1.xpose.msra.mxu0 0.0
        %3066 = vmatprep.subr.mxu0 0.0
        %3067 = vmatpush1.xpose.msra.mxu0 0.0
        %3068 = vmatprep.subr.mxu0 0.0
        %3069 = vmatpush1.xpose.msra.mxu0 0.0
        %3070 = vmatprep.subr.mxu0 0.0
        %3071 = vmatpush1.xpose.msra.mxu0 0.0
        %3072 = vmatprep.subr.mxu0 0.0
        %3073 = vmatpush1.xpose.msra.mxu0 0.0
        %3074 = vmatprep.subr.mxu0 0.0
        %3075 = vmatpush1.xpose.msra.mxu0 0.0
        %3076 = vmatprep.subr.mxu0 0.0
        %3077 = vmatpush1.xpose.msra.mxu0 0.0
        %3078 = vmatprep.subr.mxu0 0.0
        %3079 = vmatpush1.xpose.msra.mxu0 0.0
        %3080 = vmatprep.mubr.f32.mxu0 0.0
        %3081 = vmatmul.mubr.f32.gmra.mrb[0].mxu0 %v3012
        %v3082 = vpop.f32.mrb[0].mxu0
        %v3083 = vadd.f32 0.0, %v3082
        %v3084 = vpop.f32.mrb[0].mxu0
        %3085 = vdwg.mxu0
        %v3086 = vmul.f32 %v3083, 0.35355338
        %v3087 = vadd.f32 %v3086, %v2570
        %v3088 = vsel %vm1440, %v3087, -inf
        %3089 = vmax.xlane.f32.xlu0 %v3088
        %v3090 = vpop.xlane.xlu0 %3089
        %v3091 = vsub.f32 %v3087, %v3090
        %v3092 = vmul.f32 %v3091, 1.442695
        %v3093 = vpow.pop %v3092
        %v3094 = vsel %vm1440, %v3093, 0.0
        %3095 = vadd.xlane.f32.xlu0 %v3094
        %v3096 = vpop.xlane.xlu0 %3095
        %v3097 = vrcp.pop %v3096
        %v3098 = vmul.f32 %v3093, %v3097
        %3099 = vrot.lane.b32.xlu0 %v2486, 104
        %v3100 = vpop.permute.xlu0 %3099
        %v3103 = vsel %vm1440, %v3098, 0
        %3105 = vmatprep.subr.mxu0 0.0
        %3106 = vmatpush1.msra.mxu0 %v3100
        %3107 = vmatprep.subr.mxu0 0.0
        %3108 = vmatpush1.msra.mxu0 0.0
        %3109 = vmatprep.subr.mxu0 0.0
        %3110 = vmatpush1.msra.mxu0 0.0
        %3111 = vmatprep.subr.mxu0 0.0
        %3112 = vmatpush1.msra.mxu0 0.0
        %3113 = vmatprep.subr.mxu0 0.0
        %3114 = vmatpush1.msra.mxu0 0.0
        %3115 = vmatprep.subr.mxu0 0.0
        %3116 = vmatpush1.msra.mxu0 0.0
        %3117 = vmatprep.subr.mxu0 0.0
        %3118 = vmatpush1.msra.mxu0 0.0
        %3119 = vmatprep.subr.mxu0 0.0
        %3120 = vmatpush1.msra.mxu0 0.0
        %3121 = vmatprep.subr.mxu0 0.0
        %3122 = vmatpush1.msra.mxu0 0.0
        %3123 = vmatprep.subr.mxu0 0.0
        %3124 = vmatpush1.msra.mxu0 0.0
        %3125 = vmatprep.subr.mxu0 0.0
        %3126 = vmatpush1.msra.mxu0 0.0
        %3127 = vmatprep.subr.mxu0 0.0
        %3128 = vmatpush1.msra.mxu0 0.0
        %3129 = vmatprep.subr.mxu0 0.0
        %3130 = vmatpush1.msra.mxu0 0.0
        %3131 = vmatprep.subr.mxu0 0.0
        %3132 = vmatpush1.msra.mxu0 0.0
        %3133 = vmatprep.subr.mxu0 0.0
        %3134 = vmatpush1.msra.mxu0 0.0
        %3135 = vmatprep.subr.mxu0 0.0
        %3136 = vmatpush1.msra.mxu0 0.0
        %3137 = vmatprep.subr.mxu0 0.0
        %3138 = vmatpush1.msra.mxu0 0.0
        %3139 = vmatprep.subr.mxu0 0.0
        %3140 = vmatpush1.msra.mxu0 0.0
        %3141 = vmatprep.subr.mxu0 0.0
        %3142 = vmatpush1.msra.mxu0 0.0
        %3143 = vmatprep.subr.mxu0 0.0
        %3144 = vmatpush1.msra.mxu0 0.0
        %3145 = vmatprep.subr.mxu0 0.0
        %3146 = vmatpush1.msra.mxu0 0.0
        %3147 = vmatprep.subr.mxu0 0.0
        %3148 = vmatpush1.msra.mxu0 0.0
        %3149 = vmatprep.subr.mxu0 0.0
        %3150 = vmatpush1.msra.mxu0 0.0
        %3151 = vmatprep.subr.mxu0 0.0
        %3152 = vmatpush1.msra.mxu0 0.0
        %3153 = vmatprep.subr.mxu0 0.0
        %3154 = vmatpush1.msra.mxu0 0.0
        %3155 = vmatprep.subr.mxu0 0.0
        %3156 = vmatpush1.msra.mxu0 0.0
        %3157 = vmatprep.subr.mxu0 0.0
        %3158 = vmatpush1.msra.mxu0 0.0
        %3159 = vmatprep.subr.mxu0 0.0
        %3160 = vmatpush1.msra.mxu0 0.0
        %3161 = vmatprep.subr.mxu0 0.0
        %3162 = vmatpush1.msra.mxu0 0.0
        %3163 = vmatprep.subr.mxu0 0.0
        %3164 = vmatpush1.msra.mxu0 0.0
        %3165 = vmatprep.subr.mxu0 0.0
        %3166 = vmatpush1.msra.mxu0 0.0
        %3167 = vmatprep.subr.mxu0 0.0
        %3168 = vmatpush1.msra.mxu0 0.0
        %3169 = vmatprep.mubr.f32.mxu0 0.0
        %3170 = vmatmul.mubr.f32.gmra.mrb[0].mxu0 %v3103
        %v3171 = vpop.f32.mrb[0].mxu0
        %v3172 = vadd.f32 0.0, %v3171
        %v3173 = vpop.f32.mrb[0].mxu0
        %3174 = vdwg.mxu0
        %3176 = vrot.lane.b32.xlu0 %v3172, 24
        %v3177 = vpop.permute.xlu0 %3176
        %3179 = vst.msk [vmem:[#allocation2] sm:$0xff] %vm2122, %v3177
        %s3180 = scalar_lea.vmem %s1169, 24 [#allocation26]
        %3181 = vst.msk [vmem:[%s3180] sm:$0xff] %vm1440, %v3098
        %v3182 = vld [vmem:[#allocation2] sm:$0xff]
        %v3183 = vld [vmem:[%s37] sm:$0xff]
        %v3184 = vld [vmem:[%s37 + $0x8] sm:$0xff]
        %v3185 = vld [vmem:[%s37 + $0x10] sm:$0xff]
        %v3186 = vld [vmem:[%s37 + $0x18] sm:$0xff]
        %v3187 = vld [vmem:[#allocation12] sm:$0x1]
        %v3189 = vlaneseq
        %v3190 = vshrl.u32 %v3189, 7
        %v3191 = vsub.s32 0, %v3190
        %v3192 = vrot.slane %v3187, %v3191
        %v3195 = vsel %vm1204, %v3182, 0
        %3197 = vmatprep.subr.mxu0 0.0
        %3198 = vmatpush1.msra.mxu0 %v3183
        %3199 = vmatprep.subr.mxu0 0.0
        %3200 = vmatpush1.msra.mxu0 %v3184
        %3201 = vmatprep.subr.mxu0 0.0
        %3202 = vmatpush1.msra.mxu0 %v3185
        %3203 = vmatprep.subr.mxu0 0.0
        %3204 = vmatpush1.msra.mxu0 %v3186
        %3205 = vmatprep.subr.mxu0 0.0
        %3206 = vmatpush1.msra.mxu0 0.0
        %3207 = vmatprep.subr.mxu0 0.0
        %3208 = vmatpush1.msra.mxu0 0.0
        %3209 = vmatprep.subr.mxu0 0.0
        %3210 = vmatpush1.msra.mxu0 0.0
        %3211 = vmatprep.subr.mxu0 0.0
        %3212 = vmatpush1.msra.mxu0 0.0
        %3213 = vmatprep.subr.mxu0 0.0
        %3214 = vmatpush1.msra.mxu0 0.0
        %3215 = vmatprep.subr.mxu0 0.0
        %3216 = vmatpush1.msra.mxu0 0.0
        %3217 = vmatprep.subr.mxu0 0.0
        %3218 = vmatpush1.msra.mxu0 0.0
        %3219 = vmatprep.subr.mxu0 0.0
        %3220 = vmatpush1.msra.mxu0 0.0
        %3221 = vmatprep.subr.mxu0 0.0
        %3222 = vmatpush1.msra.mxu0 0.0
        %3223 = vmatprep.subr.mxu0 0.0
        %3224 = vmatpush1.msra.mxu0 0.0
        %3225 = vmatprep.subr.mxu0 0.0
        %3226 = vmatpush1.msra.mxu0 0.0
        %3227 = vmatprep.subr.mxu0 0.0
        %3228 = vmatpush1.msra.mxu0 0.0
        %3229 = vmatprep.subr.mxu0 0.0
        %3230 = vmatpush1.msra.mxu0 0.0
        %3231 = vmatprep.subr.mxu0 0.0
        %3232 = vmatpush1.msra.mxu0 0.0
        %3233 = vmatprep.subr.mxu0 0.0
        %3234 = vmatpush1.msra.mxu0 0.0
        %3235 = vmatprep.subr.mxu0 0.0
        %3236 = vmatpush1.msra.mxu0 0.0
        %3237 = vmatprep.subr.mxu0 0.0
        %3238 = vmatpush1.msra.mxu0 0.0
        %3239 = vmatprep.subr.mxu0 0.0
        %3240 = vmatpush1.msra.mxu0 0.0
        %3241 = vmatprep.subr.mxu0 0.0
        %3242 = vmatpush1.msra.mxu0 0.0
        %3243 = vmatprep.subr.mxu0 0.0
        %3244 = vmatpush1.msra.mxu0 0.0
        %3245 = vmatprep.subr.mxu0 0.0
        %3246 = vmatpush1.msra.mxu0 0.0
        %3247 = vmatprep.subr.mxu0 0.0
        %3248 = vmatpush1.msra.mxu0 0.0
        %3249 = vmatprep.subr.mxu0 0.0
        %3250 = vmatpush1.msra.mxu0 0.0
        %3251 = vmatprep.subr.mxu0 0.0
        %3252 = vmatpush1.msra.mxu0 0.0
        %3253 = vmatprep.subr.mxu0 0.0
        %3254 = vmatpush1.msra.mxu0 0.0
        %3255 = vmatprep.subr.mxu0 0.0
        %3256 = vmatpush1.msra.mxu0 0.0
        %3257 = vmatprep.subr.mxu0 0.0
        %3258 = vmatpush1.msra.mxu0 0.0
        %3259 = vmatprep.subr.mxu0 0.0
        %3260 = vmatpush1.msra.mxu0 0.0
        %3261 = vmatprep.mubr.f32.mxu0 0.0
        %3262 = vmatmul.mubr.f32.gmra.mrb[0].mxu0 %v3195
        %v3263 = vpop.f32.mrb[0].mxu0
        %v3264 = vadd.f32 %v3192, %v3263
        %v3265 = vpop.f32.mrb[0].mxu0
        %3266 = vdwg.mxu0
        %v3267 = vadd.f32 %v2239, %v3264
        %v3268 = vsel %vm1204, %v3267, 0.0
        %3269 = vadd.xlane.f32.xlu0 %v3268
        %v3270 = vpop.xlane.xlu0 %3269
        %v3271 = vmul.f32 %v3270, %v2213
        %v3272 = vsub.f32 %v3267, %v3271
        %v3273 = vmul.f32 %v3272, %v3272
        %v3274 = vsel %vm1204, %v3273, 0.0
        %3275 = vadd.xlane.f32.xlu0 %v3274
        %v3276 = vpop.xlane.xlu0 %3275
        %v3277 = vmul.f32 %v3276, %v2213
        %v3278 = vadd.f32 %v3277, 1e-05
        %v3279 = vrsqrt.pop %v3278
        %v3280 = vmul.f32 %v3272, %v3279
        %v3281 = vld [vmem:[#allocation20] sm:$0x1]
        %v3283 = vlaneseq
        %v3284 = vshrl.u32 %v3283, 7
        %v3285 = vsub.s32 0, %v3284
        %v3286 = vrot.slane %v3281, %v3285
        %v3288 = vmul.f32 %v3280, %v3286
        %v3289 = vld [vmem:[#allocation21] sm:$0x1]
        %v3291 = vlaneseq
        %v3292 = vshrl.u32 %v3291, 7
        %v3293 = vsub.s32 0, %v3292
        %v3294 = vrot.slane %v3289, %v3293
        %v3296 = vadd.f32 %v3288, %v3294
        %v3297 = vld [vmem:[%s41] sm:$0xff]
        %v3298 = vld [vmem:[%s41 + $0x8] sm:$0xff]
        %v3299 = vld [vmem:[%s41 + $0x10] sm:$0xff]
        %v3300 = vld [vmem:[%s41 + $0x18] sm:$0xff]
        %v3301 = vld [vmem:[#allocation14] sm:$0x1]
        %v3303 = vlaneseq
        %v3304 = vshrl.u32 %v3303, 7
        %v3305 = vsub.s32 0, %v3304
        %v3306 = vrot.slane %v3301, %v3305
        %v3309 = vsel %vm1204, %v3296, 0
        %3311 = vmatprep.subr.mxu0 0.0
        %3312 = vmatpush1.msra.mxu0 %v3297
        %3313 = vmatprep.subr.mxu0 0.0
        %3314 = vmatpush1.msra.mxu0 %v3298
        %3315 = vmatprep.subr.mxu0 0.0
        %3316 = vmatpush1.msra.mxu0 %v3299
        %3317 = vmatprep.subr.mxu0 0.0
        %3318 = vmatpush1.msra.mxu0 %v3300
        %3319 = vmatprep.subr.mxu0 0.0
        %3320 = vmatpush1.msra.mxu0 0.0
        %3321 = vmatprep.subr.mxu0 0.0
        %3322 = vmatpush1.msra.mxu0 0.0
        %3323 = vmatprep.subr.mxu0 0.0
        %3324 = vmatpush1.msra.mxu0 0.0
        %3325 = vmatprep.subr.mxu0 0.0
        %3326 = vmatpush1.msra.mxu0 0.0
        %3327 = vmatprep.subr.mxu0 0.0
        %3328 = vmatpush1.msra.mxu0 0.0
        %3329 = vmatprep.subr.mxu0 0.0
        %3330 = vmatpush1.msra.mxu0 0.0
        %3331 = vmatprep.subr.mxu0 0.0
        %3332 = vmatpush1.msra.mxu0 0.0
        %3333 = vmatprep.subr.mxu0 0.0
        %3334 = vmatpush1.msra.mxu0 0.0
        %3335 = vmatprep.subr.mxu0 0.0
        %3336 = vmatpush1.msra.mxu0 0.0
        %3337 = vmatprep.subr.mxu0 0.0
        %3338 = vmatpush1.msra.mxu0 0.0
        %3339 = vmatprep.subr.mxu0 0.0
        %3340 = vmatpush1.msra.mxu0 0.0
        %3341 = vmatprep.subr.mxu0 0.0
        %3342 = vmatpush1.msra.mxu0 0.0
        %3343 = vmatprep.subr.mxu0 0.0
        %3344 = vmatpush1.msra.mxu0 0.0
        %3345 = vmatprep.subr.mxu0 0.0
        %3346 = vmatpush1.msra.mxu0 0.0
        %3347 = vmatprep.subr.mxu0 0.0
        %3348 = vmatpush1.msra.mxu0 0.0
        %3349 = vmatprep.subr.mxu0 0.0
        %3350 = vmatpush1.msra.mxu0 0.0
        %3351 = vmatprep.subr.mxu0 0.0
        %3352 = vmatpush1.msra.mxu0 0.0
        %3353 = vmatprep.subr.mxu0 0.0
        %3354 = vmatpush1.msra.mxu0 0.0
        %3355 = vmatprep.subr.mxu0 0.0
        %3356 = vmatpush1.msra.mxu0 0.0
        %3357 = vmatprep.subr.mxu0 0.0
        %3358 = vmatpush1.msra.mxu0 0.0
        %3359 = vmatprep.subr.mxu0 0.0
        %3360 = vmatpush1.msra.mxu0 0.0
        %3361 = vmatprep.subr.mxu0 0.0
        %3362 = vmatpush1.msra.mxu0 0.0
        %3363 = vmatprep.subr.mxu0 0.0
        %3364 = vmatpush1.msra.mxu0 0.0
        %3365 = vmatprep.subr.mxu0 0.0
        %3366 = vmatpush1.msra.mxu0 0.0
        %3367 = vmatprep.subr.mxu0 0.0
        %3368 = vmatpush1.msra.mxu0 0.0
        %3369 = vmatprep.subr.mxu0 0.0
        %3370 = vmatpush1.msra.mxu0 0.0
        %3371 = vmatprep.subr.mxu0 0.0
        %3372 = vmatpush1.msra.mxu0 0.0
        %3373 = vmatprep.subr.mxu0 0.0
        %3374 = vmatpush1.msra.mxu0 0.0
        %3375 = vmatprep.mubr.f32.mxu0 0.0
        %3376 = vmatmul.mubr.f32.gmra.mrb[0].mxu0 %v3309
        %v3377 = vpop.f32.mrb[0].mxu0
        %v3378 = vadd.f32 %v3306, %v3377
        %v3379 = vpop.f32.mrb[0].mxu0
        %3380 = vdwg.mxu0
        %v3381 = vmax.f32 %v3378, 0.0
        %v3382 = vld [vmem:[%s45] sm:$0xff]
        %v3383 = vld [vmem:[%s45 + $0x8] sm:$0xff]
        %v3384 = vld [vmem:[%s45 + $0x10] sm:$0xff]
        %v3385 = vld [vmem:[%s45 + $0x18] sm:$0xff]
        %v3386 = vld [vmem:[%s45 + $0x20] sm:$0xff]
        %v3387 = vld [vmem:[%s45 + $0x28] sm:$0xff]
        %v3388 = vld [vmem:[%s45 + $0x30] sm:$0xff]
        %v3389 = vld [vmem:[%s45 + $0x38] sm:$0xff]
        %v3390 = vld [vmem:[#allocation15] sm:$0x1]
        %v3392 = vlaneseq
        %v3393 = vshrl.u32 %v3392, 7
        %v3394 = vsub.s32 0, %v3393
        %v3395 = vrot.slane %v3390, %v3394
        %vm3397 = vcmask 523264
        %v3399 = vsel %vm3397, %v3381, 0
        %3401 = vmatprep.subr.mxu0 0.0
        %3402 = vmatpush1.msra.mxu0 %v3382
        %3403 = vmatprep.subr.mxu0 0.0
        %3404 = vmatpush1.msra.mxu0 %v3383
        %3405 = vmatprep.subr.mxu0 0.0
        %3406 = vmatpush1.msra.mxu0 %v3384
        %3407 = vmatprep.subr.mxu0 0.0
        %3408 = vmatpush1.msra.mxu0 %v3385
        %3409 = vmatprep.subr.mxu0 0.0
        %3410 = vmatpush1.msra.mxu0 %v3386
        %3411 = vmatprep.subr.mxu0 0.0
        %3412 = vmatpush1.msra.mxu0 %v3387
        %3413 = vmatprep.subr.mxu0 0.0
        %3414 = vmatpush1.msra.mxu0 %v3388
        %3415 = vmatprep.subr.mxu0 0.0
        %3416 = vmatpush1.msra.mxu0 %v3389
        %3417 = vmatprep.subr.mxu0 0.0
        %3418 = vmatpush1.msra.mxu0 0.0
        %3419 = vmatprep.subr.mxu0 0.0
        %3420 = vmatpush1.msra.mxu0 0.0
        %3421 = vmatprep.subr.mxu0 0.0
        %3422 = vmatpush1.msra.mxu0 0.0
        %3423 = vmatprep.subr.mxu0 0.0
        %3424 = vmatpush1.msra.mxu0 0.0
        %3425 = vmatprep.subr.mxu0 0.0
        %3426 = vmatpush1.msra.mxu0 0.0
        %3427 = vmatprep.subr.mxu0 0.0
        %3428 = vmatpush1.msra.mxu0 0.0
        %3429 = vmatprep.subr.mxu0 0.0
        %3430 = vmatpush1.msra.mxu0 0.0
        %3431 = vmatprep.subr.mxu0 0.0
        %3432 = vmatpush1.msra.mxu0 0.0
        %3433 = vmatprep.subr.mxu0 0.0
        %3434 = vmatpush1.msra.mxu0 0.0
        %3435 = vmatprep.subr.mxu0 0.0
        %3436 = vmatpush1.msra.mxu0 0.0
        %3437 = vmatprep.subr.mxu0 0.0
        %3438 = vmatpush1.msra.mxu0 0.0
        %3439 = vmatprep.subr.mxu0 0.0
        %3440 = vmatpush1.msra.mxu0 0.0
        %3441 = vmatprep.subr.mxu0 0.0
        %3442 = vmatpush1.msra.mxu0 0.0
        %3443 = vmatprep.subr.mxu0 0.0
        %3444 = vmatpush1.msra.mxu0 0.0
        %3445 = vmatprep.subr.mxu0 0.0
        %3446 = vmatpush1.msra.mxu0 0.0
        %3447 = vmatprep.subr.mxu0 0.0
        %3448 = vmatpush1.msra.mxu0 0.0
        %3449 = vmatprep.subr.mxu0 0.0
        %3450 = vmatpush1.msra.mxu0 0.0
        %3451 = vmatprep.subr.mxu0 0.0
        %3452 = vmatpush1.msra.mxu0 0.0
        %3453 = vmatprep.subr.mxu0 0.0
        %3454 = vmatpush1.msra.mxu0 0.0
        %3455 = vmatprep.subr.mxu0 0.0
        %3456 = vmatpush1.msra.mxu0 0.0
        %3457 = vmatprep.subr.mxu0 0.0
        %3458 = vmatpush1.msra.mxu0 0.0
        %3459 = vmatprep.subr.mxu0 0.0
        %3460 = vmatpush1.msra.mxu0 0.0
        %3461 = vmatprep.subr.mxu0 0.0
        %3462 = vmatpush1.msra.mxu0 0.0
        %3463 = vmatprep.subr.mxu0 0.0
        %3464 = vmatpush1.msra.mxu0 0.0
        %3465 = vmatprep.mubr.f32.mxu0 0.0
        %3466 = vmatmul.mubr.f32.gmra.mrb[0].mxu0 %v3399
        %v3467 = vpop.f32.mrb[0].mxu0
        %v3468 = vadd.f32 %v3395, %v3467
        %v3469 = vpop.f32.mrb[0].mxu0
        %3470 = vdwg.mxu0
        %v3471 = vadd.f32 %v3296, %v3468
        %v3472 = vsel %vm1204, %v3471, 0.0
        %3473 = vadd.xlane.f32.xlu0 %v3472
        %v3474 = vpop.xlane.xlu0 %3473
        %v3475 = vmul.f32 %v3474, %v2213
        %v3476 = vsub.f32 %v3471, %v3475
        %v3477 = vmul.f32 %v3476, %v3476
        %v3478 = vsel %vm1204, %v3477, 0.0
        %3479 = vadd.xlane.f32.xlu0 %v3478
        %v3480 = vpop.xlane.xlu0 %3479
        %v3481 = vmul.f32 %v3480, %v2213
        %v3482 = vadd.f32 %v3481, 1e-05
        %v3483 = vrsqrt.pop %v3482
        %v3484 = vmul.f32 %v3476, %v3483
        %v3485 = vld [vmem:[#allocation23] sm:$0x1]
        %v3487 = vlaneseq
        %v3488 = vshrl.u32 %v3487, 7
        %v3489 = vsub.s32 0, %v3488
        %v3490 = vrot.slane %v3485, %v3489
        %v3492 = vmul.f32 %v3484, %v3490
        %v3493 = vld [vmem:[#allocation24] sm:$0x1]
        %v3495 = vlaneseq
        %v3496 = vshrl.u32 %v3495, 7
        %v3497 = vsub.s32 0, %v3496
        %v3498 = vrot.slane %v3493, %v3497
        %v3500 = vadd.f32 %v3492, %v3498
        %3501 = vst.msk [vmem:[%s1188] sm:$0xff] %vm1204, %v3500
        %p3502 = scmp.lt.s32.totalorder %s86, 1
        %s3503 = scalar_select %p3502, %s86, 1
        %s3504 = smul.addr %s3503, 8
        %s3505 = scalar_lea.vmem %s61, %s3504
        %s3506 = sand.u32 %s770, 1
        %s3507 = scalar_lea.sflag [#allocation5], %s3506
        %s3508 = sand.u32 %s770, 1
        %s3509 = smul.addr %s3508, 32
        %s3510 = scalar_lea.vmem [#allocation26], %s3509
        // Predicated region
        $region197: #{decoder_forward.4} parent=139 // pred_check
          %p3511 = pneg %p754
        $region198: #{decoder_forward.4} parent=139 // pred_check_branch
          %3513 = sbr.rel (%p3511) target = $region200
        $region199: #{decoder_forward.4} parent=139 // pred_region
          _
        $region200: #{decoder_forward.4} parent=139 // pred_fallthru
          _
        // Predicated region
        $region201: #{decoder_forward.4} parent=139 // pred_check
          %p3514 = pneg %p780
        $region202: #{decoder_forward.4} parent=139 // pred_check_branch
          %3516 = sbr.rel (%p3514) target = $region204
        $region203: #{decoder_forward.4} parent=139 // pred_region
          %s3518 = ssub.s32 512, 512
          %3519 = vsyncadd %s3507, %s3518
          %s3520 = smul.addr %s86, 4
          %s3521 = smul.addr %s3520, 128
          %s3522 = scalar_lea.hbm %s63, %s3521
          %s3523 = sshll.u32 %s3510, 4
          %s3524 = int_to_ptr.vmem [resolvable:$true] %s3523
          %3529 = dma.vmem_to_hbm [thread:$0]  %s3524, 512, %s3522, %s3507, 128, 128, 8
        $region204: #{decoder_forward.4} parent=139 // pred_fallthru
          _
      $region140: #{decoder_forward.4} parent=5 // pred_fallthru
        _
      %p3530 = scmp.le.s32.totalorder 2, %s81
      // Predicated region
      $region205: #{decoder_forward.4} parent=5 // pred_check
        %p3531 = pneg %p3530
      $region206: #{decoder_forward.4} parent=5 // pred_check_branch
        %3533 = sbr.rel (%p3531) target = $region208
      $region207: #{decoder_forward.4} parent=5 // pred_region
        %s3534 = ssub.s32 %s81, 2
        // Predicated region
        $region209: #{decoder_forward.4} parent=207 // pred_check
          %p3535 = pneg %p760
        $region210: #{decoder_forward.4} parent=207 // pred_check_branch
          %3537 = sbr.rel (%p3535) target = $region212
        $region211: #{decoder_forward.4} parent=207 // pred_region
          %p3538 = scmp.lt.s32.totalorder %s87, 1
          %s3539 = scalar_select %p3538, %s87, 1
          %s3540 = smul.addr %s3539, 8
          %s3541 = scalar_lea.vmem %s61, %s3540
        $region212: #{decoder_forward.4} parent=207 // pred_fallthru
          _
        // Predicated region
        $region213: #{decoder_forward.4} parent=207 // pred_check
          %p3542 = pneg %p786
        $region214: #{decoder_forward.4} parent=207 // pred_check_branch
          %3544 = sbr.rel (%p3542) target = $region216
        $region215: #{decoder_forward.4} parent=207 // pred_region
          %s3545 = sand.u32 %s771, 1
          %s3546 = scalar_lea.sflag [#allocation5], %s3545
          %s3547 = sand.u32 %s771, 1
          %s3548 = smul.addr %s3547, 32
          %s3549 = scalar_lea.vmem [#allocation26], %s3548
          %3550 = dma.done %s3546, 512
        $region216: #{decoder_forward.4} parent=207 // pred_fallthru
          _
      $region208: #{decoder_forward.4} parent=5 // pred_fallthru
        _
    $region6: #{decoder_forward.4} parent=1 // loop_footer
      %s85 = sadd.s32 1, %s81
    $region7: #{decoder_forward.4} parent=1 // loop_footer_branch
      %80 = sbr.rel target = $region3
    $region8: #{decoder_forward.4} parent=1 // loop_exit
      _
    %3551 = vsyncpa [#allocation4], 1
    %s3552 = scalar_lea.sflag [#allocation4], 1
    %3553 = vsyncpa %s3552, 1
    %3554 = vsyncpa [#allocation7], 1
    %3555 = vsyncpa [#allocation10], 1
    %3556 = vsyncpa [#allocation13], 1
    %3557 = vsyncpa [#allocation16], 1
    %3558 = vsyncpa [#allocation19], 1
    %3559 = vsyncpa [#allocation22], 1
    %3560 = vsyncpa [#allocation25], 1
    %3561 = vsyncpa [#allocation5], 1
    %s3562 = scalar_lea.sflag [#allocation5], 1
    %3563 = vsyncpa %s3562, 1

</llo_original>
